<compile_context>
chip_gen: v6e
topology: v6e:2x2x1
jax: 0.10.0
libtpu: 0.0.40
codegen_flags: <defaults>
</compile_context>

<pallas_src>
import functools
import math

import jax
import jax.numpy as jnp
from jax.experimental import pallas as pl

# ------------------------- small config (mirrors OptimizedDeepSeekArgs) -----------------
HIDDEN    = 128   # hidden_size
N_HEADS   = 4     # num_attention_heads
QK_DIM    = 32    # qk_rope_head_dim
V_DIM     = 32    # v_head_dim
Q_LORA    = 64    # q_lora_rank
KV_LORA   = 64    # kv_lora_rank
INTER     = 256   # intermediate_size
N_EXPERTS = 8     # n_routed_experts
N_SHARED  = 2     # n_shared_experts
N_ACT     = 2     # n_activated_experts
LN_EPS    = 1e-5

assert QK_DIM == V_DIM            # one head-lane mask is reused for q/k and v layouts
assert N_HEADS * QK_DIM == HIDDEN

_PARAM_ORDER = (
    "ln1_g", "ln1_b",
    "q_a_w", "q_a_ln_g", "q_a_ln_b", "q_b_w",
    "kv_a_w", "kv_a_ln_g", "kv_a_ln_b", "k_b_w", "v_b_w",
    "o_w",
    "ln2_g", "ln2_b",
    "gate_w", "expand",
    "fused_w1", "fused_b1", "fused_w2", "fused_b2",
)


# ------------------------------------ fused kernel --------------------------------------
def _fused_layer_kernel(
    x_ref, bias_ref, hmask_ref,
    ln1_g_ref, ln1_b_ref,
    q_a_w_ref, q_a_ln_g_ref, q_a_ln_b_ref, q_b_w_ref,
    kv_a_w_ref, kv_a_ln_g_ref, kv_a_ln_b_ref, k_b_w_ref, v_b_w_ref,
    o_w_ref,
    ln2_g_ref, ln2_b_ref,
    gate_w_ref, expand_ref,
    w1_ref, b1_ref, w2_ref, b2_ref,
    o_ref,
    *, exact_gelu: bool,
):
    f32 = jnp.float32
    x = x_ref[...]                                            # (BS, HIDDEN) f32
    BS = x.shape[0]

    def ln(v, g, b):
        mu = jnp.mean(v, axis=-1, keepdims=True)
        var = jnp.mean(jnp.square(v - mu), axis=-1, keepdims=True)   # biased (torch LN)
        return (v - mu) * jax.lax.rsqrt(var + LN_EPS) * g + b

    def mm(a, b):
        return jnp.dot(a, b, preferred_element_type=f32)

    def gelu(v):
        if exact_gelu:
            # torch nn.GELU() default = exact erf formulation.
            return jax.nn.gelu(v, approximate=False)
        # Fallback (only if lax.erf has no Mosaic lowering): Abramowitz & Stegun 7.1.26
        # polynomial erf, |abs err| <= 1.5e-7 (f32-level accuracy), built from supported ops.
        a1, a2, a3, a4, a5 = 0.254829592, -0.284496736, 1.421413741, -1.453152027, 1.061405429
        u = v * 0.7071067811865476
        sgn = jnp.where(u < 0.0, -1.0, 1.0)
        au = jnp.abs(u)
        t = 1.0 / (1.0 + 0.3275911 * au)
        poly = ((((a5 * t + a4) * t + a3) * t + a2) * t + a1) * t
        erf_u = sgn * (1.0 - poly * jnp.exp(-au * au))
        return 0.5 * v * (1.0 + erf_u)

    # ----------------------- attention block (pre-LN MLA + residual) --------------------
    h = ln(x, ln1_g_ref[...], ln1_b_ref[...])

    q_a = ln(mm(h, q_a_w_ref[...]), q_a_ln_g_ref[...], q_a_ln_b_ref[...])
    q = mm(q_a, q_b_w_ref[...])                               # (BS, NH*QK), heads on lanes

    # kv_a_w only holds the kv_lora columns; the k_pe split is discarded by the reference.
    kv_a = ln(mm(h, kv_a_w_ref[...]), kv_a_ln_g_ref[...], kv_a_ln_b_ref[...])
    k = mm(kv_a, k_b_w_ref[...])                              # (BS, NH*QK)
    v = mm(kv_a, v_b_w_ref[...])                              # (BS, NH*V)

    # TODO(synk): OptimizedAttentionKernels.scaled_dot_product_attention_optimized is not
    # provided; implemented as standard non-causal SDPA (no RoPE, dropout=0 / eval).
    k_t = k.T                                                 # (HIDDEN, BS), hoisted
    bias = bias_ref[...]                                      # (BS, BS) block-diag batch mask
    hmask = hmask_ref[...]                                    # (NH, HIDDEN) 0/1 lane masks
    scale = 1.0 / math.sqrt(QK_DIM)

    ctx = jnp.zeros((BS, N_HEADS * V_DIM), f32)
    for hd in range(N_HEADS):                                 # static unroll, 4 heads
        m_h = hmask[hd:hd + 1, :]                             # (1, HIDDEN)
        # masked full-width contraction == per-head scores (K=128 MXU push, no lane slices)
        s = mm(q * m_h, k_t) * scale + bias                   # (BS, BS)
        s = s - jnp.max(s, axis=-1, keepdims=True)
        p = jnp.exp(s)
        p = p / jnp.sum(p, axis=-1, keepdims=True)
        ctx = ctx + mm(p, v * m_h)                            # only head-hd lanes non-zero
    x1 = x + mm(ctx, o_w_ref[...])                            # single full-width o_proj

    # ------------------------------ MoE block (pre-LN + residual) -----------------------
    h2 = ln(x1, ln2_g_ref[...], ln2_b_ref[...])

    # Router: softmax -> top-k -> re-softmax of the selected probabilities (matches
    # torch: topk(softmax(logits)) then softmax of the top-k probs).  Exact divisions.
    logits = mm(h2, gate_w_ref[...])                          # (BS, E)
    lmax = jnp.max(logits, axis=-1, keepdims=True)
    el = jnp.exp(logits - lmax)
    probs = el / jnp.sum(el, axis=-1, keepdims=True)

    eidx = jax.lax.broadcasted_iota(jnp.int32, probs.shape, 1)
    remaining = probs
    sel = jnp.zeros(probs.shape, f32)
    for _ in range(N_ACT):                                    # N_ACT=2 unrolled
        mx = jnp.max(remaining, axis=-1, keepdims=True)
        cand = jnp.where(remaining >= mx, eidx, N_EXPERTS)    # lowest-index tie-break
        amin = jnp.min(cand, axis=-1, keepdims=True)
        picked = eidx == amin
        sel = sel + picked.astype(f32)
        remaining = jnp.where(picked, -jnp.inf, remaining)

    z = jnp.where(sel > 0.0, probs, -jnp.inf)
    z = z - jnp.max(z, axis=-1, keepdims=True)
    ez = jnp.exp(z)
    gates = ez / jnp.sum(ez, axis=-1, keepdims=True)          # (BS, E), rows sum to 1

    # Routed + shared experts fused into one wide matmul pair.  gate_full carries the
    # per-expert gates on the routed lanes and exactly 1.0 on the shared lanes.
    # TODO(synk): OptimizedMLP definition not provided; assumed Linear->GELU->Linear with
    # bias, dropout disabled (eval mode).
    gate_full = mm(gates, expand_ref[...])                    # (BS, E*I + NS*I)
    hh = mm(h2, w1_ref[...]) + b1_ref[...]                    # (BS, 2560)
    act = gelu(hh)
    moe = mm(act * gate_full, w2_ref[...]) + mm(gates, b2_ref[...])   # (BS, HIDDEN)

    o_ref[...] = x1 + moe


# --------------------------------- host-side wrapper -------------------------------------
def deepseek_layer_forward(x, params, *, exact_gelu=True):
    B, S, Hd = x.shape
    assert Hd == HIDDEN
    BS = B * S
    x2d = x.reshape(BS, HIDDEN)

    # Block-diagonal additive bias: folding the batch into rows must not let tokens of
    # different batch elements attend to each other.
    ids = jnp.arange(BS, dtype=jnp.int32) // S
    attn_bias = jnp.where(ids[:, None] == ids[None, :], 0.0, -1e30).astype(jnp.float32)
    # Per-head lane masks (hoisted constants; QK_DIM == V_DIM so one mask serves q/k and v).
    head_mask = jnp.repeat(jnp.eye(N_HEADS, dtype=jnp.float32), QK_DIM, axis=1)  # (NH, HIDDEN)

    weights = [params[name] for name in _PARAM_ORDER]

    # Single grid step: every operand is a whole-array VMEM block (~3 MiB of weights),
    # no pipelining / double-buffering needed.  For much larger shapes (or to keep both
    # v7x TensorCores busy) add a parallel grid axis over batch or the fused expert lane
    # axis, and move re_w1/re_w2 to memory_space=pl.ANY with an emit_pipeline loop.
    out2d = pl.pallas_call(
        functools.partial(_fused_layer_kernel, exact_gelu=exact_gelu),
        out_shape=jax.ShapeDtypeStruct((BS, HIDDEN), jnp.float32),
    )(x2d, attn_bias, head_mask, *weights)
    return out2d.reshape(B, S, HIDDEN)


# --------------------------------- deterministic params ---------------------------------
def init_params(key):
    ks = iter(jax.random.split(key, 14))

    def w(shape, scale=0.02):
        return (scale * jax.random.normal(next(ks), shape)).astype(jnp.float32)

    p = {}
    p["ln1_g"] = jnp.ones((1, HIDDEN), jnp.float32)
    p["ln1_b"] = jnp.zeros((1, HIDDEN), jnp.float32)
    p["ln2_g"] = jnp.ones((1, HIDDEN), jnp.float32)
    p["ln2_b"] = jnp.zeros((1, HIDDEN), jnp.float32)

    # Projections stored as (in_features, out_features) == torch weight transposed.
    p["q_a_w"] = w((HIDDEN, Q_LORA))
    p["q_a_ln_g"] = jnp.ones((1, Q_LORA), jnp.float32)
    p["q_a_ln_b"] = jnp.zeros((1, Q_LORA), jnp.float32)
    p["q_b_w"] = w((Q_LORA, N_HEADS * QK_DIM))

    # Only the kv_lora columns of kv_a_proj_with_mqa are kept (k_pe is unused upstream).
    p["kv_a_w"] = w((HIDDEN, KV_LORA))
    p["kv_a_ln_g"] = jnp.ones((1, KV_LORA), jnp.float32)
    p["kv_a_ln_b"] = jnp.zeros((1, KV_LORA), jnp.float32)
    # kv_b_proj split host-side into separate k/v projection weights (lane-dense outputs).
    kv_b = w((KV_LORA, N_HEADS, QK_DIM + V_DIM))
    p["k_b_w"] = kv_b[:, :, :QK_DIM].reshape(KV_LORA, N_HEADS * QK_DIM)
    p["v_b_w"] = kv_b[:, :, QK_DIM:].reshape(KV_LORA, N_HEADS * V_DIM)

    p["o_w"] = w((N_HEADS * V_DIM, HIDDEN))
    p["gate_w"] = w((HIDDEN, N_EXPERTS))

    # Routed experts in fused layout (expert e owns columns/rows e*INTER:(e+1)*INTER).
    re_w1 = w((HIDDEN, N_EXPERTS * INTER))
    re_b1 = w((1, N_EXPERTS * INTER))
    re_w2 = w((N_EXPERTS * INTER, HIDDEN))
    re_b2 = w((N_EXPERTS, HIDDEN))
    # Shared experts, same fused layout.
    se_w1 = w((HIDDEN, N_SHARED * INTER))
    se_b1 = w((1, N_SHARED * INTER))
    se_w2 = w((N_SHARED * INTER, HIDDEN))
    se_b2 = w((N_SHARED, HIDDEN))
    se_b2_mean = jnp.mean(se_b2, axis=0, keepdims=True)       # torch: sum then /= n_shared

    # Fuse routed + shared experts into ONE matmul pair (host-side, one time):
    #   W1 = [re_w1 | se_w1]           (HIDDEN, E*I + NS*I)
    #   W2 = [re_w2 ; se_w2 / NS]      (E*I + NS*I, HIDDEN)
    #   b2 = re_b2 + mean(se_b2)       (E, HIDDEN)   -- applied via gates (sum(gates)==1)
    p["fused_w1"] = jnp.concatenate([re_w1, se_w1], axis=1)
    p["fused_b1"] = jnp.concatenate([re_b1, se_b1], axis=1)
    p["fused_w2"] = jnp.concatenate([re_w2, se_w2 * (1.0 / N_SHARED)], axis=0)
    p["fused_b2"] = re_b2 + se_b2_mean

    # Gate expansion matrix (hoisted out of the kernel): indicator blocks over routed
    # lanes, all-ones over shared lanes (gates sum to 1 -> shared path is unscaled).
    eye_blocks = jnp.repeat(jnp.eye(N_EXPERTS, dtype=jnp.float32), INTER, axis=1)
    shared_ones = jnp.ones((N_EXPERTS, N_SHARED * INTER), jnp.float32)
    p["expand"] = jnp.concatenate([eye_blocks, shared_ones], axis=1)
    return p


if __name__ == "__main__":
    key = jax.random.PRNGKey(0)
    pkey, xkey = jax.random.split(key)
    params = init_params(pkey)

    B, S = 2, 16
    x = jax.random.normal(xkey, (B, S, HIDDEN), jnp.float32)

    try:
        fwd = jax.jit(functools.partial(deepseek_layer_forward, exact_gelu=True))
        out = fwd(x, params)
        jax.block_until_ready(out)
    except Exception:
        # TODO(synk): lax.erf not lowerable on this Mosaic build -> polynomial-erf GELU.
        fwd = jax.jit(functools.partial(deepseek_layer_forward, exact_gelu=False))
        out = fwd(x, params)
        jax.block_until_ready(out)

    assert out.shape == (B, S, HIDDEN)
    assert bool(jnp.all(jnp.isfinite(out)))
    print("KERNEL_OK")
</pallas_src>

<mosaic_0001>
module attributes {stable_mosaic.version = 11 : i64} {
  func.func @_fused_layer_kernel(%arg0: memref<32x128xf32, #tpu.memory_space<vmem>>, %arg1: memref<32x32xf32, #tpu.memory_space<vmem>>, %arg2: memref<4x128xf32, #tpu.memory_space<vmem>>, %arg3: memref<1x128xf32, #tpu.memory_space<vmem>>, %arg4: memref<1x128xf32, #tpu.memory_space<vmem>>, %arg5: memref<128x64xf32, #tpu.memory_space<vmem>>, %arg6: memref<1x64xf32, #tpu.memory_space<vmem>>, %arg7: memref<1x64xf32, #tpu.memory_space<vmem>>, %arg8: memref<64x128xf32, #tpu.memory_space<vmem>>, %arg9: memref<128x64xf32, #tpu.memory_space<vmem>>, %arg10: memref<1x64xf32, #tpu.memory_space<vmem>>, %arg11: memref<1x64xf32, #tpu.memory_space<vmem>>, %arg12: memref<64x128xf32, #tpu.memory_space<vmem>>, %arg13: memref<64x128xf32, #tpu.memory_space<vmem>>, %arg14: memref<128x128xf32, #tpu.memory_space<vmem>>, %arg15: memref<1x128xf32, #tpu.memory_space<vmem>>, %arg16: memref<1x128xf32, #tpu.memory_space<vmem>>, %arg17: memref<128x8xf32, #tpu.memory_space<vmem>>, %arg18: memref<8x2560xf32, #tpu.memory_space<vmem>>, %arg19: memref<128x2560xf32, #tpu.memory_space<vmem>>, %arg20: memref<1x2560xf32, #tpu.memory_space<vmem>>, %arg21: memref<2560x128xf32, #tpu.memory_space<vmem>>, %arg22: memref<8x128xf32, #tpu.memory_space<vmem>>, %arg23: memref<32x128xf32, #tpu.memory_space<vmem>>) attributes {dimension_semantics = [], scalar_prefetch = 0 : i64, scratch_operands = 0 : i64, tpu.core_type = #tpu.core_type<tc>} {
    %c0 = arith.constant 0 : index
    %c0_0 = arith.constant 0 : index
    %0 = vector.load %arg0[%c0, %c0_0] : memref<32x128xf32, #tpu.memory_space<vmem>>, vector<32x128xf32>
    %c0_1 = arith.constant 0 : index
    %c0_2 = arith.constant 0 : index
    %1 = vector.load %arg3[%c0_1, %c0_2] : memref<1x128xf32, #tpu.memory_space<vmem>>, vector<1x128xf32>
    %c0_3 = arith.constant 0 : index
    %c0_4 = arith.constant 0 : index
    %2 = vector.load %arg4[%c0_3, %c0_4] : memref<1x128xf32, #tpu.memory_space<vmem>>, vector<1x128xf32>
    %cst = arith.constant dense<0.000000e+00> : vector<32xf32>
    %3 = vector.multi_reduction <add>, %0, %cst [1] : vector<32x128xf32> to vector<32xf32>
    %4 = vector.shape_cast %3 : vector<32xf32> to vector<32x1xf32>
    %cst_5 = arith.constant 1.280000e+02 : f32
    %5 = vector.broadcast %cst_5 : f32 to vector<32x1xf32>
    %6 = arith.divf %4, %5 : vector<32x1xf32>
    %7 = vector.broadcast %6 : vector<32x1xf32> to vector<32x128xf32>
    %8 = arith.subf %0, %7 : vector<32x128xf32>
    %9 = arith.mulf %8, %8 : vector<32x128xf32>
    %cst_6 = arith.constant dense<0.000000e+00> : vector<32xf32>
    %10 = vector.multi_reduction <add>, %9, %cst_6 [1] : vector<32x128xf32> to vector<32xf32>
    %11 = vector.shape_cast %10 : vector<32xf32> to vector<32x1xf32>
    %cst_7 = arith.constant 1.280000e+02 : f32
    %12 = vector.broadcast %cst_7 : f32 to vector<32x1xf32>
    %13 = arith.divf %11, %12 : vector<32x1xf32>
    %14 = vector.broadcast %6 : vector<32x1xf32> to vector<32x128xf32>
    %15 = arith.subf %0, %14 : vector<32x128xf32>
    %cst_8 = arith.constant 9.99999974E-6 : f32
    %16 = vector.broadcast %cst_8 : f32 to vector<32x1xf32>
    %17 = arith.addf %13, %16 : vector<32x1xf32>
    %18 = math.rsqrt %17 : vector<32x1xf32>
    %19 = vector.broadcast %18 : vector<32x1xf32> to vector<32x128xf32>
    %20 = arith.mulf %15, %19 : vector<32x128xf32>
    %21 = vector.broadcast %1 : vector<1x128xf32> to vector<32x128xf32>
    %22 = arith.mulf %20, %21 : vector<32x128xf32>
    %23 = vector.broadcast %2 : vector<1x128xf32> to vector<32x128xf32>
    %24 = arith.addf %22, %23 : vector<32x128xf32>
    %c0_9 = arith.constant 0 : index
    %c0_10 = arith.constant 0 : index
    %25 = vector.load %arg5[%c0_9, %c0_10] : memref<128x64xf32, #tpu.memory_space<vmem>>, vector<128x64xf32>
    %cst_11 = arith.constant dense<0.000000e+00> : vector<32x64xf32>
    %26 = tpu.matmul %24, %25, %cst_11 {dimension_numbers = #tpu.dot_dimension_numbers<[1], [0], [0], [1], [0, 0, 1, 1], [], []>} : vector<32x128xf32>, vector<128x64xf32>, vector<32x64xf32> -> vector<32x64xf32>
    %c0_12 = arith.constant 0 : index
    %c0_13 = arith.constant 0 : index
    %27 = vector.load %arg6[%c0_12, %c0_13] : memref<1x64xf32, #tpu.memory_space<vmem>>, vector<1x64xf32>
    %c0_14 = arith.constant 0 : index
    %c0_15 = arith.constant 0 : index
    %28 = vector.load %arg7[%c0_14, %c0_15] : memref<1x64xf32, #tpu.memory_space<vmem>>, vector<1x64xf32>
    %cst_16 = arith.constant dense<0.000000e+00> : vector<32xf32>
    %29 = vector.multi_reduction <add>, %26, %cst_16 [1] : vector<32x64xf32> to vector<32xf32>
    %30 = vector.shape_cast %29 : vector<32xf32> to vector<32x1xf32>
    %cst_17 = arith.constant 6.400000e+01 : f32
    %31 = vector.broadcast %cst_17 : f32 to vector<32x1xf32>
    %32 = arith.divf %30, %31 : vector<32x1xf32>
    %33 = vector.broadcast %32 : vector<32x1xf32> to vector<32x64xf32>
    %34 = arith.subf %26, %33 : vector<32x64xf32>
    %35 = arith.mulf %34, %34 : vector<32x64xf32>
    %cst_18 = arith.constant dense<0.000000e+00> : vector<32xf32>
    %36 = vector.multi_reduction <add>, %35, %cst_18 [1] : vector<32x64xf32> to vector<32xf32>
    %37 = vector.shape_cast %36 : vector<32xf32> to vector<32x1xf32>
    %cst_19 = arith.constant 6.400000e+01 : f32
    %38 = vector.broadcast %cst_19 : f32 to vector<32x1xf32>
    %39 = arith.divf %37, %38 : vector<32x1xf32>
    %40 = vector.broadcast %32 : vector<32x1xf32> to vector<32x64xf32>
    %41 = arith.subf %26, %40 : vector<32x64xf32>
    %cst_20 = arith.constant 9.99999974E-6 : f32
    %42 = vector.broadcast %cst_20 : f32 to vector<32x1xf32>
    %43 = arith.addf %39, %42 : vector<32x1xf32>
    %44 = math.rsqrt %43 : vector<32x1xf32>
    %45 = vector.broadcast %44 : vector<32x1xf32> to vector<32x64xf32>
    %46 = arith.mulf %41, %45 : vector<32x64xf32>
    %47 = vector.broadcast %27 : vector<1x64xf32> to vector<32x64xf32>
    %48 = arith.mulf %46, %47 : vector<32x64xf32>
    %49 = vector.broadcast %28 : vector<1x64xf32> to vector<32x64xf32>
    %50 = arith.addf %48, %49 : vector<32x64xf32>
    %c0_21 = arith.constant 0 : index
    %c0_22 = arith.constant 0 : index
    %51 = vector.load %arg8[%c0_21, %c0_22] : memref<64x128xf32, #tpu.memory_space<vmem>>, vector<64x128xf32>
    %cst_23 = arith.constant dense<0.000000e+00> : vector<32x128xf32>
    %52 = tpu.matmul %50, %51, %cst_23 {dimension_numbers = #tpu.dot_dimension_numbers<[1], [0], [0], [1], [0, 0, 1, 1], [], []>} : vector<32x64xf32>, vector<64x128xf32>, vector<32x128xf32> -> vector<32x128xf32>
    %c0_24 = arith.constant 0 : index
    %c0_25 = arith.constant 0 : index
    %53 = vector.load %arg9[%c0_24, %c0_25] : memref<128x64xf32, #tpu.memory_space<vmem>>, vector<128x64xf32>
    %cst_26 = arith.constant dense<0.000000e+00> : vector<32x64xf32>
    %54 = tpu.matmul %24, %53, %cst_26 {dimension_numbers = #tpu.dot_dimension_numbers<[1], [0], [0], [1], [0, 0, 1, 1], [], []>} : vector<32x128xf32>, vector<128x64xf32>, vector<32x64xf32> -> vector<32x64xf32>
    %c0_27 = arith.constant 0 : index
    %c0_28 = arith.constant 0 : index
    %55 = vector.load %arg10[%c0_27, %c0_28] : memref<1x64xf32, #tpu.memory_space<vmem>>, vector<1x64xf32>
    %c0_29 = arith.constant 0 : index
    %c0_30 = arith.constant 0 : index
    %56 = vector.load %arg11[%c0_29, %c0_30] : memref<1x64xf32, #tpu.memory_space<vmem>>, vector<1x64xf32>
    %cst_31 = arith.constant dense<0.000000e+00> : vector<32xf32>
    %57 = vector.multi_reduction <add>, %54, %cst_31 [1] : vector<32x64xf32> to vector<32xf32>
    %58 = vector.shape_cast %57 : vector<32xf32> to vector<32x1xf32>
    %cst_32 = arith.constant 6.400000e+01 : f32
    %59 = vector.broadcast %cst_32 : f32 to vector<32x1xf32>
    %60 = arith.divf %58, %59 : vector<32x1xf32>
    %61 = vector.broadcast %60 : vector<32x1xf32> to vector<32x64xf32>
    %62 = arith.subf %54, %61 : vector<32x64xf32>
    %63 = arith.mulf %62, %62 : vector<32x64xf32>
    %cst_33 = arith.constant dense<0.000000e+00> : vector<32xf32>
    %64 = vector.multi_reduction <add>, %63, %cst_33 [1] : vector<32x64xf32> to vector<32xf32>
    %65 = vector.shape_cast %64 : vector<32xf32> to vector<32x1xf32>
    %cst_34 = arith.constant 6.400000e+01 : f32
    %66 = vector.broadcast %cst_34 : f32 to vector<32x1xf32>
    %67 = arith.divf %65, %66 : vector<32x1xf32>
    %68 = vector.broadcast %60 : vector<32x1xf32> to vector<32x64xf32>
    %69 = arith.subf %54, %68 : vector<32x64xf32>
    %cst_35 = arith.constant 9.99999974E-6 : f32
    %70 = vector.broadcast %cst_35 : f32 to vector<32x1xf32>
    %71 = arith.addf %67, %70 : vector<32x1xf32>
    %72 = math.rsqrt %71 : vector<32x1xf32>
    %73 = vector.broadcast %72 : vector<32x1xf32> to vector<32x64xf32>
    %74 = arith.mulf %69, %73 : vector<32x64xf32>
    %75 = vector.broadcast %55 : vector<1x64xf32> to vector<32x64xf32>
    %76 = arith.mulf %74, %75 : vector<32x64xf32>
    %77 = vector.broadcast %56 : vector<1x64xf32> to vector<32x64xf32>
    %78 = arith.addf %76, %77 : vector<32x64xf32>
    %c0_36 = arith.constant 0 : index
    %c0_37 = arith.constant 0 : index
    %79 = vector.load %arg12[%c0_36, %c0_37] : memref<64x128xf32, #tpu.memory_space<vmem>>, vector<64x128xf32>
    %cst_38 = arith.constant dense<0.000000e+00> : vector<32x128xf32>
    %80 = tpu.matmul %78, %79, %cst_38 {dimension_numbers = #tpu.dot_dimension_numbers<[1], [0], [0], [1], [0, 0, 1, 1], [], []>} : vector<32x64xf32>, vector<64x128xf32>, vector<32x128xf32> -> vector<32x128xf32>
    %c0_39 = arith.constant 0 : index
    %c0_40 = arith.constant 0 : index
    %81 = vector.load %arg13[%c0_39, %c0_40] : memref<64x128xf32, #tpu.memory_space<vmem>>, vector<64x128xf32>
    %cst_41 = arith.constant dense<0.000000e+00> : vector<32x128xf32>
    %82 = tpu.matmul %78, %81, %cst_41 {dimension_numbers = #tpu.dot_dimension_numbers<[1], [0], [0], [1], [0, 0, 1, 1], [], []>} : vector<32x64xf32>, vector<64x128xf32>, vector<32x128xf32> -> vector<32x128xf32>
    %83 = tpu.transpose %80, [1, 0] : vector<32x128xf32> -> vector<128x32xf32>
    %c0_42 = arith.constant 0 : index
    %c0_43 = arith.constant 0 : index
    %84 = vector.load %arg1[%c0_42, %c0_43] : memref<32x32xf32, #tpu.memory_space<vmem>>, vector<32x32xf32>
    %c0_44 = arith.constant 0 : index
    %c0_45 = arith.constant 0 : index
    %85 = vector.load %arg2[%c0_44, %c0_45] : memref<4x128xf32, #tpu.memory_space<vmem>>, vector<4x128xf32>
    %cst_46 = arith.constant 0.000000e+00 : f32
    %86 = vector.broadcast %cst_46 : f32 to vector<32x128xf32>
    %87 = vector.extract_strided_slice %85 {offsets = [0, 0], sizes = [1, 128], strides = [1, 1]} : vector<4x128xf32> to vector<1x128xf32>
    %88 = vector.broadcast %87 : vector<1x128xf32> to vector<32x128xf32>
    %89 = arith.mulf %52, %88 : vector<32x128xf32>
    %cst_47 = arith.constant dense<0.000000e+00> : vector<32x32xf32>
    %90 = tpu.matmul %89, %83, %cst_47 {dimension_numbers = #tpu.dot_dimension_numbers<[1], [0], [0], [1], [0, 0, 1, 1], [], []>} : vector<32x128xf32>, vector<128x32xf32>, vector<32x32xf32> -> vector<32x32xf32>
    %cst_48 = arith.constant 0.176776692 : f32
    %91 = vector.broadcast %cst_48 : f32 to vector<32x32xf32>
    %92 = arith.mulf %90, %91 : vector<32x32xf32>
    %93 = arith.addf %92, %84 : vector<32x32xf32>
    %cst_49 = arith.constant dense<0xFF800000> : vector<32xf32>
    %94 = vector.multi_reduction <maximumf>, %93, %cst_49 [1] : vector<32x32xf32> to vector<32xf32>
    %95 = vector.shape_cast %94 : vector<32xf32> to vector<32x1xf32>
    %96 = vector.broadcast %95 : vector<32x1xf32> to vector<32x32xf32>
    %97 = arith.subf %93, %96 : vector<32x32xf32>
    %98 = math.exp %97 : vector<32x32xf32>
    %cst_50 = arith.constant dense<0.000000e+00> : vector<32xf32>
    %99 = vector.multi_reduction <add>, %98, %cst_50 [1] : vector<32x32xf32> to vector<32xf32>
    %100 = vector.shape_cast %99 : vector<32xf32> to vector<32x1xf32>
    %101 = vector.broadcast %100 : vector<32x1xf32> to vector<32x32xf32>
    %102 = arith.divf %98, %101 : vector<32x32xf32>
    %103 = vector.broadcast %87 : vector<1x128xf32> to vector<32x128xf32>
    %104 = arith.mulf %82, %103 : vector<32x128xf32>
    %cst_51 = arith.constant dense<0.000000e+00> : vector<32x128xf32>
    %105 = tpu.matmul %102, %104, %cst_51 {dimension_numbers = #tpu.dot_dimension_numbers<[1], [0], [0], [1], [0, 0, 1, 1], [], []>} : vector<32x32xf32>, vector<32x128xf32>, vector<32x128xf32> -> vector<32x128xf32>
    %106 = arith.addf %86, %105 : vector<32x128xf32>
    %107 = vector.extract_strided_slice %85 {offsets = [1, 0], sizes = [1, 128], strides = [1, 1]} : vector<4x128xf32> to vector<1x128xf32>
    %108 = vector.broadcast %107 : vector<1x128xf32> to vector<32x128xf32>
    %109 = arith.mulf %52, %108 : vector<32x128xf32>
    %cst_52 = arith.constant dense<0.000000e+00> : vector<32x32xf32>
    %110 = tpu.matmul %109, %83, %cst_52 {dimension_numbers = #tpu.dot_dimension_numbers<[1], [0], [0], [1], [0, 0, 1, 1], [], []>} : vector<32x128xf32>, vector<128x32xf32>, vector<32x32xf32> -> vector<32x32xf32>
    %cst_53 = arith.constant 0.176776692 : f32
    %111 = vector.broadcast %cst_53 : f32 to vector<32x32xf32>
    %112 = arith.mulf %110, %111 : vector<32x32xf32>
    %113 = arith.addf %112, %84 : vector<32x32xf32>
    %cst_54 = arith.constant dense<0xFF800000> : vector<32xf32>
    %114 = vector.multi_reduction <maximumf>, %113, %cst_54 [1] : vector<32x32xf32> to vector<32xf32>
    %115 = vector.shape_cast %114 : vector<32xf32> to vector<32x1xf32>
    %116 = vector.broadcast %115 : vector<32x1xf32> to vector<32x32xf32>
    %117 = arith.subf %113, %116 : vector<32x32xf32>
    %118 = math.exp %117 : vector<32x32xf32>
    %cst_55 = arith.constant dense<0.000000e+00> : vector<32xf32>
    %119 = vector.multi_reduction <add>, %118, %cst_55 [1] : vector<32x32xf32> to vector<32xf32>
    %120 = vector.shape_cast %119 : vector<32xf32> to vector<32x1xf32>
    %121 = vector.broadcast %120 : vector<32x1xf32> to vector<32x32xf32>
    %122 = arith.divf %118, %121 : vector<32x32xf32>
    %123 = vector.broadcast %107 : vector<1x128xf32> to vector<32x128xf32>
    %124 = arith.mulf %82, %123 : vector<32x128xf32>
    %cst_56 = arith.constant dense<0.000000e+00> : vector<32x128xf32>
    %125 = tpu.matmul %122, %124, %cst_56 {dimension_numbers = #tpu.dot_dimension_numbers<[1], [0], [0], [1], [0, 0, 1, 1], [], []>} : vector<32x32xf32>, vector<32x128xf32>, vector<32x128xf32> -> vector<32x128xf32>
    %126 = arith.addf %106, %125 : vector<32x128xf32>
    %127 = vector.extract_strided_slice %85 {offsets = [2, 0], sizes = [1, 128], strides = [1, 1]} : vector<4x128xf32> to vector<1x128xf32>
    %128 = vector.broadcast %127 : vector<1x128xf32> to vector<32x128xf32>
    %129 = arith.mulf %52, %128 : vector<32x128xf32>
    %cst_57 = arith.constant dense<0.000000e+00> : vector<32x32xf32>
    %130 = tpu.matmul %129, %83, %cst_57 {dimension_numbers = #tpu.dot_dimension_numbers<[1], [0], [0], [1], [0, 0, 1, 1], [], []>} : vector<32x128xf32>, vector<128x32xf32>, vector<32x32xf32> -> vector<32x32xf32>
    %cst_58 = arith.constant 0.176776692 : f32
    %131 = vector.broadcast %cst_58 : f32 to vector<32x32xf32>
    %132 = arith.mulf %130, %131 : vector<32x32xf32>
    %133 = arith.addf %132, %84 : vector<32x32xf32>
    %cst_59 = arith.constant dense<0xFF800000> : vector<32xf32>
    %134 = vector.multi_reduction <maximumf>, %133, %cst_59 [1] : vector<32x32xf32> to vector<32xf32>
    %135 = vector.shape_cast %134 : vector<32xf32> to vector<32x1xf32>
    %136 = vector.broadcast %135 : vector<32x1xf32> to vector<32x32xf32>
    %137 = arith.subf %133, %136 : vector<32x32xf32>
    %138 = math.exp %137 : vector<32x32xf32>
    %cst_60 = arith.constant dense<0.000000e+00> : vector<32xf32>
    %139 = vector.multi_reduction <add>, %138, %cst_60 [1] : vector<32x32xf32> to vector<32xf32>
    %140 = vector.shape_cast %139 : vector<32xf32> to vector<32x1xf32>
    %141 = vector.broadcast %140 : vector<32x1xf32> to vector<32x32xf32>
    %142 = arith.divf %138, %141 : vector<32x32xf32>
    %143 = vector.broadcast %127 : vector<1x128xf32> to vector<32x128xf32>
    %144 = arith.mulf %82, %143 : vector<32x128xf32>
    %cst_61 = arith.constant dense<0.000000e+00> : vector<32x128xf32>
    %145 = tpu.matmul %142, %144, %cst_61 {dimension_numbers = #tpu.dot_dimension_numbers<[1], [0], [0], [1], [0, 0, 1, 1], [], []>} : vector<32x32xf32>, vector<32x128xf32>, vector<32x128xf32> -> vector<32x128xf32>
    %146 = arith.addf %126, %145 : vector<32x128xf32>
    %147 = vector.extract_strided_slice %85 {offsets = [3, 0], sizes = [1, 128], strides = [1, 1]} : vector<4x128xf32> to vector<1x128xf32>
    %148 = vector.broadcast %147 : vector<1x128xf32> to vector<32x128xf32>
    %149 = arith.mulf %52, %148 : vector<32x128xf32>
    %cst_62 = arith.constant dense<0.000000e+00> : vector<32x32xf32>
    %150 = tpu.matmul %149, %83, %cst_62 {dimension_numbers = #tpu.dot_dimension_numbers<[1], [0], [0], [1], [0, 0, 1, 1], [], []>} : vector<32x128xf32>, vector<128x32xf32>, vector<32x32xf32> -> vector<32x32xf32>
    %cst_63 = arith.constant 0.176776692 : f32
    %151 = vector.broadcast %cst_63 : f32 to vector<32x32xf32>
    %152 = arith.mulf %150, %151 : vector<32x32xf32>
    %153 = arith.addf %152, %84 : vector<32x32xf32>
    %cst_64 = arith.constant dense<0xFF800000> : vector<32xf32>
    %154 = vector.multi_reduction <maximumf>, %153, %cst_64 [1] : vector<32x32xf32> to vector<32xf32>
    %155 = vector.shape_cast %154 : vector<32xf32> to vector<32x1xf32>
    %156 = vector.broadcast %155 : vector<32x1xf32> to vector<32x32xf32>
    %157 = arith.subf %153, %156 : vector<32x32xf32>
    %158 = math.exp %157 : vector<32x32xf32>
    %cst_65 = arith.constant dense<0.000000e+00> : vector<32xf32>
    %159 = vector.multi_reduction <add>, %158, %cst_65 [1] : vector<32x32xf32> to vector<32xf32>
    %160 = vector.shape_cast %159 : vector<32xf32> to vector<32x1xf32>
    %161 = vector.broadcast %160 : vector<32x1xf32> to vector<32x32xf32>
    %162 = arith.divf %158, %161 : vector<32x32xf32>
    %163 = vector.broadcast %147 : vector<1x128xf32> to vector<32x128xf32>
    %164 = arith.mulf %82, %163 : vector<32x128xf32>
    %cst_66 = arith.constant dense<0.000000e+00> : vector<32x128xf32>
    %165 = tpu.matmul %162, %164, %cst_66 {dimension_numbers = #tpu.dot_dimension_numbers<[1], [0], [0], [1], [0, 0, 1, 1], [], []>} : vector<32x32xf32>, vector<32x128xf32>, vector<32x128xf32> -> vector<32x128xf32>
    %166 = arith.addf %146, %165 : vector<32x128xf32>
    %c0_67 = arith.constant 0 : index
    %c0_68 = arith.constant 0 : index
    %167 = vector.load %arg14[%c0_67, %c0_68] : memref<128x128xf32, #tpu.memory_space<vmem>>, vector<128x128xf32>
    %cst_69 = arith.constant dense<0.000000e+00> : vector<32x128xf32>
    %168 = tpu.matmul %166, %167, %cst_69 {dimension_numbers = #tpu.dot_dimension_numbers<[1], [0], [0], [1], [0, 0, 1, 1], [], []>} : vector<32x128xf32>, vector<128x128xf32>, vector<32x128xf32> -> vector<32x128xf32>
    %169 = arith.addf %0, %168 : vector<32x128xf32>
    %c0_70 = arith.constant 0 : index
    %c0_71 = arith.constant 0 : index
    %170 = vector.load %arg15[%c0_70, %c0_71] : memref<1x128xf32, #tpu.memory_space<vmem>>, vector<1x128xf32>
    %c0_72 = arith.constant 0 : index
    %c0_73 = arith.constant 0 : index
    %171 = vector.load %arg16[%c0_72, %c0_73] : memref<1x128xf32, #tpu.memory_space<vmem>>, vector<1x128xf32>
    %cst_74 = arith.constant dense<0.000000e+00> : vector<32xf32>
    %172 = vector.multi_reduction <add>, %169, %cst_74 [1] : vector<32x128xf32> to vector<32xf32>
    %173 = vector.shape_cast %172 : vector<32xf32> to vector<32x1xf32>
    %cst_75 = arith.constant 1.280000e+02 : f32
    %174 = vector.broadcast %cst_75 : f32 to vector<32x1xf32>
    %175 = arith.divf %173, %174 : vector<32x1xf32>
    %176 = vector.broadcast %175 : vector<32x1xf32> to vector<32x128xf32>
    %177 = arith.subf %169, %176 : vector<32x128xf32>
    %178 = arith.mulf %177, %177 : vector<32x128xf32>
    %cst_76 = arith.constant dense<0.000000e+00> : vector<32xf32>
    %179 = vector.multi_reduction <add>, %178, %cst_76 [1] : vector<32x128xf32> to vector<32xf32>
    %180 = vector.shape_cast %179 : vector<32xf32> to vector<32x1xf32>
    %cst_77 = arith.constant 1.280000e+02 : f32
    %181 = vector.broadcast %cst_77 : f32 to vector<32x1xf32>
    %182 = arith.divf %180, %181 : vector<32x1xf32>
    %183 = vector.broadcast %175 : vector<32x1xf32> to vector<32x128xf32>
    %184 = arith.subf %169, %183 : vector<32x128xf32>
    %cst_78 = arith.constant 9.99999974E-6 : f32
    %185 = vector.broadcast %cst_78 : f32 to vector<32x1xf32>
    %186 = arith.addf %182, %185 : vector<32x1xf32>
    %187 = math.rsqrt %186 : vector<32x1xf32>
    %188 = vector.broadcast %187 : vector<32x1xf32> to vector<32x128xf32>
    %189 = arith.mulf %184, %188 : vector<32x128xf32>
    %190 = vector.broadcast %170 : vector<1x128xf32> to vector<32x128xf32>
    %191 = arith.mulf %189, %190 : vector<32x128xf32>
    %192 = vector.broadcast %171 : vector<1x128xf32> to vector<32x128xf32>
    %193 = arith.addf %191, %192 : vector<32x128xf32>
    %c0_79 = arith.constant 0 : index
    %c0_80 = arith.constant 0 : index
    %194 = vector.load %arg17[%c0_79, %c0_80] : memref<128x8xf32, #tpu.memory_space<vmem>>, vector<128x8xf32>
    %cst_81 = arith.constant dense<0.000000e+00> : vector<32x8xf32>
    %195 = tpu.matmul %193, %194, %cst_81 {dimension_numbers = #tpu.dot_dimension_numbers<[1], [0], [0], [1], [0, 0, 1, 1], [], []>} : vector<32x128xf32>, vector<128x8xf32>, vector<32x8xf32> -> vector<32x8xf32>
    %cst_82 = arith.constant dense<0xFF800000> : vector<32xf32>
    %196 = vector.multi_reduction <maximumf>, %195, %cst_82 [1] : vector<32x8xf32> to vector<32xf32>
    %197 = vector.shape_cast %196 : vector<32xf32> to vector<32x1xf32>
    %198 = vector.broadcast %197 : vector<32x1xf32> to vector<32x8xf32>
    %199 = arith.subf %195, %198 : vector<32x8xf32>
    %200 = math.exp %199 : vector<32x8xf32>
    %cst_83 = arith.constant dense<0.000000e+00> : vector<32xf32>
    %201 = vector.multi_reduction <add>, %200, %cst_83 [1] : vector<32x8xf32> to vector<32xf32>
    %202 = vector.shape_cast %201 : vector<32xf32> to vector<32x1xf32>
    %203 = vector.broadcast %202 : vector<32x1xf32> to vector<32x8xf32>
    %204 = arith.divf %200, %203 : vector<32x8xf32>
    %205 = tpu.iota {dimensions = array<i32: 1>} : vector<32x8xi32>
    %cst_84 = arith.constant 0.000000e+00 : f32
    %206 = vector.broadcast %cst_84 : f32 to vector<32x8xf32>
    %cst_85 = arith.constant dense<0xFF800000> : vector<32xf32>
    %207 = vector.multi_reduction <maximumf>, %204, %cst_85 [1] : vector<32x8xf32> to vector<32xf32>
    %208 = vector.shape_cast %207 : vector<32xf32> to vector<32x1xf32>
    %209 = vector.broadcast %208 : vector<32x1xf32> to vector<32x8xf32>
    %210 = arith.cmpf oge, %204, %209 : vector<32x8xf32>
    %c8_i32 = arith.constant 8 : i32
    %211 = vector.broadcast %c8_i32 : i32 to vector<32x8xi32>
    %212 = arith.select %210, %205, %211 : vector<32x8xi1>, vector<32x8xi32>
    %cst_86 = arith.constant dense<2147483647> : vector<32xi32>
    %213 = vector.multi_reduction <minsi>, %212, %cst_86 [1] : vector<32x8xi32> to vector<32xi32>
    %214 = vector.shape_cast %213 : vector<32xi32> to vector<32x1xi32>
    %215 = vector.broadcast %214 : vector<32x1xi32> to vector<32x8xi32>
    %216 = arith.cmpi eq, %205, %215 : vector<32x8xi32>
    %217 = arith.extui %216 : vector<32x8xi1> to vector<32x8xi32>
    %218 = arith.sitofp %217 : vector<32x8xi32> to vector<32x8xf32>
    %219 = arith.addf %206, %218 : vector<32x8xf32>
    %cst_87 = arith.constant 0xFF800000 : f32
    %220 = vector.broadcast %cst_87 : f32 to vector<32x8xf32>
    %221 = arith.select %216, %220, %204 : vector<32x8xi1>, vector<32x8xf32>
    %cst_88 = arith.constant dense<0xFF800000> : vector<32xf32>
    %222 = vector.multi_reduction <maximumf>, %221, %cst_88 [1] : vector<32x8xf32> to vector<32xf32>
    %223 = vector.shape_cast %222 : vector<32xf32> to vector<32x1xf32>
    %224 = vector.broadcast %223 : vector<32x1xf32> to vector<32x8xf32>
    %225 = arith.cmpf oge, %221, %224 : vector<32x8xf32>
    %c8_i32_89 = arith.constant 8 : i32
    %226 = vector.broadcast %c8_i32_89 : i32 to vector<32x8xi32>
    %227 = arith.select %225, %205, %226 : vector<32x8xi1>, vector<32x8xi32>
    %cst_90 = arith.constant dense<2147483647> : vector<32xi32>
    %228 = vector.multi_reduction <minsi>, %227, %cst_90 [1] : vector<32x8xi32> to vector<32xi32>
    %229 = vector.shape_cast %228 : vector<32xi32> to vector<32x1xi32>
    %230 = vector.broadcast %229 : vector<32x1xi32> to vector<32x8xi32>
    %231 = arith.cmpi eq, %205, %230 : vector<32x8xi32>
    %232 = arith.extui %231 : vector<32x8xi1> to vector<32x8xi32>
    %233 = arith.sitofp %232 : vector<32x8xi32> to vector<32x8xf32>
    %234 = arith.addf %219, %233 : vector<32x8xf32>
    %cst_91 = arith.constant 0.000000e+00 : f32
    %235 = vector.broadcast %cst_91 : f32 to vector<32x8xf32>
    %236 = arith.cmpf ogt, %234, %235 : vector<32x8xf32>
    %cst_92 = arith.constant 0xFF800000 : f32
    %237 = vector.broadcast %cst_92 : f32 to vector<32x8xf32>
    %238 = arith.select %236, %204, %237 : vector<32x8xi1>, vector<32x8xf32>
    %cst_93 = arith.constant dense<0xFF800000> : vector<32xf32>
    %239 = vector.multi_reduction <maximumf>, %238, %cst_93 [1] : vector<32x8xf32> to vector<32xf32>
    %240 = vector.shape_cast %239 : vector<32xf32> to vector<32x1xf32>
    %241 = vector.broadcast %240 : vector<32x1xf32> to vector<32x8xf32>
    %242 = arith.subf %238, %241 : vector<32x8xf32>
    %243 = math.exp %242 : vector<32x8xf32>
    %cst_94 = arith.constant dense<0.000000e+00> : vector<32xf32>
    %244 = vector.multi_reduction <add>, %243, %cst_94 [1] : vector<32x8xf32> to vector<32xf32>
    %245 = vector.shape_cast %244 : vector<32xf32> to vector<32x1xf32>
    %246 = vector.broadcast %245 : vector<32x1xf32> to vector<32x8xf32>
    %247 = arith.divf %243, %246 : vector<32x8xf32>
    %c0_95 = arith.constant 0 : index
    %c0_96 = arith.constant 0 : index
    %248 = vector.load %arg18[%c0_95, %c0_96] : memref<8x2560xf32, #tpu.memory_space<vmem>>, vector<8x2560xf32>
    %cst_97 = arith.constant dense<0.000000e+00> : vector<32x2560xf32>
    %249 = tpu.matmul %247, %248, %cst_97 {dimension_numbers = #tpu.dot_dimension_numbers<[1], [0], [0], [1], [0, 0, 1, 1], [], []>} : vector<32x8xf32>, vector<8x2560xf32>, vector<32x2560xf32> -> vector<32x2560xf32>
    %c0_98 = arith.constant 0 : index
    %c0_99 = arith.constant 0 : index
    %250 = vector.load %arg19[%c0_98, %c0_99] : memref<128x2560xf32, #tpu.memory_space<vmem>>, vector<128x2560xf32>
    %cst_100 = arith.constant dense<0.000000e+00> : vector<32x2560xf32>
    %251 = tpu.matmul %193, %250, %cst_100 {dimension_numbers = #tpu.dot_dimension_numbers<[1], [0], [0], [1], [0, 0, 1, 1], [], []>} : vector<32x128xf32>, vector<128x2560xf32>, vector<32x2560xf32> -> vector<32x2560xf32>
    %c0_101 = arith.constant 0 : index
    %c0_102 = arith.constant 0 : index
    %252 = vector.load %arg20[%c0_101, %c0_102] : memref<1x2560xf32, #tpu.memory_space<vmem>>, vector<1x2560xf32>
    %253 = vector.broadcast %252 : vector<1x2560xf32> to vector<32x2560xf32>
    %254 = arith.addf %251, %253 : vector<32x2560xf32>
    %cst_103 = arith.constant 0.707106769 : f32
    %255 = vector.broadcast %cst_103 : f32 to vector<32x2560xf32>
    %256 = arith.mulf %254, %255 : vector<32x2560xf32>
    %cst_104 = arith.constant 0.000000e+00 : f32
    %257 = vector.broadcast %cst_104 : f32 to vector<32x2560xf32>
    %258 = arith.cmpf olt, %256, %257 : vector<32x2560xf32>
    %cst_105 = arith.constant -1.000000e+00 : f32
    %cst_106 = arith.constant 1.000000e+00 : f32
    %259 = vector.broadcast %cst_105 : f32 to vector<32x2560xf32>
    %260 = vector.broadcast %cst_106 : f32 to vector<32x2560xf32>
    %261 = arith.select %258, %259, %260 : vector<32x2560xi1>, vector<32x2560xf32>
    %262 = math.absf %256 : vector<32x2560xf32>
    %cst_107 = arith.constant 0.327591091 : f32
    %263 = vector.broadcast %cst_107 : f32 to vector<32x2560xf32>
    %264 = arith.mulf %263, %262 : vector<32x2560xf32>
    %cst_108 = arith.constant 1.000000e+00 : f32
    %265 = vector.broadcast %cst_108 : f32 to vector<32x2560xf32>
    %266 = arith.addf %265, %264 : vector<32x2560xf32>
    %cst_109 = arith.constant 1.000000e+00 : f32
    %267 = vector.broadcast %cst_109 : f32 to vector<32x2560xf32>
    %268 = arith.divf %267, %266 : vector<32x2560xf32>
    %cst_110 = arith.constant 1.06140542 : f32
    %269 = vector.broadcast %cst_110 : f32 to vector<32x2560xf32>
    %270 = arith.mulf %269, %268 : vector<32x2560xf32>
    %cst_111 = arith.constant -1.45315206 : f32
    %271 = vector.broadcast %cst_111 : f32 to vector<32x2560xf32>
    %272 = arith.addf %270, %271 : vector<32x2560xf32>
    %273 = arith.mulf %272, %268 : vector<32x2560xf32>
    %cst_112 = arith.constant 1.42141378 : f32
    %274 = vector.broadcast %cst_112 : f32 to vector<32x2560xf32>
    %275 = arith.addf %273, %274 : vector<32x2560xf32>
    %276 = arith.mulf %275, %268 : vector<32x2560xf32>
    %cst_113 = arith.constant -0.284496725 : f32
    %277 = vector.broadcast %cst_113 : f32 to vector<32x2560xf32>
    %278 = arith.addf %276, %277 : vector<32x2560xf32>
    %279 = arith.mulf %278, %268 : vector<32x2560xf32>
    %cst_114 = arith.constant 0.254829586 : f32
    %280 = vector.broadcast %cst_114 : f32 to vector<32x2560xf32>
    %281 = arith.addf %279, %280 : vector<32x2560xf32>
    %282 = arith.mulf %281, %268 : vector<32x2560xf32>
    %cst_115 = arith.constant 0.000000e+00 : f32
    %283 = vector.broadcast %cst_115 : f32 to vector<32x2560xf32>
    %284 = arith.subf %283, %262 : vector<32x2560xf32>
    %285 = arith.mulf %284, %262 : vector<32x2560xf32>
    %286 = math.exp %285 : vector<32x2560xf32>
    %287 = arith.mulf %282, %286 : vector<32x2560xf32>
    %cst_116 = arith.constant 1.000000e+00 : f32
    %288 = vector.broadcast %cst_116 : f32 to vector<32x2560xf32>
    %289 = arith.subf %288, %287 : vector<32x2560xf32>
    %290 = arith.mulf %261, %289 : vector<32x2560xf32>
    %cst_117 = arith.constant 5.000000e-01 : f32
    %291 = vector.broadcast %cst_117 : f32 to vector<32x2560xf32>
    %292 = arith.mulf %291, %254 : vector<32x2560xf32>
    %cst_118 = arith.constant 1.000000e+00 : f32
    %293 = vector.broadcast %cst_118 : f32 to vector<32x2560xf32>
    %294 = arith.addf %293, %290 : vector<32x2560xf32>
    %295 = arith.mulf %292, %294 : vector<32x2560xf32>
    %296 = arith.mulf %295, %249 : vector<32x2560xf32>
    %c0_119 = arith.constant 0 : index
    %c0_120 = arith.constant 0 : index
    %297 = vector.load %arg21[%c0_119, %c0_120] : memref<2560x128xf32, #tpu.memory_space<vmem>>, vector<2560x128xf32>
    %cst_121 = arith.constant dense<0.000000e+00> : vector<32x128xf32>
    %298 = tpu.matmul %296, %297, %cst_121 {dimension_numbers = #tpu.dot_dimension_numbers<[1], [0], [0], [1], [0, 0, 1, 1], [], []>} : vector<32x2560xf32>, vector<2560x128xf32>, vector<32x128xf32> -> vector<32x128xf32>
    %c0_122 = arith.constant 0 : index
    %c0_123 = arith.constant 0 : index
    %299 = vector.load %arg22[%c0_122, %c0_123] : memref<8x128xf32, #tpu.memory_space<vmem>>, vector<8x128xf32>
    %cst_124 = arith.constant dense<0.000000e+00> : vector<32x128xf32>
    %300 = tpu.matmul %247, %299, %cst_124 {dimension_numbers = #tpu.dot_dimension_numbers<[1], [0], [0], [1], [0, 0, 1, 1], [], []>} : vector<32x8xf32>, vector<8x128xf32>, vector<32x128xf32> -> vector<32x128xf32>
    %301 = arith.addf %298, %300 : vector<32x128xf32>
    %302 = arith.addf %169, %301 : vector<32x128xf32>
    %c0_125 = arith.constant 0 : index
    %c0_126 = arith.constant 0 : index
    %303 = vector.load %arg23[%c0_125, %c0_126] : memref<32x128xf32, #tpu.memory_space<vmem>>, vector<32x128xf32>
    tpu.vector_store %arg23[%c0_125, %c0_126], %302 {strides = array<i32>} : memref<32x128xf32, #tpu.memory_space<vmem>>, vector<32x128xf32>,
    return
  }
}

</mosaic_0001>

<llo_original>
// kernel: deepseek_layer_forward.1
$region0: #{deepseek_layer_forward.1}
  #allocation0 [shape = 'u32[]', space=smem, size = 0x4, offset = 0x4, fixed_abs, tag = 'smem constant byte address 0x4 - core index']
  #allocation1 [shape = 'u32[144,128]{1,0:T(1,128)}', space=vmem, size = 0x12000, scoped, tag = 'internal scratch']
  %s0 = inlined_call_operand.hbm [shape: f32[32,128], index: 0, kind: input, shape index: {}]
  %s1 = inlined_call_operand.vmem [shape: f32[32,32], index: 1, kind: input, shape index: {}]
  %s2 = inlined_call_operand.vmem [shape: f32[4,128], index: 2, kind: input, shape index: {}]
  %s3 = inlined_call_operand.hbm [shape: f32[1,128], index: 3, kind: input, shape index: {}]
  %s4 = inlined_call_operand.hbm [shape: f32[1,128], index: 4, kind: input, shape index: {}]
  %s5 = inlined_call_operand.vmem [shape: f32[128,64], index: 5, kind: input, shape index: {}]
  %s6 = inlined_call_operand.hbm [shape: f32[1,64], index: 6, kind: input, shape index: {}]
  %s7 = inlined_call_operand.hbm [shape: f32[1,64], index: 7, kind: input, shape index: {}]
  %s8 = inlined_call_operand.hbm [shape: f32[64,128], index: 8, kind: input, shape index: {}]
  %s9 = inlined_call_operand.vmem [shape: f32[128,64], index: 9, kind: input, shape index: {}]
  %s10 = inlined_call_operand.hbm [shape: f32[1,64], index: 10, kind: input, shape index: {}]
  %s11 = inlined_call_operand.hbm [shape: f32[1,64], index: 11, kind: input, shape index: {}]
  %s12 = inlined_call_operand.hbm [shape: f32[64,128], index: 12, kind: input, shape index: {}]
  %s13 = inlined_call_operand.hbm [shape: f32[64,128], index: 13, kind: input, shape index: {}]
  %s14 = inlined_call_operand.hbm [shape: f32[128,128], index: 14, kind: input, shape index: {}]
  %s15 = inlined_call_operand.hbm [shape: f32[1,128], index: 15, kind: input, shape index: {}]
  %s16 = inlined_call_operand.hbm [shape: f32[1,128], index: 16, kind: input, shape index: {}]
  %s17 = inlined_call_operand.vmem [shape: f32[128,8], index: 17, kind: input, shape index: {}]
  %s18 = inlined_call_operand.hbm [shape: f32[8,2560], index: 18, kind: input, shape index: {}]
  %s19 = inlined_call_operand.hbm [shape: f32[128,2560], index: 19, kind: input, shape index: {}]
  %s20 = inlined_call_operand.hbm [shape: f32[1,2560], index: 20, kind: input, shape index: {}]
  %s21 = inlined_call_operand.hbm [shape: f32[2560,128], index: 21, kind: input, shape index: {}]
  %s22 = inlined_call_operand.hbm [shape: f32[8,128], index: 22, kind: input, shape index: {}]
  %s23 = inlined_call_operand.hbm [shape: f32[32,128], index: 23, kind: output, shape index: {}]
  %s24 = sld [smem:[#allocation0]]
  $region174: #{deepseek_layer_forward.1} parent=0
    _
  %s26 = ssub.s32 1, %s24
  %s27 = scalar_select 0, %s26, %s24
  $region1: #{deepseek_layer_forward.1} parent=0
    #allocation2 [shape = 'u8[16384]{0}', space=vmem, size = 0x4000, scoped, tag = 'input window, operand 0, single buffered']
    #allocation3 [shape = 's32[1]{0}', space=sflag, size = 0x4, scoped, tag = 'scoped memory for deepseek_layer_forward.1']
    #allocation4 [shape = 's32[1]{0}', space=sflag, size = 0x4, scoped, tag = 'scoped memory for deepseek_layer_forward.1']
    #allocation5 [shape = 'u8[512]{0}', space=vmem, size = 0x400, scoped, tag = 'input window, operand 3, single buffered']
    #allocation6 [shape = 's32[1]{0}', space=sflag, size = 0x4, scoped, tag = 'scoped memory for deepseek_layer_forward.1']
    #allocation7 [shape = 'u8[512]{0}', space=vmem, size = 0x400, scoped, tag = 'input window, operand 4, single buffered']
    #allocation8 [shape = 'u8[512]{0}', space=vmem, size = 0x400, scoped, tag = 'input window, operand 6, single buffered']
    #allocation9 [shape = 's32[1]{0}', space=sflag, size = 0x4, scoped, tag = 'scoped memory for deepseek_layer_forward.1']
    #allocation10 [shape = 'u8[512]{0}', space=vmem, size = 0x400, scoped, tag = 'input window, operand 7, single buffered']
    #allocation11 [shape = 'u8[32768]{0}', space=vmem, size = 0x8000, scoped, tag = 'input window, operand 8, single buffered']
    #allocation12 [shape = 's32[1]{0}', space=sflag, size = 0x4, scoped, tag = 'scoped memory for deepseek_layer_forward.1']
    #allocation13 [shape = 'u8[512]{0}', space=vmem, size = 0x400, scoped, tag = 'input window, operand 10, single buffered']
    #allocation14 [shape = 'u8[512]{0}', space=vmem, size = 0x400, scoped, tag = 'input window, operand 11, single buffered']
    #allocation15 [shape = 's32[1]{0}', space=sflag, size = 0x4, scoped, tag = 'scoped memory for deepseek_layer_forward.1']
    #allocation16 [shape = 'u8[32768]{0}', space=vmem, size = 0x8000, scoped, tag = 'input window, operand 12, single buffered']
    #allocation17 [shape = 'u8[32768]{0}', space=vmem, size = 0x8000, scoped, tag = 'input window, operand 13, single buffered']
    #allocation18 [shape = 's32[1]{0}', space=sflag, size = 0x4, scoped, tag = 'scoped memory for deepseek_layer_forward.1']
    #allocation19 [shape = 'u8[65536]{0}', space=vmem, size = 0x10000, scoped, tag = 'input window, operand 14, single buffered']
    #allocation20 [shape = 'u8[512]{0}', space=vmem, size = 0x400, scoped, tag = 'input window, operand 15, single buffered']
    #allocation21 [shape = 's32[1]{0}', space=sflag, size = 0x4, scoped, tag = 'scoped memory for deepseek_layer_forward.1']
    #allocation22 [shape = 'u8[512]{0}', space=vmem, size = 0x400, scoped, tag = 'input window, operand 16, single buffered']
    #allocation23 [shape = 'u8[81920]{0}', space=vmem, size = 0x14000, scoped, tag = 'input window, operand 18, single buffered']
    #allocation24 [shape = 's32[1]{0}', space=sflag, size = 0x4, scoped, tag = 'scoped memory for deepseek_layer_forward.1']
    #allocation25 [shape = 'u8[1310720]{0}', space=vmem, size = 0x140000, scoped, tag = 'input window, operand 19, single buffered']
    #allocation26 [shape = 'u8[10240]{0}', space=vmem, size = 0x2800, scoped, tag = 'input window, operand 20, single buffered']
    #allocation27 [shape = 's32[1]{0}', space=sflag, size = 0x4, scoped, tag = 'scoped memory for deepseek_layer_forward.1']
    #allocation28 [shape = 'u8[1310720]{0}', space=vmem, size = 0x140000, scoped, tag = 'input window, operand 21, single buffered']
    #allocation29 [shape = 'u8[4096]{0}', space=vmem, size = 0x1000, scoped, tag = 'input window, operand 22, single buffered']
    #allocation30 [shape = 's32[1]{0}', space=sflag, size = 0x4, scoped, tag = 'scoped memory for deepseek_layer_forward.1']
    #allocation31 [shape = 'u8[16384]{0}', space=vmem, size = 0x4000, scoped, tag = 'output window, operand 0, single buffered']
    %28 = vsyncpa [#allocation3], 0
    %29 = vsyncpa [#allocation6], 0
    %30 = vsyncpa [#allocation9], 0
    %31 = vsyncpa [#allocation12], 0
    %32 = vsyncpa [#allocation15], 0
    %33 = vsyncpa [#allocation18], 0
    %34 = vsyncpa [#allocation21], 0
    %35 = vsyncpa [#allocation24], 0
    %36 = vsyncpa [#allocation27], 0
    %37 = vsyncpa [#allocation30], 0
    %38 = vsyncpa [#allocation4], 0
    // Predicated region
    $region2: #{deepseek_layer_forward.1} parent=1 // pred_check
      _
    $region3: #{deepseek_layer_forward.1} parent=1 // pred_check_branch
      %40 = sbr.rel (0) target = $region5
    $region4: #{deepseek_layer_forward.1} parent=1 // pred_region
      %s42 = ssub.s32 512, 512
      %43 = vsyncadd [#allocation3], %s42
      %s44 = sshll.u32 [#allocation2], 4
      %s45 = int_to_ptr.vmem [resolvable:$true] %s44
      %50 = dma.hbm_to_vmem [thread:$0]  %s0, 512, %s45, [#allocation3], 128, 128, 8
    $region5: #{deepseek_layer_forward.1} parent=1 // pred_fallthru
      _
    // Predicated region
    $region6: #{deepseek_layer_forward.1} parent=1 // pred_check
      _
    $region7: #{deepseek_layer_forward.1} parent=1 // pred_check_branch
      %52 = sbr.rel (0) target = $region9
    $region8: #{deepseek_layer_forward.1} parent=1 // pred_region
      _
    $region9: #{deepseek_layer_forward.1} parent=1 // pred_fallthru
      _
    // Predicated region
    $region10: #{deepseek_layer_forward.1} parent=1 // pred_check
      _
    $region11: #{deepseek_layer_forward.1} parent=1 // pred_check_branch
      %54 = sbr.rel (0) target = $region13
    $region12: #{deepseek_layer_forward.1} parent=1 // pred_region
      _
    $region13: #{deepseek_layer_forward.1} parent=1 // pred_fallthru
      _
    // Predicated region
    $region14: #{deepseek_layer_forward.1} parent=1 // pred_check
      _
    $region15: #{deepseek_layer_forward.1} parent=1 // pred_check_branch
      %56 = sbr.rel (0) target = $region17
    $region16: #{deepseek_layer_forward.1} parent=1 // pred_region
      %s58 = ssub.s32 16, 16
      %59 = vsyncadd [#allocation6], %s58
      %s61 = sshll.u32 [#allocation5], 4
      %s62 = int_to_ptr.vmem [resolvable:$true] %s61
      %64 = dma.hbm_to_vmem [thread:$0]  %s3, 16, %s62, [#allocation6]
    $region17: #{deepseek_layer_forward.1} parent=1 // pred_fallthru
      _
    // Predicated region
    $region18: #{deepseek_layer_forward.1} parent=1 // pred_check
      _
    $region19: #{deepseek_layer_forward.1} parent=1 // pred_check_branch
      %66 = sbr.rel (0) target = $region21
    $region20: #{deepseek_layer_forward.1} parent=1 // pred_region
      %s68 = ssub.s32 16, 16
      %69 = vsyncadd [#allocation6], %s68
      %s71 = sshll.u32 [#allocation7], 4
      %s72 = int_to_ptr.vmem [resolvable:$true] %s71
      %74 = dma.hbm_to_vmem [thread:$0]  %s4, 16, %s72, [#allocation6]
    $region21: #{deepseek_layer_forward.1} parent=1 // pred_fallthru
      _
    // Predicated region
    $region22: #{deepseek_layer_forward.1} parent=1 // pred_check
      _
    $region23: #{deepseek_layer_forward.1} parent=1 // pred_check_branch
      %76 = sbr.rel (0) target = $region25
    $region24: #{deepseek_layer_forward.1} parent=1 // pred_region
      _
    $region25: #{deepseek_layer_forward.1} parent=1 // pred_fallthru
      _
    // Predicated region
    $region26: #{deepseek_layer_forward.1} parent=1 // pred_check
      _
    $region27: #{deepseek_layer_forward.1} parent=1 // pred_check_branch
      %78 = sbr.rel (0) target = $region29
    $region28: #{deepseek_layer_forward.1} parent=1 // pred_region
      %s80 = ssub.s32 16, 16
      %81 = vsyncadd [#allocation9], %s80
      %s83 = sshll.u32 [#allocation8], 4
      %s84 = int_to_ptr.vmem [resolvable:$true] %s83
      %86 = dma.hbm_to_vmem [thread:$0]  %s6, 16, %s84, [#allocation9]
    $region29: #{deepseek_layer_forward.1} parent=1 // pred_fallthru
      _
    // Predicated region
    $region30: #{deepseek_layer_forward.1} parent=1 // pred_check
      _
    $region31: #{deepseek_layer_forward.1} parent=1 // pred_check_branch
      %88 = sbr.rel (0) target = $region33
    $region32: #{deepseek_layer_forward.1} parent=1 // pred_region
      %s90 = ssub.s32 16, 16
      %91 = vsyncadd [#allocation9], %s90
      %s93 = sshll.u32 [#allocation10], 4
      %s94 = int_to_ptr.vmem [resolvable:$true] %s93
      %96 = dma.hbm_to_vmem [thread:$0]  %s7, 16, %s94, [#allocation9]
    $region33: #{deepseek_layer_forward.1} parent=1 // pred_fallthru
      _
    // Predicated region
    $region34: #{deepseek_layer_forward.1} parent=1 // pred_check
      _
    $region35: #{deepseek_layer_forward.1} parent=1 // pred_check_branch
      %98 = sbr.rel (0) target = $region37
    $region36: #{deepseek_layer_forward.1} parent=1 // pred_region
      %s100 = ssub.s32 1024, 1024
      %101 = vsyncadd [#allocation12], %s100
      %s102 = sshll.u32 [#allocation11], 4
      %s103 = int_to_ptr.vmem [resolvable:$true] %s102
      %108 = dma.hbm_to_vmem [thread:$0]  %s8, 1024, %s103, [#allocation12], 128, 128, 8
    $region37: #{deepseek_layer_forward.1} parent=1 // pred_fallthru
      _
    // Predicated region
    $region38: #{deepseek_layer_forward.1} parent=1 // pred_check
      _
    $region39: #{deepseek_layer_forward.1} parent=1 // pred_check_branch
      %110 = sbr.rel (0) target = $region41
    $region40: #{deepseek_layer_forward.1} parent=1 // pred_region
      _
    $region41: #{deepseek_layer_forward.1} parent=1 // pred_fallthru
      _
    // Predicated region
    $region42: #{deepseek_layer_forward.1} parent=1 // pred_check
      _
    $region43: #{deepseek_layer_forward.1} parent=1 // pred_check_branch
      %112 = sbr.rel (0) target = $region45
    $region44: #{deepseek_layer_forward.1} parent=1 // pred_region
      %s114 = ssub.s32 16, 16
      %115 = vsyncadd [#allocation12], %s114
      %s117 = sshll.u32 [#allocation13], 4
      %s118 = int_to_ptr.vmem [resolvable:$true] %s117
      %120 = dma.hbm_to_vmem [thread:$0]  %s10, 16, %s118, [#allocation12]
    $region45: #{deepseek_layer_forward.1} parent=1 // pred_fallthru
      _
    // Predicated region
    $region46: #{deepseek_layer_forward.1} parent=1 // pred_check
      _
    $region47: #{deepseek_layer_forward.1} parent=1 // pred_check_branch
      %122 = sbr.rel (0) target = $region49
    $region48: #{deepseek_layer_forward.1} parent=1 // pred_region
      %s124 = ssub.s32 16, 16
      %125 = vsyncadd [#allocation15], %s124
      %s127 = sshll.u32 [#allocation14], 4
      %s128 = int_to_ptr.vmem [resolvable:$true] %s127
      %130 = dma.hbm_to_vmem [thread:$0]  %s11, 16, %s128, [#allocation15]
    $region49: #{deepseek_layer_forward.1} parent=1 // pred_fallthru
      _
    // Predicated region
    $region50: #{deepseek_layer_forward.1} parent=1 // pred_check
      _
    $region51: #{deepseek_layer_forward.1} parent=1 // pred_check_branch
      %132 = sbr.rel (0) target = $region53
    $region52: #{deepseek_layer_forward.1} parent=1 // pred_region
      %s134 = ssub.s32 1024, 1024
      %135 = vsyncadd [#allocation15], %s134
      %s136 = sshll.u32 [#allocation16], 4
      %s137 = int_to_ptr.vmem [resolvable:$true] %s136
      %142 = dma.hbm_to_vmem [thread:$0]  %s12, 1024, %s137, [#allocation15], 128, 128, 8
    $region53: #{deepseek_layer_forward.1} parent=1 // pred_fallthru
      _
    // Predicated region
    $region54: #{deepseek_layer_forward.1} parent=1 // pred_check
      _
    $region55: #{deepseek_layer_forward.1} parent=1 // pred_check_branch
      %144 = sbr.rel (0) target = $region57
    $region56: #{deepseek_layer_forward.1} parent=1 // pred_region
      %s146 = ssub.s32 1024, 1024
      %147 = vsyncadd [#allocation18], %s146
      %s148 = sshll.u32 [#allocation17], 4
      %s149 = int_to_ptr.vmem [resolvable:$true] %s148
      %154 = dma.hbm_to_vmem [thread:$0]  %s13, 1024, %s149, [#allocation18], 128, 128, 8
    $region57: #{deepseek_layer_forward.1} parent=1 // pred_fallthru
      _
    // Predicated region
    $region58: #{deepseek_layer_forward.1} parent=1 // pred_check
      _
    $region59: #{deepseek_layer_forward.1} parent=1 // pred_check_branch
      %156 = sbr.rel (0) target = $region61
    $region60: #{deepseek_layer_forward.1} parent=1 // pred_region
      %s158 = ssub.s32 2048, 2048
      %159 = vsyncadd [#allocation18], %s158
      %s160 = sshll.u32 [#allocation19], 4
      %s161 = int_to_ptr.vmem [resolvable:$true] %s160
      %166 = dma.hbm_to_vmem [thread:$0]  %s14, 2048, %s161, [#allocation18], 128, 128, 8
    $region61: #{deepseek_layer_forward.1} parent=1 // pred_fallthru
      _
    // Predicated region
    $region62: #{deepseek_layer_forward.1} parent=1 // pred_check
      _
    $region63: #{deepseek_layer_forward.1} parent=1 // pred_check_branch
      %168 = sbr.rel (0) target = $region65
    $region64: #{deepseek_layer_forward.1} parent=1 // pred_region
      %s170 = ssub.s32 16, 16
      %171 = vsyncadd [#allocation21], %s170
      %s173 = sshll.u32 [#allocation20], 4
      %s174 = int_to_ptr.vmem [resolvable:$true] %s173
      %176 = dma.hbm_to_vmem [thread:$0]  %s15, 16, %s174, [#allocation21]
    $region65: #{deepseek_layer_forward.1} parent=1 // pred_fallthru
      _
    // Predicated region
    $region66: #{deepseek_layer_forward.1} parent=1 // pred_check
      _
    $region67: #{deepseek_layer_forward.1} parent=1 // pred_check_branch
      %178 = sbr.rel (0) target = $region69
    $region68: #{deepseek_layer_forward.1} parent=1 // pred_region
      %s180 = ssub.s32 16, 16
      %181 = vsyncadd [#allocation21], %s180
      %s183 = sshll.u32 [#allocation22], 4
      %s184 = int_to_ptr.vmem [resolvable:$true] %s183
      %186 = dma.hbm_to_vmem [thread:$0]  %s16, 16, %s184, [#allocation21]
    $region69: #{deepseek_layer_forward.1} parent=1 // pred_fallthru
      _
    // Predicated region
    $region70: #{deepseek_layer_forward.1} parent=1 // pred_check
      _
    $region71: #{deepseek_layer_forward.1} parent=1 // pred_check_branch
      %188 = sbr.rel (0) target = $region73
    $region72: #{deepseek_layer_forward.1} parent=1 // pred_region
      _
    $region73: #{deepseek_layer_forward.1} parent=1 // pred_fallthru
      _
    // Predicated region
    $region74: #{deepseek_layer_forward.1} parent=1 // pred_check
      _
    $region75: #{deepseek_layer_forward.1} parent=1 // pred_check_branch
      %190 = sbr.rel (0) target = $region77
    $region76: #{deepseek_layer_forward.1} parent=1 // pred_region
      %s192 = ssub.s32 2560, 2560
      %193 = vsyncadd [#allocation24], %s192
      %s195 = sshll.u32 [#allocation23], 4
      %s196 = int_to_ptr.vmem [resolvable:$true] %s195
      %198 = dma.hbm_to_vmem [thread:$0]  %s18, 2560, %s196, [#allocation24]
    $region77: #{deepseek_layer_forward.1} parent=1 // pred_fallthru
      _
    // Predicated region
    $region78: #{deepseek_layer_forward.1} parent=1 // pred_check
      _
    $region79: #{deepseek_layer_forward.1} parent=1 // pred_check_branch
      %200 = sbr.rel (0) target = $region81
    $region80: #{deepseek_layer_forward.1} parent=1 // pred_region
      %s202 = ssub.s32 40960, 40960
      %203 = vsyncadd [#allocation24], %s202
      %s204 = sshll.u32 [#allocation25], 4
      %s205 = int_to_ptr.vmem [resolvable:$true] %s204
      %210 = dma.hbm_to_vmem [thread:$0]  %s19, 40960, %s205, [#allocation24], 2560, 2560, 160
    $region81: #{deepseek_layer_forward.1} parent=1 // pred_fallthru
      _
    // Predicated region
    $region82: #{deepseek_layer_forward.1} parent=1 // pred_check
      _
    $region83: #{deepseek_layer_forward.1} parent=1 // pred_check_branch
      %212 = sbr.rel (0) target = $region85
    $region84: #{deepseek_layer_forward.1} parent=1 // pred_region
      %s214 = ssub.s32 320, 320
      %215 = vsyncadd [#allocation27], %s214
      %s217 = sshll.u32 [#allocation26], 4
      %s218 = int_to_ptr.vmem [resolvable:$true] %s217
      %220 = dma.hbm_to_vmem [thread:$0]  %s20, 320, %s218, [#allocation27]
    $region85: #{deepseek_layer_forward.1} parent=1 // pred_fallthru
      _
    // Predicated region
    $region86: #{deepseek_layer_forward.1} parent=1 // pred_check
      _
    $region87: #{deepseek_layer_forward.1} parent=1 // pred_check_branch
      %222 = sbr.rel (0) target = $region89
    $region88: #{deepseek_layer_forward.1} parent=1 // pred_region
      %s224 = ssub.s32 40960, 40960
      %225 = vsyncadd [#allocation27], %s224
      %s226 = sshll.u32 [#allocation28], 4
      %s227 = int_to_ptr.vmem [resolvable:$true] %s226
      %232 = dma.hbm_to_vmem [thread:$0]  %s21, 40960, %s227, [#allocation27], 128, 128, 8
    $region89: #{deepseek_layer_forward.1} parent=1 // pred_fallthru
      _
    // Predicated region
    $region90: #{deepseek_layer_forward.1} parent=1 // pred_check
      _
    $region91: #{deepseek_layer_forward.1} parent=1 // pred_check_branch
      %234 = sbr.rel (0) target = $region93
    $region92: #{deepseek_layer_forward.1} parent=1 // pred_region
      %s236 = ssub.s32 128, 128
      %237 = vsyncadd [#allocation30], %s236
      %s239 = sshll.u32 [#allocation29], 4
      %s240 = int_to_ptr.vmem [resolvable:$true] %s239
      %242 = dma.hbm_to_vmem [thread:$0]  %s22, 128, %s240, [#allocation30]
    $region93: #{deepseek_layer_forward.1} parent=1 // pred_fallthru
      _
    // Predicated region
    $region94: #{deepseek_layer_forward.1} parent=1 // pred_check
      _
    $region95: #{deepseek_layer_forward.1} parent=1 // pred_check_branch
      %244 = sbr.rel (0) target = $region97
    $region96: #{deepseek_layer_forward.1} parent=1 // pred_region
      %245 = dma.done [#allocation3], 512
    $region97: #{deepseek_layer_forward.1} parent=1 // pred_fallthru
      _
    // Predicated region
    $region98: #{deepseek_layer_forward.1} parent=1 // pred_check
      _
    $region99: #{deepseek_layer_forward.1} parent=1 // pred_check_branch
      %247 = sbr.rel (0) target = $region101
    $region100: #{deepseek_layer_forward.1} parent=1 // pred_region
      %248 = dma.done [#allocation6], 16
    $region101: #{deepseek_layer_forward.1} parent=1 // pred_fallthru
      _
    // Predicated region
    $region102: #{deepseek_layer_forward.1} parent=1 // pred_check
      _
    $region103: #{deepseek_layer_forward.1} parent=1 // pred_check_branch
      %250 = sbr.rel (0) target = $region105
    $region104: #{deepseek_layer_forward.1} parent=1 // pred_region
      %251 = dma.done [#allocation6], 16
    $region105: #{deepseek_layer_forward.1} parent=1 // pred_fallthru
      _
    // Predicated region
    $region106: #{deepseek_layer_forward.1} parent=1 // pred_check
      _
    $region107: #{deepseek_layer_forward.1} parent=1 // pred_check_branch
      %253 = sbr.rel (0) target = $region109
    $region108: #{deepseek_layer_forward.1} parent=1 // pred_region
      %254 = dma.done [#allocation9], 16
    $region109: #{deepseek_layer_forward.1} parent=1 // pred_fallthru
      _
    // Predicated region
    $region110: #{deepseek_layer_forward.1} parent=1 // pred_check
      _
    $region111: #{deepseek_layer_forward.1} parent=1 // pred_check_branch
      %256 = sbr.rel (0) target = $region113
    $region112: #{deepseek_layer_forward.1} parent=1 // pred_region
      %257 = dma.done [#allocation9], 16
    $region113: #{deepseek_layer_forward.1} parent=1 // pred_fallthru
      _
    // Predicated region
    $region114: #{deepseek_layer_forward.1} parent=1 // pred_check
      _
    $region115: #{deepseek_layer_forward.1} parent=1 // pred_check_branch
      %259 = sbr.rel (0) target = $region117
    $region116: #{deepseek_layer_forward.1} parent=1 // pred_region
      %260 = dma.done [#allocation12], 1024
    $region117: #{deepseek_layer_forward.1} parent=1 // pred_fallthru
      _
    // Predicated region
    $region118: #{deepseek_layer_forward.1} parent=1 // pred_check
      _
    $region119: #{deepseek_layer_forward.1} parent=1 // pred_check_branch
      %262 = sbr.rel (0) target = $region121
    $region120: #{deepseek_layer_forward.1} parent=1 // pred_region
      %263 = dma.done [#allocation12], 16
    $region121: #{deepseek_layer_forward.1} parent=1 // pred_fallthru
      _
    // Predicated region
    $region122: #{deepseek_layer_forward.1} parent=1 // pred_check
      _
    $region123: #{deepseek_layer_forward.1} parent=1 // pred_check_branch
      %265 = sbr.rel (0) target = $region125
    $region124: #{deepseek_layer_forward.1} parent=1 // pred_region
      %266 = dma.done [#allocation15], 16
    $region125: #{deepseek_layer_forward.1} parent=1 // pred_fallthru
      _
    // Predicated region
    $region126: #{deepseek_layer_forward.1} parent=1 // pred_check
      _
    $region127: #{deepseek_layer_forward.1} parent=1 // pred_check_branch
      %268 = sbr.rel (0) target = $region129
    $region128: #{deepseek_layer_forward.1} parent=1 // pred_region
      %269 = dma.done [#allocation15], 1024
    $region129: #{deepseek_layer_forward.1} parent=1 // pred_fallthru
      _
    // Predicated region
    $region130: #{deepseek_layer_forward.1} parent=1 // pred_check
      _
    $region131: #{deepseek_layer_forward.1} parent=1 // pred_check_branch
      %271 = sbr.rel (0) target = $region133
    $region132: #{deepseek_layer_forward.1} parent=1 // pred_region
      %272 = dma.done [#allocation18], 1024
    $region133: #{deepseek_layer_forward.1} parent=1 // pred_fallthru
      _
    // Predicated region
    $region134: #{deepseek_layer_forward.1} parent=1 // pred_check
      _
    $region135: #{deepseek_layer_forward.1} parent=1 // pred_check_branch
      %274 = sbr.rel (0) target = $region137
    $region136: #{deepseek_layer_forward.1} parent=1 // pred_region
      %275 = dma.done [#allocation18], 2048
    $region137: #{deepseek_layer_forward.1} parent=1 // pred_fallthru
      _
    // Predicated region
    $region138: #{deepseek_layer_forward.1} parent=1 // pred_check
      _
    $region139: #{deepseek_layer_forward.1} parent=1 // pred_check_branch
      %277 = sbr.rel (0) target = $region141
    $region140: #{deepseek_layer_forward.1} parent=1 // pred_region
      %278 = dma.done [#allocation21], 16
    $region141: #{deepseek_layer_forward.1} parent=1 // pred_fallthru
      _
    // Predicated region
    $region142: #{deepseek_layer_forward.1} parent=1 // pred_check
      _
    $region143: #{deepseek_layer_forward.1} parent=1 // pred_check_branch
      %280 = sbr.rel (0) target = $region145
    $region144: #{deepseek_layer_forward.1} parent=1 // pred_region
      %281 = dma.done [#allocation21], 16
    $region145: #{deepseek_layer_forward.1} parent=1 // pred_fallthru
      _
    // Predicated region
    $region146: #{deepseek_layer_forward.1} parent=1 // pred_check
      _
    $region147: #{deepseek_layer_forward.1} parent=1 // pred_check_branch
      %283 = sbr.rel (0) target = $region149
    $region148: #{deepseek_layer_forward.1} parent=1 // pred_region
      %284 = dma.done [#allocation24], 2560
    $region149: #{deepseek_layer_forward.1} parent=1 // pred_fallthru
      _
    // Predicated region
    $region150: #{deepseek_layer_forward.1} parent=1 // pred_check
      _
    $region151: #{deepseek_layer_forward.1} parent=1 // pred_check_branch
      %286 = sbr.rel (0) target = $region153
    $region152: #{deepseek_layer_forward.1} parent=1 // pred_region
      %287 = dma.done [#allocation24], 40960
    $region153: #{deepseek_layer_forward.1} parent=1 // pred_fallthru
      _
    // Predicated region
    $region154: #{deepseek_layer_forward.1} parent=1 // pred_check
      _
    $region155: #{deepseek_layer_forward.1} parent=1 // pred_check_branch
      %289 = sbr.rel (0) target = $region157
    $region156: #{deepseek_layer_forward.1} parent=1 // pred_region
      %290 = dma.done [#allocation27], 320
    $region157: #{deepseek_layer_forward.1} parent=1 // pred_fallthru
      _
    // Predicated region
    $region158: #{deepseek_layer_forward.1} parent=1 // pred_check
      _
    $region159: #{deepseek_layer_forward.1} parent=1 // pred_check_branch
      %292 = sbr.rel (0) target = $region161
    $region160: #{deepseek_layer_forward.1} parent=1 // pred_region
      %293 = dma.done [#allocation27], 40960
    $region161: #{deepseek_layer_forward.1} parent=1 // pred_fallthru
      _
    // Predicated region
    $region162: #{deepseek_layer_forward.1} parent=1 // pred_check
      _
    $region163: #{deepseek_layer_forward.1} parent=1 // pred_check_branch
      %295 = sbr.rel (0) target = $region165
    $region164: #{deepseek_layer_forward.1} parent=1 // pred_region
      %296 = dma.done [#allocation30], 128
    $region165: #{deepseek_layer_forward.1} parent=1 // pred_fallthru
      _
    %v297 = vld [vmem:[#allocation2] sm:$0xff]
    %v298 = vld [vmem:[#allocation2 + $0x8] sm:$0xff]
    %v299 = vld [vmem:[#allocation2 + $0x10] sm:$0xff]
    %v300 = vld [vmem:[#allocation2 + $0x18] sm:$0xff]
    %v301 = vld [vmem:[#allocation5] sm:$0x1]
    %v302 = vld [vmem:[#allocation7] sm:$0x1]
    %303 = vadd.xlane.f32.xlu0 %v297
    %v304 = vpop.xlane.xlu0 %303
    %305 = vadd.xlane.f32.xlu0 %v298
    %v306 = vpop.xlane.xlu0 %305
    %307 = vadd.xlane.f32.xlu0 %v299
    %v308 = vpop.xlane.xlu0 %307
    %309 = vadd.xlane.f32.xlu0 %v300
    %v310 = vpop.xlane.xlu0 %309
    %v311 = vrcp.pop 128.0
    %v312 = vmul.f32 %v304, %v311
    %v313 = vmul.f32 %v306, %v311
    %v314 = vmul.f32 %v308, %v311
    %v315 = vmul.f32 %v310, %v311
    %v316 = vsub.f32 %v297, %v312
    %v317 = vsub.f32 %v298, %v313
    %v318 = vsub.f32 %v299, %v314
    %v319 = vsub.f32 %v300, %v315
    %v320 = vmul.f32 %v316, %v316
    %v321 = vmul.f32 %v317, %v317
    %v322 = vmul.f32 %v318, %v318
    %v323 = vmul.f32 %v319, %v319
    %324 = vadd.xlane.f32.xlu0 %v320
    %v325 = vpop.xlane.xlu0 %324
    %326 = vadd.xlane.f32.xlu0 %v321
    %v327 = vpop.xlane.xlu0 %326
    %328 = vadd.xlane.f32.xlu0 %v322
    %v329 = vpop.xlane.xlu0 %328
    %330 = vadd.xlane.f32.xlu0 %v323
    %v331 = vpop.xlane.xlu0 %330
    %v332 = vmul.f32 %v325, %v311
    %v333 = vmul.f32 %v327, %v311
    %v334 = vmul.f32 %v329, %v311
    %v335 = vmul.f32 %v331, %v311
    %v336 = vadd.f32 %v332, 1e-05
    %v337 = vadd.f32 %v333, 1e-05
    %v338 = vadd.f32 %v334, 1e-05
    %v339 = vadd.f32 %v335, 1e-05
    %v340 = vrsqrt.pop %v336
    %v341 = vrsqrt.pop %v337
    %v342 = vrsqrt.pop %v338
    %v343 = vrsqrt.pop %v339
    %v344 = vmul.f32 %v316, %v340
    %v345 = vmul.f32 %v317, %v341
    %v346 = vmul.f32 %v318, %v342
    %v347 = vmul.f32 %v319, %v343
    %v349 = vlaneseq
    %v350 = vshrl.u32 %v349, 7
    %v351 = vsub.s32 0, %v350
    %v352 = vrot.slane %v301, %v351
    %v354 = vmul.f32 %v344, %v352
    %v355 = vmul.f32 %v345, %v352
    %v356 = vmul.f32 %v346, %v352
    %v357 = vmul.f32 %v347, %v352
    %v359 = vlaneseq
    %v360 = vshrl.u32 %v359, 7
    %v361 = vsub.s32 0, %v360
    %v362 = vrot.slane %v302, %v361
    %v364 = vadd.f32 %v354, %v362
    %v365 = vadd.f32 %v355, %v362
    %v366 = vadd.f32 %v356, %v362
    %v367 = vadd.f32 %v357, %v362
    %v368 = vld [vmem:[%s5] sm:$0xff]
    %v369 = vld [vmem:[%s5 + $0x8] sm:$0xff]
    %v370 = vld [vmem:[%s5 + $0x10] sm:$0xff]
    %v371 = vld [vmem:[%s5 + $0x18] sm:$0xff]
    %v372 = vld [vmem:[%s5 + $0x20] sm:$0xff]
    %v373 = vld [vmem:[%s5 + $0x28] sm:$0xff]
    %v374 = vld [vmem:[%s5 + $0x30] sm:$0xff]
    %v375 = vld [vmem:[%s5 + $0x38] sm:$0xff]
    %v376 = vld [vmem:[%s5 + $0x40] sm:$0xff]
    %v377 = vld [vmem:[%s5 + $0x48] sm:$0xff]
    %v378 = vld [vmem:[%s5 + $0x50] sm:$0xff]
    %v379 = vld [vmem:[%s5 + $0x58] sm:$0xff]
    %v380 = vld [vmem:[%s5 + $0x60] sm:$0xff]
    %v381 = vld [vmem:[%s5 + $0x68] sm:$0xff]
    %v382 = vld [vmem:[%s5 + $0x70] sm:$0xff]
    %v383 = vld [vmem:[%s5 + $0x78] sm:$0xff]
    %384 = vmatprep.subr.mxu0 0.0
    %385 = vmatpush1.msra.mxu0 %v383
    %386 = vmatprep.subr.mxu0 0.0
    %387 = vmatpush1.msra.mxu0 %v382
    %388 = vmatprep.subr.mxu0 0.0
    %389 = vmatpush1.msra.mxu0 %v381
    %390 = vmatprep.subr.mxu0 0.0
    %391 = vmatpush1.msra.mxu0 %v380
    %392 = vmatprep.subr.mxu0 0.0
    %393 = vmatpush1.msra.mxu0 %v379
    %394 = vmatprep.subr.mxu0 0.0
    %395 = vmatpush1.msra.mxu0 %v378
    %396 = vmatprep.subr.mxu0 0.0
    %397 = vmatpush1.msra.mxu0 %v377
    %398 = vmatprep.subr.mxu0 0.0
    %399 = vmatpush1.msra.mxu0 %v376
    %400 = vmatprep.subr.mxu0 0.0
    %401 = vmatpush1.msra.mxu0 %v375
    %402 = vmatprep.subr.mxu0 0.0
    %403 = vmatpush1.msra.mxu0 %v374
    %404 = vmatprep.subr.mxu0 0.0
    %405 = vmatpush1.msra.mxu0 %v373
    %406 = vmatprep.subr.mxu0 0.0
    %407 = vmatpush1.msra.mxu0 %v372
    %408 = vmatprep.subr.mxu0 0.0
    %409 = vmatpush1.msra.mxu0 %v371
    %410 = vmatprep.subr.mxu0 0.0
    %411 = vmatpush1.msra.mxu0 %v370
    %412 = vmatprep.subr.mxu0 0.0
    %413 = vmatpush1.msra.mxu0 %v369
    %414 = vmatprep.subr.mxu0 0.0
    %415 = vmatpush1.msra.mxu0 %v368
    %416 = vmatprep.subr.mxu0 0.0
    %417 = vmatpush2.msra.mxu0 0.0
    %418 = vmatprep.subr.mxu0 0.0
    %419 = vmatpush2.msra.mxu0 0.0
    %420 = vmatprep.subr.mxu0 0.0
    %421 = vmatpush2.msra.mxu0 0.0
    %422 = vmatprep.subr.mxu0 0.0
    %423 = vmatpush2.msra.mxu0 0.0
    %424 = vmatprep.subr.mxu0 0.0
    %425 = vmatpush2.msra.mxu0 0.0
    %426 = vmatprep.subr.mxu0 0.0
    %427 = vmatpush2.msra.mxu0 0.0
    %428 = vmatprep.subr.mxu0 0.0
    %429 = vmatpush2.msra.mxu0 0.0
    %430 = vmatprep.subr.mxu0 0.0
    %431 = vmatpush2.msra.mxu0 0.0
    %432 = vmatprep.subr.mxu0 0.0
    %433 = vmatpush2.msra.mxu0 0.0
    %434 = vmatprep.subr.mxu0 0.0
    %435 = vmatpush2.msra.mxu0 0.0
    %436 = vmatprep.subr.mxu0 0.0
    %437 = vmatpush2.msra.mxu0 0.0
    %438 = vmatprep.subr.mxu0 0.0
    %439 = vmatpush2.msra.mxu0 0.0
    %440 = vmatprep.subr.mxu0 0.0
    %441 = vmatpush2.msra.mxu0 0.0
    %442 = vmatprep.subr.mxu0 0.0
    %443 = vmatpush2.msra.mxu0 0.0
    %444 = vmatprep.subr.mxu0 0.0
    %445 = vmatpush2.msra.mxu0 0.0
    %446 = vmatprep.subr.mxu0 0.0
    %447 = vmatpush2.msra.mxu0 0.0
    %448 = vmatprep.mubr.f32.mxu0 0.0
    %449 = vmatmul.mubr.f32.gmra.mxu0 %v364
    %v450 = vpop.f32.mrf.mxu0
    %v451 = vadd.f32 0.0, %v450
    %v452 = vpop.f32.mrf.mxu0
    %453 = vmatprep.mubr.f32.mxu0 0.0
    %454 = vmatmul.mubr.f32.gmra.mxu0 %v365
    %v455 = vpop.f32.mrf.mxu0
    %v456 = vadd.f32 0.0, %v455
    %v457 = vpop.f32.mrf.mxu0
    %458 = vmatprep.mubr.f32.mxu0 0.0
    %459 = vmatmul.mubr.f32.gmra.mxu0 %v366
    %v460 = vpop.f32.mrf.mxu0
    %v461 = vadd.f32 0.0, %v460
    %v462 = vpop.f32.mrf.mxu0
    %463 = vmatprep.mubr.f32.mxu0 0.0
    %464 = vmatmul.mubr.f32.gmra.mxu0 %v367
    %v465 = vpop.f32.mrf.mxu0
    %v466 = vadd.f32 0.0, %v465
    %v467 = vpop.f32.mrf.mxu0
    %468 = vdwg.mxu0
    %v469 = vld [vmem:[#allocation8] sm:$0x1]
    %v470 = vld [vmem:[#allocation10] sm:$0x1]
    %vm471 = vcmask 523264
    %v472 = vsel %vm471, %v451, 0.0
    %473 = vadd.xlane.f32.xlu0 %v472
    %v474 = vpop.xlane.xlu0 %473
    %v475 = vsel %vm471, %v456, 0.0
    %476 = vadd.xlane.f32.xlu0 %v475
    %v477 = vpop.xlane.xlu0 %476
    %v478 = vsel %vm471, %v461, 0.0
    %479 = vadd.xlane.f32.xlu0 %v478
    %v480 = vpop.xlane.xlu0 %479
    %v481 = vsel %vm471, %v466, 0.0
    %482 = vadd.xlane.f32.xlu0 %v481
    %v483 = vpop.xlane.xlu0 %482
    %v484 = vrcp.pop 64.0
    %v485 = vmul.f32 %v474, %v484
    %v486 = vmul.f32 %v477, %v484
    %v487 = vmul.f32 %v480, %v484
    %v488 = vmul.f32 %v483, %v484
    %v489 = vsub.f32 %v451, %v485
    %v490 = vsub.f32 %v456, %v486
    %v491 = vsub.f32 %v461, %v487
    %v492 = vsub.f32 %v466, %v488
    %v493 = vmul.f32 %v489, %v489
    %v494 = vmul.f32 %v490, %v490
    %v495 = vmul.f32 %v491, %v491
    %v496 = vmul.f32 %v492, %v492
    %v497 = vsel %vm471, %v493, 0.0
    %498 = vadd.xlane.f32.xlu0 %v497
    %v499 = vpop.xlane.xlu0 %498
    %v500 = vsel %vm471, %v494, 0.0
    %501 = vadd.xlane.f32.xlu0 %v500
    %v502 = vpop.xlane.xlu0 %501
    %v503 = vsel %vm471, %v495, 0.0
    %504 = vadd.xlane.f32.xlu0 %v503
    %v505 = vpop.xlane.xlu0 %504
    %v506 = vsel %vm471, %v496, 0.0
    %507 = vadd.xlane.f32.xlu0 %v506
    %v508 = vpop.xlane.xlu0 %507
    %v509 = vmul.f32 %v499, %v484
    %v510 = vmul.f32 %v502, %v484
    %v511 = vmul.f32 %v505, %v484
    %v512 = vmul.f32 %v508, %v484
    %v513 = vadd.f32 %v509, 1e-05
    %v514 = vadd.f32 %v510, 1e-05
    %v515 = vadd.f32 %v511, 1e-05
    %v516 = vadd.f32 %v512, 1e-05
    %v517 = vrsqrt.pop %v513
    %v518 = vrsqrt.pop %v514
    %v519 = vrsqrt.pop %v515
    %v520 = vrsqrt.pop %v516
    %v521 = vmul.f32 %v489, %v517
    %v522 = vmul.f32 %v490, %v518
    %v523 = vmul.f32 %v491, %v519
    %v524 = vmul.f32 %v492, %v520
    %v526 = vlaneseq
    %v527 = vshrl.u32 %v526, 7
    %v528 = vsub.s32 0, %v527
    %v529 = vrot.slane %v469, %v528
    %v531 = vmul.f32 %v521, %v529
    %v532 = vmul.f32 %v522, %v529
    %v533 = vmul.f32 %v523, %v529
    %v534 = vmul.f32 %v524, %v529
    %v536 = vlaneseq
    %v537 = vshrl.u32 %v536, 7
    %v538 = vsub.s32 0, %v537
    %v539 = vrot.slane %v470, %v538
    %v541 = vadd.f32 %v531, %v539
    %v542 = vadd.f32 %v532, %v539
    %v543 = vadd.f32 %v533, %v539
    %v544 = vadd.f32 %v534, %v539
    %v545 = vld [vmem:[#allocation11] sm:$0xff]
    %v546 = vld [vmem:[#allocation11 + $0x8] sm:$0xff]
    %v547 = vld [vmem:[#allocation11 + $0x10] sm:$0xff]
    %v548 = vld [vmem:[#allocation11 + $0x18] sm:$0xff]
    %v549 = vld [vmem:[#allocation11 + $0x20] sm:$0xff]
    %v550 = vld [vmem:[#allocation11 + $0x28] sm:$0xff]
    %v551 = vld [vmem:[#allocation11 + $0x30] sm:$0xff]
    %v552 = vld [vmem:[#allocation11 + $0x38] sm:$0xff]
    %v554 = vsel %vm471, %v541, 0
    %v557 = vsel %vm471, %v542, 0
    %v560 = vsel %vm471, %v543, 0
    %v563 = vsel %vm471, %v544, 0
    %565 = vmatprep.subr.mxu0 0.0
    %566 = vmatpush1.msra.mxu0 0.0
    %567 = vmatprep.subr.mxu0 0.0
    %568 = vmatpush1.msra.mxu0 0.0
    %569 = vmatprep.subr.mxu0 0.0
    %570 = vmatpush1.msra.mxu0 0.0
    %571 = vmatprep.subr.mxu0 0.0
    %572 = vmatpush1.msra.mxu0 0.0
    %573 = vmatprep.subr.mxu0 0.0
    %574 = vmatpush1.msra.mxu0 0.0
    %575 = vmatprep.subr.mxu0 0.0
    %576 = vmatpush1.msra.mxu0 0.0
    %577 = vmatprep.subr.mxu0 0.0
    %578 = vmatpush1.msra.mxu0 0.0
    %579 = vmatprep.subr.mxu0 0.0
    %580 = vmatpush1.msra.mxu0 0.0
    %581 = vmatprep.subr.mxu0 0.0
    %582 = vmatpush1.msra.mxu0 %v552
    %583 = vmatprep.subr.mxu0 0.0
    %584 = vmatpush1.msra.mxu0 %v551
    %585 = vmatprep.subr.mxu0 0.0
    %586 = vmatpush1.msra.mxu0 %v550
    %587 = vmatprep.subr.mxu0 0.0
    %588 = vmatpush1.msra.mxu0 %v549
    %589 = vmatprep.subr.mxu0 0.0
    %590 = vmatpush1.msra.mxu0 %v548
    %591 = vmatprep.subr.mxu0 0.0
    %592 = vmatpush1.msra.mxu0 %v547
    %593 = vmatprep.subr.mxu0 0.0
    %594 = vmatpush1.msra.mxu0 %v546
    %595 = vmatprep.subr.mxu0 0.0
    %596 = vmatpush1.msra.mxu0 %v545
    %597 = vmatprep.subr.mxu0 0.0
    %598 = vmatpush2.msra.mxu0 0.0
    %599 = vmatprep.subr.mxu0 0.0
    %600 = vmatpush2.msra.mxu0 0.0
    %601 = vmatprep.subr.mxu0 0.0
    %602 = vmatpush2.msra.mxu0 0.0
    %603 = vmatprep.subr.mxu0 0.0
    %604 = vmatpush2.msra.mxu0 0.0
    %605 = vmatprep.subr.mxu0 0.0
    %606 = vmatpush2.msra.mxu0 0.0
    %607 = vmatprep.subr.mxu0 0.0
    %608 = vmatpush2.msra.mxu0 0.0
    %609 = vmatprep.subr.mxu0 0.0
    %610 = vmatpush2.msra.mxu0 0.0
    %611 = vmatprep.subr.mxu0 0.0
    %612 = vmatpush2.msra.mxu0 0.0
    %613 = vmatprep.subr.mxu0 0.0
    %614 = vmatpush2.msra.mxu0 0.0
    %615 = vmatprep.subr.mxu0 0.0
    %616 = vmatpush2.msra.mxu0 0.0
    %617 = vmatprep.subr.mxu0 0.0
    %618 = vmatpush2.msra.mxu0 0.0
    %619 = vmatprep.subr.mxu0 0.0
    %620 = vmatpush2.msra.mxu0 0.0
    %621 = vmatprep.subr.mxu0 0.0
    %622 = vmatpush2.msra.mxu0 0.0
    %623 = vmatprep.subr.mxu0 0.0
    %624 = vmatpush2.msra.mxu0 0.0
    %625 = vmatprep.subr.mxu0 0.0
    %626 = vmatpush2.msra.mxu0 0.0
    %627 = vmatprep.subr.mxu0 0.0
    %628 = vmatpush2.msra.mxu0 0.0
    %629 = vmatprep.mubr.f32.mxu0 0.0
    %630 = vmatmul.mubr.f32.gmra.mxu0 %v554
    %v631 = vpop.f32.mrf.mxu0
    %v632 = vadd.f32 0.0, %v631
    %v633 = vpop.f32.mrf.mxu0
    %634 = vmatprep.mubr.f32.mxu0 0.0
    %635 = vmatmul.mubr.f32.gmra.mxu0 %v557
    %v636 = vpop.f32.mrf.mxu0
    %v637 = vadd.f32 0.0, %v636
    %v638 = vpop.f32.mrf.mxu0
    %639 = vmatprep.mubr.f32.mxu0 0.0
    %640 = vmatmul.mubr.f32.gmra.mxu0 %v560
    %v641 = vpop.f32.mrf.mxu0
    %v642 = vadd.f32 0.0, %v641
    %v643 = vpop.f32.mrf.mxu0
    %644 = vmatprep.mubr.f32.mxu0 0.0
    %645 = vmatmul.mubr.f32.gmra.mxu0 %v563
    %v646 = vpop.f32.mrf.mxu0
    %v647 = vadd.f32 0.0, %v646
    %v648 = vpop.f32.mrf.mxu0
    %649 = vdwg.mxu0
    %v650 = vld [vmem:[%s9] sm:$0xff]
    %v651 = vld [vmem:[%s9 + $0x8] sm:$0xff]
    %v652 = vld [vmem:[%s9 + $0x10] sm:$0xff]
    %v653 = vld [vmem:[%s9 + $0x18] sm:$0xff]
    %v654 = vld [vmem:[%s9 + $0x20] sm:$0xff]
    %v655 = vld [vmem:[%s9 + $0x28] sm:$0xff]
    %v656 = vld [vmem:[%s9 + $0x30] sm:$0xff]
    %v657 = vld [vmem:[%s9 + $0x38] sm:$0xff]
    %v658 = vld [vmem:[%s9 + $0x40] sm:$0xff]
    %v659 = vld [vmem:[%s9 + $0x48] sm:$0xff]
    %v660 = vld [vmem:[%s9 + $0x50] sm:$0xff]
    %v661 = vld [vmem:[%s9 + $0x58] sm:$0xff]
    %v662 = vld [vmem:[%s9 + $0x60] sm:$0xff]
    %v663 = vld [vmem:[%s9 + $0x68] sm:$0xff]
    %v664 = vld [vmem:[%s9 + $0x70] sm:$0xff]
    %v665 = vld [vmem:[%s9 + $0x78] sm:$0xff]
    %666 = vmatprep.subr.mxu0 0.0
    %667 = vmatpush1.msra.mxu0 %v665
    %668 = vmatprep.subr.mxu0 0.0
    %669 = vmatpush1.msra.mxu0 %v664
    %670 = vmatprep.subr.mxu0 0.0
    %671 = vmatpush1.msra.mxu0 %v663
    %672 = vmatprep.subr.mxu0 0.0
    %673 = vmatpush1.msra.mxu0 %v662
    %674 = vmatprep.subr.mxu0 0.0
    %675 = vmatpush1.msra.mxu0 %v661
    %676 = vmatprep.subr.mxu0 0.0
    %677 = vmatpush1.msra.mxu0 %v660
    %678 = vmatprep.subr.mxu0 0.0
    %679 = vmatpush1.msra.mxu0 %v659
    %680 = vmatprep.subr.mxu0 0.0
    %681 = vmatpush1.msra.mxu0 %v658
    %682 = vmatprep.subr.mxu0 0.0
    %683 = vmatpush1.msra.mxu0 %v657
    %684 = vmatprep.subr.mxu0 0.0
    %685 = vmatpush1.msra.mxu0 %v656
    %686 = vmatprep.subr.mxu0 0.0
    %687 = vmatpush1.msra.mxu0 %v655
    %688 = vmatprep.subr.mxu0 0.0
    %689 = vmatpush1.msra.mxu0 %v654
    %690 = vmatprep.subr.mxu0 0.0
    %691 = vmatpush1.msra.mxu0 %v653
    %692 = vmatprep.subr.mxu0 0.0
    %693 = vmatpush1.msra.mxu0 %v652
    %694 = vmatprep.subr.mxu0 0.0
    %695 = vmatpush1.msra.mxu0 %v651
    %696 = vmatprep.subr.mxu0 0.0
    %697 = vmatpush1.msra.mxu0 %v650
    %698 = vmatprep.subr.mxu0 0.0
    %699 = vmatpush2.msra.mxu0 0.0
    %700 = vmatprep.subr.mxu0 0.0
    %701 = vmatpush2.msra.mxu0 0.0
    %702 = vmatprep.subr.mxu0 0.0
    %703 = vmatpush2.msra.mxu0 0.0
    %704 = vmatprep.subr.mxu0 0.0
    %705 = vmatpush2.msra.mxu0 0.0
    %706 = vmatprep.subr.mxu0 0.0
    %707 = vmatpush2.msra.mxu0 0.0
    %708 = vmatprep.subr.mxu0 0.0
    %709 = vmatpush2.msra.mxu0 0.0
    %710 = vmatprep.subr.mxu0 0.0
    %711 = vmatpush2.msra.mxu0 0.0
    %712 = vmatprep.subr.mxu0 0.0
    %713 = vmatpush2.msra.mxu0 0.0
    %714 = vmatprep.subr.mxu0 0.0
    %715 = vmatpush2.msra.mxu0 0.0
    %716 = vmatprep.subr.mxu0 0.0
    %717 = vmatpush2.msra.mxu0 0.0
    %718 = vmatprep.subr.mxu0 0.0
    %719 = vmatpush2.msra.mxu0 0.0
    %720 = vmatprep.subr.mxu0 0.0
    %721 = vmatpush2.msra.mxu0 0.0
    %722 = vmatprep.subr.mxu0 0.0
    %723 = vmatpush2.msra.mxu0 0.0
    %724 = vmatprep.subr.mxu0 0.0
    %725 = vmatpush2.msra.mxu0 0.0
    %726 = vmatprep.subr.mxu0 0.0
    %727 = vmatpush2.msra.mxu0 0.0
    %728 = vmatprep.subr.mxu0 0.0
    %729 = vmatpush2.msra.mxu0 0.0
    %730 = vmatprep.mubr.f32.mxu0 0.0
    %731 = vmatmul.mubr.f32.gmra.mxu0 %v364
    %v732 = vpop.f32.mrf.mxu0
    %v733 = vadd.f32 0.0, %v732
    %v734 = vpop.f32.mrf.mxu0
    %735 = vmatprep.mubr.f32.mxu0 0.0
    %736 = vmatmul.mubr.f32.gmra.mxu0 %v365
    %v737 = vpop.f32.mrf.mxu0
    %v738 = vadd.f32 0.0, %v737
    %v739 = vpop.f32.mrf.mxu0
    %740 = vmatprep.mubr.f32.mxu0 0.0
    %741 = vmatmul.mubr.f32.gmra.mxu0 %v366
    %v742 = vpop.f32.mrf.mxu0
    %v743 = vadd.f32 0.0, %v742
    %v744 = vpop.f32.mrf.mxu0
    %745 = vmatprep.mubr.f32.mxu0 0.0
    %746 = vmatmul.mubr.f32.gmra.mxu0 %v367
    %v747 = vpop.f32.mrf.mxu0
    %v748 = vadd.f32 0.0, %v747
    %v749 = vpop.f32.mrf.mxu0
    %750 = vdwg.mxu0
    %v751 = vld [vmem:[#allocation13] sm:$0x1]
    %v752 = vld [vmem:[#allocation14] sm:$0x1]
    %v753 = vsel %vm471, %v733, 0.0
    %754 = vadd.xlane.f32.xlu0 %v753
    %v755 = vpop.xlane.xlu0 %754
    %v756 = vsel %vm471, %v738, 0.0
    %757 = vadd.xlane.f32.xlu0 %v756
    %v758 = vpop.xlane.xlu0 %757
    %v759 = vsel %vm471, %v743, 0.0
    %760 = vadd.xlane.f32.xlu0 %v759
    %v761 = vpop.xlane.xlu0 %760
    %v762 = vsel %vm471, %v748, 0.0
    %763 = vadd.xlane.f32.xlu0 %v762
    %v764 = vpop.xlane.xlu0 %763
    %v765 = vmul.f32 %v755, %v484
    %v766 = vmul.f32 %v758, %v484
    %v767 = vmul.f32 %v761, %v484
    %v768 = vmul.f32 %v764, %v484
    %v769 = vsub.f32 %v733, %v765
    %v770 = vsub.f32 %v738, %v766
    %v771 = vsub.f32 %v743, %v767
    %v772 = vsub.f32 %v748, %v768
    %v773 = vmul.f32 %v769, %v769
    %v774 = vmul.f32 %v770, %v770
    %v775 = vmul.f32 %v771, %v771
    %v776 = vmul.f32 %v772, %v772
    %v777 = vsel %vm471, %v773, 0.0
    %778 = vadd.xlane.f32.xlu0 %v777
    %v779 = vpop.xlane.xlu0 %778
    %v780 = vsel %vm471, %v774, 0.0
    %781 = vadd.xlane.f32.xlu0 %v780
    %v782 = vpop.xlane.xlu0 %781
    %v783 = vsel %vm471, %v775, 0.0
    %784 = vadd.xlane.f32.xlu0 %v783
    %v785 = vpop.xlane.xlu0 %784
    %v786 = vsel %vm471, %v776, 0.0
    %787 = vadd.xlane.f32.xlu0 %v786
    %v788 = vpop.xlane.xlu0 %787
    %v789 = vmul.f32 %v779, %v484
    %v790 = vmul.f32 %v782, %v484
    %v791 = vmul.f32 %v785, %v484
    %v792 = vmul.f32 %v788, %v484
    %v793 = vadd.f32 %v789, 1e-05
    %v794 = vadd.f32 %v790, 1e-05
    %v795 = vadd.f32 %v791, 1e-05
    %v796 = vadd.f32 %v792, 1e-05
    %v797 = vrsqrt.pop %v793
    %v798 = vrsqrt.pop %v794
    %v799 = vrsqrt.pop %v795
    %v800 = vrsqrt.pop %v796
    %v801 = vmul.f32 %v769, %v797
    %v802 = vmul.f32 %v770, %v798
    %v803 = vmul.f32 %v771, %v799
    %v804 = vmul.f32 %v772, %v800
    %v806 = vlaneseq
    %v807 = vshrl.u32 %v806, 7
    %v808 = vsub.s32 0, %v807
    %v809 = vrot.slane %v751, %v808
    %v811 = vmul.f32 %v801, %v809
    %v812 = vmul.f32 %v802, %v809
    %v813 = vmul.f32 %v803, %v809
    %v814 = vmul.f32 %v804, %v809
    %v816 = vlaneseq
    %v817 = vshrl.u32 %v816, 7
    %v818 = vsub.s32 0, %v817
    %v819 = vrot.slane %v752, %v818
    %v821 = vadd.f32 %v811, %v819
    %v822 = vadd.f32 %v812, %v819
    %v823 = vadd.f32 %v813, %v819
    %v824 = vadd.f32 %v814, %v819
    %v825 = vld [vmem:[#allocation16] sm:$0xff]
    %v826 = vld [vmem:[#allocation16 + $0x8] sm:$0xff]
    %v827 = vld [vmem:[#allocation16 + $0x10] sm:$0xff]
    %v828 = vld [vmem:[#allocation16 + $0x18] sm:$0xff]
    %v829 = vld [vmem:[#allocation16 + $0x20] sm:$0xff]
    %v830 = vld [vmem:[#allocation16 + $0x28] sm:$0xff]
    %v831 = vld [vmem:[#allocation16 + $0x30] sm:$0xff]
    %v832 = vld [vmem:[#allocation16 + $0x38] sm:$0xff]
    %v834 = vsel %vm471, %v821, 0
    %v837 = vsel %vm471, %v822, 0
    %v840 = vsel %vm471, %v823, 0
    %v843 = vsel %vm471, %v824, 0
    %845 = vmatprep.subr.mxu0 0.0
    %846 = vmatpush1.msra.mxu0 0.0
    %847 = vmatprep.subr.mxu0 0.0
    %848 = vmatpush1.msra.mxu0 0.0
    %849 = vmatprep.subr.mxu0 0.0
    %850 = vmatpush1.msra.mxu0 0.0
    %851 = vmatprep.subr.mxu0 0.0
    %852 = vmatpush1.msra.mxu0 0.0
    %853 = vmatprep.subr.mxu0 0.0
    %854 = vmatpush1.msra.mxu0 0.0
    %855 = vmatprep.subr.mxu0 0.0
    %856 = vmatpush1.msra.mxu0 0.0
    %857 = vmatprep.subr.mxu0 0.0
    %858 = vmatpush1.msra.mxu0 0.0
    %859 = vmatprep.subr.mxu0 0.0
    %860 = vmatpush1.msra.mxu0 0.0
    %861 = vmatprep.subr.mxu0 0.0
    %862 = vmatpush1.msra.mxu0 %v832
    %863 = vmatprep.subr.mxu0 0.0
    %864 = vmatpush1.msra.mxu0 %v831
    %865 = vmatprep.subr.mxu0 0.0
    %866 = vmatpush1.msra.mxu0 %v830
    %867 = vmatprep.subr.mxu0 0.0
    %868 = vmatpush1.msra.mxu0 %v829
    %869 = vmatprep.subr.mxu0 0.0
    %870 = vmatpush1.msra.mxu0 %v828
    %871 = vmatprep.subr.mxu0 0.0
    %872 = vmatpush1.msra.mxu0 %v827
    %873 = vmatprep.subr.mxu0 0.0
    %874 = vmatpush1.msra.mxu0 %v826
    %875 = vmatprep.subr.mxu0 0.0
    %876 = vmatpush1.msra.mxu0 %v825
    %877 = vmatprep.subr.mxu0 0.0
    %878 = vmatpush2.msra.mxu0 0.0
    %879 = vmatprep.subr.mxu0 0.0
    %880 = vmatpush2.msra.mxu0 0.0
    %881 = vmatprep.subr.mxu0 0.0
    %882 = vmatpush2.msra.mxu0 0.0
    %883 = vmatprep.subr.mxu0 0.0
    %884 = vmatpush2.msra.mxu0 0.0
    %885 = vmatprep.subr.mxu0 0.0
    %886 = vmatpush2.msra.mxu0 0.0
    %887 = vmatprep.subr.mxu0 0.0
    %888 = vmatpush2.msra.mxu0 0.0
    %889 = vmatprep.subr.mxu0 0.0
    %890 = vmatpush2.msra.mxu0 0.0
    %891 = vmatprep.subr.mxu0 0.0
    %892 = vmatpush2.msra.mxu0 0.0
    %893 = vmatprep.subr.mxu0 0.0
    %894 = vmatpush2.msra.mxu0 0.0
    %895 = vmatprep.subr.mxu0 0.0
    %896 = vmatpush2.msra.mxu0 0.0
    %897 = vmatprep.subr.mxu0 0.0
    %898 = vmatpush2.msra.mxu0 0.0
    %899 = vmatprep.subr.mxu0 0.0
    %900 = vmatpush2.msra.mxu0 0.0
    %901 = vmatprep.subr.mxu0 0.0
    %902 = vmatpush2.msra.mxu0 0.0
    %903 = vmatprep.subr.mxu0 0.0
    %904 = vmatpush2.msra.mxu0 0.0
    %905 = vmatprep.subr.mxu0 0.0
    %906 = vmatpush2.msra.mxu0 0.0
    %907 = vmatprep.subr.mxu0 0.0
    %908 = vmatpush2.msra.mxu0 0.0
    %909 = vmatprep.mubr.f32.mxu0 0.0
    %910 = vmatmul.mubr.f32.gmra.mxu0 %v834
    %v911 = vpop.f32.mrf.mxu0
    %v912 = vadd.f32 0.0, %v911
    %v913 = vpop.f32.mrf.mxu0
    %914 = vmatprep.mubr.f32.mxu0 0.0
    %915 = vmatmul.mubr.f32.gmra.mxu0 %v837
    %v916 = vpop.f32.mrf.mxu0
    %v917 = vadd.f32 0.0, %v916
    %v918 = vpop.f32.mrf.mxu0
    %919 = vmatprep.mubr.f32.mxu0 0.0
    %920 = vmatmul.mubr.f32.gmra.mxu0 %v840
    %v921 = vpop.f32.mrf.mxu0
    %v922 = vadd.f32 0.0, %v921
    %v923 = vpop.f32.mrf.mxu0
    %924 = vmatprep.mubr.f32.mxu0 0.0
    %925 = vmatmul.mubr.f32.gmra.mxu0 %v843
    %v926 = vpop.f32.mrf.mxu0
    %v927 = vadd.f32 0.0, %v926
    %v928 = vpop.f32.mrf.mxu0
    %929 = vdwg.mxu0
    %v930 = vld [vmem:[#allocation17] sm:$0xff]
    %v931 = vld [vmem:[#allocation17 + $0x8] sm:$0xff]
    %v932 = vld [vmem:[#allocation17 + $0x10] sm:$0xff]
    %v933 = vld [vmem:[#allocation17 + $0x18] sm:$0xff]
    %v934 = vld [vmem:[#allocation17 + $0x20] sm:$0xff]
    %v935 = vld [vmem:[#allocation17 + $0x28] sm:$0xff]
    %v936 = vld [vmem:[#allocation17 + $0x30] sm:$0xff]
    %v937 = vld [vmem:[#allocation17 + $0x38] sm:$0xff]
    %938 = vmatprep.subr.mxu0 0.0
    %939 = vmatpush1.msra.mxu0 0.0
    %940 = vmatprep.subr.mxu0 0.0
    %941 = vmatpush1.msra.mxu0 0.0
    %942 = vmatprep.subr.mxu0 0.0
    %943 = vmatpush1.msra.mxu0 0.0
    %944 = vmatprep.subr.mxu0 0.0
    %945 = vmatpush1.msra.mxu0 0.0
    %946 = vmatprep.subr.mxu0 0.0
    %947 = vmatpush1.msra.mxu0 0.0
    %948 = vmatprep.subr.mxu0 0.0
    %949 = vmatpush1.msra.mxu0 0.0
    %950 = vmatprep.subr.mxu0 0.0
    %951 = vmatpush1.msra.mxu0 0.0
    %952 = vmatprep.subr.mxu0 0.0
    %953 = vmatpush1.msra.mxu0 0.0
    %954 = vmatprep.subr.mxu0 0.0
    %955 = vmatpush1.msra.mxu0 %v937
    %956 = vmatprep.subr.mxu0 0.0
    %957 = vmatpush1.msra.mxu0 %v936
    %958 = vmatprep.subr.mxu0 0.0
    %959 = vmatpush1.msra.mxu0 %v935
    %960 = vmatprep.subr.mxu0 0.0
    %961 = vmatpush1.msra.mxu0 %v934
    %962 = vmatprep.subr.mxu0 0.0
    %963 = vmatpush1.msra.mxu0 %v933
    %964 = vmatprep.subr.mxu0 0.0
    %965 = vmatpush1.msra.mxu0 %v932
    %966 = vmatprep.subr.mxu0 0.0
    %967 = vmatpush1.msra.mxu0 %v931
    %968 = vmatprep.subr.mxu0 0.0
    %969 = vmatpush1.msra.mxu0 %v930
    %970 = vmatprep.subr.mxu0 0.0
    %971 = vmatpush2.msra.mxu0 0.0
    %972 = vmatprep.subr.mxu0 0.0
    %973 = vmatpush2.msra.mxu0 0.0
    %974 = vmatprep.subr.mxu0 0.0
    %975 = vmatpush2.msra.mxu0 0.0
    %976 = vmatprep.subr.mxu0 0.0
    %977 = vmatpush2.msra.mxu0 0.0
    %978 = vmatprep.subr.mxu0 0.0
    %979 = vmatpush2.msra.mxu0 0.0
    %980 = vmatprep.subr.mxu0 0.0
    %981 = vmatpush2.msra.mxu0 0.0
    %982 = vmatprep.subr.mxu0 0.0
    %983 = vmatpush2.msra.mxu0 0.0
    %984 = vmatprep.subr.mxu0 0.0
    %985 = vmatpush2.msra.mxu0 0.0
    %986 = vmatprep.subr.mxu0 0.0
    %987 = vmatpush2.msra.mxu0 0.0
    %988 = vmatprep.subr.mxu0 0.0
    %989 = vmatpush2.msra.mxu0 0.0
    %990 = vmatprep.subr.mxu0 0.0
    %991 = vmatpush2.msra.mxu0 0.0
    %992 = vmatprep.subr.mxu0 0.0
    %993 = vmatpush2.msra.mxu0 0.0
    %994 = vmatprep.subr.mxu0 0.0
    %995 = vmatpush2.msra.mxu0 0.0
    %996 = vmatprep.subr.mxu0 0.0
    %997 = vmatpush2.msra.mxu0 0.0
    %998 = vmatprep.subr.mxu0 0.0
    %999 = vmatpush2.msra.mxu0 0.0
    %1000 = vmatprep.subr.mxu0 0.0
    %1001 = vmatpush2.msra.mxu0 0.0
    %1002 = vmatprep.mubr.f32.mxu0 0.0
    %1003 = vmatmul.mubr.f32.gmra.mxu0 %v834
    %v1004 = vpop.f32.mrf.mxu0
    %v1005 = vadd.f32 0.0, %v1004
    %v1006 = vpop.f32.mrf.mxu0
    %1007 = vmatprep.mubr.f32.mxu0 0.0
    %1008 = vmatmul.mubr.f32.gmra.mxu0 %v837
    %v1009 = vpop.f32.mrf.mxu0
    %v1010 = vadd.f32 0.0, %v1009
    %v1011 = vpop.f32.mrf.mxu0
    %1012 = vmatprep.mubr.f32.mxu0 0.0
    %1013 = vmatmul.mubr.f32.gmra.mxu0 %v840
    %v1014 = vpop.f32.mrf.mxu0
    %v1015 = vadd.f32 0.0, %v1014
    %v1016 = vpop.f32.mrf.mxu0
    %1017 = vmatprep.mubr.f32.mxu0 0.0
    %1018 = vmatmul.mubr.f32.gmra.mxu0 %v843
    %v1019 = vpop.f32.mrf.mxu0
    %v1020 = vadd.f32 0.0, %v1019
    %v1021 = vpop.f32.mrf.mxu0
    %1022 = vdwg.mxu0
    %v1023 = vld [vmem:[%s1] sm:$0xff]
    %v1024 = vld [vmem:[%s1 + $0x8] sm:$0xff]
    %v1025 = vld [vmem:[%s1 + $0x10] sm:$0xff]
    %v1026 = vld [vmem:[%s1 + $0x18] sm:$0xff]
    %v1027 = vld [vmem:[%s2] sm:$0xf]
    %v1028 = vlaneseq
    %v1029 = vshrl.u32 %v1028, 7
    %v1030 = vsub.s32 0, %v1029
    %v1031 = vrot.slane %v1027, %v1030
    %v1032 = vmul.f32 %v632, %v1031
    %v1033 = vmul.f32 %v637, %v1031
    %v1034 = vmul.f32 %v642, %v1031
    %v1035 = vmul.f32 %v647, %v1031
    %1036 = vmatprep.subr.mxu0 0.0
    %1037 = vmatpush1.xpose.msra.mxu0 0.0
    %1038 = vmatprep.subr.mxu0 0.0
    %1039 = vmatpush1.xpose.msra.mxu0 0.0
    %1040 = vmatprep.subr.mxu0 0.0
    %1041 = vmatpush1.xpose.msra.mxu0 0.0
    %1042 = vmatprep.subr.mxu0 0.0
    %1043 = vmatpush1.xpose.msra.mxu0 0.0
    %1044 = vmatprep.subr.mxu0 0.0
    %1045 = vmatpush1.xpose.msra.mxu0 0.0
    %1046 = vmatprep.subr.mxu0 0.0
    %1047 = vmatpush1.xpose.msra.mxu0 0.0
    %1048 = vmatprep.subr.mxu0 0.0
    %1049 = vmatpush1.xpose.msra.mxu0 0.0
    %1050 = vmatprep.subr.mxu0 0.0
    %1051 = vmatpush1.xpose.msra.mxu0 0.0
    %1052 = vmatprep.subr.mxu0 0.0
    %1053 = vmatpush1.xpose.msra.mxu0 0.0
    %1054 = vmatprep.subr.mxu0 0.0
    %1055 = vmatpush1.xpose.msra.mxu0 0.0
    %1056 = vmatprep.subr.mxu0 0.0
    %1057 = vmatpush1.xpose.msra.mxu0 0.0
    %1058 = vmatprep.subr.mxu0 0.0
    %1059 = vmatpush1.xpose.msra.mxu0 0.0
    %1060 = vmatprep.subr.mxu0 0.0
    %1061 = vmatpush1.xpose.msra.mxu0 %v927
    %1062 = vmatprep.subr.mxu0 0.0
    %1063 = vmatpush1.xpose.msra.mxu0 %v922
    %1064 = vmatprep.subr.mxu0 0.0
    %1065 = vmatpush1.xpose.msra.mxu0 %v917
    %1066 = vmatprep.subr.mxu0 0.0
    %1067 = vmatpush1.xpose.msra.mxu0 %v912
    %1068 = vmatprep.subr.mxu0 0.0
    %1069 = vmatpush2.xpose.msra.mxu0 0.0
    %1070 = vmatprep.subr.mxu0 0.0
    %1071 = vmatpush2.xpose.msra.mxu0 0.0
    %1072 = vmatprep.subr.mxu0 0.0
    %1073 = vmatpush2.xpose.msra.mxu0 0.0
    %1074 = vmatprep.subr.mxu0 0.0
    %1075 = vmatpush2.xpose.msra.mxu0 0.0
    %1076 = vmatprep.subr.mxu0 0.0
    %1077 = vmatpush2.xpose.msra.mxu0 0.0
    %1078 = vmatprep.subr.mxu0 0.0
    %1079 = vmatpush2.xpose.msra.mxu0 0.0
    %1080 = vmatprep.subr.mxu0 0.0
    %1081 = vmatpush2.xpose.msra.mxu0 0.0
    %1082 = vmatprep.subr.mxu0 0.0
    %1083 = vmatpush2.xpose.msra.mxu0 0.0
    %1084 = vmatprep.subr.mxu0 0.0
    %1085 = vmatpush2.xpose.msra.mxu0 0.0
    %1086 = vmatprep.subr.mxu0 0.0
    %1087 = vmatpush2.xpose.msra.mxu0 0.0
    %1088 = vmatprep.subr.mxu0 0.0
    %1089 = vmatpush2.xpose.msra.mxu0 0.0
    %1090 = vmatprep.subr.mxu0 0.0
    %1091 = vmatpush2.xpose.msra.mxu0 0.0
    %1092 = vmatprep.subr.mxu0 0.0
    %1093 = vmatpush2.xpose.msra.mxu0 0.0
    %1094 = vmatprep.subr.mxu0 0.0
    %1095 = vmatpush2.xpose.msra.mxu0 0.0
    %1096 = vmatprep.subr.mxu0 0.0
    %1097 = vmatpush2.xpose.msra.mxu0 0.0
    %1098 = vmatprep.subr.mxu0 0.0
    %1099 = vmatpush2.xpose.msra.mxu0 0.0
    %1100 = vmatprep.mubr.f32.mxu0 0.0
    %1101 = vmatmul.mubr.f32.gmra.mxu0 %v1032
    %v1102 = vpop.f32.mrf.mxu0
    %v1103 = vadd.f32 0.0, %v1102
    %v1104 = vpop.f32.mrf.mxu0
    %1105 = vmatprep.mubr.f32.mxu0 0.0
    %1106 = vmatmul.mubr.f32.gmra.mxu0 %v1033
    %v1107 = vpop.f32.mrf.mxu0
    %v1108 = vadd.f32 0.0, %v1107
    %v1109 = vpop.f32.mrf.mxu0
    %1110 = vmatprep.mubr.f32.mxu0 0.0
    %1111 = vmatmul.mubr.f32.gmra.mxu0 %v1034
    %v1112 = vpop.f32.mrf.mxu0
    %v1113 = vadd.f32 0.0, %v1112
    %v1114 = vpop.f32.mrf.mxu0
    %1115 = vmatprep.mubr.f32.mxu0 0.0
    %1116 = vmatmul.mubr.f32.gmra.mxu0 %v1035
    %v1117 = vpop.f32.mrf.mxu0
    %v1118 = vadd.f32 0.0, %v1117
    %v1119 = vpop.f32.mrf.mxu0
    %1120 = vdwg.mxu0
    %v1121 = vmul.f32 %v1103, 0.17677669
    %v1122 = vmul.f32 %v1108, 0.17677669
    %v1123 = vmul.f32 %v1113, 0.17677669
    %v1124 = vmul.f32 %v1118, 0.17677669
    %v1125 = vadd.f32 %v1121, %v1023
    %v1126 = vadd.f32 %v1122, %v1024
    %v1127 = vadd.f32 %v1123, %v1025
    %v1128 = vadd.f32 %v1124, %v1026
    %vm1129 = vcmask 261120
    %v1130 = vsel %vm1129, %v1125, -inf
    %1131 = vmax.xlane.f32.xlu0 %v1130
    %v1132 = vpop.xlane.xlu0 %1131
    %v1133 = vsel %vm1129, %v1126, -inf
    %1134 = vmax.xlane.f32.xlu0 %v1133
    %v1135 = vpop.xlane.xlu0 %1134
    %v1136 = vsel %vm1129, %v1127, -inf
    %1137 = vmax.xlane.f32.xlu0 %v1136
    %v1138 = vpop.xlane.xlu0 %1137
    %v1139 = vsel %vm1129, %v1128, -inf
    %1140 = vmax.xlane.f32.xlu0 %v1139
    %v1141 = vpop.xlane.xlu0 %1140
    %v1142 = vsub.f32 %v1125, %v1132
    %v1143 = vsub.f32 %v1126, %v1135
    %v1144 = vsub.f32 %v1127, %v1138
    %v1145 = vsub.f32 %v1128, %v1141
    %v1146 = vmul.f32 %v1142, 1.442695
    %v1147 = vpow.pop %v1146
    %v1148 = vmul.f32 %v1143, 1.442695
    %v1149 = vpow.pop %v1148
    %v1150 = vmul.f32 %v1144, 1.442695
    %v1151 = vpow.pop %v1150
    %v1152 = vmul.f32 %v1145, 1.442695
    %v1153 = vpow.pop %v1152
    %v1154 = vsel %vm1129, %v1147, 0.0
    %1155 = vadd.xlane.f32.xlu0 %v1154
    %v1156 = vpop.xlane.xlu0 %1155
    %v1157 = vsel %vm1129, %v1149, 0.0
    %1158 = vadd.xlane.f32.xlu0 %v1157
    %v1159 = vpop.xlane.xlu0 %1158
    %v1160 = vsel %vm1129, %v1151, 0.0
    %1161 = vadd.xlane.f32.xlu0 %v1160
    %v1162 = vpop.xlane.xlu0 %1161
    %v1163 = vsel %vm1129, %v1153, 0.0
    %1164 = vadd.xlane.f32.xlu0 %v1163
    %v1165 = vpop.xlane.xlu0 %1164
    %v1166 = vrcp.pop %v1156
    %v1167 = vmul.f32 %v1147, %v1166
    %v1168 = vrcp.pop %v1159
    %v1169 = vmul.f32 %v1149, %v1168
    %v1170 = vrcp.pop %v1162
    %v1171 = vmul.f32 %v1151, %v1170
    %v1172 = vrcp.pop %v1165
    %v1173 = vmul.f32 %v1153, %v1172
    %v1174 = vmul.f32 %v1005, %v1031
    %v1175 = vmul.f32 %v1010, %v1031
    %v1176 = vmul.f32 %v1015, %v1031
    %v1177 = vmul.f32 %v1020, %v1031
    %v1178 = vlaneseq
    %v1179 = vshrl.u32 %v1178, 7
    %v1180 = vsub.s32 1, %v1179
    %v1181 = vrot.slane %v1027, %v1180
    %v1182 = vmul.f32 %v632, %v1181
    %v1183 = vmul.f32 %v637, %v1181
    %v1184 = vmul.f32 %v642, %v1181
    %v1185 = vmul.f32 %v647, %v1181
    %1186 = vmatprep.subr.mxu0 0.0
    %1187 = vmatpush1.xpose.msra.mxu0 0.0
    %1188 = vmatprep.subr.mxu0 0.0
    %1189 = vmatpush1.xpose.msra.mxu0 0.0
    %1190 = vmatprep.subr.mxu0 0.0
    %1191 = vmatpush1.xpose.msra.mxu0 0.0
    %1192 = vmatprep.subr.mxu0 0.0
    %1193 = vmatpush1.xpose.msra.mxu0 0.0
    %1194 = vmatprep.subr.mxu0 0.0
    %1195 = vmatpush1.xpose.msra.mxu0 0.0
    %1196 = vmatprep.subr.mxu0 0.0
    %1197 = vmatpush1.xpose.msra.mxu0 0.0
    %1198 = vmatprep.subr.mxu0 0.0
    %1199 = vmatpush1.xpose.msra.mxu0 0.0
    %1200 = vmatprep.subr.mxu0 0.0
    %1201 = vmatpush1.xpose.msra.mxu0 0.0
    %1202 = vmatprep.subr.mxu0 0.0
    %1203 = vmatpush1.xpose.msra.mxu0 0.0
    %1204 = vmatprep.subr.mxu0 0.0
    %1205 = vmatpush1.xpose.msra.mxu0 0.0
    %1206 = vmatprep.subr.mxu0 0.0
    %1207 = vmatpush1.xpose.msra.mxu0 0.0
    %1208 = vmatprep.subr.mxu0 0.0
    %1209 = vmatpush1.xpose.msra.mxu0 0.0
    %1210 = vmatprep.subr.mxu0 0.0
    %1211 = vmatpush1.xpose.msra.mxu0 %v927
    %1212 = vmatprep.subr.mxu0 0.0
    %1213 = vmatpush1.xpose.msra.mxu0 %v922
    %1214 = vmatprep.subr.mxu0 0.0
    %1215 = vmatpush1.xpose.msra.mxu0 %v917
    %1216 = vmatprep.subr.mxu0 0.0
    %1217 = vmatpush1.xpose.msra.mxu0 %v912
    %1218 = vmatprep.subr.mxu0 0.0
    %1219 = vmatpush2.xpose.msra.mxu0 0.0
    %1220 = vmatprep.subr.mxu0 0.0
    %1221 = vmatpush2.xpose.msra.mxu0 0.0
    %1222 = vmatprep.subr.mxu0 0.0
    %1223 = vmatpush2.xpose.msra.mxu0 0.0
    %1224 = vmatprep.subr.mxu0 0.0
    %1225 = vmatpush2.xpose.msra.mxu0 0.0
    %1226 = vmatprep.subr.mxu0 0.0
    %1227 = vmatpush2.xpose.msra.mxu0 0.0
    %1228 = vmatprep.subr.mxu0 0.0
    %1229 = vmatpush2.xpose.msra.mxu0 0.0
    %1230 = vmatprep.subr.mxu0 0.0
    %1231 = vmatpush2.xpose.msra.mxu0 0.0
    %1232 = vmatprep.subr.mxu0 0.0
    %1233 = vmatpush2.xpose.msra.mxu0 0.0
    %1234 = vmatprep.subr.mxu0 0.0
    %1235 = vmatpush2.xpose.msra.mxu0 0.0
    %1236 = vmatprep.subr.mxu0 0.0
    %1237 = vmatpush2.xpose.msra.mxu0 0.0
    %1238 = vmatprep.subr.mxu0 0.0
    %1239 = vmatpush2.xpose.msra.mxu0 0.0
    %1240 = vmatprep.subr.mxu0 0.0
    %1241 = vmatpush2.xpose.msra.mxu0 0.0
    %1242 = vmatprep.subr.mxu0 0.0
    %1243 = vmatpush2.xpose.msra.mxu0 0.0
    %1244 = vmatprep.subr.mxu0 0.0
    %1245 = vmatpush2.xpose.msra.mxu0 0.0
    %1246 = vmatprep.subr.mxu0 0.0
    %1247 = vmatpush2.xpose.msra.mxu0 0.0
    %1248 = vmatprep.subr.mxu0 0.0
    %1249 = vmatpush2.xpose.msra.mxu0 0.0
    %1250 = vmatprep.mubr.f32.mxu0 0.0
    %1251 = vmatmul.mubr.f32.gmra.mxu0 %v1182
    %v1252 = vpop.f32.mrf.mxu0
    %v1253 = vadd.f32 0.0, %v1252
    %v1254 = vpop.f32.mrf.mxu0
    %1255 = vmatprep.mubr.f32.mxu0 0.0
    %1256 = vmatmul.mubr.f32.gmra.mxu0 %v1183
    %v1257 = vpop.f32.mrf.mxu0
    %v1258 = vadd.f32 0.0, %v1257
    %v1259 = vpop.f32.mrf.mxu0
    %1260 = vmatprep.mubr.f32.mxu0 0.0
    %1261 = vmatmul.mubr.f32.gmra.mxu0 %v1184
    %v1262 = vpop.f32.mrf.mxu0
    %v1263 = vadd.f32 0.0, %v1262
    %v1264 = vpop.f32.mrf.mxu0
    %1265 = vmatprep.mubr.f32.mxu0 0.0
    %1266 = vmatmul.mubr.f32.gmra.mxu0 %v1185
    %v1267 = vpop.f32.mrf.mxu0
    %v1268 = vadd.f32 0.0, %v1267
    %v1269 = vpop.f32.mrf.mxu0
    %1270 = vdwg.mxu0
    %v1271 = vmul.f32 %v1253, 0.17677669
    %v1272 = vmul.f32 %v1258, 0.17677669
    %v1273 = vmul.f32 %v1263, 0.17677669
    %v1274 = vmul.f32 %v1268, 0.17677669
    %v1275 = vadd.f32 %v1271, %v1023
    %v1276 = vadd.f32 %v1272, %v1024
    %v1277 = vadd.f32 %v1273, %v1025
    %v1278 = vadd.f32 %v1274, %v1026
    %v1279 = vsel %vm1129, %v1275, -inf
    %1280 = vmax.xlane.f32.xlu0 %v1279
    %v1281 = vpop.xlane.xlu0 %1280
    %v1282 = vsel %vm1129, %v1276, -inf
    %1283 = vmax.xlane.f32.xlu0 %v1282
    %v1284 = vpop.xlane.xlu0 %1283
    %v1285 = vsel %vm1129, %v1277, -inf
    %1286 = vmax.xlane.f32.xlu0 %v1285
    %v1287 = vpop.xlane.xlu0 %1286
    %v1288 = vsel %vm1129, %v1278, -inf
    %1289 = vmax.xlane.f32.xlu0 %v1288
    %v1290 = vpop.xlane.xlu0 %1289
    %v1291 = vsub.f32 %v1275, %v1281
    %v1292 = vsub.f32 %v1276, %v1284
    %v1293 = vsub.f32 %v1277, %v1287
    %v1294 = vsub.f32 %v1278, %v1290
    %v1295 = vmul.f32 %v1291, 1.442695
    %v1296 = vpow.pop %v1295
    %v1297 = vmul.f32 %v1292, 1.442695
    %v1298 = vpow.pop %v1297
    %v1299 = vmul.f32 %v1293, 1.442695
    %v1300 = vpow.pop %v1299
    %v1301 = vmul.f32 %v1294, 1.442695
    %v1302 = vpow.pop %v1301
    %v1303 = vsel %vm1129, %v1296, 0.0
    %1304 = vadd.xlane.f32.xlu0 %v1303
    %v1305 = vpop.xlane.xlu0 %1304
    %v1306 = vsel %vm1129, %v1298, 0.0
    %1307 = vadd.xlane.f32.xlu0 %v1306
    %v1308 = vpop.xlane.xlu0 %1307
    %v1309 = vsel %vm1129, %v1300, 0.0
    %1310 = vadd.xlane.f32.xlu0 %v1309
    %v1311 = vpop.xlane.xlu0 %1310
    %v1312 = vsel %vm1129, %v1302, 0.0
    %1313 = vadd.xlane.f32.xlu0 %v1312
    %v1314 = vpop.xlane.xlu0 %1313
    %v1315 = vrcp.pop %v1305
    %v1316 = vmul.f32 %v1296, %v1315
    %v1317 = vrcp.pop %v1308
    %v1318 = vmul.f32 %v1298, %v1317
    %v1319 = vrcp.pop %v1311
    %v1320 = vmul.f32 %v1300, %v1319
    %v1321 = vrcp.pop %v1314
    %v1322 = vmul.f32 %v1302, %v1321
    %v1323 = vmul.f32 %v1005, %v1181
    %v1324 = vmul.f32 %v1010, %v1181
    %v1325 = vmul.f32 %v1015, %v1181
    %v1326 = vmul.f32 %v1020, %v1181
    %v1328 = vsel %vm1129, %v1316, 0
    %v1331 = vsel %vm1129, %v1318, 0
    %v1334 = vsel %vm1129, %v1320, 0
    %v1337 = vsel %vm1129, %v1322, 0
    %1339 = vmatprep.subr.mxu0 0.0
    %1340 = vmatpush1.msra.mxu0 0.0
    %1341 = vmatprep.subr.mxu0 0.0
    %1342 = vmatpush1.msra.mxu0 0.0
    %1343 = vmatprep.subr.mxu0 0.0
    %1344 = vmatpush1.msra.mxu0 0.0
    %1345 = vmatprep.subr.mxu0 0.0
    %1346 = vmatpush1.msra.mxu0 0.0
    %1347 = vmatprep.subr.mxu0 0.0
    %1348 = vmatpush1.msra.mxu0 0.0
    %1349 = vmatprep.subr.mxu0 0.0
    %1350 = vmatpush1.msra.mxu0 0.0
    %1351 = vmatprep.subr.mxu0 0.0
    %1352 = vmatpush1.msra.mxu0 0.0
    %1353 = vmatprep.subr.mxu0 0.0
    %1354 = vmatpush1.msra.mxu0 0.0
    %1355 = vmatprep.subr.mxu0 0.0
    %1356 = vmatpush1.msra.mxu0 0.0
    %1357 = vmatprep.subr.mxu0 0.0
    %1358 = vmatpush1.msra.mxu0 0.0
    %1359 = vmatprep.subr.mxu0 0.0
    %1360 = vmatpush1.msra.mxu0 0.0
    %1361 = vmatprep.subr.mxu0 0.0
    %1362 = vmatpush1.msra.mxu0 0.0
    %1363 = vmatprep.subr.mxu0 0.0
    %1364 = vmatpush1.msra.mxu0 %v1326
    %1365 = vmatprep.subr.mxu0 0.0
    %1366 = vmatpush1.msra.mxu0 %v1325
    %1367 = vmatprep.subr.mxu0 0.0
    %1368 = vmatpush1.msra.mxu0 %v1324
    %1369 = vmatprep.subr.mxu0 0.0
    %1370 = vmatpush1.msra.mxu0 %v1323
    %1371 = vmatprep.subr.mxu0 0.0
    %1372 = vmatpush2.msra.mxu0 0.0
    %1373 = vmatprep.subr.mxu0 0.0
    %1374 = vmatpush2.msra.mxu0 0.0
    %1375 = vmatprep.subr.mxu0 0.0
    %1376 = vmatpush2.msra.mxu0 0.0
    %1377 = vmatprep.subr.mxu0 0.0
    %1378 = vmatpush2.msra.mxu0 0.0
    %1379 = vmatprep.subr.mxu0 0.0
    %1380 = vmatpush2.msra.mxu0 0.0
    %1381 = vmatprep.subr.mxu0 0.0
    %1382 = vmatpush2.msra.mxu0 0.0
    %1383 = vmatprep.subr.mxu0 0.0
    %1384 = vmatpush2.msra.mxu0 0.0
    %1385 = vmatprep.subr.mxu0 0.0
    %1386 = vmatpush2.msra.mxu0 0.0
    %1387 = vmatprep.subr.mxu0 0.0
    %1388 = vmatpush2.msra.mxu0 0.0
    %1389 = vmatprep.subr.mxu0 0.0
    %1390 = vmatpush2.msra.mxu0 0.0
    %1391 = vmatprep.subr.mxu0 0.0
    %1392 = vmatpush2.msra.mxu0 0.0
    %1393 = vmatprep.subr.mxu0 0.0
    %1394 = vmatpush2.msra.mxu0 0.0
    %1395 = vmatprep.subr.mxu0 0.0
    %1396 = vmatpush2.msra.mxu0 0.0
    %1397 = vmatprep.subr.mxu0 0.0
    %1398 = vmatpush2.msra.mxu0 0.0
    %1399 = vmatprep.subr.mxu0 0.0
    %1400 = vmatpush2.msra.mxu0 0.0
    %1401 = vmatprep.subr.mxu0 0.0
    %1402 = vmatpush2.msra.mxu0 0.0
    %1403 = vmatprep.mubr.f32.mxu0 0.0
    %1404 = vmatmul.mubr.f32.gmra.mxu0 %v1328
    %v1405 = vpop.f32.mrf.mxu0
    %v1406 = vadd.f32 0.0, %v1405
    %v1407 = vpop.f32.mrf.mxu0
    %1408 = vmatprep.mubr.f32.mxu0 0.0
    %1409 = vmatmul.mubr.f32.gmra.mxu0 %v1331
    %v1410 = vpop.f32.mrf.mxu0
    %v1411 = vadd.f32 0.0, %v1410
    %v1412 = vpop.f32.mrf.mxu0
    %1413 = vmatprep.mubr.f32.mxu0 0.0
    %1414 = vmatmul.mubr.f32.gmra.mxu0 %v1334
    %v1415 = vpop.f32.mrf.mxu0
    %v1416 = vadd.f32 0.0, %v1415
    %v1417 = vpop.f32.mrf.mxu0
    %1418 = vmatprep.mubr.f32.mxu0 0.0
    %1419 = vmatmul.mubr.f32.gmra.mxu0 %v1337
    %v1420 = vpop.f32.mrf.mxu0
    %v1421 = vadd.f32 0.0, %v1420
    %v1422 = vpop.f32.mrf.mxu0
    %1423 = vdwg.mxu0
    %v1425 = vsel %vm1129, %v1167, 0
    %v1428 = vsel %vm1129, %v1169, 0
    %v1431 = vsel %vm1129, %v1171, 0
    %v1434 = vsel %vm1129, %v1173, 0
    %1436 = vmatprep.subr.mxu0 0.0
    %1437 = vmatpush1.msra.mxu0 0.0
    %1438 = vmatprep.subr.mxu0 0.0
    %1439 = vmatpush1.msra.mxu0 0.0
    %1440 = vmatprep.subr.mxu0 0.0
    %1441 = vmatpush1.msra.mxu0 0.0
    %1442 = vmatprep.subr.mxu0 0.0
    %1443 = vmatpush1.msra.mxu0 0.0
    %1444 = vmatprep.subr.mxu0 0.0
    %1445 = vmatpush1.msra.mxu0 0.0
    %1446 = vmatprep.subr.mxu0 0.0
    %1447 = vmatpush1.msra.mxu0 0.0
    %1448 = vmatprep.subr.mxu0 0.0
    %1449 = vmatpush1.msra.mxu0 0.0
    %1450 = vmatprep.subr.mxu0 0.0
    %1451 = vmatpush1.msra.mxu0 0.0
    %1452 = vmatprep.subr.mxu0 0.0
    %1453 = vmatpush1.msra.mxu0 0.0
    %1454 = vmatprep.subr.mxu0 0.0
    %1455 = vmatpush1.msra.mxu0 0.0
    %1456 = vmatprep.subr.mxu0 0.0
    %1457 = vmatpush1.msra.mxu0 0.0
    %1458 = vmatprep.subr.mxu0 0.0
    %1459 = vmatpush1.msra.mxu0 0.0
    %1460 = vmatprep.subr.mxu0 0.0
    %1461 = vmatpush1.msra.mxu0 %v1177
    %1462 = vmatprep.subr.mxu0 0.0
    %1463 = vmatpush1.msra.mxu0 %v1176
    %1464 = vmatprep.subr.mxu0 0.0
    %1465 = vmatpush1.msra.mxu0 %v1175
    %1466 = vmatprep.subr.mxu0 0.0
    %1467 = vmatpush1.msra.mxu0 %v1174
    %1468 = vmatprep.subr.mxu0 0.0
    %1469 = vmatpush2.msra.mxu0 0.0
    %1470 = vmatprep.subr.mxu0 0.0
    %1471 = vmatpush2.msra.mxu0 0.0
    %1472 = vmatprep.subr.mxu0 0.0
    %1473 = vmatpush2.msra.mxu0 0.0
    %1474 = vmatprep.subr.mxu0 0.0
    %1475 = vmatpush2.msra.mxu0 0.0
    %1476 = vmatprep.subr.mxu0 0.0
    %1477 = vmatpush2.msra.mxu0 0.0
    %1478 = vmatprep.subr.mxu0 0.0
    %1479 = vmatpush2.msra.mxu0 0.0
    %1480 = vmatprep.subr.mxu0 0.0
    %1481 = vmatpush2.msra.mxu0 0.0
    %1482 = vmatprep.subr.mxu0 0.0
    %1483 = vmatpush2.msra.mxu0 0.0
    %1484 = vmatprep.subr.mxu0 0.0
    %1485 = vmatpush2.msra.mxu0 0.0
    %1486 = vmatprep.subr.mxu0 0.0
    %1487 = vmatpush2.msra.mxu0 0.0
    %1488 = vmatprep.subr.mxu0 0.0
    %1489 = vmatpush2.msra.mxu0 0.0
    %1490 = vmatprep.subr.mxu0 0.0
    %1491 = vmatpush2.msra.mxu0 0.0
    %1492 = vmatprep.subr.mxu0 0.0
    %1493 = vmatpush2.msra.mxu0 0.0
    %1494 = vmatprep.subr.mxu0 0.0
    %1495 = vmatpush2.msra.mxu0 0.0
    %1496 = vmatprep.subr.mxu0 0.0
    %1497 = vmatpush2.msra.mxu0 0.0
    %1498 = vmatprep.subr.mxu0 0.0
    %1499 = vmatpush2.msra.mxu0 0.0
    %1500 = vmatprep.mubr.f32.mxu0 0.0
    %1501 = vmatmul.mubr.f32.gmra.mxu0 %v1425
    %v1502 = vpop.f32.mrf.mxu0
    %v1503 = vadd.f32 %v1406, %v1502
    %v1504 = vpop.f32.mrf.mxu0
    %1505 = vmatprep.mubr.f32.mxu0 0.0
    %1506 = vmatmul.mubr.f32.gmra.mxu0 %v1428
    %v1507 = vpop.f32.mrf.mxu0
    %v1508 = vadd.f32 %v1411, %v1507
    %v1509 = vpop.f32.mrf.mxu0
    %1510 = vmatprep.mubr.f32.mxu0 0.0
    %1511 = vmatmul.mubr.f32.gmra.mxu0 %v1431
    %v1512 = vpop.f32.mrf.mxu0
    %v1513 = vadd.f32 %v1416, %v1512
    %v1514 = vpop.f32.mrf.mxu0
    %1515 = vmatprep.mubr.f32.mxu0 0.0
    %1516 = vmatmul.mubr.f32.gmra.mxu0 %v1434
    %v1517 = vpop.f32.mrf.mxu0
    %v1518 = vadd.f32 %v1421, %v1517
    %v1519 = vpop.f32.mrf.mxu0
    %1520 = vdwg.mxu0
    %v1521 = vlaneseq
    %v1522 = vshrl.u32 %v1521, 7
    %v1523 = vsub.s32 2, %v1522
    %v1524 = vrot.slane %v1027, %v1523
    %v1525 = vmul.f32 %v632, %v1524
    %v1526 = vmul.f32 %v637, %v1524
    %v1527 = vmul.f32 %v642, %v1524
    %v1528 = vmul.f32 %v647, %v1524
    %1529 = vmatprep.subr.mxu0 0.0
    %1530 = vmatpush1.xpose.msra.mxu0 0.0
    %1531 = vmatprep.subr.mxu0 0.0
    %1532 = vmatpush1.xpose.msra.mxu0 0.0
    %1533 = vmatprep.subr.mxu0 0.0
    %1534 = vmatpush1.xpose.msra.mxu0 0.0
    %1535 = vmatprep.subr.mxu0 0.0
    %1536 = vmatpush1.xpose.msra.mxu0 0.0
    %1537 = vmatprep.subr.mxu0 0.0
    %1538 = vmatpush1.xpose.msra.mxu0 0.0
    %1539 = vmatprep.subr.mxu0 0.0
    %1540 = vmatpush1.xpose.msra.mxu0 0.0
    %1541 = vmatprep.subr.mxu0 0.0
    %1542 = vmatpush1.xpose.msra.mxu0 0.0
    %1543 = vmatprep.subr.mxu0 0.0
    %1544 = vmatpush1.xpose.msra.mxu0 0.0
    %1545 = vmatprep.subr.mxu0 0.0
    %1546 = vmatpush1.xpose.msra.mxu0 0.0
    %1547 = vmatprep.subr.mxu0 0.0
    %1548 = vmatpush1.xpose.msra.mxu0 0.0
    %1549 = vmatprep.subr.mxu0 0.0
    %1550 = vmatpush1.xpose.msra.mxu0 0.0
    %1551 = vmatprep.subr.mxu0 0.0
    %1552 = vmatpush1.xpose.msra.mxu0 0.0
    %1553 = vmatprep.subr.mxu0 0.0
    %1554 = vmatpush1.xpose.msra.mxu0 %v927
    %1555 = vmatprep.subr.mxu0 0.0
    %1556 = vmatpush1.xpose.msra.mxu0 %v922
    %1557 = vmatprep.subr.mxu0 0.0
    %1558 = vmatpush1.xpose.msra.mxu0 %v917
    %1559 = vmatprep.subr.mxu0 0.0
    %1560 = vmatpush1.xpose.msra.mxu0 %v912
    %1561 = vmatprep.subr.mxu0 0.0
    %1562 = vmatpush2.xpose.msra.mxu0 0.0
    %1563 = vmatprep.subr.mxu0 0.0
    %1564 = vmatpush2.xpose.msra.mxu0 0.0
    %1565 = vmatprep.subr.mxu0 0.0
    %1566 = vmatpush2.xpose.msra.mxu0 0.0
    %1567 = vmatprep.subr.mxu0 0.0
    %1568 = vmatpush2.xpose.msra.mxu0 0.0
    %1569 = vmatprep.subr.mxu0 0.0
    %1570 = vmatpush2.xpose.msra.mxu0 0.0
    %1571 = vmatprep.subr.mxu0 0.0
    %1572 = vmatpush2.xpose.msra.mxu0 0.0
    %1573 = vmatprep.subr.mxu0 0.0
    %1574 = vmatpush2.xpose.msra.mxu0 0.0
    %1575 = vmatprep.subr.mxu0 0.0
    %1576 = vmatpush2.xpose.msra.mxu0 0.0
    %1577 = vmatprep.subr.mxu0 0.0
    %1578 = vmatpush2.xpose.msra.mxu0 0.0
    %1579 = vmatprep.subr.mxu0 0.0
    %1580 = vmatpush2.xpose.msra.mxu0 0.0
    %1581 = vmatprep.subr.mxu0 0.0
    %1582 = vmatpush2.xpose.msra.mxu0 0.0
    %1583 = vmatprep.subr.mxu0 0.0
    %1584 = vmatpush2.xpose.msra.mxu0 0.0
    %1585 = vmatprep.subr.mxu0 0.0
    %1586 = vmatpush2.xpose.msra.mxu0 0.0
    %1587 = vmatprep.subr.mxu0 0.0
    %1588 = vmatpush2.xpose.msra.mxu0 0.0
    %1589 = vmatprep.subr.mxu0 0.0
    %1590 = vmatpush2.xpose.msra.mxu0 0.0
    %1591 = vmatprep.subr.mxu0 0.0
    %1592 = vmatpush2.xpose.msra.mxu0 0.0
    %1593 = vmatprep.mubr.f32.mxu0 0.0
    %1594 = vmatmul.mubr.f32.gmra.mxu0 %v1525
    %v1595 = vpop.f32.mrf.mxu0
    %v1596 = vadd.f32 0.0, %v1595
    %v1597 = vpop.f32.mrf.mxu0
    %1598 = vmatprep.mubr.f32.mxu0 0.0
    %1599 = vmatmul.mubr.f32.gmra.mxu0 %v1526
    %v1600 = vpop.f32.mrf.mxu0
    %v1601 = vadd.f32 0.0, %v1600
    %v1602 = vpop.f32.mrf.mxu0
    %1603 = vmatprep.mubr.f32.mxu0 0.0
    %1604 = vmatmul.mubr.f32.gmra.mxu0 %v1527
    %v1605 = vpop.f32.mrf.mxu0
    %v1606 = vadd.f32 0.0, %v1605
    %v1607 = vpop.f32.mrf.mxu0
    %1608 = vmatprep.mubr.f32.mxu0 0.0
    %1609 = vmatmul.mubr.f32.gmra.mxu0 %v1528
    %v1610 = vpop.f32.mrf.mxu0
    %v1611 = vadd.f32 0.0, %v1610
    %v1612 = vpop.f32.mrf.mxu0
    %1613 = vdwg.mxu0
    %v1614 = vmul.f32 %v1596, 0.17677669
    %v1615 = vmul.f32 %v1601, 0.17677669
    %v1616 = vmul.f32 %v1606, 0.17677669
    %v1617 = vmul.f32 %v1611, 0.17677669
    %v1618 = vadd.f32 %v1614, %v1023
    %v1619 = vadd.f32 %v1615, %v1024
    %v1620 = vadd.f32 %v1616, %v1025
    %v1621 = vadd.f32 %v1617, %v1026
    %v1622 = vsel %vm1129, %v1618, -inf
    %1623 = vmax.xlane.f32.xlu0 %v1622
    %v1624 = vpop.xlane.xlu0 %1623
    %v1625 = vsel %vm1129, %v1619, -inf
    %1626 = vmax.xlane.f32.xlu0 %v1625
    %v1627 = vpop.xlane.xlu0 %1626
    %v1628 = vsel %vm1129, %v1620, -inf
    %1629 = vmax.xlane.f32.xlu0 %v1628
    %v1630 = vpop.xlane.xlu0 %1629
    %v1631 = vsel %vm1129, %v1621, -inf
    %1632 = vmax.xlane.f32.xlu0 %v1631
    %v1633 = vpop.xlane.xlu0 %1632
    %v1634 = vsub.f32 %v1618, %v1624
    %v1635 = vsub.f32 %v1619, %v1627
    %v1636 = vsub.f32 %v1620, %v1630
    %v1637 = vsub.f32 %v1621, %v1633
    %v1638 = vmul.f32 %v1634, 1.442695
    %v1639 = vpow.pop %v1638
    %v1640 = vmul.f32 %v1635, 1.442695
    %v1641 = vpow.pop %v1640
    %v1642 = vmul.f32 %v1636, 1.442695
    %v1643 = vpow.pop %v1642
    %v1644 = vmul.f32 %v1637, 1.442695
    %v1645 = vpow.pop %v1644
    %v1646 = vsel %vm1129, %v1639, 0.0
    %1647 = vadd.xlane.f32.xlu0 %v1646
    %v1648 = vpop.xlane.xlu0 %1647
    %v1649 = vsel %vm1129, %v1641, 0.0
    %1650 = vadd.xlane.f32.xlu0 %v1649
    %v1651 = vpop.xlane.xlu0 %1650
    %v1652 = vsel %vm1129, %v1643, 0.0
    %1653 = vadd.xlane.f32.xlu0 %v1652
    %v1654 = vpop.xlane.xlu0 %1653
    %v1655 = vsel %vm1129, %v1645, 0.0
    %1656 = vadd.xlane.f32.xlu0 %v1655
    %v1657 = vpop.xlane.xlu0 %1656
    %v1658 = vrcp.pop %v1648
    %v1659 = vmul.f32 %v1639, %v1658
    %v1660 = vrcp.pop %v1651
    %v1661 = vmul.f32 %v1641, %v1660
    %v1662 = vrcp.pop %v1654
    %v1663 = vmul.f32 %v1643, %v1662
    %v1664 = vrcp.pop %v1657
    %v1665 = vmul.f32 %v1645, %v1664
    %v1666 = vmul.f32 %v1005, %v1524
    %v1667 = vmul.f32 %v1010, %v1524
    %v1668 = vmul.f32 %v1015, %v1524
    %v1669 = vmul.f32 %v1020, %v1524
    %v1671 = vsel %vm1129, %v1659, 0
    %v1674 = vsel %vm1129, %v1661, 0
    %v1677 = vsel %vm1129, %v1663, 0
    %v1680 = vsel %vm1129, %v1665, 0
    %1682 = vmatprep.subr.mxu0 0.0
    %1683 = vmatpush1.msra.mxu0 0.0
    %1684 = vmatprep.subr.mxu0 0.0
    %1685 = vmatpush1.msra.mxu0 0.0
    %1686 = vmatprep.subr.mxu0 0.0
    %1687 = vmatpush1.msra.mxu0 0.0
    %1688 = vmatprep.subr.mxu0 0.0
    %1689 = vmatpush1.msra.mxu0 0.0
    %1690 = vmatprep.subr.mxu0 0.0
    %1691 = vmatpush1.msra.mxu0 0.0
    %1692 = vmatprep.subr.mxu0 0.0
    %1693 = vmatpush1.msra.mxu0 0.0
    %1694 = vmatprep.subr.mxu0 0.0
    %1695 = vmatpush1.msra.mxu0 0.0
    %1696 = vmatprep.subr.mxu0 0.0
    %1697 = vmatpush1.msra.mxu0 0.0
    %1698 = vmatprep.subr.mxu0 0.0
    %1699 = vmatpush1.msra.mxu0 0.0
    %1700 = vmatprep.subr.mxu0 0.0
    %1701 = vmatpush1.msra.mxu0 0.0
    %1702 = vmatprep.subr.mxu0 0.0
    %1703 = vmatpush1.msra.mxu0 0.0
    %1704 = vmatprep.subr.mxu0 0.0
    %1705 = vmatpush1.msra.mxu0 0.0
    %1706 = vmatprep.subr.mxu0 0.0
    %1707 = vmatpush1.msra.mxu0 %v1669
    %1708 = vmatprep.subr.mxu0 0.0
    %1709 = vmatpush1.msra.mxu0 %v1668
    %1710 = vmatprep.subr.mxu0 0.0
    %1711 = vmatpush1.msra.mxu0 %v1667
    %1712 = vmatprep.subr.mxu0 0.0
    %1713 = vmatpush1.msra.mxu0 %v1666
    %1714 = vmatprep.subr.mxu0 0.0
    %1715 = vmatpush2.msra.mxu0 0.0
    %1716 = vmatprep.subr.mxu0 0.0
    %1717 = vmatpush2.msra.mxu0 0.0
    %1718 = vmatprep.subr.mxu0 0.0
    %1719 = vmatpush2.msra.mxu0 0.0
    %1720 = vmatprep.subr.mxu0 0.0
    %1721 = vmatpush2.msra.mxu0 0.0
    %1722 = vmatprep.subr.mxu0 0.0
    %1723 = vmatpush2.msra.mxu0 0.0
    %1724 = vmatprep.subr.mxu0 0.0
    %1725 = vmatpush2.msra.mxu0 0.0
    %1726 = vmatprep.subr.mxu0 0.0
    %1727 = vmatpush2.msra.mxu0 0.0
    %1728 = vmatprep.subr.mxu0 0.0
    %1729 = vmatpush2.msra.mxu0 0.0
    %1730 = vmatprep.subr.mxu0 0.0
    %1731 = vmatpush2.msra.mxu0 0.0
    %1732 = vmatprep.subr.mxu0 0.0
    %1733 = vmatpush2.msra.mxu0 0.0
    %1734 = vmatprep.subr.mxu0 0.0
    %1735 = vmatpush2.msra.mxu0 0.0
    %1736 = vmatprep.subr.mxu0 0.0
    %1737 = vmatpush2.msra.mxu0 0.0
    %1738 = vmatprep.subr.mxu0 0.0
    %1739 = vmatpush2.msra.mxu0 0.0
    %1740 = vmatprep.subr.mxu0 0.0
    %1741 = vmatpush2.msra.mxu0 0.0
    %1742 = vmatprep.subr.mxu0 0.0
    %1743 = vmatpush2.msra.mxu0 0.0
    %1744 = vmatprep.subr.mxu0 0.0
    %1745 = vmatpush2.msra.mxu0 0.0
    %1746 = vmatprep.mubr.f32.mxu0 0.0
    %1747 = vmatmul.mubr.f32.gmra.mxu0 %v1671
    %v1748 = vpop.f32.mrf.mxu0
    %v1749 = vadd.f32 0.0, %v1748
    %v1750 = vpop.f32.mrf.mxu0
    %1751 = vmatprep.mubr.f32.mxu0 0.0
    %1752 = vmatmul.mubr.f32.gmra.mxu0 %v1674
    %v1753 = vpop.f32.mrf.mxu0
    %v1754 = vadd.f32 0.0, %v1753
    %v1755 = vpop.f32.mrf.mxu0
    %1756 = vmatprep.mubr.f32.mxu0 0.0
    %1757 = vmatmul.mubr.f32.gmra.mxu0 %v1677
    %v1758 = vpop.f32.mrf.mxu0
    %v1759 = vadd.f32 0.0, %v1758
    %v1760 = vpop.f32.mrf.mxu0
    %1761 = vmatprep.mubr.f32.mxu0 0.0
    %1762 = vmatmul.mubr.f32.gmra.mxu0 %v1680
    %v1763 = vpop.f32.mrf.mxu0
    %v1764 = vadd.f32 0.0, %v1763
    %v1765 = vpop.f32.mrf.mxu0
    %1766 = vdwg.mxu0
    %v1767 = vadd.f32 %v1503, %v1749
    %v1768 = vadd.f32 %v1508, %v1754
    %v1769 = vadd.f32 %v1513, %v1759
    %v1770 = vadd.f32 %v1518, %v1764
    %v1771 = vlaneseq
    %v1772 = vshrl.u32 %v1771, 7
    %v1773 = vsub.s32 3, %v1772
    %v1774 = vrot.slane %v1027, %v1773
    %v1775 = vmul.f32 %v632, %v1774
    %v1776 = vmul.f32 %v637, %v1774
    %v1777 = vmul.f32 %v642, %v1774
    %v1778 = vmul.f32 %v647, %v1774
    %1779 = vmatprep.subr.mxu0 0.0
    %1780 = vmatpush1.xpose.msra.mxu0 0.0
    %1781 = vmatprep.subr.mxu0 0.0
    %1782 = vmatpush1.xpose.msra.mxu0 0.0
    %1783 = vmatprep.subr.mxu0 0.0
    %1784 = vmatpush1.xpose.msra.mxu0 0.0
    %1785 = vmatprep.subr.mxu0 0.0
    %1786 = vmatpush1.xpose.msra.mxu0 0.0
    %1787 = vmatprep.subr.mxu0 0.0
    %1788 = vmatpush1.xpose.msra.mxu0 0.0
    %1789 = vmatprep.subr.mxu0 0.0
    %1790 = vmatpush1.xpose.msra.mxu0 0.0
    %1791 = vmatprep.subr.mxu0 0.0
    %1792 = vmatpush1.xpose.msra.mxu0 0.0
    %1793 = vmatprep.subr.mxu0 0.0
    %1794 = vmatpush1.xpose.msra.mxu0 0.0
    %1795 = vmatprep.subr.mxu0 0.0
    %1796 = vmatpush1.xpose.msra.mxu0 0.0
    %1797 = vmatprep.subr.mxu0 0.0
    %1798 = vmatpush1.xpose.msra.mxu0 0.0
    %1799 = vmatprep.subr.mxu0 0.0
    %1800 = vmatpush1.xpose.msra.mxu0 0.0
    %1801 = vmatprep.subr.mxu0 0.0
    %1802 = vmatpush1.xpose.msra.mxu0 0.0
    %1803 = vmatprep.subr.mxu0 0.0
    %1804 = vmatpush1.xpose.msra.mxu0 %v927
    %1805 = vmatprep.subr.mxu0 0.0
    %1806 = vmatpush1.xpose.msra.mxu0 %v922
    %1807 = vmatprep.subr.mxu0 0.0
    %1808 = vmatpush1.xpose.msra.mxu0 %v917
    %1809 = vmatprep.subr.mxu0 0.0
    %1810 = vmatpush1.xpose.msra.mxu0 %v912
    %1811 = vmatprep.subr.mxu0 0.0
    %1812 = vmatpush2.xpose.msra.mxu0 0.0
    %1813 = vmatprep.subr.mxu0 0.0
    %1814 = vmatpush2.xpose.msra.mxu0 0.0
    %1815 = vmatprep.subr.mxu0 0.0
    %1816 = vmatpush2.xpose.msra.mxu0 0.0
    %1817 = vmatprep.subr.mxu0 0.0
    %1818 = vmatpush2.xpose.msra.mxu0 0.0
    %1819 = vmatprep.subr.mxu0 0.0
    %1820 = vmatpush2.xpose.msra.mxu0 0.0
    %1821 = vmatprep.subr.mxu0 0.0
    %1822 = vmatpush2.xpose.msra.mxu0 0.0
    %1823 = vmatprep.subr.mxu0 0.0
    %1824 = vmatpush2.xpose.msra.mxu0 0.0
    %1825 = vmatprep.subr.mxu0 0.0
    %1826 = vmatpush2.xpose.msra.mxu0 0.0
    %1827 = vmatprep.subr.mxu0 0.0
    %1828 = vmatpush2.xpose.msra.mxu0 0.0
    %1829 = vmatprep.subr.mxu0 0.0
    %1830 = vmatpush2.xpose.msra.mxu0 0.0
    %1831 = vmatprep.subr.mxu0 0.0
    %1832 = vmatpush2.xpose.msra.mxu0 0.0
    %1833 = vmatprep.subr.mxu0 0.0
    %1834 = vmatpush2.xpose.msra.mxu0 0.0
    %1835 = vmatprep.subr.mxu0 0.0
    %1836 = vmatpush2.xpose.msra.mxu0 0.0
    %1837 = vmatprep.subr.mxu0 0.0
    %1838 = vmatpush2.xpose.msra.mxu0 0.0
    %1839 = vmatprep.subr.mxu0 0.0
    %1840 = vmatpush2.xpose.msra.mxu0 0.0
    %1841 = vmatprep.subr.mxu0 0.0
    %1842 = vmatpush2.xpose.msra.mxu0 0.0
    %1843 = vmatprep.mubr.f32.mxu0 0.0
    %1844 = vmatmul.mubr.f32.gmra.mxu0 %v1775
    %v1845 = vpop.f32.mrf.mxu0
    %v1846 = vadd.f32 0.0, %v1845
    %v1847 = vpop.f32.mrf.mxu0
    %1848 = vmatprep.mubr.f32.mxu0 0.0
    %1849 = vmatmul.mubr.f32.gmra.mxu0 %v1776
    %v1850 = vpop.f32.mrf.mxu0
    %v1851 = vadd.f32 0.0, %v1850
    %v1852 = vpop.f32.mrf.mxu0
    %1853 = vmatprep.mubr.f32.mxu0 0.0
    %1854 = vmatmul.mubr.f32.gmra.mxu0 %v1777
    %v1855 = vpop.f32.mrf.mxu0
    %v1856 = vadd.f32 0.0, %v1855
    %v1857 = vpop.f32.mrf.mxu0
    %1858 = vmatprep.mubr.f32.mxu0 0.0
    %1859 = vmatmul.mubr.f32.gmra.mxu0 %v1778
    %v1860 = vpop.f32.mrf.mxu0
    %v1861 = vadd.f32 0.0, %v1860
    %v1862 = vpop.f32.mrf.mxu0
    %1863 = vdwg.mxu0
    %v1864 = vmul.f32 %v1846, 0.17677669
    %v1865 = vmul.f32 %v1851, 0.17677669
    %v1866 = vmul.f32 %v1856, 0.17677669
    %v1867 = vmul.f32 %v1861, 0.17677669
    %v1868 = vadd.f32 %v1864, %v1023
    %v1869 = vadd.f32 %v1865, %v1024
    %v1870 = vadd.f32 %v1866, %v1025
    %v1871 = vadd.f32 %v1867, %v1026
    %v1872 = vsel %vm1129, %v1868, -inf
    %1873 = vmax.xlane.f32.xlu0 %v1872
    %v1874 = vpop.xlane.xlu0 %1873
    %v1875 = vsel %vm1129, %v1869, -inf
    %1876 = vmax.xlane.f32.xlu0 %v1875
    %v1877 = vpop.xlane.xlu0 %1876
    %v1878 = vsel %vm1129, %v1870, -inf
    %1879 = vmax.xlane.f32.xlu0 %v1878
    %v1880 = vpop.xlane.xlu0 %1879
    %v1881 = vsel %vm1129, %v1871, -inf
    %1882 = vmax.xlane.f32.xlu0 %v1881
    %v1883 = vpop.xlane.xlu0 %1882
    %v1884 = vsub.f32 %v1868, %v1874
    %v1885 = vsub.f32 %v1869, %v1877
    %v1886 = vsub.f32 %v1870, %v1880
    %v1887 = vsub.f32 %v1871, %v1883
    %v1888 = vmul.f32 %v1884, 1.442695
    %v1889 = vpow.pop %v1888
    %v1890 = vmul.f32 %v1885, 1.442695
    %v1891 = vpow.pop %v1890
    %v1892 = vmul.f32 %v1886, 1.442695
    %v1893 = vpow.pop %v1892
    %v1894 = vmul.f32 %v1887, 1.442695
    %v1895 = vpow.pop %v1894
    %v1896 = vsel %vm1129, %v1889, 0.0
    %1897 = vadd.xlane.f32.xlu0 %v1896
    %v1898 = vpop.xlane.xlu0 %1897
    %v1899 = vsel %vm1129, %v1891, 0.0
    %1900 = vadd.xlane.f32.xlu0 %v1899
    %v1901 = vpop.xlane.xlu0 %1900
    %v1902 = vsel %vm1129, %v1893, 0.0
    %1903 = vadd.xlane.f32.xlu0 %v1902
    %v1904 = vpop.xlane.xlu0 %1903
    %v1905 = vsel %vm1129, %v1895, 0.0
    %1906 = vadd.xlane.f32.xlu0 %v1905
    %v1907 = vpop.xlane.xlu0 %1906
    %v1908 = vrcp.pop %v1898
    %v1909 = vmul.f32 %v1889, %v1908
    %v1910 = vrcp.pop %v1901
    %v1911 = vmul.f32 %v1891, %v1910
    %v1912 = vrcp.pop %v1904
    %v1913 = vmul.f32 %v1893, %v1912
    %v1914 = vrcp.pop %v1907
    %v1915 = vmul.f32 %v1895, %v1914
    %v1916 = vmul.f32 %v1005, %v1774
    %v1917 = vmul.f32 %v1010, %v1774
    %v1918 = vmul.f32 %v1015, %v1774
    %v1919 = vmul.f32 %v1020, %v1774
    %v1921 = vsel %vm1129, %v1909, 0
    %v1924 = vsel %vm1129, %v1911, 0
    %v1927 = vsel %vm1129, %v1913, 0
    %v1930 = vsel %vm1129, %v1915, 0
    %1932 = vmatprep.subr.mxu0 0.0
    %1933 = vmatpush1.msra.mxu0 0.0
    %1934 = vmatprep.subr.mxu0 0.0
    %1935 = vmatpush1.msra.mxu0 0.0
    %1936 = vmatprep.subr.mxu0 0.0
    %1937 = vmatpush1.msra.mxu0 0.0
    %1938 = vmatprep.subr.mxu0 0.0
    %1939 = vmatpush1.msra.mxu0 0.0
    %1940 = vmatprep.subr.mxu0 0.0
    %1941 = vmatpush1.msra.mxu0 0.0
    %1942 = vmatprep.subr.mxu0 0.0
    %1943 = vmatpush1.msra.mxu0 0.0
    %1944 = vmatprep.subr.mxu0 0.0
    %1945 = vmatpush1.msra.mxu0 0.0
    %1946 = vmatprep.subr.mxu0 0.0
    %1947 = vmatpush1.msra.mxu0 0.0
    %1948 = vmatprep.subr.mxu0 0.0
    %1949 = vmatpush1.msra.mxu0 0.0
    %1950 = vmatprep.subr.mxu0 0.0
    %1951 = vmatpush1.msra.mxu0 0.0
    %1952 = vmatprep.subr.mxu0 0.0
    %1953 = vmatpush1.msra.mxu0 0.0
    %1954 = vmatprep.subr.mxu0 0.0
    %1955 = vmatpush1.msra.mxu0 0.0
    %1956 = vmatprep.subr.mxu0 0.0
    %1957 = vmatpush1.msra.mxu0 %v1919
    %1958 = vmatprep.subr.mxu0 0.0
    %1959 = vmatpush1.msra.mxu0 %v1918
    %1960 = vmatprep.subr.mxu0 0.0
    %1961 = vmatpush1.msra.mxu0 %v1917
    %1962 = vmatprep.subr.mxu0 0.0
    %1963 = vmatpush1.msra.mxu0 %v1916
    %1964 = vmatprep.subr.mxu0 0.0
    %1965 = vmatpush2.msra.mxu0 0.0
    %1966 = vmatprep.subr.mxu0 0.0
    %1967 = vmatpush2.msra.mxu0 0.0
    %1968 = vmatprep.subr.mxu0 0.0
    %1969 = vmatpush2.msra.mxu0 0.0
    %1970 = vmatprep.subr.mxu0 0.0
    %1971 = vmatpush2.msra.mxu0 0.0
    %1972 = vmatprep.subr.mxu0 0.0
    %1973 = vmatpush2.msra.mxu0 0.0
    %1974 = vmatprep.subr.mxu0 0.0
    %1975 = vmatpush2.msra.mxu0 0.0
    %1976 = vmatprep.subr.mxu0 0.0
    %1977 = vmatpush2.msra.mxu0 0.0
    %1978 = vmatprep.subr.mxu0 0.0
    %1979 = vmatpush2.msra.mxu0 0.0
    %1980 = vmatprep.subr.mxu0 0.0
    %1981 = vmatpush2.msra.mxu0 0.0
    %1982 = vmatprep.subr.mxu0 0.0
    %1983 = vmatpush2.msra.mxu0 0.0
    %1984 = vmatprep.subr.mxu0 0.0
    %1985 = vmatpush2.msra.mxu0 0.0
    %1986 = vmatprep.subr.mxu0 0.0
    %1987 = vmatpush2.msra.mxu0 0.0
    %1988 = vmatprep.subr.mxu0 0.0
    %1989 = vmatpush2.msra.mxu0 0.0
    %1990 = vmatprep.subr.mxu0 0.0
    %1991 = vmatpush2.msra.mxu0 0.0
    %1992 = vmatprep.subr.mxu0 0.0
    %1993 = vmatpush2.msra.mxu0 0.0
    %1994 = vmatprep.subr.mxu0 0.0
    %1995 = vmatpush2.msra.mxu0 0.0
    %1996 = vmatprep.mubr.f32.mxu0 0.0
    %1997 = vmatmul.mubr.f32.gmra.mxu0 %v1921
    %v1998 = vpop.f32.mrf.mxu0
    %v1999 = vadd.f32 0.0, %v1998
    %v2000 = vpop.f32.mrf.mxu0
    %2001 = vmatprep.mubr.f32.mxu0 0.0
    %2002 = vmatmul.mubr.f32.gmra.mxu0 %v1924
    %v2003 = vpop.f32.mrf.mxu0
    %v2004 = vadd.f32 0.0, %v2003
    %v2005 = vpop.f32.mrf.mxu0
    %2006 = vmatprep.mubr.f32.mxu0 0.0
    %2007 = vmatmul.mubr.f32.gmra.mxu0 %v1927
    %v2008 = vpop.f32.mrf.mxu0
    %v2009 = vadd.f32 0.0, %v2008
    %v2010 = vpop.f32.mrf.mxu0
    %2011 = vmatprep.mubr.f32.mxu0 0.0
    %2012 = vmatmul.mubr.f32.gmra.mxu0 %v1930
    %v2013 = vpop.f32.mrf.mxu0
    %v2014 = vadd.f32 0.0, %v2013
    %v2015 = vpop.f32.mrf.mxu0
    %2016 = vdwg.mxu0
    %v2017 = vadd.f32 %v1767, %v1999
    %v2018 = vadd.f32 %v1768, %v2004
    %v2019 = vadd.f32 %v1769, %v2009
    %v2020 = vadd.f32 %v1770, %v2014
    %v2021 = vld [vmem:[#allocation19] sm:$0xff]
    %v2022 = vld [vmem:[#allocation19 + $0x8] sm:$0xff]
    %v2023 = vld [vmem:[#allocation19 + $0x10] sm:$0xff]
    %v2024 = vld [vmem:[#allocation19 + $0x18] sm:$0xff]
    %v2025 = vld [vmem:[#allocation19 + $0x20] sm:$0xff]
    %v2026 = vld [vmem:[#allocation19 + $0x28] sm:$0xff]
    %v2027 = vld [vmem:[#allocation19 + $0x30] sm:$0xff]
    %v2028 = vld [vmem:[#allocation19 + $0x38] sm:$0xff]
    %v2029 = vld [vmem:[#allocation19 + $0x40] sm:$0xff]
    %v2030 = vld [vmem:[#allocation19 + $0x48] sm:$0xff]
    %v2031 = vld [vmem:[#allocation19 + $0x50] sm:$0xff]
    %v2032 = vld [vmem:[#allocation19 + $0x58] sm:$0xff]
    %v2033 = vld [vmem:[#allocation19 + $0x60] sm:$0xff]
    %v2034 = vld [vmem:[#allocation19 + $0x68] sm:$0xff]
    %v2035 = vld [vmem:[#allocation19 + $0x70] sm:$0xff]
    %v2036 = vld [vmem:[#allocation19 + $0x78] sm:$0xff]
    %2037 = vmatprep.subr.mxu0 0.0
    %2038 = vmatpush1.msra.mxu0 %v2036
    %2039 = vmatprep.subr.mxu0 0.0
    %2040 = vmatpush1.msra.mxu0 %v2035
    %2041 = vmatprep.subr.mxu0 0.0
    %2042 = vmatpush1.msra.mxu0 %v2034
    %2043 = vmatprep.subr.mxu0 0.0
    %2044 = vmatpush1.msra.mxu0 %v2033
    %2045 = vmatprep.subr.mxu0 0.0
    %2046 = vmatpush1.msra.mxu0 %v2032
    %2047 = vmatprep.subr.mxu0 0.0
    %2048 = vmatpush1.msra.mxu0 %v2031
    %2049 = vmatprep.subr.mxu0 0.0
    %2050 = vmatpush1.msra.mxu0 %v2030
    %2051 = vmatprep.subr.mxu0 0.0
    %2052 = vmatpush1.msra.mxu0 %v2029
    %2053 = vmatprep.subr.mxu0 0.0
    %2054 = vmatpush1.msra.mxu0 %v2028
    %2055 = vmatprep.subr.mxu0 0.0
    %2056 = vmatpush1.msra.mxu0 %v2027
    %2057 = vmatprep.subr.mxu0 0.0
    %2058 = vmatpush1.msra.mxu0 %v2026
    %2059 = vmatprep.subr.mxu0 0.0
    %2060 = vmatpush1.msra.mxu0 %v2025
    %2061 = vmatprep.subr.mxu0 0.0
    %2062 = vmatpush1.msra.mxu0 %v2024
    %2063 = vmatprep.subr.mxu0 0.0
    %2064 = vmatpush1.msra.mxu0 %v2023
    %2065 = vmatprep.subr.mxu0 0.0
    %2066 = vmatpush1.msra.mxu0 %v2022
    %2067 = vmatprep.subr.mxu0 0.0
    %2068 = vmatpush1.msra.mxu0 %v2021
    %2069 = vmatprep.subr.mxu0 0.0
    %2070 = vmatpush2.msra.mxu0 0.0
    %2071 = vmatprep.subr.mxu0 0.0
    %2072 = vmatpush2.msra.mxu0 0.0
    %2073 = vmatprep.subr.mxu0 0.0
    %2074 = vmatpush2.msra.mxu0 0.0
    %2075 = vmatprep.subr.mxu0 0.0
    %2076 = vmatpush2.msra.mxu0 0.0
    %2077 = vmatprep.subr.mxu0 0.0
    %2078 = vmatpush2.msra.mxu0 0.0
    %2079 = vmatprep.subr.mxu0 0.0
    %2080 = vmatpush2.msra.mxu0 0.0
    %2081 = vmatprep.subr.mxu0 0.0
    %2082 = vmatpush2.msra.mxu0 0.0
    %2083 = vmatprep.subr.mxu0 0.0
    %2084 = vmatpush2.msra.mxu0 0.0
    %2085 = vmatprep.subr.mxu0 0.0
    %2086 = vmatpush2.msra.mxu0 0.0
    %2087 = vmatprep.subr.mxu0 0.0
    %2088 = vmatpush2.msra.mxu0 0.0
    %2089 = vmatprep.subr.mxu0 0.0
    %2090 = vmatpush2.msra.mxu0 0.0
    %2091 = vmatprep.subr.mxu0 0.0
    %2092 = vmatpush2.msra.mxu0 0.0
    %2093 = vmatprep.subr.mxu0 0.0
    %2094 = vmatpush2.msra.mxu0 0.0
    %2095 = vmatprep.subr.mxu0 0.0
    %2096 = vmatpush2.msra.mxu0 0.0
    %2097 = vmatprep.subr.mxu0 0.0
    %2098 = vmatpush2.msra.mxu0 0.0
    %2099 = vmatprep.subr.mxu0 0.0
    %2100 = vmatpush2.msra.mxu0 0.0
    %2101 = vmatprep.mubr.f32.mxu0 0.0
    %2102 = vmatmul.mubr.f32.gmra.mxu0 %v2017
    %v2103 = vpop.f32.mrf.mxu0
    %v2104 = vadd.f32 0.0, %v2103
    %v2105 = vpop.f32.mrf.mxu0
    %2106 = vmatprep.mubr.f32.mxu0 0.0
    %2107 = vmatmul.mubr.f32.gmra.mxu0 %v2018
    %v2108 = vpop.f32.mrf.mxu0
    %v2109 = vadd.f32 0.0, %v2108
    %v2110 = vpop.f32.mrf.mxu0
    %2111 = vmatprep.mubr.f32.mxu0 0.0
    %2112 = vmatmul.mubr.f32.gmra.mxu0 %v2019
    %v2113 = vpop.f32.mrf.mxu0
    %v2114 = vadd.f32 0.0, %v2113
    %v2115 = vpop.f32.mrf.mxu0
    %2116 = vmatprep.mubr.f32.mxu0 0.0
    %2117 = vmatmul.mubr.f32.gmra.mxu0 %v2020
    %v2118 = vpop.f32.mrf.mxu0
    %v2119 = vadd.f32 0.0, %v2118
    %v2120 = vpop.f32.mrf.mxu0
    %2121 = vdwg.mxu0
    %v2122 = vadd.f32 %v297, %v2104
    %v2123 = vadd.f32 %v298, %v2109
    %v2124 = vadd.f32 %v299, %v2114
    %v2125 = vadd.f32 %v300, %v2119
    %v2126 = vld [vmem:[#allocation20] sm:$0x1]
    %v2127 = vld [vmem:[#allocation22] sm:$0x1]
    %2128 = vadd.xlane.f32.xlu0 %v2122
    %v2129 = vpop.xlane.xlu0 %2128
    %2130 = vadd.xlane.f32.xlu0 %v2123
    %v2131 = vpop.xlane.xlu0 %2130
    %2132 = vadd.xlane.f32.xlu0 %v2124
    %v2133 = vpop.xlane.xlu0 %2132
    %2134 = vadd.xlane.f32.xlu0 %v2125
    %v2135 = vpop.xlane.xlu0 %2134
    %v2136 = vmul.f32 %v2129, %v311
    %v2137 = vmul.f32 %v2131, %v311
    %v2138 = vmul.f32 %v2133, %v311
    %v2139 = vmul.f32 %v2135, %v311
    %v2140 = vsub.f32 %v2122, %v2136
    %v2141 = vsub.f32 %v2123, %v2137
    %v2142 = vsub.f32 %v2124, %v2138
    %v2143 = vsub.f32 %v2125, %v2139
    %v2144 = vmul.f32 %v2140, %v2140
    %v2145 = vmul.f32 %v2141, %v2141
    %v2146 = vmul.f32 %v2142, %v2142
    %v2147 = vmul.f32 %v2143, %v2143
    %2148 = vadd.xlane.f32.xlu0 %v2144
    %v2149 = vpop.xlane.xlu0 %2148
    %2150 = vadd.xlane.f32.xlu0 %v2145
    %v2151 = vpop.xlane.xlu0 %2150
    %2152 = vadd.xlane.f32.xlu0 %v2146
    %v2153 = vpop.xlane.xlu0 %2152
    %2154 = vadd.xlane.f32.xlu0 %v2147
    %v2155 = vpop.xlane.xlu0 %2154
    %v2156 = vmul.f32 %v2149, %v311
    %v2157 = vmul.f32 %v2151, %v311
    %v2158 = vmul.f32 %v2153, %v311
    %v2159 = vmul.f32 %v2155, %v311
    %v2160 = vadd.f32 %v2156, 1e-05
    %v2161 = vadd.f32 %v2157, 1e-05
    %v2162 = vadd.f32 %v2158, 1e-05
    %v2163 = vadd.f32 %v2159, 1e-05
    %v2164 = vrsqrt.pop %v2160
    %v2165 = vrsqrt.pop %v2161
    %v2166 = vrsqrt.pop %v2162
    %v2167 = vrsqrt.pop %v2163
    %v2168 = vmul.f32 %v2140, %v2164
    %v2169 = vmul.f32 %v2141, %v2165
    %v2170 = vmul.f32 %v2142, %v2166
    %v2171 = vmul.f32 %v2143, %v2167
    %v2173 = vlaneseq
    %v2174 = vshrl.u32 %v2173, 7
    %v2175 = vsub.s32 0, %v2174
    %v2176 = vrot.slane %v2126, %v2175
    %v2178 = vmul.f32 %v2168, %v2176
    %v2179 = vmul.f32 %v2169, %v2176
    %v2180 = vmul.f32 %v2170, %v2176
    %v2181 = vmul.f32 %v2171, %v2176
    %v2183 = vlaneseq
    %v2184 = vshrl.u32 %v2183, 7
    %v2185 = vsub.s32 0, %v2184
    %v2186 = vrot.slane %v2127, %v2185
    %v2188 = vadd.f32 %v2178, %v2186
    %v2189 = vadd.f32 %v2179, %v2186
    %v2190 = vadd.f32 %v2180, %v2186
    %v2191 = vadd.f32 %v2181, %v2186
    %v2192 = vld [vmem:[%s17] sm:$0xff]
    %v2193 = vld [vmem:[%s17 + $0x8] sm:$0xff]
    %v2194 = vld [vmem:[%s17 + $0x10] sm:$0xff]
    %v2195 = vld [vmem:[%s17 + $0x18] sm:$0xff]
    %v2196 = vld [vmem:[%s17 + $0x20] sm:$0xff]
    %v2197 = vld [vmem:[%s17 + $0x28] sm:$0xff]
    %v2198 = vld [vmem:[%s17 + $0x30] sm:$0xff]
    %v2199 = vld [vmem:[%s17 + $0x38] sm:$0xff]
    %v2200 = vld [vmem:[%s17 + $0x40] sm:$0xff]
    %v2201 = vld [vmem:[%s17 + $0x48] sm:$0xff]
    %v2202 = vld [vmem:[%s17 + $0x50] sm:$0xff]
    %v2203 = vld [vmem:[%s17 + $0x58] sm:$0xff]
    %v2204 = vld [vmem:[%s17 + $0x60] sm:$0xff]
    %v2205 = vld [vmem:[%s17 + $0x68] sm:$0xff]
    %v2206 = vld [vmem:[%s17 + $0x70] sm:$0xff]
    %v2207 = vld [vmem:[%s17 + $0x78] sm:$0xff]
    %2208 = vmatprep.subr.mxu0 0.0
    %2209 = vmatpush1.msra.mxu0 %v2207
    %2210 = vmatprep.subr.mxu0 0.0
    %2211 = vmatpush1.msra.mxu0 %v2206
    %2212 = vmatprep.subr.mxu0 0.0
    %2213 = vmatpush1.msra.mxu0 %v2205
    %2214 = vmatprep.subr.mxu0 0.0
    %2215 = vmatpush1.msra.mxu0 %v2204
    %2216 = vmatprep.subr.mxu0 0.0
    %2217 = vmatpush1.msra.mxu0 %v2203
    %2218 = vmatprep.subr.mxu0 0.0
    %2219 = vmatpush1.msra.mxu0 %v2202
    %2220 = vmatprep.subr.mxu0 0.0
    %2221 = vmatpush1.msra.mxu0 %v2201
    %2222 = vmatprep.subr.mxu0 0.0
    %2223 = vmatpush1.msra.mxu0 %v2200
    %2224 = vmatprep.subr.mxu0 0.0
    %2225 = vmatpush1.msra.mxu0 %v2199
    %2226 = vmatprep.subr.mxu0 0.0
    %2227 = vmatpush1.msra.mxu0 %v2198
    %2228 = vmatprep.subr.mxu0 0.0
    %2229 = vmatpush1.msra.mxu0 %v2197
    %2230 = vmatprep.subr.mxu0 0.0
    %2231 = vmatpush1.msra.mxu0 %v2196
    %2232 = vmatprep.subr.mxu0 0.0
    %2233 = vmatpush1.msra.mxu0 %v2195
    %2234 = vmatprep.subr.mxu0 0.0
    %2235 = vmatpush1.msra.mxu0 %v2194
    %2236 = vmatprep.subr.mxu0 0.0
    %2237 = vmatpush1.msra.mxu0 %v2193
    %2238 = vmatprep.subr.mxu0 0.0
    %2239 = vmatpush1.msra.mxu0 %v2192
    %2240 = vmatprep.subr.mxu0 0.0
    %2241 = vmatpush2.msra.mxu0 0.0
    %2242 = vmatprep.subr.mxu0 0.0
    %2243 = vmatpush2.msra.mxu0 0.0
    %2244 = vmatprep.subr.mxu0 0.0
    %2245 = vmatpush2.msra.mxu0 0.0
    %2246 = vmatprep.subr.mxu0 0.0
    %2247 = vmatpush2.msra.mxu0 0.0
    %2248 = vmatprep.subr.mxu0 0.0
    %2249 = vmatpush2.msra.mxu0 0.0
    %2250 = vmatprep.subr.mxu0 0.0
    %2251 = vmatpush2.msra.mxu0 0.0
    %2252 = vmatprep.subr.mxu0 0.0
    %2253 = vmatpush2.msra.mxu0 0.0
    %2254 = vmatprep.subr.mxu0 0.0
    %2255 = vmatpush2.msra.mxu0 0.0
    %2256 = vmatprep.subr.mxu0 0.0
    %2257 = vmatpush2.msra.mxu0 0.0
    %2258 = vmatprep.subr.mxu0 0.0
    %2259 = vmatpush2.msra.mxu0 0.0
    %2260 = vmatprep.subr.mxu0 0.0
    %2261 = vmatpush2.msra.mxu0 0.0
    %2262 = vmatprep.subr.mxu0 0.0
    %2263 = vmatpush2.msra.mxu0 0.0
    %2264 = vmatprep.subr.mxu0 0.0
    %2265 = vmatpush2.msra.mxu0 0.0
    %2266 = vmatprep.subr.mxu0 0.0
    %2267 = vmatpush2.msra.mxu0 0.0
    %2268 = vmatprep.subr.mxu0 0.0
    %2269 = vmatpush2.msra.mxu0 0.0
    %2270 = vmatprep.subr.mxu0 0.0
    %2271 = vmatpush2.msra.mxu0 0.0
    %2272 = vmatprep.mubr.f32.mxu0 0.0
    %2273 = vmatmul.mubr.f32.gmra.mxu0 %v2188
    %v2274 = vpop.f32.mrf.mxu0
    %v2275 = vadd.f32 0.0, %v2274
    %v2276 = vpop.f32.mrf.mxu0
    %2277 = vmatprep.mubr.f32.mxu0 0.0
    %2278 = vmatmul.mubr.f32.gmra.mxu0 %v2189
    %v2279 = vpop.f32.mrf.mxu0
    %v2280 = vadd.f32 0.0, %v2279
    %v2281 = vpop.f32.mrf.mxu0
    %2282 = vmatprep.mubr.f32.mxu0 0.0
    %2283 = vmatmul.mubr.f32.gmra.mxu0 %v2190
    %v2284 = vpop.f32.mrf.mxu0
    %v2285 = vadd.f32 0.0, %v2284
    %v2286 = vpop.f32.mrf.mxu0
    %2287 = vmatprep.mubr.f32.mxu0 0.0
    %2288 = vmatmul.mubr.f32.gmra.mxu0 %v2191
    %v2289 = vpop.f32.mrf.mxu0
    %v2290 = vadd.f32 0.0, %v2289
    %v2291 = vpop.f32.mrf.mxu0
    %2292 = vdwg.mxu0
    %vm2293 = vcmask 64512
    %v2294 = vsel %vm2293, %v2275, -inf
    %2295 = vmax.xlane.f32.xlu0 %v2294
    %v2296 = vpop.xlane.xlu0 %2295
    %v2297 = vsel %vm2293, %v2280, -inf
    %2298 = vmax.xlane.f32.xlu0 %v2297
    %v2299 = vpop.xlane.xlu0 %2298
    %v2300 = vsel %vm2293, %v2285, -inf
    %2301 = vmax.xlane.f32.xlu0 %v2300
    %v2302 = vpop.xlane.xlu0 %2301
    %v2303 = vsel %vm2293, %v2290, -inf
    %2304 = vmax.xlane.f32.xlu0 %v2303
    %v2305 = vpop.xlane.xlu0 %2304
    %v2306 = vsub.f32 %v2275, %v2296
    %v2307 = vsub.f32 %v2280, %v2299
    %v2308 = vsub.f32 %v2285, %v2302
    %v2309 = vsub.f32 %v2290, %v2305
    %v2310 = vmul.f32 %v2306, 1.442695
    %v2311 = vpow.pop %v2310
    %v2312 = vmul.f32 %v2307, 1.442695
    %v2313 = vpow.pop %v2312
    %v2314 = vmul.f32 %v2308, 1.442695
    %v2315 = vpow.pop %v2314
    %v2316 = vmul.f32 %v2309, 1.442695
    %v2317 = vpow.pop %v2316
    %v2318 = vsel %vm2293, %v2311, 0.0
    %2319 = vadd.xlane.f32.xlu0 %v2318
    %v2320 = vpop.xlane.xlu0 %2319
    %v2321 = vsel %vm2293, %v2313, 0.0
    %2322 = vadd.xlane.f32.xlu0 %v2321
    %v2323 = vpop.xlane.xlu0 %2322
    %v2324 = vsel %vm2293, %v2315, 0.0
    %2325 = vadd.xlane.f32.xlu0 %v2324
    %v2326 = vpop.xlane.xlu0 %2325
    %v2327 = vsel %vm2293, %v2317, 0.0
    %2328 = vadd.xlane.f32.xlu0 %v2327
    %v2329 = vpop.xlane.xlu0 %2328
    %v2330 = vrcp.pop %v2320
    %v2331 = vmul.f32 %v2311, %v2330
    %v2332 = vrcp.pop %v2323
    %v2333 = vmul.f32 %v2313, %v2332
    %v2334 = vrcp.pop %v2326
    %v2335 = vmul.f32 %v2315, %v2334
    %v2336 = vrcp.pop %v2329
    %v2337 = vmul.f32 %v2317, %v2336
    %v2338 = vlaneseq
    %v2339 = vand.u32 %v2338, 127
    %v2340 = vsel %vm2293, %v2331, -inf
    %2341 = vmax.xlane.f32.xlu0 %v2340
    %v2342 = vpop.xlane.xlu0 %2341
    %v2343 = vsel %vm2293, %v2333, -inf
    %2344 = vmax.xlane.f32.xlu0 %v2343
    %v2345 = vpop.xlane.xlu0 %2344
    %v2346 = vsel %vm2293, %v2335, -inf
    %2347 = vmax.xlane.f32.xlu0 %v2346
    %v2348 = vpop.xlane.xlu0 %2347
    %v2349 = vsel %vm2293, %v2337, -inf
    %2350 = vmax.xlane.f32.xlu0 %v2349
    %v2351 = vpop.xlane.xlu0 %2350
    %vm2352 = vcmp.ge.f32.partialorder %v2331, %v2342
    %vm2353 = vcmp.ge.f32.partialorder %v2333, %v2345
    %vm2354 = vcmp.ge.f32.partialorder %v2335, %v2348
    %vm2355 = vcmp.ge.f32.partialorder %v2337, %v2351
    %v2356 = vsel %vm2352, %v2339, 8
    %v2357 = vsel %vm2353, %v2339, 8
    %v2358 = vsel %vm2354, %v2339, 8
    %v2359 = vsel %vm2355, %v2339, 8
    %v2360 = vsel %vm2293, %v2356, 2147483647
    %v2361 = vand.u32 %v2360, 65535
    %v2362 = vshra.s32 %v2360, 16
    %v2363 = vcvt.s32.f32 %v2361
    %v2364 = vcvt.s32.f32 %v2362
    %2365 = vmin.xlane.f32.xlu0 %v2364
    %v2366 = vpop.xlane.xlu0 %2365
    %vm2367 = vcmp.eq.f32.partialorder %v2364, %v2366
    %v2368 = vsel %vm2367, %v2363, inf
    %2369 = vmin.xlane.f32.xlu0 %v2368
    %v2370 = vpop.xlane.xlu0 %2369
    %v2371 = vcvt.f32.s32 %v2370
    %v2372 = vcvt.f32.s32 %v2366
    %v2373 = vshll.u32 %v2372, 16
    %v2374 = vadd.s32 %v2373, %v2371
    %v2375 = vsel %vm2293, %v2357, 2147483647
    %v2376 = vand.u32 %v2375, 65535
    %v2377 = vshra.s32 %v2375, 16
    %v2378 = vcvt.s32.f32 %v2376
    %v2379 = vcvt.s32.f32 %v2377
    %2380 = vmin.xlane.f32.xlu0 %v2379
    %v2381 = vpop.xlane.xlu0 %2380
    %vm2382 = vcmp.eq.f32.partialorder %v2379, %v2381
    %v2383 = vsel %vm2382, %v2378, inf
    %2384 = vmin.xlane.f32.xlu0 %v2383
    %v2385 = vpop.xlane.xlu0 %2384
    %v2386 = vcvt.f32.s32 %v2385
    %v2387 = vcvt.f32.s32 %v2381
    %v2388 = vshll.u32 %v2387, 16
    %v2389 = vadd.s32 %v2388, %v2386
    %v2390 = vsel %vm2293, %v2358, 2147483647
    %v2391 = vand.u32 %v2390, 65535
    %v2392 = vshra.s32 %v2390, 16
    %v2393 = vcvt.s32.f32 %v2391
    %v2394 = vcvt.s32.f32 %v2392
    %2395 = vmin.xlane.f32.xlu0 %v2394
    %v2396 = vpop.xlane.xlu0 %2395
    %vm2397 = vcmp.eq.f32.partialorder %v2394, %v2396
    %v2398 = vsel %vm2397, %v2393, inf
    %2399 = vmin.xlane.f32.xlu0 %v2398
    %v2400 = vpop.xlane.xlu0 %2399
    %v2401 = vcvt.f32.s32 %v2400
    %v2402 = vcvt.f32.s32 %v2396
    %v2403 = vshll.u32 %v2402, 16
    %v2404 = vadd.s32 %v2403, %v2401
    %v2405 = vsel %vm2293, %v2359, 2147483647
    %v2406 = vand.u32 %v2405, 65535
    %v2407 = vshra.s32 %v2405, 16
    %v2408 = vcvt.s32.f32 %v2406
    %v2409 = vcvt.s32.f32 %v2407
    %2410 = vmin.xlane.f32.xlu0 %v2409
    %v2411 = vpop.xlane.xlu0 %2410
    %vm2412 = vcmp.eq.f32.partialorder %v2409, %v2411
    %v2413 = vsel %vm2412, %v2408, inf
    %2414 = vmin.xlane.f32.xlu0 %v2413
    %v2415 = vpop.xlane.xlu0 %2414
    %v2416 = vcvt.f32.s32 %v2415
    %v2417 = vcvt.f32.s32 %v2411
    %v2418 = vshll.u32 %v2417, 16
    %v2419 = vadd.s32 %v2418, %v2416
    %vm2420 = vcmp.eq.s32.totalorder %v2339, %v2374
    %vm2421 = vcmp.eq.s32.totalorder %v2339, %v2389
    %vm2422 = vcmp.eq.s32.totalorder %v2339, %v2404
    %vm2423 = vcmp.eq.s32.totalorder %v2339, %v2419
    %v2424 = vsel %vm2420, 1, 0
    %v2425 = vsel %vm2421, 1, 0
    %v2426 = vsel %vm2422, 1, 0
    %v2427 = vsel %vm2423, 1, 0
    %v2428 = vcvt.s32.f32 %v2424
    %v2429 = vcvt.s32.f32 %v2425
    %v2430 = vcvt.s32.f32 %v2426
    %v2431 = vcvt.s32.f32 %v2427
    %v2432 = vadd.f32 %v2428, 0.0
    %v2433 = vadd.f32 %v2429, 0.0
    %v2434 = vadd.f32 %v2430, 0.0
    %v2435 = vadd.f32 %v2431, 0.0
    %v2436 = vsel %vm2420, -inf, %v2331
    %v2437 = vsel %vm2421, -inf, %v2333
    %v2438 = vsel %vm2422, -inf, %v2335
    %v2439 = vsel %vm2423, -inf, %v2337
    %v2440 = vsel %vm2293, %v2436, -inf
    %2441 = vmax.xlane.f32.xlu0 %v2440
    %v2442 = vpop.xlane.xlu0 %2441
    %v2443 = vsel %vm2293, %v2437, -inf
    %2444 = vmax.xlane.f32.xlu0 %v2443
    %v2445 = vpop.xlane.xlu0 %2444
    %v2446 = vsel %vm2293, %v2438, -inf
    %2447 = vmax.xlane.f32.xlu0 %v2446
    %v2448 = vpop.xlane.xlu0 %2447
    %v2449 = vsel %vm2293, %v2439, -inf
    %2450 = vmax.xlane.f32.xlu0 %v2449
    %v2451 = vpop.xlane.xlu0 %2450
    %vm2452 = vcmp.ge.f32.partialorder %v2436, %v2442
    %vm2453 = vcmp.ge.f32.partialorder %v2437, %v2445
    %vm2454 = vcmp.ge.f32.partialorder %v2438, %v2448
    %vm2455 = vcmp.ge.f32.partialorder %v2439, %v2451
    %v2456 = vsel %vm2452, %v2339, 8
    %v2457 = vsel %vm2453, %v2339, 8
    %v2458 = vsel %vm2454, %v2339, 8
    %v2459 = vsel %vm2455, %v2339, 8
    %v2460 = vsel %vm2293, %v2456, 2147483647
    %v2461 = vand.u32 %v2460, 65535
    %v2462 = vshra.s32 %v2460, 16
    %v2463 = vcvt.s32.f32 %v2461
    %v2464 = vcvt.s32.f32 %v2462
    %2465 = vmin.xlane.f32.xlu0 %v2464
    %v2466 = vpop.xlane.xlu0 %2465
    %vm2467 = vcmp.eq.f32.partialorder %v2464, %v2466
    %v2468 = vsel %vm2467, %v2463, inf
    %2469 = vmin.xlane.f32.xlu0 %v2468
    %v2470 = vpop.xlane.xlu0 %2469
    %v2471 = vcvt.f32.s32 %v2470
    %v2472 = vcvt.f32.s32 %v2466
    %v2473 = vshll.u32 %v2472, 16
    %v2474 = vadd.s32 %v2473, %v2471
    %v2475 = vsel %vm2293, %v2457, 2147483647
    %v2476 = vand.u32 %v2475, 65535
    %v2477 = vshra.s32 %v2475, 16
    %v2478 = vcvt.s32.f32 %v2476
    %v2479 = vcvt.s32.f32 %v2477
    %2480 = vmin.xlane.f32.xlu0 %v2479
    %v2481 = vpop.xlane.xlu0 %2480
    %vm2482 = vcmp.eq.f32.partialorder %v2479, %v2481
    %v2483 = vsel %vm2482, %v2478, inf
    %2484 = vmin.xlane.f32.xlu0 %v2483
    %v2485 = vpop.xlane.xlu0 %2484
    %v2486 = vcvt.f32.s32 %v2485
    %v2487 = vcvt.f32.s32 %v2481
    %v2488 = vshll.u32 %v2487, 16
    %v2489 = vadd.s32 %v2488, %v2486
    %v2490 = vsel %vm2293, %v2458, 2147483647
    %v2491 = vand.u32 %v2490, 65535
    %v2492 = vshra.s32 %v2490, 16
    %v2493 = vcvt.s32.f32 %v2491
    %v2494 = vcvt.s32.f32 %v2492
    %2495 = vmin.xlane.f32.xlu0 %v2494
    %v2496 = vpop.xlane.xlu0 %2495
    %vm2497 = vcmp.eq.f32.partialorder %v2494, %v2496
    %v2498 = vsel %vm2497, %v2493, inf
    %2499 = vmin.xlane.f32.xlu0 %v2498
    %v2500 = vpop.xlane.xlu0 %2499
    %v2501 = vcvt.f32.s32 %v2500
    %v2502 = vcvt.f32.s32 %v2496
    %v2503 = vshll.u32 %v2502, 16
    %v2504 = vadd.s32 %v2503, %v2501
    %v2505 = vsel %vm2293, %v2459, 2147483647
    %v2506 = vand.u32 %v2505, 65535
    %v2507 = vshra.s32 %v2505, 16
    %v2508 = vcvt.s32.f32 %v2506
    %v2509 = vcvt.s32.f32 %v2507
    %2510 = vmin.xlane.f32.xlu0 %v2509
    %v2511 = vpop.xlane.xlu0 %2510
    %vm2512 = vcmp.eq.f32.partialorder %v2509, %v2511
    %v2513 = vsel %vm2512, %v2508, inf
    %2514 = vmin.xlane.f32.xlu0 %v2513
    %v2515 = vpop.xlane.xlu0 %2514
    %v2516 = vcvt.f32.s32 %v2515
    %v2517 = vcvt.f32.s32 %v2511
    %v2518 = vshll.u32 %v2517, 16
    %v2519 = vadd.s32 %v2518, %v2516
    %vm2520 = vcmp.eq.s32.totalorder %v2339, %v2474
    %vm2521 = vcmp.eq.s32.totalorder %v2339, %v2489
    %vm2522 = vcmp.eq.s32.totalorder %v2339, %v2504
    %vm2523 = vcmp.eq.s32.totalorder %v2339, %v2519
    %v2524 = vsel %vm2520, 1, 0
    %v2525 = vsel %vm2521, 1, 0
    %v2526 = vsel %vm2522, 1, 0
    %v2527 = vsel %vm2523, 1, 0
    %v2528 = vcvt.s32.f32 %v2524
    %v2529 = vcvt.s32.f32 %v2525
    %v2530 = vcvt.s32.f32 %v2526
    %v2531 = vcvt.s32.f32 %v2527
    %v2532 = vadd.f32 %v2432, %v2528
    %v2533 = vadd.f32 %v2433, %v2529
    %v2534 = vadd.f32 %v2434, %v2530
    %v2535 = vadd.f32 %v2435, %v2531
    %vm2536 = vcmp.gt.f32.partialorder %v2532, 0.0
    %vm2537 = vcmp.gt.f32.partialorder %v2533, 0.0
    %vm2538 = vcmp.gt.f32.partialorder %v2534, 0.0
    %vm2539 = vcmp.gt.f32.partialorder %v2535, 0.0
    %v2540 = vsel %vm2536, %v2331, -inf
    %v2541 = vsel %vm2537, %v2333, -inf
    %v2542 = vsel %vm2538, %v2335, -inf
    %v2543 = vsel %vm2539, %v2337, -inf
    %v2544 = vsel %vm2293, %v2540, -inf
    %2545 = vmax.xlane.f32.xlu0 %v2544
    %v2546 = vpop.xlane.xlu0 %2545
    %v2547 = vsel %vm2293, %v2541, -inf
    %2548 = vmax.xlane.f32.xlu0 %v2547
    %v2549 = vpop.xlane.xlu0 %2548
    %v2550 = vsel %vm2293, %v2542, -inf
    %2551 = vmax.xlane.f32.xlu0 %v2550
    %v2552 = vpop.xlane.xlu0 %2551
    %v2553 = vsel %vm2293, %v2543, -inf
    %2554 = vmax.xlane.f32.xlu0 %v2553
    %v2555 = vpop.xlane.xlu0 %2554
    %v2556 = vsub.f32 %v2540, %v2546
    %v2557 = vsub.f32 %v2541, %v2549
    %v2558 = vsub.f32 %v2542, %v2552
    %v2559 = vsub.f32 %v2543, %v2555
    %v2560 = vmul.f32 %v2556, 1.442695
    %v2561 = vpow.pop %v2560
    %v2562 = vmul.f32 %v2557, 1.442695
    %v2563 = vpow.pop %v2562
    %v2564 = vmul.f32 %v2558, 1.442695
    %v2565 = vpow.pop %v2564
    %v2566 = vmul.f32 %v2559, 1.442695
    %v2567 = vpow.pop %v2566
    %v2568 = vsel %vm2293, %v2561, 0.0
    %2569 = vadd.xlane.f32.xlu0 %v2568
    %v2570 = vpop.xlane.xlu0 %2569
    %v2571 = vsel %vm2293, %v2563, 0.0
    %2572 = vadd.xlane.f32.xlu0 %v2571
    %v2573 = vpop.xlane.xlu0 %2572
    %v2574 = vsel %vm2293, %v2565, 0.0
    %2575 = vadd.xlane.f32.xlu0 %v2574
    %v2576 = vpop.xlane.xlu0 %2575
    %v2577 = vsel %vm2293, %v2567, 0.0
    %2578 = vadd.xlane.f32.xlu0 %v2577
    %v2579 = vpop.xlane.xlu0 %2578
    %v2580 = vrcp.pop %v2570
    %v2581 = vmul.f32 %v2561, %v2580
    %v2582 = vrcp.pop %v2573
    %v2583 = vmul.f32 %v2563, %v2582
    %v2584 = vrcp.pop %v2576
    %v2585 = vmul.f32 %v2565, %v2584
    %v2586 = vrcp.pop %v2579
    %v2587 = vmul.f32 %v2567, %v2586
    %v2588 = vld [vmem:[#allocation23] sm:$0xff]
    %v2589 = vld [vmem:[#allocation23 + $0x8] sm:$0xff]
    %v2590 = vld [vmem:[#allocation23 + $0x10] sm:$0xff]
    %v2591 = vld [vmem:[#allocation23 + $0x18] sm:$0xff]
    %v2592 = vld [vmem:[#allocation23 + $0x20] sm:$0xff]
    %v2593 = vld [vmem:[#allocation23 + $0x28] sm:$0xff]
    %v2594 = vld [vmem:[#allocation23 + $0x30] sm:$0xff]
    %v2595 = vld [vmem:[#allocation23 + $0x38] sm:$0xff]
    %v2596 = vld [vmem:[#allocation23 + $0x40] sm:$0xff]
    %v2597 = vld [vmem:[#allocation23 + $0x48] sm:$0xff]
    %v2598 = vld [vmem:[#allocation23 + $0x50] sm:$0xff]
    %v2599 = vld [vmem:[#allocation23 + $0x58] sm:$0xff]
    %v2600 = vld [vmem:[#allocation23 + $0x60] sm:$0xff]
    %v2601 = vld [vmem:[#allocation23 + $0x68] sm:$0xff]
    %v2602 = vld [vmem:[#allocation23 + $0x70] sm:$0xff]
    %v2603 = vld [vmem:[#allocation23 + $0x78] sm:$0xff]
    %v2604 = vld [vmem:[#allocation23 + $0x80] sm:$0xff]
    %v2605 = vld [vmem:[#allocation23 + $0x88] sm:$0xff]
    %v2606 = vld [vmem:[#allocation23 + $0x90] sm:$0xff]
    %v2607 = vld [vmem:[#allocation23 + $0x98] sm:$0xff]
    %v2609 = vsel %vm2293, %v2581, 0
    %v2612 = vsel %vm2293, %v2583, 0
    %v2615 = vsel %vm2293, %v2585, 0
    %v2618 = vsel %vm2293, %v2587, 0
    %2620 = vmatprep.subr.mxu0 0.0
    %2621 = vmatpush1.msra.mxu0 0.0
    %2622 = vmatprep.subr.mxu0 0.0
    %2623 = vmatpush1.msra.mxu0 0.0
    %2624 = vmatprep.subr.mxu0 0.0
    %2625 = vmatpush1.msra.mxu0 0.0
    %2626 = vmatprep.subr.mxu0 0.0
    %2627 = vmatpush1.msra.mxu0 0.0
    %2628 = vmatprep.subr.mxu0 0.0
    %2629 = vmatpush1.msra.mxu0 0.0
    %2630 = vmatprep.subr.mxu0 0.0
    %2631 = vmatpush1.msra.mxu0 0.0
    %2632 = vmatprep.subr.mxu0 0.0
    %2633 = vmatpush1.msra.mxu0 0.0
    %2634 = vmatprep.subr.mxu0 0.0
    %2635 = vmatpush1.msra.mxu0 0.0
    %2636 = vmatprep.subr.mxu0 0.0
    %2637 = vmatpush1.msra.mxu0 0.0
    %2638 = vmatprep.subr.mxu0 0.0
    %2639 = vmatpush1.msra.mxu0 0.0
    %2640 = vmatprep.subr.mxu0 0.0
    %2641 = vmatpush1.msra.mxu0 0.0
    %2642 = vmatprep.subr.mxu0 0.0
    %2643 = vmatpush1.msra.mxu0 0.0
    %2644 = vmatprep.subr.mxu0 0.0
    %2645 = vmatpush1.msra.mxu0 0.0
    %2646 = vmatprep.subr.mxu0 0.0
    %2647 = vmatpush1.msra.mxu0 0.0
    %2648 = vmatprep.subr.mxu0 0.0
    %2649 = vmatpush1.msra.mxu0 0.0
    %2650 = vmatprep.subr.mxu0 %v2589
    %2651 = vmatpush1.msra.mxu0 %v2588
    %2652 = vmatprep.subr.mxu0 0.0
    %2653 = vmatpush2.msra.mxu0 0.0
    %2654 = vmatprep.subr.mxu0 0.0
    %2655 = vmatpush2.msra.mxu0 0.0
    %2656 = vmatprep.subr.mxu0 0.0
    %2657 = vmatpush2.msra.mxu0 0.0
    %2658 = vmatprep.subr.mxu0 0.0
    %2659 = vmatpush2.msra.mxu0 0.0
    %2660 = vmatprep.subr.mxu0 0.0
    %2661 = vmatpush2.msra.mxu0 0.0
    %2662 = vmatprep.subr.mxu0 0.0
    %2663 = vmatpush2.msra.mxu0 0.0
    %2664 = vmatprep.subr.mxu0 0.0
    %2665 = vmatpush2.msra.mxu0 0.0
    %2666 = vmatprep.subr.mxu0 0.0
    %2667 = vmatpush2.msra.mxu0 0.0
    %2668 = vmatprep.subr.mxu0 0.0
    %2669 = vmatpush2.msra.mxu0 0.0
    %2670 = vmatprep.subr.mxu0 0.0
    %2671 = vmatpush2.msra.mxu0 0.0
    %2672 = vmatprep.subr.mxu0 0.0
    %2673 = vmatpush2.msra.mxu0 0.0
    %2674 = vmatprep.subr.mxu0 0.0
    %2675 = vmatpush2.msra.mxu0 0.0
    %2676 = vmatprep.subr.mxu0 0.0
    %2677 = vmatpush2.msra.mxu0 0.0
    %2678 = vmatprep.subr.mxu0 0.0
    %2679 = vmatpush2.msra.mxu0 0.0
    %2680 = vmatprep.subr.mxu0 0.0
    %2681 = vmatpush2.msra.mxu0 0.0
    %2682 = vmatprep.subr.mxu0 0.0
    %2683 = vmatpush2.msra.mxu0 0.0
    %2684 = vmatprep.mubr.f32.mxu0 0.0
    %2685 = vmatmul.mubr.f32.gmra.mxu0 %v2609
    %v2686 = vpop.f32.mrf.mxu0
    %v2687 = vadd.f32 0.0, %v2686
    %v2688 = vpop.f32.mrf.mxu0
    %v2689 = vadd.f32 0.0, %v2688
    %2690 = vmatprep.mubr.f32.mxu0 0.0
    %2691 = vmatmul.mubr.f32.gmra.mxu0 %v2612
    %v2692 = vpop.f32.mrf.mxu0
    %v2693 = vadd.f32 0.0, %v2692
    %v2694 = vpop.f32.mrf.mxu0
    %v2695 = vadd.f32 0.0, %v2694
    %2696 = vmatprep.mubr.f32.mxu0 0.0
    %2697 = vmatmul.mubr.f32.gmra.mxu0 %v2615
    %v2698 = vpop.f32.mrf.mxu0
    %v2699 = vadd.f32 0.0, %v2698
    %v2700 = vpop.f32.mrf.mxu0
    %v2701 = vadd.f32 0.0, %v2700
    %2702 = vmatprep.mubr.f32.mxu0 0.0
    %2703 = vmatmul.mubr.f32.gmra.mxu0 %v2618
    %v2704 = vpop.f32.mrf.mxu0
    %v2705 = vadd.f32 0.0, %v2704
    %v2706 = vpop.f32.mrf.mxu0
    %v2707 = vadd.f32 0.0, %v2706
    %2708 = vdwg.mxu0
    %2709 = vmatprep.subr.mxu0 0.0
    %2710 = vmatpush1.msra.mxu0 0.0
    %2711 = vmatprep.subr.mxu0 0.0
    %2712 = vmatpush1.msra.mxu0 0.0
    %2713 = vmatprep.subr.mxu0 0.0
    %2714 = vmatpush1.msra.mxu0 0.0
    %2715 = vmatprep.subr.mxu0 0.0
    %2716 = vmatpush1.msra.mxu0 0.0
    %2717 = vmatprep.subr.mxu0 0.0
    %2718 = vmatpush1.msra.mxu0 0.0
    %2719 = vmatprep.subr.mxu0 0.0
    %2720 = vmatpush1.msra.mxu0 0.0
    %2721 = vmatprep.subr.mxu0 0.0
    %2722 = vmatpush1.msra.mxu0 0.0
    %2723 = vmatprep.subr.mxu0 0.0
    %2724 = vmatpush1.msra.mxu0 0.0
    %2725 = vmatprep.subr.mxu0 0.0
    %2726 = vmatpush1.msra.mxu0 0.0
    %2727 = vmatprep.subr.mxu0 0.0
    %2728 = vmatpush1.msra.mxu0 0.0
    %2729 = vmatprep.subr.mxu0 0.0
    %2730 = vmatpush1.msra.mxu0 0.0
    %2731 = vmatprep.subr.mxu0 0.0
    %2732 = vmatpush1.msra.mxu0 0.0
    %2733 = vmatprep.subr.mxu0 0.0
    %2734 = vmatpush1.msra.mxu0 0.0
    %2735 = vmatprep.subr.mxu0 0.0
    %2736 = vmatpush1.msra.mxu0 0.0
    %2737 = vmatprep.subr.mxu0 0.0
    %2738 = vmatpush1.msra.mxu0 0.0
    %2739 = vmatprep.subr.mxu0 %v2591
    %2740 = vmatpush1.msra.mxu0 %v2590
    %2741 = vmatprep.subr.mxu0 0.0
    %2742 = vmatpush2.msra.mxu0 0.0
    %2743 = vmatprep.subr.mxu0 0.0
    %2744 = vmatpush2.msra.mxu0 0.0
    %2745 = vmatprep.subr.mxu0 0.0
    %2746 = vmatpush2.msra.mxu0 0.0
    %2747 = vmatprep.subr.mxu0 0.0
    %2748 = vmatpush2.msra.mxu0 0.0
    %2749 = vmatprep.subr.mxu0 0.0
    %2750 = vmatpush2.msra.mxu0 0.0
    %2751 = vmatprep.subr.mxu0 0.0
    %2752 = vmatpush2.msra.mxu0 0.0
    %2753 = vmatprep.subr.mxu0 0.0
    %2754 = vmatpush2.msra.mxu0 0.0
    %2755 = vmatprep.subr.mxu0 0.0
    %2756 = vmatpush2.msra.mxu0 0.0
    %2757 = vmatprep.subr.mxu0 0.0
    %2758 = vmatpush2.msra.mxu0 0.0
    %2759 = vmatprep.subr.mxu0 0.0
    %2760 = vmatpush2.msra.mxu0 0.0
    %2761 = vmatprep.subr.mxu0 0.0
    %2762 = vmatpush2.msra.mxu0 0.0
    %2763 = vmatprep.subr.mxu0 0.0
    %2764 = vmatpush2.msra.mxu0 0.0
    %2765 = vmatprep.subr.mxu0 0.0
    %2766 = vmatpush2.msra.mxu0 0.0
    %2767 = vmatprep.subr.mxu0 0.0
    %2768 = vmatpush2.msra.mxu0 0.0
    %2769 = vmatprep.subr.mxu0 0.0
    %2770 = vmatpush2.msra.mxu0 0.0
    %2771 = vmatprep.subr.mxu0 0.0
    %2772 = vmatpush2.msra.mxu0 0.0
    %2773 = vmatprep.mubr.f32.mxu0 0.0
    %2774 = vmatmul.mubr.f32.gmra.mxu0 %v2609
    %v2775 = vpop.f32.mrf.mxu0
    %v2776 = vadd.f32 0.0, %v2775
    %v2777 = vpop.f32.mrf.mxu0
    %v2778 = vadd.f32 0.0, %v2777
    %2779 = vmatprep.mubr.f32.mxu0 0.0
    %2780 = vmatmul.mubr.f32.gmra.mxu0 %v2612
    %v2781 = vpop.f32.mrf.mxu0
    %v2782 = vadd.f32 0.0, %v2781
    %v2783 = vpop.f32.mrf.mxu0
    %v2784 = vadd.f32 0.0, %v2783
    %2785 = vmatprep.mubr.f32.mxu0 0.0
    %2786 = vmatmul.mubr.f32.gmra.mxu0 %v2615
    %v2787 = vpop.f32.mrf.mxu0
    %v2788 = vadd.f32 0.0, %v2787
    %v2789 = vpop.f32.mrf.mxu0
    %v2790 = vadd.f32 0.0, %v2789
    %2791 = vmatprep.mubr.f32.mxu0 0.0
    %2792 = vmatmul.mubr.f32.gmra.mxu0 %v2618
    %v2793 = vpop.f32.mrf.mxu0
    %v2794 = vadd.f32 0.0, %v2793
    %v2795 = vpop.f32.mrf.mxu0
    %v2796 = vadd.f32 0.0, %v2795
    %2797 = vdwg.mxu0
    %2798 = vmatprep.subr.mxu0 0.0
    %2799 = vmatpush1.msra.mxu0 0.0
    %2800 = vmatprep.subr.mxu0 0.0
    %2801 = vmatpush1.msra.mxu0 0.0
    %2802 = vmatprep.subr.mxu0 0.0
    %2803 = vmatpush1.msra.mxu0 0.0
    %2804 = vmatprep.subr.mxu0 0.0
    %2805 = vmatpush1.msra.mxu0 0.0
    %2806 = vmatprep.subr.mxu0 0.0
    %2807 = vmatpush1.msra.mxu0 0.0
    %2808 = vmatprep.subr.mxu0 0.0
    %2809 = vmatpush1.msra.mxu0 0.0
    %2810 = vmatprep.subr.mxu0 0.0
    %2811 = vmatpush1.msra.mxu0 0.0
    %2812 = vmatprep.subr.mxu0 0.0
    %2813 = vmatpush1.msra.mxu0 0.0
    %2814 = vmatprep.subr.mxu0 0.0
    %2815 = vmatpush1.msra.mxu0 0.0
    %2816 = vmatprep.subr.mxu0 0.0
    %2817 = vmatpush1.msra.mxu0 0.0
    %2818 = vmatprep.subr.mxu0 0.0
    %2819 = vmatpush1.msra.mxu0 0.0
    %2820 = vmatprep.subr.mxu0 0.0
    %2821 = vmatpush1.msra.mxu0 0.0
    %2822 = vmatprep.subr.mxu0 0.0
    %2823 = vmatpush1.msra.mxu0 0.0
    %2824 = vmatprep.subr.mxu0 0.0
    %2825 = vmatpush1.msra.mxu0 0.0
    %2826 = vmatprep.subr.mxu0 0.0
    %2827 = vmatpush1.msra.mxu0 0.0
    %2828 = vmatprep.subr.mxu0 %v2593
    %2829 = vmatpush1.msra.mxu0 %v2592
    %2830 = vmatprep.subr.mxu0 0.0
    %2831 = vmatpush2.msra.mxu0 0.0
    %2832 = vmatprep.subr.mxu0 0.0
    %2833 = vmatpush2.msra.mxu0 0.0
    %2834 = vmatprep.subr.mxu0 0.0
    %2835 = vmatpush2.msra.mxu0 0.0
    %2836 = vmatprep.subr.mxu0 0.0
    %2837 = vmatpush2.msra.mxu0 0.0
    %2838 = vmatprep.subr.mxu0 0.0
    %2839 = vmatpush2.msra.mxu0 0.0
    %2840 = vmatprep.subr.mxu0 0.0
    %2841 = vmatpush2.msra.mxu0 0.0
    %2842 = vmatprep.subr.mxu0 0.0
    %2843 = vmatpush2.msra.mxu0 0.0
    %2844 = vmatprep.subr.mxu0 0.0
    %2845 = vmatpush2.msra.mxu0 0.0
    %2846 = vmatprep.subr.mxu0 0.0
    %2847 = vmatpush2.msra.mxu0 0.0
    %2848 = vmatprep.subr.mxu0 0.0
    %2849 = vmatpush2.msra.mxu0 0.0
    %2850 = vmatprep.subr.mxu0 0.0
    %2851 = vmatpush2.msra.mxu0 0.0
    %2852 = vmatprep.subr.mxu0 0.0
    %2853 = vmatpush2.msra.mxu0 0.0
    %2854 = vmatprep.subr.mxu0 0.0
    %2855 = vmatpush2.msra.mxu0 0.0
    %2856 = vmatprep.subr.mxu0 0.0
    %2857 = vmatpush2.msra.mxu0 0.0
    %2858 = vmatprep.subr.mxu0 0.0
    %2859 = vmatpush2.msra.mxu0 0.0
    %2860 = vmatprep.subr.mxu0 0.0
    %2861 = vmatpush2.msra.mxu0 0.0
    %2862 = vmatprep.mubr.f32.mxu0 0.0
    %2863 = vmatmul.mubr.f32.gmra.mxu0 %v2609
    %v2864 = vpop.f32.mrf.mxu0
    %v2865 = vadd.f32 0.0, %v2864
    %v2866 = vpop.f32.mrf.mxu0
    %v2867 = vadd.f32 0.0, %v2866
    %2868 = vmatprep.mubr.f32.mxu0 0.0
    %2869 = vmatmul.mubr.f32.gmra.mxu0 %v2612
    %v2870 = vpop.f32.mrf.mxu0
    %v2871 = vadd.f32 0.0, %v2870
    %v2872 = vpop.f32.mrf.mxu0
    %v2873 = vadd.f32 0.0, %v2872
    %2874 = vmatprep.mubr.f32.mxu0 0.0
    %2875 = vmatmul.mubr.f32.gmra.mxu0 %v2615
    %v2876 = vpop.f32.mrf.mxu0
    %v2877 = vadd.f32 0.0, %v2876
    %v2878 = vpop.f32.mrf.mxu0
    %v2879 = vadd.f32 0.0, %v2878
    %2880 = vmatprep.mubr.f32.mxu0 0.0
    %2881 = vmatmul.mubr.f32.gmra.mxu0 %v2618
    %v2882 = vpop.f32.mrf.mxu0
    %v2883 = vadd.f32 0.0, %v2882
    %v2884 = vpop.f32.mrf.mxu0
    %v2885 = vadd.f32 0.0, %v2884
    %2886 = vdwg.mxu0
    %2887 = vmatprep.subr.mxu0 0.0
    %2888 = vmatpush1.msra.mxu0 0.0
    %2889 = vmatprep.subr.mxu0 0.0
    %2890 = vmatpush1.msra.mxu0 0.0
    %2891 = vmatprep.subr.mxu0 0.0
    %2892 = vmatpush1.msra.mxu0 0.0
    %2893 = vmatprep.subr.mxu0 0.0
    %2894 = vmatpush1.msra.mxu0 0.0
    %2895 = vmatprep.subr.mxu0 0.0
    %2896 = vmatpush1.msra.mxu0 0.0
    %2897 = vmatprep.subr.mxu0 0.0
    %2898 = vmatpush1.msra.mxu0 0.0
    %2899 = vmatprep.subr.mxu0 0.0
    %2900 = vmatpush1.msra.mxu0 0.0
    %2901 = vmatprep.subr.mxu0 0.0
    %2902 = vmatpush1.msra.mxu0 0.0
    %2903 = vmatprep.subr.mxu0 0.0
    %2904 = vmatpush1.msra.mxu0 0.0
    %2905 = vmatprep.subr.mxu0 0.0
    %2906 = vmatpush1.msra.mxu0 0.0
    %2907 = vmatprep.subr.mxu0 0.0
    %2908 = vmatpush1.msra.mxu0 0.0
    %2909 = vmatprep.subr.mxu0 0.0
    %2910 = vmatpush1.msra.mxu0 0.0
    %2911 = vmatprep.subr.mxu0 0.0
    %2912 = vmatpush1.msra.mxu0 0.0
    %2913 = vmatprep.subr.mxu0 0.0
    %2914 = vmatpush1.msra.mxu0 0.0
    %2915 = vmatprep.subr.mxu0 0.0
    %2916 = vmatpush1.msra.mxu0 0.0
    %2917 = vmatprep.subr.mxu0 %v2595
    %2918 = vmatpush1.msra.mxu0 %v2594
    %2919 = vmatprep.subr.mxu0 0.0
    %2920 = vmatpush2.msra.mxu0 0.0
    %2921 = vmatprep.subr.mxu0 0.0
    %2922 = vmatpush2.msra.mxu0 0.0
    %2923 = vmatprep.subr.mxu0 0.0
    %2924 = vmatpush2.msra.mxu0 0.0
    %2925 = vmatprep.subr.mxu0 0.0
    %2926 = vmatpush2.msra.mxu0 0.0
    %2927 = vmatprep.subr.mxu0 0.0
    %2928 = vmatpush2.msra.mxu0 0.0
    %2929 = vmatprep.subr.mxu0 0.0
    %2930 = vmatpush2.msra.mxu0 0.0
    %2931 = vmatprep.subr.mxu0 0.0
    %2932 = vmatpush2.msra.mxu0 0.0
    %2933 = vmatprep.subr.mxu0 0.0
    %2934 = vmatpush2.msra.mxu0 0.0
    %2935 = vmatprep.subr.mxu0 0.0
    %2936 = vmatpush2.msra.mxu0 0.0
    %2937 = vmatprep.subr.mxu0 0.0
    %2938 = vmatpush2.msra.mxu0 0.0
    %2939 = vmatprep.subr.mxu0 0.0
    %2940 = vmatpush2.msra.mxu0 0.0
    %2941 = vmatprep.subr.mxu0 0.0
    %2942 = vmatpush2.msra.mxu0 0.0
    %2943 = vmatprep.subr.mxu0 0.0
    %2944 = vmatpush2.msra.mxu0 0.0
    %2945 = vmatprep.subr.mxu0 0.0
    %2946 = vmatpush2.msra.mxu0 0.0
    %2947 = vmatprep.subr.mxu0 0.0
    %2948 = vmatpush2.msra.mxu0 0.0
    %2949 = vmatprep.subr.mxu0 0.0
    %2950 = vmatpush2.msra.mxu0 0.0
    %2951 = vmatprep.mubr.f32.mxu0 0.0
    %2952 = vmatmul.mubr.f32.gmra.mxu0 %v2609
    %v2953 = vpop.f32.mrf.mxu0
    %v2954 = vadd.f32 0.0, %v2953
    %v2955 = vpop.f32.mrf.mxu0
    %v2956 = vadd.f32 0.0, %v2955
    %2957 = vmatprep.mubr.f32.mxu0 0.0
    %2958 = vmatmul.mubr.f32.gmra.mxu0 %v2612
    %v2959 = vpop.f32.mrf.mxu0
    %v2960 = vadd.f32 0.0, %v2959
    %v2961 = vpop.f32.mrf.mxu0
    %v2962 = vadd.f32 0.0, %v2961
    %2963 = vmatprep.mubr.f32.mxu0 0.0
    %2964 = vmatmul.mubr.f32.gmra.mxu0 %v2615
    %v2965 = vpop.f32.mrf.mxu0
    %v2966 = vadd.f32 0.0, %v2965
    %v2967 = vpop.f32.mrf.mxu0
    %v2968 = vadd.f32 0.0, %v2967
    %2969 = vmatprep.mubr.f32.mxu0 0.0
    %2970 = vmatmul.mubr.f32.gmra.mxu0 %v2618
    %v2971 = vpop.f32.mrf.mxu0
    %v2972 = vadd.f32 0.0, %v2971
    %v2973 = vpop.f32.mrf.mxu0
    %v2974 = vadd.f32 0.0, %v2973
    %2975 = vdwg.mxu0
    %2976 = vmatprep.subr.mxu0 0.0
    %2977 = vmatpush1.msra.mxu0 0.0
    %2978 = vmatprep.subr.mxu0 0.0
    %2979 = vmatpush1.msra.mxu0 0.0
    %2980 = vmatprep.subr.mxu0 0.0
    %2981 = vmatpush1.msra.mxu0 0.0
    %2982 = vmatprep.subr.mxu0 0.0
    %2983 = vmatpush1.msra.mxu0 0.0
    %2984 = vmatprep.subr.mxu0 0.0
    %2985 = vmatpush1.msra.mxu0 0.0
    %2986 = vmatprep.subr.mxu0 0.0
    %2987 = vmatpush1.msra.mxu0 0.0
    %2988 = vmatprep.subr.mxu0 0.0
    %2989 = vmatpush1.msra.mxu0 0.0
    %2990 = vmatprep.subr.mxu0 0.0
    %2991 = vmatpush1.msra.mxu0 0.0
    %2992 = vmatprep.subr.mxu0 0.0
    %2993 = vmatpush1.msra.mxu0 0.0
    %2994 = vmatprep.subr.mxu0 0.0
    %2995 = vmatpush1.msra.mxu0 0.0
    %2996 = vmatprep.subr.mxu0 0.0
    %2997 = vmatpush1.msra.mxu0 0.0
    %2998 = vmatprep.subr.mxu0 0.0
    %2999 = vmatpush1.msra.mxu0 0.0
    %3000 = vmatprep.subr.mxu0 0.0
    %3001 = vmatpush1.msra.mxu0 0.0
    %3002 = vmatprep.subr.mxu0 0.0
    %3003 = vmatpush1.msra.mxu0 0.0
    %3004 = vmatprep.subr.mxu0 0.0
    %3005 = vmatpush1.msra.mxu0 0.0
    %3006 = vmatprep.subr.mxu0 %v2597
    %3007 = vmatpush1.msra.mxu0 %v2596
    %3008 = vmatprep.subr.mxu0 0.0
    %3009 = vmatpush2.msra.mxu0 0.0
    %3010 = vmatprep.subr.mxu0 0.0
    %3011 = vmatpush2.msra.mxu0 0.0
    %3012 = vmatprep.subr.mxu0 0.0
    %3013 = vmatpush2.msra.mxu0 0.0
    %3014 = vmatprep.subr.mxu0 0.0
    %3015 = vmatpush2.msra.mxu0 0.0
    %3016 = vmatprep.subr.mxu0 0.0
    %3017 = vmatpush2.msra.mxu0 0.0
    %3018 = vmatprep.subr.mxu0 0.0
    %3019 = vmatpush2.msra.mxu0 0.0
    %3020 = vmatprep.subr.mxu0 0.0
    %3021 = vmatpush2.msra.mxu0 0.0
    %3022 = vmatprep.subr.mxu0 0.0
    %3023 = vmatpush2.msra.mxu0 0.0
    %3024 = vmatprep.subr.mxu0 0.0
    %3025 = vmatpush2.msra.mxu0 0.0
    %3026 = vmatprep.subr.mxu0 0.0
    %3027 = vmatpush2.msra.mxu0 0.0
    %3028 = vmatprep.subr.mxu0 0.0
    %3029 = vmatpush2.msra.mxu0 0.0
    %3030 = vmatprep.subr.mxu0 0.0
    %3031 = vmatpush2.msra.mxu0 0.0
    %3032 = vmatprep.subr.mxu0 0.0
    %3033 = vmatpush2.msra.mxu0 0.0
    %3034 = vmatprep.subr.mxu0 0.0
    %3035 = vmatpush2.msra.mxu0 0.0
    %3036 = vmatprep.subr.mxu0 0.0
    %3037 = vmatpush2.msra.mxu0 0.0
    %3038 = vmatprep.subr.mxu0 0.0
    %3039 = vmatpush2.msra.mxu0 0.0
    %3040 = vmatprep.mubr.f32.mxu0 0.0
    %3041 = vmatmul.mubr.f32.gmra.mxu0 %v2609
    %v3042 = vpop.f32.mrf.mxu0
    %v3043 = vadd.f32 0.0, %v3042
    %v3044 = vpop.f32.mrf.mxu0
    %v3045 = vadd.f32 0.0, %v3044
    %3046 = vmatprep.mubr.f32.mxu0 0.0
    %3047 = vmatmul.mubr.f32.gmra.mxu0 %v2612
    %v3048 = vpop.f32.mrf.mxu0
    %v3049 = vadd.f32 0.0, %v3048
    %v3050 = vpop.f32.mrf.mxu0
    %v3051 = vadd.f32 0.0, %v3050
    %3052 = vmatprep.mubr.f32.mxu0 0.0
    %3053 = vmatmul.mubr.f32.gmra.mxu0 %v2615
    %v3054 = vpop.f32.mrf.mxu0
    %v3055 = vadd.f32 0.0, %v3054
    %v3056 = vpop.f32.mrf.mxu0
    %v3057 = vadd.f32 0.0, %v3056
    %3058 = vmatprep.mubr.f32.mxu0 0.0
    %3059 = vmatmul.mubr.f32.gmra.mxu0 %v2618
    %v3060 = vpop.f32.mrf.mxu0
    %v3061 = vadd.f32 0.0, %v3060
    %v3062 = vpop.f32.mrf.mxu0
    %v3063 = vadd.f32 0.0, %v3062
    %3064 = vdwg.mxu0
    %3065 = vmatprep.subr.mxu0 0.0
    %3066 = vmatpush1.msra.mxu0 0.0
    %3067 = vmatprep.subr.mxu0 0.0
    %3068 = vmatpush1.msra.mxu0 0.0
    %3069 = vmatprep.subr.mxu0 0.0
    %3070 = vmatpush1.msra.mxu0 0.0
    %3071 = vmatprep.subr.mxu0 0.0
    %3072 = vmatpush1.msra.mxu0 0.0
    %3073 = vmatprep.subr.mxu0 0.0
    %3074 = vmatpush1.msra.mxu0 0.0
    %3075 = vmatprep.subr.mxu0 0.0
    %3076 = vmatpush1.msra.mxu0 0.0
    %3077 = vmatprep.subr.mxu0 0.0
    %3078 = vmatpush1.msra.mxu0 0.0
    %3079 = vmatprep.subr.mxu0 0.0
    %3080 = vmatpush1.msra.mxu0 0.0
    %3081 = vmatprep.subr.mxu0 0.0
    %3082 = vmatpush1.msra.mxu0 0.0
    %3083 = vmatprep.subr.mxu0 0.0
    %3084 = vmatpush1.msra.mxu0 0.0
    %3085 = vmatprep.subr.mxu0 0.0
    %3086 = vmatpush1.msra.mxu0 0.0
    %3087 = vmatprep.subr.mxu0 0.0
    %3088 = vmatpush1.msra.mxu0 0.0
    %3089 = vmatprep.subr.mxu0 0.0
    %3090 = vmatpush1.msra.mxu0 0.0
    %3091 = vmatprep.subr.mxu0 0.0
    %3092 = vmatpush1.msra.mxu0 0.0
    %3093 = vmatprep.subr.mxu0 0.0
    %3094 = vmatpush1.msra.mxu0 0.0
    %3095 = vmatprep.subr.mxu0 %v2599
    %3096 = vmatpush1.msra.mxu0 %v2598
    %3097 = vmatprep.subr.mxu0 0.0
    %3098 = vmatpush2.msra.mxu0 0.0
    %3099 = vmatprep.subr.mxu0 0.0
    %3100 = vmatpush2.msra.mxu0 0.0
    %3101 = vmatprep.subr.mxu0 0.0
    %3102 = vmatpush2.msra.mxu0 0.0
    %3103 = vmatprep.subr.mxu0 0.0
    %3104 = vmatpush2.msra.mxu0 0.0
    %3105 = vmatprep.subr.mxu0 0.0
    %3106 = vmatpush2.msra.mxu0 0.0
    %3107 = vmatprep.subr.mxu0 0.0
    %3108 = vmatpush2.msra.mxu0 0.0
    %3109 = vmatprep.subr.mxu0 0.0
    %3110 = vmatpush2.msra.mxu0 0.0
    %3111 = vmatprep.subr.mxu0 0.0
    %3112 = vmatpush2.msra.mxu0 0.0
    %3113 = vmatprep.subr.mxu0 0.0
    %3114 = vmatpush2.msra.mxu0 0.0
    %3115 = vmatprep.subr.mxu0 0.0
    %3116 = vmatpush2.msra.mxu0 0.0
    %3117 = vmatprep.subr.mxu0 0.0
    %3118 = vmatpush2.msra.mxu0 0.0
    %3119 = vmatprep.subr.mxu0 0.0
    %3120 = vmatpush2.msra.mxu0 0.0
    %3121 = vmatprep.subr.mxu0 0.0
    %3122 = vmatpush2.msra.mxu0 0.0
    %3123 = vmatprep.subr.mxu0 0.0
    %3124 = vmatpush2.msra.mxu0 0.0
    %3125 = vmatprep.subr.mxu0 0.0
    %3126 = vmatpush2.msra.mxu0 0.0
    %3127 = vmatprep.subr.mxu0 0.0
    %3128 = vmatpush2.msra.mxu0 0.0
    %3129 = vmatprep.mubr.f32.mxu0 0.0
    %3130 = vmatmul.mubr.f32.gmra.mxu0 %v2609
    %v3131 = vpop.f32.mrf.mxu0
    %v3132 = vadd.f32 0.0, %v3131
    %v3133 = vpop.f32.mrf.mxu0
    %v3134 = vadd.f32 0.0, %v3133
    %3135 = vmatprep.mubr.f32.mxu0 0.0
    %3136 = vmatmul.mubr.f32.gmra.mxu0 %v2612
    %v3137 = vpop.f32.mrf.mxu0
    %v3138 = vadd.f32 0.0, %v3137
    %v3139 = vpop.f32.mrf.mxu0
    %v3140 = vadd.f32 0.0, %v3139
    %3141 = vmatprep.mubr.f32.mxu0 0.0
    %3142 = vmatmul.mubr.f32.gmra.mxu0 %v2615
    %v3143 = vpop.f32.mrf.mxu0
    %v3144 = vadd.f32 0.0, %v3143
    %v3145 = vpop.f32.mrf.mxu0
    %v3146 = vadd.f32 0.0, %v3145
    %3147 = vmatprep.mubr.f32.mxu0 0.0
    %3148 = vmatmul.mubr.f32.gmra.mxu0 %v2618
    %v3149 = vpop.f32.mrf.mxu0
    %v3150 = vadd.f32 0.0, %v3149
    %v3151 = vpop.f32.mrf.mxu0
    %v3152 = vadd.f32 0.0, %v3151
    %3153 = vdwg.mxu0
    %3154 = vmatprep.subr.mxu0 0.0
    %3155 = vmatpush1.msra.mxu0 0.0
    %3156 = vmatprep.subr.mxu0 0.0
    %3157 = vmatpush1.msra.mxu0 0.0
    %3158 = vmatprep.subr.mxu0 0.0
    %3159 = vmatpush1.msra.mxu0 0.0
    %3160 = vmatprep.subr.mxu0 0.0
    %3161 = vmatpush1.msra.mxu0 0.0
    %3162 = vmatprep.subr.mxu0 0.0
    %3163 = vmatpush1.msra.mxu0 0.0
    %3164 = vmatprep.subr.mxu0 0.0
    %3165 = vmatpush1.msra.mxu0 0.0
    %3166 = vmatprep.subr.mxu0 0.0
    %3167 = vmatpush1.msra.mxu0 0.0
    %3168 = vmatprep.subr.mxu0 0.0
    %3169 = vmatpush1.msra.mxu0 0.0
    %3170 = vmatprep.subr.mxu0 0.0
    %3171 = vmatpush1.msra.mxu0 0.0
    %3172 = vmatprep.subr.mxu0 0.0
    %3173 = vmatpush1.msra.mxu0 0.0
    %3174 = vmatprep.subr.mxu0 0.0
    %3175 = vmatpush1.msra.mxu0 0.0
    %3176 = vmatprep.subr.mxu0 0.0
    %3177 = vmatpush1.msra.mxu0 0.0
    %3178 = vmatprep.subr.mxu0 0.0
    %3179 = vmatpush1.msra.mxu0 0.0
    %3180 = vmatprep.subr.mxu0 0.0
    %3181 = vmatpush1.msra.mxu0 0.0
    %3182 = vmatprep.subr.mxu0 0.0
    %3183 = vmatpush1.msra.mxu0 0.0
    %3184 = vmatprep.subr.mxu0 %v2601
    %3185 = vmatpush1.msra.mxu0 %v2600
    %3186 = vmatprep.subr.mxu0 0.0
    %3187 = vmatpush2.msra.mxu0 0.0
    %3188 = vmatprep.subr.mxu0 0.0
    %3189 = vmatpush2.msra.mxu0 0.0
    %3190 = vmatprep.subr.mxu0 0.0
    %3191 = vmatpush2.msra.mxu0 0.0
    %3192 = vmatprep.subr.mxu0 0.0
    %3193 = vmatpush2.msra.mxu0 0.0
    %3194 = vmatprep.subr.mxu0 0.0
    %3195 = vmatpush2.msra.mxu0 0.0
    %3196 = vmatprep.subr.mxu0 0.0
    %3197 = vmatpush2.msra.mxu0 0.0
    %3198 = vmatprep.subr.mxu0 0.0
    %3199 = vmatpush2.msra.mxu0 0.0
    %3200 = vmatprep.subr.mxu0 0.0
    %3201 = vmatpush2.msra.mxu0 0.0
    %3202 = vmatprep.subr.mxu0 0.0
    %3203 = vmatpush2.msra.mxu0 0.0
    %3204 = vmatprep.subr.mxu0 0.0
    %3205 = vmatpush2.msra.mxu0 0.0
    %3206 = vmatprep.subr.mxu0 0.0
    %3207 = vmatpush2.msra.mxu0 0.0
    %3208 = vmatprep.subr.mxu0 0.0
    %3209 = vmatpush2.msra.mxu0 0.0
    %3210 = vmatprep.subr.mxu0 0.0
    %3211 = vmatpush2.msra.mxu0 0.0
    %3212 = vmatprep.subr.mxu0 0.0
    %3213 = vmatpush2.msra.mxu0 0.0
    %3214 = vmatprep.subr.mxu0 0.0
    %3215 = vmatpush2.msra.mxu0 0.0
    %3216 = vmatprep.subr.mxu0 0.0
    %3217 = vmatpush2.msra.mxu0 0.0
    %3218 = vmatprep.mubr.f32.mxu0 0.0
    %3219 = vmatmul.mubr.f32.gmra.mxu0 %v2609
    %v3220 = vpop.f32.mrf.mxu0
    %v3221 = vadd.f32 0.0, %v3220
    %v3222 = vpop.f32.mrf.mxu0
    %v3223 = vadd.f32 0.0, %v3222
    %3224 = vmatprep.mubr.f32.mxu0 0.0
    %3225 = vmatmul.mubr.f32.gmra.mxu0 %v2612
    %v3226 = vpop.f32.mrf.mxu0
    %v3227 = vadd.f32 0.0, %v3226
    %v3228 = vpop.f32.mrf.mxu0
    %v3229 = vadd.f32 0.0, %v3228
    %3230 = vmatprep.mubr.f32.mxu0 0.0
    %3231 = vmatmul.mubr.f32.gmra.mxu0 %v2615
    %v3232 = vpop.f32.mrf.mxu0
    %v3233 = vadd.f32 0.0, %v3232
    %v3234 = vpop.f32.mrf.mxu0
    %v3235 = vadd.f32 0.0, %v3234
    %3236 = vmatprep.mubr.f32.mxu0 0.0
    %3237 = vmatmul.mubr.f32.gmra.mxu0 %v2618
    %v3238 = vpop.f32.mrf.mxu0
    %v3239 = vadd.f32 0.0, %v3238
    %v3240 = vpop.f32.mrf.mxu0
    %v3241 = vadd.f32 0.0, %v3240
    %3242 = vdwg.mxu0
    %3243 = vmatprep.subr.mxu0 0.0
    %3244 = vmatpush1.msra.mxu0 0.0
    %3245 = vmatprep.subr.mxu0 0.0
    %3246 = vmatpush1.msra.mxu0 0.0
    %3247 = vmatprep.subr.mxu0 0.0
    %3248 = vmatpush1.msra.mxu0 0.0
    %3249 = vmatprep.subr.mxu0 0.0
    %3250 = vmatpush1.msra.mxu0 0.0
    %3251 = vmatprep.subr.mxu0 0.0
    %3252 = vmatpush1.msra.mxu0 0.0
    %3253 = vmatprep.subr.mxu0 0.0
    %3254 = vmatpush1.msra.mxu0 0.0
    %3255 = vmatprep.subr.mxu0 0.0
    %3256 = vmatpush1.msra.mxu0 0.0
    %3257 = vmatprep.subr.mxu0 0.0
    %3258 = vmatpush1.msra.mxu0 0.0
    %3259 = vmatprep.subr.mxu0 0.0
    %3260 = vmatpush1.msra.mxu0 0.0
    %3261 = vmatprep.subr.mxu0 0.0
    %3262 = vmatpush1.msra.mxu0 0.0
    %3263 = vmatprep.subr.mxu0 0.0
    %3264 = vmatpush1.msra.mxu0 0.0
    %3265 = vmatprep.subr.mxu0 0.0
    %3266 = vmatpush1.msra.mxu0 0.0
    %3267 = vmatprep.subr.mxu0 0.0
    %3268 = vmatpush1.msra.mxu0 0.0
    %3269 = vmatprep.subr.mxu0 0.0
    %3270 = vmatpush1.msra.mxu0 0.0
    %3271 = vmatprep.subr.mxu0 0.0
    %3272 = vmatpush1.msra.mxu0 0.0
    %3273 = vmatprep.subr.mxu0 %v2603
    %3274 = vmatpush1.msra.mxu0 %v2602
    %3275 = vmatprep.subr.mxu0 0.0
    %3276 = vmatpush2.msra.mxu0 0.0
    %3277 = vmatprep.subr.mxu0 0.0
    %3278 = vmatpush2.msra.mxu0 0.0
    %3279 = vmatprep.subr.mxu0 0.0
    %3280 = vmatpush2.msra.mxu0 0.0
    %3281 = vmatprep.subr.mxu0 0.0
    %3282 = vmatpush2.msra.mxu0 0.0
    %3283 = vmatprep.subr.mxu0 0.0
    %3284 = vmatpush2.msra.mxu0 0.0
    %3285 = vmatprep.subr.mxu0 0.0
    %3286 = vmatpush2.msra.mxu0 0.0
    %3287 = vmatprep.subr.mxu0 0.0
    %3288 = vmatpush2.msra.mxu0 0.0
    %3289 = vmatprep.subr.mxu0 0.0
    %3290 = vmatpush2.msra.mxu0 0.0
    %3291 = vmatprep.subr.mxu0 0.0
    %3292 = vmatpush2.msra.mxu0 0.0
    %3293 = vmatprep.subr.mxu0 0.0
    %3294 = vmatpush2.msra.mxu0 0.0
    %3295 = vmatprep.subr.mxu0 0.0
    %3296 = vmatpush2.msra.mxu0 0.0
    %3297 = vmatprep.subr.mxu0 0.0
    %3298 = vmatpush2.msra.mxu0 0.0
    %3299 = vmatprep.subr.mxu0 0.0
    %3300 = vmatpush2.msra.mxu0 0.0
    %3301 = vmatprep.subr.mxu0 0.0
    %3302 = vmatpush2.msra.mxu0 0.0
    %3303 = vmatprep.subr.mxu0 0.0
    %3304 = vmatpush2.msra.mxu0 0.0
    %3305 = vmatprep.subr.mxu0 0.0
    %3306 = vmatpush2.msra.mxu0 0.0
    %3307 = vmatprep.mubr.f32.mxu0 0.0
    %3308 = vmatmul.mubr.f32.gmra.mxu0 %v2609
    %v3309 = vpop.f32.mrf.mxu0
    %v3310 = vadd.f32 0.0, %v3309
    %v3311 = vpop.f32.mrf.mxu0
    %v3312 = vadd.f32 0.0, %v3311
    %3313 = vmatprep.mubr.f32.mxu0 0.0
    %3314 = vmatmul.mubr.f32.gmra.mxu0 %v2612
    %v3315 = vpop.f32.mrf.mxu0
    %v3316 = vadd.f32 0.0, %v3315
    %v3317 = vpop.f32.mrf.mxu0
    %v3318 = vadd.f32 0.0, %v3317
    %3319 = vmatprep.mubr.f32.mxu0 0.0
    %3320 = vmatmul.mubr.f32.gmra.mxu0 %v2615
    %v3321 = vpop.f32.mrf.mxu0
    %v3322 = vadd.f32 0.0, %v3321
    %v3323 = vpop.f32.mrf.mxu0
    %v3324 = vadd.f32 0.0, %v3323
    %3325 = vmatprep.mubr.f32.mxu0 0.0
    %3326 = vmatmul.mubr.f32.gmra.mxu0 %v2618
    %v3327 = vpop.f32.mrf.mxu0
    %v3328 = vadd.f32 0.0, %v3327
    %v3329 = vpop.f32.mrf.mxu0
    %v3330 = vadd.f32 0.0, %v3329
    %3331 = vdwg.mxu0
    %3332 = vmatprep.subr.mxu0 0.0
    %3333 = vmatpush1.msra.mxu0 0.0
    %3334 = vmatprep.subr.mxu0 0.0
    %3335 = vmatpush1.msra.mxu0 0.0
    %3336 = vmatprep.subr.mxu0 0.0
    %3337 = vmatpush1.msra.mxu0 0.0
    %3338 = vmatprep.subr.mxu0 0.0
    %3339 = vmatpush1.msra.mxu0 0.0
    %3340 = vmatprep.subr.mxu0 0.0
    %3341 = vmatpush1.msra.mxu0 0.0
    %3342 = vmatprep.subr.mxu0 0.0
    %3343 = vmatpush1.msra.mxu0 0.0
    %3344 = vmatprep.subr.mxu0 0.0
    %3345 = vmatpush1.msra.mxu0 0.0
    %3346 = vmatprep.subr.mxu0 0.0
    %3347 = vmatpush1.msra.mxu0 0.0
    %3348 = vmatprep.subr.mxu0 0.0
    %3349 = vmatpush1.msra.mxu0 0.0
    %3350 = vmatprep.subr.mxu0 0.0
    %3351 = vmatpush1.msra.mxu0 0.0
    %3352 = vmatprep.subr.mxu0 0.0
    %3353 = vmatpush1.msra.mxu0 0.0
    %3354 = vmatprep.subr.mxu0 0.0
    %3355 = vmatpush1.msra.mxu0 0.0
    %3356 = vmatprep.subr.mxu0 0.0
    %3357 = vmatpush1.msra.mxu0 0.0
    %3358 = vmatprep.subr.mxu0 0.0
    %3359 = vmatpush1.msra.mxu0 0.0
    %3360 = vmatprep.subr.mxu0 0.0
    %3361 = vmatpush1.msra.mxu0 0.0
    %3362 = vmatprep.subr.mxu0 %v2605
    %3363 = vmatpush1.msra.mxu0 %v2604
    %3364 = vmatprep.subr.mxu0 0.0
    %3365 = vmatpush2.msra.mxu0 0.0
    %3366 = vmatprep.subr.mxu0 0.0
    %3367 = vmatpush2.msra.mxu0 0.0
    %3368 = vmatprep.subr.mxu0 0.0
    %3369 = vmatpush2.msra.mxu0 0.0
    %3370 = vmatprep.subr.mxu0 0.0
    %3371 = vmatpush2.msra.mxu0 0.0
    %3372 = vmatprep.subr.mxu0 0.0
    %3373 = vmatpush2.msra.mxu0 0.0
    %3374 = vmatprep.subr.mxu0 0.0
    %3375 = vmatpush2.msra.mxu0 0.0
    %3376 = vmatprep.subr.mxu0 0.0
    %3377 = vmatpush2.msra.mxu0 0.0
    %3378 = vmatprep.subr.mxu0 0.0
    %3379 = vmatpush2.msra.mxu0 0.0
    %3380 = vmatprep.subr.mxu0 0.0
    %3381 = vmatpush2.msra.mxu0 0.0
    %3382 = vmatprep.subr.mxu0 0.0
    %3383 = vmatpush2.msra.mxu0 0.0
    %3384 = vmatprep.subr.mxu0 0.0
    %3385 = vmatpush2.msra.mxu0 0.0
    %3386 = vmatprep.subr.mxu0 0.0
    %3387 = vmatpush2.msra.mxu0 0.0
    %3388 = vmatprep.subr.mxu0 0.0
    %3389 = vmatpush2.msra.mxu0 0.0
    %3390 = vmatprep.subr.mxu0 0.0
    %3391 = vmatpush2.msra.mxu0 0.0
    %3392 = vmatprep.subr.mxu0 0.0
    %3393 = vmatpush2.msra.mxu0 0.0
    %3394 = vmatprep.subr.mxu0 0.0
    %3395 = vmatpush2.msra.mxu0 0.0
    %3396 = vmatprep.mubr.f32.mxu0 0.0
    %3397 = vmatmul.mubr.f32.gmra.mxu0 %v2609
    %v3398 = vpop.f32.mrf.mxu0
    %v3399 = vadd.f32 0.0, %v3398
    %v3400 = vpop.f32.mrf.mxu0
    %v3401 = vadd.f32 0.0, %v3400
    %3402 = vmatprep.mubr.f32.mxu0 0.0
    %3403 = vmatmul.mubr.f32.gmra.mxu0 %v2612
    %v3404 = vpop.f32.mrf.mxu0
    %v3405 = vadd.f32 0.0, %v3404
    %v3406 = vpop.f32.mrf.mxu0
    %v3407 = vadd.f32 0.0, %v3406
    %3408 = vmatprep.mubr.f32.mxu0 0.0
    %3409 = vmatmul.mubr.f32.gmra.mxu0 %v2615
    %v3410 = vpop.f32.mrf.mxu0
    %v3411 = vadd.f32 0.0, %v3410
    %v3412 = vpop.f32.mrf.mxu0
    %v3413 = vadd.f32 0.0, %v3412
    %3414 = vmatprep.mubr.f32.mxu0 0.0
    %3415 = vmatmul.mubr.f32.gmra.mxu0 %v2618
    %v3416 = vpop.f32.mrf.mxu0
    %v3417 = vadd.f32 0.0, %v3416
    %v3418 = vpop.f32.mrf.mxu0
    %v3419 = vadd.f32 0.0, %v3418
    %3420 = vdwg.mxu0
    %3421 = vmatprep.subr.mxu0 0.0
    %3422 = vmatpush1.msra.mxu0 0.0
    %3423 = vmatprep.subr.mxu0 0.0
    %3424 = vmatpush1.msra.mxu0 0.0
    %3425 = vmatprep.subr.mxu0 0.0
    %3426 = vmatpush1.msra.mxu0 0.0
    %3427 = vmatprep.subr.mxu0 0.0
    %3428 = vmatpush1.msra.mxu0 0.0
    %3429 = vmatprep.subr.mxu0 0.0
    %3430 = vmatpush1.msra.mxu0 0.0
    %3431 = vmatprep.subr.mxu0 0.0
    %3432 = vmatpush1.msra.mxu0 0.0
    %3433 = vmatprep.subr.mxu0 0.0
    %3434 = vmatpush1.msra.mxu0 0.0
    %3435 = vmatprep.subr.mxu0 0.0
    %3436 = vmatpush1.msra.mxu0 0.0
    %3437 = vmatprep.subr.mxu0 0.0
    %3438 = vmatpush1.msra.mxu0 0.0
    %3439 = vmatprep.subr.mxu0 0.0
    %3440 = vmatpush1.msra.mxu0 0.0
    %3441 = vmatprep.subr.mxu0 0.0
    %3442 = vmatpush1.msra.mxu0 0.0
    %3443 = vmatprep.subr.mxu0 0.0
    %3444 = vmatpush1.msra.mxu0 0.0
    %3445 = vmatprep.subr.mxu0 0.0
    %3446 = vmatpush1.msra.mxu0 0.0
    %3447 = vmatprep.subr.mxu0 0.0
    %3448 = vmatpush1.msra.mxu0 0.0
    %3449 = vmatprep.subr.mxu0 0.0
    %3450 = vmatpush1.msra.mxu0 0.0
    %3451 = vmatprep.subr.mxu0 %v2607
    %3452 = vmatpush1.msra.mxu0 %v2606
    %3453 = vmatprep.subr.mxu0 0.0
    %3454 = vmatpush2.msra.mxu0 0.0
    %3455 = vmatprep.subr.mxu0 0.0
    %3456 = vmatpush2.msra.mxu0 0.0
    %3457 = vmatprep.subr.mxu0 0.0
    %3458 = vmatpush2.msra.mxu0 0.0
    %3459 = vmatprep.subr.mxu0 0.0
    %3460 = vmatpush2.msra.mxu0 0.0
    %3461 = vmatprep.subr.mxu0 0.0
    %3462 = vmatpush2.msra.mxu0 0.0
    %3463 = vmatprep.subr.mxu0 0.0
    %3464 = vmatpush2.msra.mxu0 0.0
    %3465 = vmatprep.subr.mxu0 0.0
    %3466 = vmatpush2.msra.mxu0 0.0
    %3467 = vmatprep.subr.mxu0 0.0
    %3468 = vmatpush2.msra.mxu0 0.0
    %3469 = vmatprep.subr.mxu0 0.0
    %3470 = vmatpush2.msra.mxu0 0.0
    %3471 = vmatprep.subr.mxu0 0.0
    %3472 = vmatpush2.msra.mxu0 0.0
    %3473 = vmatprep.subr.mxu0 0.0
    %3474 = vmatpush2.msra.mxu0 0.0
    %3475 = vmatprep.subr.mxu0 0.0
    %3476 = vmatpush2.msra.mxu0 0.0
    %3477 = vmatprep.subr.mxu0 0.0
    %3478 = vmatpush2.msra.mxu0 0.0
    %3479 = vmatprep.subr.mxu0 0.0
    %3480 = vmatpush2.msra.mxu0 0.0
    %3481 = vmatprep.subr.mxu0 0.0
    %3482 = vmatpush2.msra.mxu0 0.0
    %3483 = vmatprep.subr.mxu0 0.0
    %3484 = vmatpush2.msra.mxu0 0.0
    %3485 = vmatprep.mubr.f32.mxu0 0.0
    %3486 = vmatmul.mubr.f32.gmra.mxu0 %v2609
    %v3487 = vpop.f32.mrf.mxu0
    %v3488 = vadd.f32 0.0, %v3487
    %v3489 = vpop.f32.mrf.mxu0
    %v3490 = vadd.f32 0.0, %v3489
    %3491 = vmatprep.mubr.f32.mxu0 0.0
    %3492 = vmatmul.mubr.f32.gmra.mxu0 %v2612
    %v3493 = vpop.f32.mrf.mxu0
    %v3494 = vadd.f32 0.0, %v3493
    %v3495 = vpop.f32.mrf.mxu0
    %v3496 = vadd.f32 0.0, %v3495
    %3497 = vmatprep.mubr.f32.mxu0 0.0
    %3498 = vmatmul.mubr.f32.gmra.mxu0 %v2615
    %v3499 = vpop.f32.mrf.mxu0
    %v3500 = vadd.f32 0.0, %v3499
    %v3501 = vpop.f32.mrf.mxu0
    %v3502 = vadd.f32 0.0, %v3501
    %3503 = vmatprep.mubr.f32.mxu0 0.0
    %3504 = vmatmul.mubr.f32.gmra.mxu0 %v2618
    %v3505 = vpop.f32.mrf.mxu0
    %v3506 = vadd.f32 0.0, %v3505
    %v3507 = vpop.f32.mrf.mxu0
    %v3508 = vadd.f32 0.0, %v3507
    %3509 = vdwg.mxu0
    %v3510 = vld [vmem:[#allocation25] sm:$0xff]
    %v3511 = vld [vmem:[#allocation25 + $0x8] sm:$0xff]
    %v3512 = vld [vmem:[#allocation25 + $0x10] sm:$0xff]
    %v3513 = vld [vmem:[#allocation25 + $0x18] sm:$0xff]
    %v3514 = vld [vmem:[#allocation25 + $0x20] sm:$0xff]
    %v3515 = vld [vmem:[#allocation25 + $0x28] sm:$0xff]
    %v3516 = vld [vmem:[#allocation25 + $0x30] sm:$0xff]
    %v3517 = vld [vmem:[#allocation25 + $0x38] sm:$0xff]
    %v3518 = vld [vmem:[#allocation25 + $0x40] sm:$0xff]
    %v3519 = vld [vmem:[#allocation25 + $0x48] sm:$0xff]
    %v3520 = vld [vmem:[#allocation25 + $0x50] sm:$0xff]
    %v3521 = vld [vmem:[#allocation25 + $0x58] sm:$0xff]
    %v3522 = vld [vmem:[#allocation25 + $0x60] sm:$0xff]
    %v3523 = vld [vmem:[#allocation25 + $0x68] sm:$0xff]
    %v3524 = vld [vmem:[#allocation25 + $0x70] sm:$0xff]
    %v3525 = vld [vmem:[#allocation25 + $0x78] sm:$0xff]
    %v3526 = vld [vmem:[#allocation25 + $0x80] sm:$0xff]
    %v3527 = vld [vmem:[#allocation25 + $0x88] sm:$0xff]
    %v3528 = vld [vmem:[#allocation25 + $0x90] sm:$0xff]
    %v3529 = vld [vmem:[#allocation25 + $0x98] sm:$0xff]
    %v3530 = vld [vmem:[#allocation25 + $0xa0] sm:$0xff]
    %v3531 = vld [vmem:[#allocation25 + $0xa8] sm:$0xff]
    %v3532 = vld [vmem:[#allocation25 + $0xb0] sm:$0xff]
    %v3533 = vld [vmem:[#allocation25 + $0xb8] sm:$0xff]
    %v3534 = vld [vmem:[#allocation25 + $0xc0] sm:$0xff]
    %v3535 = vld [vmem:[#allocation25 + $0xc8] sm:$0xff]
    %v3536 = vld [vmem:[#allocation25 + $0xd0] sm:$0xff]
    %v3537 = vld [vmem:[#allocation25 + $0xd8] sm:$0xff]
    %v3538 = vld [vmem:[#allocation25 + $0xe0] sm:$0xff]
    %v3539 = vld [vmem:[#allocation25 + $0xe8] sm:$0xff]
    %v3540 = vld [vmem:[#allocation25 + $0xf0] sm:$0xff]
    %v3541 = vld [vmem:[#allocation25 + $0xf8] sm:$0xff]
    %v3542 = vld [vmem:[#allocation25 + $0x100] sm:$0xff]
    %v3543 = vld [vmem:[#allocation25 + $0x108] sm:$0xff]
    %v3544 = vld [vmem:[#allocation25 + $0x110] sm:$0xff]
    %v3545 = vld [vmem:[#allocation25 + $0x118] sm:$0xff]
    %v3546 = vld [vmem:[#allocation25 + $0x120] sm:$0xff]
    %v3547 = vld [vmem:[#allocation25 + $0x128] sm:$0xff]
    %v3548 = vld [vmem:[#allocation25 + $0x130] sm:$0xff]
    %v3549 = vld [vmem:[#allocation25 + $0x138] sm:$0xff]
    %v3550 = vld [vmem:[#allocation25 + $0x140] sm:$0xff]
    %v3551 = vld [vmem:[#allocation25 + $0x148] sm:$0xff]
    %v3552 = vld [vmem:[#allocation25 + $0x150] sm:$0xff]
    %v3553 = vld [vmem:[#allocation25 + $0x158] sm:$0xff]
    %v3554 = vld [vmem:[#allocation25 + $0x160] sm:$0xff]
    %v3555 = vld [vmem:[#allocation25 + $0x168] sm:$0xff]
    %v3556 = vld [vmem:[#allocation25 + $0x170] sm:$0xff]
    %v3557 = vld [vmem:[#allocation25 + $0x178] sm:$0xff]
    %v3558 = vld [vmem:[#allocation25 + $0x180] sm:$0xff]
    %v3559 = vld [vmem:[#allocation25 + $0x188] sm:$0xff]
    %v3560 = vld [vmem:[#allocation25 + $0x190] sm:$0xff]
    %v3561 = vld [vmem:[#allocation25 + $0x198] sm:$0xff]
    %v3562 = vld [vmem:[#allocation25 + $0x1a0] sm:$0xff]
    %v3563 = vld [vmem:[#allocation25 + $0x1a8] sm:$0xff]
    %v3564 = vld [vmem:[#allocation25 + $0x1b0] sm:$0xff]
    %v3565 = vld [vmem:[#allocation25 + $0x1b8] sm:$0xff]
    %v3566 = vld [vmem:[#allocation25 + $0x1c0] sm:$0xff]
    %v3567 = vld [vmem:[#allocation25 + $0x1c8] sm:$0xff]
    %v3568 = vld [vmem:[#allocation25 + $0x1d0] sm:$0xff]
    %v3569 = vld [vmem:[#allocation25 + $0x1d8] sm:$0xff]
    %v3570 = vld [vmem:[#allocation25 + $0x1e0] sm:$0xff]
    %v3571 = vld [vmem:[#allocation25 + $0x1e8] sm:$0xff]
    %v3572 = vld [vmem:[#allocation25 + $0x1f0] sm:$0xff]
    %v3573 = vld [vmem:[#allocation25 + $0x1f8] sm:$0xff]
    %v3574 = vld [vmem:[#allocation25 + $0x200] sm:$0xff]
    %v3575 = vld [vmem:[#allocation25 + $0x208] sm:$0xff]
    %v3576 = vld [vmem:[#allocation25 + $0x210] sm:$0xff]
    %v3577 = vld [vmem:[#allocation25 + $0x218] sm:$0xff]
    %v3578 = vld [vmem:[#allocation25 + $0x220] sm:$0xff]
    %v3579 = vld [vmem:[#allocation25 + $0x228] sm:$0xff]
    %v3580 = vld [vmem:[#allocation25 + $0x230] sm:$0xff]
    %v3581 = vld [vmem:[#allocation25 + $0x238] sm:$0xff]
    %v3582 = vld [vmem:[#allocation25 + $0x240] sm:$0xff]
    %v3583 = vld [vmem:[#allocation25 + $0x248] sm:$0xff]
    %v3584 = vld [vmem:[#allocation25 + $0x250] sm:$0xff]
    %v3585 = vld [vmem:[#allocation25 + $0x258] sm:$0xff]
    %v3586 = vld [vmem:[#allocation25 + $0x260] sm:$0xff]
    %v3587 = vld [vmem:[#allocation25 + $0x268] sm:$0xff]
    %v3588 = vld [vmem:[#allocation25 + $0x270] sm:$0xff]
    %v3589 = vld [vmem:[#allocation25 + $0x278] sm:$0xff]
    %v3590 = vld [vmem:[#allocation25 + $0x280] sm:$0xff]
    %v3591 = vld [vmem:[#allocation25 + $0x288] sm:$0xff]
    %v3592 = vld [vmem:[#allocation25 + $0x290] sm:$0xff]
    %v3593 = vld [vmem:[#allocation25 + $0x298] sm:$0xff]
    %v3594 = vld [vmem:[#allocation25 + $0x2a0] sm:$0xff]
    %v3595 = vld [vmem:[#allocation25 + $0x2a8] sm:$0xff]
    %v3596 = vld [vmem:[#allocation25 + $0x2b0] sm:$0xff]
    %v3597 = vld [vmem:[#allocation25 + $0x2b8] sm:$0xff]
    %v3598 = vld [vmem:[#allocation25 + $0x2c0] sm:$0xff]
    %v3599 = vld [vmem:[#allocation25 + $0x2c8] sm:$0xff]
    %v3600 = vld [vmem:[#allocation25 + $0x2d0] sm:$0xff]
    %v3601 = vld [vmem:[#allocation25 + $0x2d8] sm:$0xff]
    %v3602 = vld [vmem:[#allocation25 + $0x2e0] sm:$0xff]
    %v3603 = vld [vmem:[#allocation25 + $0x2e8] sm:$0xff]
    %v3604 = vld [vmem:[#allocation25 + $0x2f0] sm:$0xff]
    %v3605 = vld [vmem:[#allocation25 + $0x2f8] sm:$0xff]
    %v3606 = vld [vmem:[#allocation25 + $0x300] sm:$0xff]
    %v3607 = vld [vmem:[#allocation25 + $0x308] sm:$0xff]
    %v3608 = vld [vmem:[#allocation25 + $0x310] sm:$0xff]
    %v3609 = vld [vmem:[#allocation25 + $0x318] sm:$0xff]
    %v3610 = vld [vmem:[#allocation25 + $0x320] sm:$0xff]
    %v3611 = vld [vmem:[#allocation25 + $0x328] sm:$0xff]
    %v3612 = vld [vmem:[#allocation25 + $0x330] sm:$0xff]
    %v3613 = vld [vmem:[#allocation25 + $0x338] sm:$0xff]
    %v3614 = vld [vmem:[#allocation25 + $0x340] sm:$0xff]
    %v3615 = vld [vmem:[#allocation25 + $0x348] sm:$0xff]
    %v3616 = vld [vmem:[#allocation25 + $0x350] sm:$0xff]
    %v3617 = vld [vmem:[#allocation25 + $0x358] sm:$0xff]
    %v3618 = vld [vmem:[#allocation25 + $0x360] sm:$0xff]
    %v3619 = vld [vmem:[#allocation25 + $0x368] sm:$0xff]
    %v3620 = vld [vmem:[#allocation25 + $0x370] sm:$0xff]
    %v3621 = vld [vmem:[#allocation25 + $0x378] sm:$0xff]
    %v3622 = vld [vmem:[#allocation25 + $0x380] sm:$0xff]
    %v3623 = vld [vmem:[#allocation25 + $0x388] sm:$0xff]
    %v3624 = vld [vmem:[#allocation25 + $0x390] sm:$0xff]
    %v3625 = vld [vmem:[#allocation25 + $0x398] sm:$0xff]
    %v3626 = vld [vmem:[#allocation25 + $0x3a0] sm:$0xff]
    %v3627 = vld [vmem:[#allocation25 + $0x3a8] sm:$0xff]
    %v3628 = vld [vmem:[#allocation25 + $0x3b0] sm:$0xff]
    %v3629 = vld [vmem:[#allocation25 + $0x3b8] sm:$0xff]
    %v3630 = vld [vmem:[#allocation25 + $0x3c0] sm:$0xff]
    %v3631 = vld [vmem:[#allocation25 + $0x3c8] sm:$0xff]
    %v3632 = vld [vmem:[#allocation25 + $0x3d0] sm:$0xff]
    %v3633 = vld [vmem:[#allocation25 + $0x3d8] sm:$0xff]
    %v3634 = vld [vmem:[#allocation25 + $0x3e0] sm:$0xff]
    %v3635 = vld [vmem:[#allocation25 + $0x3e8] sm:$0xff]
    %v3636 = vld [vmem:[#allocation25 + $0x3f0] sm:$0xff]
    %v3637 = vld [vmem:[#allocation25 + $0x3f8] sm:$0xff]
    %v3638 = vld [vmem:[#allocation25 + $0x400] sm:$0xff]
    %v3639 = vld [vmem:[#allocation25 + $0x408] sm:$0xff]
    %v3640 = vld [vmem:[#allocation25 + $0x410] sm:$0xff]
    %v3641 = vld [vmem:[#allocation25 + $0x418] sm:$0xff]
    %v3642 = vld [vmem:[#allocation25 + $0x420] sm:$0xff]
    %v3643 = vld [vmem:[#allocation25 + $0x428] sm:$0xff]
    %v3644 = vld [vmem:[#allocation25 + $0x430] sm:$0xff]
    %v3645 = vld [vmem:[#allocation25 + $0x438] sm:$0xff]
    %v3646 = vld [vmem:[#allocation25 + $0x440] sm:$0xff]
    %v3647 = vld [vmem:[#allocation25 + $0x448] sm:$0xff]
    %v3648 = vld [vmem:[#allocation25 + $0x450] sm:$0xff]
    %v3649 = vld [vmem:[#allocation25 + $0x458] sm:$0xff]
    %v3650 = vld [vmem:[#allocation25 + $0x460] sm:$0xff]
    %v3651 = vld [vmem:[#allocation25 + $0x468] sm:$0xff]
    %v3652 = vld [vmem:[#allocation25 + $0x470] sm:$0xff]
    %v3653 = vld [vmem:[#allocation25 + $0x478] sm:$0xff]
    %v3654 = vld [vmem:[#allocation25 + $0x480] sm:$0xff]
    %v3655 = vld [vmem:[#allocation25 + $0x488] sm:$0xff]
    %v3656 = vld [vmem:[#allocation25 + $0x490] sm:$0xff]
    %v3657 = vld [vmem:[#allocation25 + $0x498] sm:$0xff]
    %v3658 = vld [vmem:[#allocation25 + $0x4a0] sm:$0xff]
    %v3659 = vld [vmem:[#allocation25 + $0x4a8] sm:$0xff]
    %v3660 = vld [vmem:[#allocation25 + $0x4b0] sm:$0xff]
    %v3661 = vld [vmem:[#allocation25 + $0x4b8] sm:$0xff]
    %v3662 = vld [vmem:[#allocation25 + $0x4c0] sm:$0xff]
    %v3663 = vld [vmem:[#allocation25 + $0x4c8] sm:$0xff]
    %v3664 = vld [vmem:[#allocation25 + $0x4d0] sm:$0xff]
    %v3665 = vld [vmem:[#allocation25 + $0x4d8] sm:$0xff]
    %v3666 = vld [vmem:[#allocation25 + $0x4e0] sm:$0xff]
    %v3667 = vld [vmem:[#allocation25 + $0x4e8] sm:$0xff]
    %v3668 = vld [vmem:[#allocation25 + $0x4f0] sm:$0xff]
    %v3669 = vld [vmem:[#allocation25 + $0x4f8] sm:$0xff]
    %v3670 = vld [vmem:[#allocation25 + $0x500] sm:$0xff]
    %v3671 = vld [vmem:[#allocation25 + $0x508] sm:$0xff]
    %v3672 = vld [vmem:[#allocation25 + $0x510] sm:$0xff]
    %v3673 = vld [vmem:[#allocation25 + $0x518] sm:$0xff]
    %v3674 = vld [vmem:[#allocation25 + $0x520] sm:$0xff]
    %v3675 = vld [vmem:[#allocation25 + $0x528] sm:$0xff]
    %v3676 = vld [vmem:[#allocation25 + $0x530] sm:$0xff]
    %v3677 = vld [vmem:[#allocation25 + $0x538] sm:$0xff]
    %v3678 = vld [vmem:[#allocation25 + $0x540] sm:$0xff]
    %v3679 = vld [vmem:[#allocation25 + $0x548] sm:$0xff]
    %v3680 = vld [vmem:[#allocation25 + $0x550] sm:$0xff]
    %v3681 = vld [vmem:[#allocation25 + $0x558] sm:$0xff]
    %v3682 = vld [vmem:[#allocation25 + $0x560] sm:$0xff]
    %v3683 = vld [vmem:[#allocation25 + $0x568] sm:$0xff]
    %v3684 = vld [vmem:[#allocation25 + $0x570] sm:$0xff]
    %v3685 = vld [vmem:[#allocation25 + $0x578] sm:$0xff]
    %v3686 = vld [vmem:[#allocation25 + $0x580] sm:$0xff]
    %v3687 = vld [vmem:[#allocation25 + $0x588] sm:$0xff]
    %v3688 = vld [vmem:[#allocation25 + $0x590] sm:$0xff]
    %v3689 = vld [vmem:[#allocation25 + $0x598] sm:$0xff]
    %v3690 = vld [vmem:[#allocation25 + $0x5a0] sm:$0xff]
    %v3691 = vld [vmem:[#allocation25 + $0x5a8] sm:$0xff]
    %v3692 = vld [vmem:[#allocation25 + $0x5b0] sm:$0xff]
    %v3693 = vld [vmem:[#allocation25 + $0x5b8] sm:$0xff]
    %v3694 = vld [vmem:[#allocation25 + $0x5c0] sm:$0xff]
    %v3695 = vld [vmem:[#allocation25 + $0x5c8] sm:$0xff]
    %v3696 = vld [vmem:[#allocation25 + $0x5d0] sm:$0xff]
    %v3697 = vld [vmem:[#allocation25 + $0x5d8] sm:$0xff]
    %v3698 = vld [vmem:[#allocation25 + $0x5e0] sm:$0xff]
    %v3699 = vld [vmem:[#allocation25 + $0x5e8] sm:$0xff]
    %v3700 = vld [vmem:[#allocation25 + $0x5f0] sm:$0xff]
    %v3701 = vld [vmem:[#allocation25 + $0x5f8] sm:$0xff]
    %v3702 = vld [vmem:[#allocation25 + $0x600] sm:$0xff]
    %v3703 = vld [vmem:[#allocation25 + $0x608] sm:$0xff]
    %v3704 = vld [vmem:[#allocation25 + $0x610] sm:$0xff]
    %v3705 = vld [vmem:[#allocation25 + $0x618] sm:$0xff]
    %v3706 = vld [vmem:[#allocation25 + $0x620] sm:$0xff]
    %v3707 = vld [vmem:[#allocation25 + $0x628] sm:$0xff]
    %v3708 = vld [vmem:[#allocation25 + $0x630] sm:$0xff]
    %v3709 = vld [vmem:[#allocation25 + $0x638] sm:$0xff]
    %v3710 = vld [vmem:[#allocation25 + $0x640] sm:$0xff]
    %v3711 = vld [vmem:[#allocation25 + $0x648] sm:$0xff]
    %v3712 = vld [vmem:[#allocation25 + $0x650] sm:$0xff]
    %v3713 = vld [vmem:[#allocation25 + $0x658] sm:$0xff]
    %v3714 = vld [vmem:[#allocation25 + $0x660] sm:$0xff]
    %v3715 = vld [vmem:[#allocation25 + $0x668] sm:$0xff]
    %v3716 = vld [vmem:[#allocation25 + $0x670] sm:$0xff]
    %v3717 = vld [vmem:[#allocation25 + $0x678] sm:$0xff]
    %v3718 = vld [vmem:[#allocation25 + $0x680] sm:$0xff]
    %v3719 = vld [vmem:[#allocation25 + $0x688] sm:$0xff]
    %v3720 = vld [vmem:[#allocation25 + $0x690] sm:$0xff]
    %v3721 = vld [vmem:[#allocation25 + $0x698] sm:$0xff]
    %v3722 = vld [vmem:[#allocation25 + $0x6a0] sm:$0xff]
    %v3723 = vld [vmem:[#allocation25 + $0x6a8] sm:$0xff]
    %v3724 = vld [vmem:[#allocation25 + $0x6b0] sm:$0xff]
    %v3725 = vld [vmem:[#allocation25 + $0x6b8] sm:$0xff]
    %v3726 = vld [vmem:[#allocation25 + $0x6c0] sm:$0xff]
    %v3727 = vld [vmem:[#allocation25 + $0x6c8] sm:$0xff]
    %v3728 = vld [vmem:[#allocation25 + $0x6d0] sm:$0xff]
    %v3729 = vld [vmem:[#allocation25 + $0x6d8] sm:$0xff]
    %v3730 = vld [vmem:[#allocation25 + $0x6e0] sm:$0xff]
    %v3731 = vld [vmem:[#allocation25 + $0x6e8] sm:$0xff]
    %v3732 = vld [vmem:[#allocation25 + $0x6f0] sm:$0xff]
    %v3733 = vld [vmem:[#allocation25 + $0x6f8] sm:$0xff]
    %v3734 = vld [vmem:[#allocation25 + $0x700] sm:$0xff]
    %v3735 = vld [vmem:[#allocation25 + $0x708] sm:$0xff]
    %v3736 = vld [vmem:[#allocation25 + $0x710] sm:$0xff]
    %v3737 = vld [vmem:[#allocation25 + $0x718] sm:$0xff]
    %v3738 = vld [vmem:[#allocation25 + $0x720] sm:$0xff]
    %v3739 = vld [vmem:[#allocation25 + $0x728] sm:$0xff]
    %v3740 = vld [vmem:[#allocation25 + $0x730] sm:$0xff]
    %v3741 = vld [vmem:[#allocation25 + $0x738] sm:$0xff]
    %v3742 = vld [vmem:[#allocation25 + $0x740] sm:$0xff]
    %v3743 = vld [vmem:[#allocation25 + $0x748] sm:$0xff]
    %v3744 = vld [vmem:[#allocation25 + $0x750] sm:$0xff]
    %v3745 = vld [vmem:[#allocation25 + $0x758] sm:$0xff]
    %v3746 = vld [vmem:[#allocation25 + $0x760] sm:$0xff]
    %v3747 = vld [vmem:[#allocation25 + $0x768] sm:$0xff]
    %v3748 = vld [vmem:[#allocation25 + $0x770] sm:$0xff]
    %v3749 = vld [vmem:[#allocation25 + $0x778] sm:$0xff]
    %v3750 = vld [vmem:[#allocation25 + $0x780] sm:$0xff]
    %v3751 = vld [vmem:[#allocation25 + $0x788] sm:$0xff]
    %v3752 = vld [vmem:[#allocation25 + $0x790] sm:$0xff]
    %v3753 = vld [vmem:[#allocation25 + $0x798] sm:$0xff]
    %v3754 = vld [vmem:[#allocation25 + $0x7a0] sm:$0xff]
    %v3755 = vld [vmem:[#allocation25 + $0x7a8] sm:$0xff]
    %v3756 = vld [vmem:[#allocation25 + $0x7b0] sm:$0xff]
    %v3757 = vld [vmem:[#allocation25 + $0x7b8] sm:$0xff]
    %v3758 = vld [vmem:[#allocation25 + $0x7c0] sm:$0xff]
    %v3759 = vld [vmem:[#allocation25 + $0x7c8] sm:$0xff]
    %v3760 = vld [vmem:[#allocation25 + $0x7d0] sm:$0xff]
    %v3761 = vld [vmem:[#allocation25 + $0x7d8] sm:$0xff]
    %v3762 = vld [vmem:[#allocation25 + $0x7e0] sm:$0xff]
    %v3763 = vld [vmem:[#allocation25 + $0x7e8] sm:$0xff]
    %v3764 = vld [vmem:[#allocation25 + $0x7f0] sm:$0xff]
    %v3765 = vld [vmem:[#allocation25 + $0x7f8] sm:$0xff]
    %v3766 = vld [vmem:[#allocation25 + $0x800] sm:$0xff]
    %v3767 = vld [vmem:[#allocation25 + $0x808] sm:$0xff]
    %v3768 = vld [vmem:[#allocation25 + $0x810] sm:$0xff]
    %v3769 = vld [vmem:[#allocation25 + $0x818] sm:$0xff]
    %v3770 = vld [vmem:[#allocation25 + $0x820] sm:$0xff]
    %v3771 = vld [vmem:[#allocation25 + $0x828] sm:$0xff]
    %v3772 = vld [vmem:[#allocation25 + $0x830] sm:$0xff]
    %v3773 = vld [vmem:[#allocation25 + $0x838] sm:$0xff]
    %v3774 = vld [vmem:[#allocation25 + $0x840] sm:$0xff]
    %v3775 = vld [vmem:[#allocation25 + $0x848] sm:$0xff]
    %v3776 = vld [vmem:[#allocation25 + $0x850] sm:$0xff]
    %v3777 = vld [vmem:[#allocation25 + $0x858] sm:$0xff]
    %v3778 = vld [vmem:[#allocation25 + $0x860] sm:$0xff]
    %v3779 = vld [vmem:[#allocation25 + $0x868] sm:$0xff]
    %v3780 = vld [vmem:[#allocation25 + $0x870] sm:$0xff]
    %v3781 = vld [vmem:[#allocation25 + $0x878] sm:$0xff]
    %v3782 = vld [vmem:[#allocation25 + $0x880] sm:$0xff]
    %v3783 = vld [vmem:[#allocation25 + $0x888] sm:$0xff]
    %v3784 = vld [vmem:[#allocation25 + $0x890] sm:$0xff]
    %v3785 = vld [vmem:[#allocation25 + $0x898] sm:$0xff]
    %v3786 = vld [vmem:[#allocation25 + $0x8a0] sm:$0xff]
    %v3787 = vld [vmem:[#allocation25 + $0x8a8] sm:$0xff]
    %v3788 = vld [vmem:[#allocation25 + $0x8b0] sm:$0xff]
    %v3789 = vld [vmem:[#allocation25 + $0x8b8] sm:$0xff]
    %v3790 = vld [vmem:[#allocation25 + $0x8c0] sm:$0xff]
    %v3791 = vld [vmem:[#allocation25 + $0x8c8] sm:$0xff]
    %v3792 = vld [vmem:[#allocation25 + $0x8d0] sm:$0xff]
    %v3793 = vld [vmem:[#allocation25 + $0x8d8] sm:$0xff]
    %v3794 = vld [vmem:[#allocation25 + $0x8e0] sm:$0xff]
    %v3795 = vld [vmem:[#allocation25 + $0x8e8] sm:$0xff]
    %v3796 = vld [vmem:[#allocation25 + $0x8f0] sm:$0xff]
    %v3797 = vld [vmem:[#allocation25 + $0x8f8] sm:$0xff]
    %v3798 = vld [vmem:[#allocation25 + $0x900] sm:$0xff]
    %v3799 = vld [vmem:[#allocation25 + $0x908] sm:$0xff]
    %v3800 = vld [vmem:[#allocation25 + $0x910] sm:$0xff]
    %v3801 = vld [vmem:[#allocation25 + $0x918] sm:$0xff]
    %v3802 = vld [vmem:[#allocation25 + $0x920] sm:$0xff]
    %v3803 = vld [vmem:[#allocation25 + $0x928] sm:$0xff]
    %v3804 = vld [vmem:[#allocation25 + $0x930] sm:$0xff]
    %v3805 = vld [vmem:[#allocation25 + $0x938] sm:$0xff]
    %v3806 = vld [vmem:[#allocation25 + $0x940] sm:$0xff]
    %v3807 = vld [vmem:[#allocation25 + $0x948] sm:$0xff]
    %v3808 = vld [vmem:[#allocation25 + $0x950] sm:$0xff]
    %v3809 = vld [vmem:[#allocation25 + $0x958] sm:$0xff]
    %v3810 = vld [vmem:[#allocation25 + $0x960] sm:$0xff]
    %v3811 = vld [vmem:[#allocation25 + $0x968] sm:$0xff]
    %v3812 = vld [vmem:[#allocation25 + $0x970] sm:$0xff]
    %v3813 = vld [vmem:[#allocation25 + $0x978] sm:$0xff]
    %v3814 = vld [vmem:[#allocation25 + $0x980] sm:$0xff]
    %v3815 = vld [vmem:[#allocation25 + $0x988] sm:$0xff]
    %v3816 = vld [vmem:[#allocation25 + $0x990] sm:$0xff]
    %v3817 = vld [vmem:[#allocation25 + $0x998] sm:$0xff]
    %v3818 = vld [vmem:[#allocation25 + $0x9a0] sm:$0xff]
    %v3819 = vld [vmem:[#allocation25 + $0x9a8] sm:$0xff]
    %v3820 = vld [vmem:[#allocation25 + $0x9b0] sm:$0xff]
    %v3821 = vld [vmem:[#allocation25 + $0x9b8] sm:$0xff]
    %v3822 = vld [vmem:[#allocation25 + $0x9c0] sm:$0xff]
    %v3823 = vld [vmem:[#allocation25 + $0x9c8] sm:$0xff]
    %v3824 = vld [vmem:[#allocation25 + $0x9d0] sm:$0xff]
    %v3825 = vld [vmem:[#allocation25 + $0x9d8] sm:$0xff]
    %v3826 = vld [vmem:[#allocation25 + $0x9e0] sm:$0xff]
    %v3827 = vld [vmem:[#allocation25 + $0x9e8] sm:$0xff]
    %v3828 = vld [vmem:[#allocation25 + $0x9f0] sm:$0xff]
    %v3829 = vld [vmem:[#allocation25 + $0x9f8] sm:$0xff]
    %v3830 = vld [vmem:[#allocation26] sm:$0xff]
    %v3831 = vld [vmem:[#allocation26 + $0x8] sm:$0xff]
    %v3832 = vld [vmem:[#allocation26 + $0x10] sm:$0xf]
    %v3836 = vlaneseq
    %v3837 = vshrl.u32 %v3836, 7
    %v3838 = vsub.s32 0, %v3837
    %v3839 = vrot.slane %v3830, %v3838
    %v3840 = vlaneseq
    %v3841 = vshrl.u32 %v3840, 7
    %v3842 = vsub.s32 1, %v3841
    %v3843 = vrot.slane %v3830, %v3842
    %v3844 = vlaneseq
    %v3845 = vshrl.u32 %v3844, 7
    %v3846 = vsub.s32 2, %v3845
    %v3847 = vrot.slane %v3830, %v3846
    %v3848 = vlaneseq
    %v3849 = vshrl.u32 %v3848, 7
    %v3850 = vsub.s32 3, %v3849
    %v3851 = vrot.slane %v3830, %v3850
    %v3852 = vlaneseq
    %v3853 = vshrl.u32 %v3852, 7
    %v3854 = vsub.s32 4, %v3853
    %v3855 = vrot.slane %v3830, %v3854
    %v3856 = vlaneseq
    %v3857 = vshrl.u32 %v3856, 7
    %v3858 = vsub.s32 5, %v3857
    %v3859 = vrot.slane %v3830, %v3858
    %v3860 = vlaneseq
    %v3861 = vshrl.u32 %v3860, 7
    %v3862 = vsub.s32 6, %v3861
    %v3863 = vrot.slane %v3830, %v3862
    %v3864 = vlaneseq
    %v3865 = vshrl.u32 %v3864, 7
    %v3866 = vsub.s32 7, %v3865
    %v3867 = vrot.slane %v3830, %v3866
    %v3868 = vlaneseq
    %v3869 = vshrl.u32 %v3868, 7
    %v3870 = vsub.s32 0, %v3869
    %v3871 = vrot.slane %v3831, %v3870
    %v3872 = vlaneseq
    %v3873 = vshrl.u32 %v3872, 7
    %v3874 = vsub.s32 1, %v3873
    %v3875 = vrot.slane %v3831, %v3874
    %v3876 = vlaneseq
    %v3877 = vshrl.u32 %v3876, 7
    %v3878 = vsub.s32 2, %v3877
    %v3879 = vrot.slane %v3831, %v3878
    %v3880 = vlaneseq
    %v3881 = vshrl.u32 %v3880, 7
    %v3882 = vsub.s32 3, %v3881
    %v3883 = vrot.slane %v3831, %v3882
    %v3884 = vlaneseq
    %v3885 = vshrl.u32 %v3884, 7
    %v3886 = vsub.s32 4, %v3885
    %v3887 = vrot.slane %v3831, %v3886
    %v3888 = vlaneseq
    %v3889 = vshrl.u32 %v3888, 7
    %v3890 = vsub.s32 5, %v3889
    %v3891 = vrot.slane %v3831, %v3890
    %v3892 = vlaneseq
    %v3893 = vshrl.u32 %v3892, 7
    %v3894 = vsub.s32 6, %v3893
    %v3895 = vrot.slane %v3831, %v3894
    %v3896 = vlaneseq
    %v3897 = vshrl.u32 %v3896, 7
    %v3898 = vsub.s32 7, %v3897
    %v3899 = vrot.slane %v3831, %v3898
    %v3900 = vlaneseq
    %v3901 = vshrl.u32 %v3900, 7
    %v3902 = vsub.s32 0, %v3901
    %v3903 = vrot.slane %v3832, %v3902
    %v3904 = vlaneseq
    %v3905 = vshrl.u32 %v3904, 7
    %v3906 = vsub.s32 1, %v3905
    %v3907 = vrot.slane %v3832, %v3906
    %v3908 = vlaneseq
    %v3909 = vshrl.u32 %v3908, 7
    %v3910 = vsub.s32 2, %v3909
    %v3911 = vrot.slane %v3832, %v3910
    %v3912 = vlaneseq
    %v3913 = vshrl.u32 %v3912, 7
    %v3914 = vsub.s32 3, %v3913
    %v3915 = vrot.slane %v3832, %v3914
    %3936 = vmatprep.subr.mxu0 %v3811
    %3937 = vmatpush1.msra.mxu0 %v3810
    %3938 = vmatprep.subr.mxu0 %v3791
    %3939 = vmatpush1.msra.mxu0 %v3790
    %3940 = vmatprep.subr.mxu0 %v3771
    %3941 = vmatpush1.msra.mxu0 %v3770
    %3942 = vmatprep.subr.mxu0 %v3751
    %3943 = vmatpush1.msra.mxu0 %v3750
    %3944 = vmatprep.subr.mxu0 %v3731
    %3945 = vmatpush1.msra.mxu0 %v3730
    %3946 = vmatprep.subr.mxu0 %v3711
    %3947 = vmatpush1.msra.mxu0 %v3710
    %3948 = vmatprep.subr.mxu0 %v3691
    %3949 = vmatpush1.msra.mxu0 %v3690
    %3950 = vmatprep.subr.mxu0 %v3671
    %3951 = vmatpush1.msra.mxu0 %v3670
    %3952 = vmatprep.subr.mxu0 %v3651
    %3953 = vmatpush1.msra.mxu0 %v3650
    %3954 = vmatprep.subr.mxu0 %v3631
    %3955 = vmatpush1.msra.mxu0 %v3630
    %3956 = vmatprep.subr.mxu0 %v3611
    %3957 = vmatpush1.msra.mxu0 %v3610
    %3958 = vmatprep.subr.mxu0 %v3591
    %3959 = vmatpush1.msra.mxu0 %v3590
    %3960 = vmatprep.subr.mxu0 %v3571
    %3961 = vmatpush1.msra.mxu0 %v3570
    %3962 = vmatprep.subr.mxu0 %v3551
    %3963 = vmatpush1.msra.mxu0 %v3550
    %3964 = vmatprep.subr.mxu0 %v3531
    %3965 = vmatpush1.msra.mxu0 %v3530
    %3966 = vmatprep.subr.mxu0 %v3511
    %3967 = vmatpush1.msra.mxu0 %v3510
    %3968 = vmatprep.subr.mxu0 0.0
    %3969 = vmatpush2.msra.mxu0 0.0
    %3970 = vmatprep.subr.mxu0 0.0
    %3971 = vmatpush2.msra.mxu0 0.0
    %3972 = vmatprep.subr.mxu0 0.0
    %3973 = vmatpush2.msra.mxu0 0.0
    %3974 = vmatprep.subr.mxu0 0.0
    %3975 = vmatpush2.msra.mxu0 0.0
    %3976 = vmatprep.subr.mxu0 0.0
    %3977 = vmatpush2.msra.mxu0 0.0
    %3978 = vmatprep.subr.mxu0 0.0
    %3979 = vmatpush2.msra.mxu0 0.0
    %3980 = vmatprep.subr.mxu0 0.0
    %3981 = vmatpush2.msra.mxu0 0.0
    %3982 = vmatprep.subr.mxu0 0.0
    %3983 = vmatpush2.msra.mxu0 0.0
    %3984 = vmatprep.subr.mxu0 0.0
    %3985 = vmatpush2.msra.mxu0 0.0
    %3986 = vmatprep.subr.mxu0 0.0
    %3987 = vmatpush2.msra.mxu0 0.0
    %3988 = vmatprep.subr.mxu0 0.0
    %3989 = vmatpush2.msra.mxu0 0.0
    %3990 = vmatprep.subr.mxu0 0.0
    %3991 = vmatpush2.msra.mxu0 0.0
    %3992 = vmatprep.subr.mxu0 0.0
    %3993 = vmatpush2.msra.mxu0 0.0
    %3994 = vmatprep.subr.mxu0 0.0
    %3995 = vmatpush2.msra.mxu0 0.0
    %3996 = vmatprep.subr.mxu0 0.0
    %3997 = vmatpush2.msra.mxu0 0.0
    %3998 = vmatprep.subr.mxu0 0.0
    %3999 = vmatpush2.msra.mxu0 0.0
    %4000 = vmatprep.mubr.f32.mxu0 0.0
    %4001 = vmatmul.mubr.f32.gmra.mxu0 %v2188
    %v4002 = vpop.f32.mrf.mxu0
    %v4003 = vadd.f32 %v3839, %v4002
    %v4004 = vpop.f32.mrf.mxu0
    %v4005 = vadd.f32 %v3843, %v4004
    %4006 = vmatprep.mubr.f32.mxu0 0.0
    %4007 = vmatmul.mubr.f32.gmra.mxu0 %v2189
    %v4008 = vpop.f32.mrf.mxu0
    %v4009 = vadd.f32 %v3839, %v4008
    %v4010 = vpop.f32.mrf.mxu0
    %v4011 = vadd.f32 %v3843, %v4010
    %4012 = vmatprep.mubr.f32.mxu0 0.0
    %4013 = vmatmul.mubr.f32.gmra.mxu0 %v2190
    %v4014 = vpop.f32.mrf.mxu0
    %v4015 = vadd.f32 %v3839, %v4014
    %v4016 = vpop.f32.mrf.mxu0
    %v4017 = vadd.f32 %v3843, %v4016
    %4018 = vmatprep.mubr.f32.mxu0 0.0
    %4019 = vmatmul.mubr.f32.gmra.mxu0 %v2191
    %v4020 = vpop.f32.mrf.mxu0
    %v4021 = vadd.f32 %v3839, %v4020
    %v4022 = vpop.f32.mrf.mxu0
    %v4023 = vadd.f32 %v3843, %v4022
    %4024 = vdwg.mxu0
    %4025 = vmatprep.subr.mxu0 %v3813
    %4026 = vmatpush1.msra.mxu0 %v3812
    %4027 = vmatprep.subr.mxu0 %v3793
    %4028 = vmatpush1.msra.mxu0 %v3792
    %4029 = vmatprep.subr.mxu0 %v3773
    %4030 = vmatpush1.msra.mxu0 %v3772
    %4031 = vmatprep.subr.mxu0 %v3753
    %4032 = vmatpush1.msra.mxu0 %v3752
    %4033 = vmatprep.subr.mxu0 %v3733
    %4034 = vmatpush1.msra.mxu0 %v3732
    %4035 = vmatprep.subr.mxu0 %v3713
    %4036 = vmatpush1.msra.mxu0 %v3712
    %4037 = vmatprep.subr.mxu0 %v3693
    %4038 = vmatpush1.msra.mxu0 %v3692
    %4039 = vmatprep.subr.mxu0 %v3673
    %4040 = vmatpush1.msra.mxu0 %v3672
    %4041 = vmatprep.subr.mxu0 %v3653
    %4042 = vmatpush1.msra.mxu0 %v3652
    %4043 = vmatprep.subr.mxu0 %v3633
    %4044 = vmatpush1.msra.mxu0 %v3632
    %4045 = vmatprep.subr.mxu0 %v3613
    %4046 = vmatpush1.msra.mxu0 %v3612
    %4047 = vmatprep.subr.mxu0 %v3593
    %4048 = vmatpush1.msra.mxu0 %v3592
    %4049 = vmatprep.subr.mxu0 %v3573
    %4050 = vmatpush1.msra.mxu0 %v3572
    %4051 = vmatprep.subr.mxu0 %v3553
    %4052 = vmatpush1.msra.mxu0 %v3552
    %4053 = vmatprep.subr.mxu0 %v3533
    %4054 = vmatpush1.msra.mxu0 %v3532
    %4055 = vmatprep.subr.mxu0 %v3513
    %4056 = vmatpush1.msra.mxu0 %v3512
    %4057 = vmatprep.subr.mxu0 0.0
    %4058 = vmatpush2.msra.mxu0 0.0
    %4059 = vmatprep.subr.mxu0 0.0
    %4060 = vmatpush2.msra.mxu0 0.0
    %4061 = vmatprep.subr.mxu0 0.0
    %4062 = vmatpush2.msra.mxu0 0.0
    %4063 = vmatprep.subr.mxu0 0.0
    %4064 = vmatpush2.msra.mxu0 0.0
    %4065 = vmatprep.subr.mxu0 0.0
    %4066 = vmatpush2.msra.mxu0 0.0
    %4067 = vmatprep.subr.mxu0 0.0
    %4068 = vmatpush2.msra.mxu0 0.0
    %4069 = vmatprep.subr.mxu0 0.0
    %4070 = vmatpush2.msra.mxu0 0.0
    %4071 = vmatprep.subr.mxu0 0.0
    %4072 = vmatpush2.msra.mxu0 0.0
    %4073 = vmatprep.subr.mxu0 0.0
    %4074 = vmatpush2.msra.mxu0 0.0
    %4075 = vmatprep.subr.mxu0 0.0
    %4076 = vmatpush2.msra.mxu0 0.0
    %4077 = vmatprep.subr.mxu0 0.0
    %4078 = vmatpush2.msra.mxu0 0.0
    %4079 = vmatprep.subr.mxu0 0.0
    %4080 = vmatpush2.msra.mxu0 0.0
    %4081 = vmatprep.subr.mxu0 0.0
    %4082 = vmatpush2.msra.mxu0 0.0
    %4083 = vmatprep.subr.mxu0 0.0
    %4084 = vmatpush2.msra.mxu0 0.0
    %4085 = vmatprep.subr.mxu0 0.0
    %4086 = vmatpush2.msra.mxu0 0.0
    %4087 = vmatprep.subr.mxu0 0.0
    %4088 = vmatpush2.msra.mxu0 0.0
    %4089 = vmatprep.mubr.f32.mxu0 0.0
    %4090 = vmatmul.mubr.f32.gmra.mxu0 %v2188
    %v4091 = vpop.f32.mrf.mxu0
    %v4092 = vadd.f32 %v3847, %v4091
    %v4093 = vpop.f32.mrf.mxu0
    %v4094 = vadd.f32 %v3851, %v4093
    %4095 = vmatprep.mubr.f32.mxu0 0.0
    %4096 = vmatmul.mubr.f32.gmra.mxu0 %v2189
    %v4097 = vpop.f32.mrf.mxu0
    %v4098 = vadd.f32 %v3847, %v4097
    %v4099 = vpop.f32.mrf.mxu0
    %v4100 = vadd.f32 %v3851, %v4099
    %4101 = vmatprep.mubr.f32.mxu0 0.0
    %4102 = vmatmul.mubr.f32.gmra.mxu0 %v2190
    %v4103 = vpop.f32.mrf.mxu0
    %v4104 = vadd.f32 %v3847, %v4103
    %v4105 = vpop.f32.mrf.mxu0
    %v4106 = vadd.f32 %v3851, %v4105
    %4107 = vmatprep.mubr.f32.mxu0 0.0
    %4108 = vmatmul.mubr.f32.gmra.mxu0 %v2191
    %v4109 = vpop.f32.mrf.mxu0
    %v4110 = vadd.f32 %v3847, %v4109
    %v4111 = vpop.f32.mrf.mxu0
    %v4112 = vadd.f32 %v3851, %v4111
    %4113 = vdwg.mxu0
    %4114 = vmatprep.subr.mxu0 %v3815
    %4115 = vmatpush1.msra.mxu0 %v3814
    %4116 = vmatprep.subr.mxu0 %v3795
    %4117 = vmatpush1.msra.mxu0 %v3794
    %4118 = vmatprep.subr.mxu0 %v3775
    %4119 = vmatpush1.msra.mxu0 %v3774
    %4120 = vmatprep.subr.mxu0 %v3755
    %4121 = vmatpush1.msra.mxu0 %v3754
    %4122 = vmatprep.subr.mxu0 %v3735
    %4123 = vmatpush1.msra.mxu0 %v3734
    %4124 = vmatprep.subr.mxu0 %v3715
    %4125 = vmatpush1.msra.mxu0 %v3714
    %4126 = vmatprep.subr.mxu0 %v3695
    %4127 = vmatpush1.msra.mxu0 %v3694
    %4128 = vmatprep.subr.mxu0 %v3675
    %4129 = vmatpush1.msra.mxu0 %v3674
    %4130 = vmatprep.subr.mxu0 %v3655
    %4131 = vmatpush1.msra.mxu0 %v3654
    %4132 = vmatprep.subr.mxu0 %v3635
    %4133 = vmatpush1.msra.mxu0 %v3634
    %4134 = vmatprep.subr.mxu0 %v3615
    %4135 = vmatpush1.msra.mxu0 %v3614
    %4136 = vmatprep.subr.mxu0 %v3595
    %4137 = vmatpush1.msra.mxu0 %v3594
    %4138 = vmatprep.subr.mxu0 %v3575
    %4139 = vmatpush1.msra.mxu0 %v3574
    %4140 = vmatprep.subr.mxu0 %v3555
    %4141 = vmatpush1.msra.mxu0 %v3554
    %4142 = vmatprep.subr.mxu0 %v3535
    %4143 = vmatpush1.msra.mxu0 %v3534
    %4144 = vmatprep.subr.mxu0 %v3515
    %4145 = vmatpush1.msra.mxu0 %v3514
    %4146 = vmatprep.subr.mxu0 0.0
    %4147 = vmatpush2.msra.mxu0 0.0
    %4148 = vmatprep.subr.mxu0 0.0
    %4149 = vmatpush2.msra.mxu0 0.0
    %4150 = vmatprep.subr.mxu0 0.0
    %4151 = vmatpush2.msra.mxu0 0.0
    %4152 = vmatprep.subr.mxu0 0.0
    %4153 = vmatpush2.msra.mxu0 0.0
    %4154 = vmatprep.subr.mxu0 0.0
    %4155 = vmatpush2.msra.mxu0 0.0
    %4156 = vmatprep.subr.mxu0 0.0
    %4157 = vmatpush2.msra.mxu0 0.0
    %4158 = vmatprep.subr.mxu0 0.0
    %4159 = vmatpush2.msra.mxu0 0.0
    %4160 = vmatprep.subr.mxu0 0.0
    %4161 = vmatpush2.msra.mxu0 0.0
    %4162 = vmatprep.subr.mxu0 0.0
    %4163 = vmatpush2.msra.mxu0 0.0
    %4164 = vmatprep.subr.mxu0 0.0
    %4165 = vmatpush2.msra.mxu0 0.0
    %4166 = vmatprep.subr.mxu0 0.0
    %4167 = vmatpush2.msra.mxu0 0.0
    %4168 = vmatprep.subr.mxu0 0.0
    %4169 = vmatpush2.msra.mxu0 0.0
    %4170 = vmatprep.subr.mxu0 0.0
    %4171 = vmatpush2.msra.mxu0 0.0
    %4172 = vmatprep.subr.mxu0 0.0
    %4173 = vmatpush2.msra.mxu0 0.0
    %4174 = vmatprep.subr.mxu0 0.0
    %4175 = vmatpush2.msra.mxu0 0.0
    %4176 = vmatprep.subr.mxu0 0.0
    %4177 = vmatpush2.msra.mxu0 0.0
    %4178 = vmatprep.mubr.f32.mxu0 0.0
    %4179 = vmatmul.mubr.f32.gmra.mxu0 %v2188
    %v4180 = vpop.f32.mrf.mxu0
    %v4181 = vadd.f32 %v3855, %v4180
    %v4182 = vpop.f32.mrf.mxu0
    %v4183 = vadd.f32 %v3859, %v4182
    %4184 = vmatprep.mubr.f32.mxu0 0.0
    %4185 = vmatmul.mubr.f32.gmra.mxu0 %v2189
    %v4186 = vpop.f32.mrf.mxu0
    %v4187 = vadd.f32 %v3855, %v4186
    %v4188 = vpop.f32.mrf.mxu0
    %v4189 = vadd.f32 %v3859, %v4188
    %4190 = vmatprep.mubr.f32.mxu0 0.0
    %4191 = vmatmul.mubr.f32.gmra.mxu0 %v2190
    %v4192 = vpop.f32.mrf.mxu0
    %v4193 = vadd.f32 %v3855, %v4192
    %v4194 = vpop.f32.mrf.mxu0
    %v4195 = vadd.f32 %v3859, %v4194
    %4196 = vmatprep.mubr.f32.mxu0 0.0
    %4197 = vmatmul.mubr.f32.gmra.mxu0 %v2191
    %v4198 = vpop.f32.mrf.mxu0
    %v4199 = vadd.f32 %v3855, %v4198
    %v4200 = vpop.f32.mrf.mxu0
    %v4201 = vadd.f32 %v3859, %v4200
    %4202 = vdwg.mxu0
    %4203 = vmatprep.subr.mxu0 %v3817
    %4204 = vmatpush1.msra.mxu0 %v3816
    %4205 = vmatprep.subr.mxu0 %v3797
    %4206 = vmatpush1.msra.mxu0 %v3796
    %4207 = vmatprep.subr.mxu0 %v3777
    %4208 = vmatpush1.msra.mxu0 %v3776
    %4209 = vmatprep.subr.mxu0 %v3757
    %4210 = vmatpush1.msra.mxu0 %v3756
    %4211 = vmatprep.subr.mxu0 %v3737
    %4212 = vmatpush1.msra.mxu0 %v3736
    %4213 = vmatprep.subr.mxu0 %v3717
    %4214 = vmatpush1.msra.mxu0 %v3716
    %4215 = vmatprep.subr.mxu0 %v3697
    %4216 = vmatpush1.msra.mxu0 %v3696
    %4217 = vmatprep.subr.mxu0 %v3677
    %4218 = vmatpush1.msra.mxu0 %v3676
    %4219 = vmatprep.subr.mxu0 %v3657
    %4220 = vmatpush1.msra.mxu0 %v3656
    %4221 = vmatprep.subr.mxu0 %v3637
    %4222 = vmatpush1.msra.mxu0 %v3636
    %4223 = vmatprep.subr.mxu0 %v3617
    %4224 = vmatpush1.msra.mxu0 %v3616
    %4225 = vmatprep.subr.mxu0 %v3597
    %4226 = vmatpush1.msra.mxu0 %v3596
    %4227 = vmatprep.subr.mxu0 %v3577
    %4228 = vmatpush1.msra.mxu0 %v3576
    %4229 = vmatprep.subr.mxu0 %v3557
    %4230 = vmatpush1.msra.mxu0 %v3556
    %4231 = vmatprep.subr.mxu0 %v3537
    %4232 = vmatpush1.msra.mxu0 %v3536
    %4233 = vmatprep.subr.mxu0 %v3517
    %4234 = vmatpush1.msra.mxu0 %v3516
    %4235 = vmatprep.subr.mxu0 0.0
    %4236 = vmatpush2.msra.mxu0 0.0
    %4237 = vmatprep.subr.mxu0 0.0
    %4238 = vmatpush2.msra.mxu0 0.0
    %4239 = vmatprep.subr.mxu0 0.0
    %4240 = vmatpush2.msra.mxu0 0.0
    %4241 = vmatprep.subr.mxu0 0.0
    %4242 = vmatpush2.msra.mxu0 0.0
    %4243 = vmatprep.subr.mxu0 0.0
    %4244 = vmatpush2.msra.mxu0 0.0
    %4245 = vmatprep.subr.mxu0 0.0
    %4246 = vmatpush2.msra.mxu0 0.0
    %4247 = vmatprep.subr.mxu0 0.0
    %4248 = vmatpush2.msra.mxu0 0.0
    %4249 = vmatprep.subr.mxu0 0.0
    %4250 = vmatpush2.msra.mxu0 0.0
    %4251 = vmatprep.subr.mxu0 0.0
    %4252 = vmatpush2.msra.mxu0 0.0
    %4253 = vmatprep.subr.mxu0 0.0
    %4254 = vmatpush2.msra.mxu0 0.0
    %4255 = vmatprep.subr.mxu0 0.0
    %4256 = vmatpush2.msra.mxu0 0.0
    %4257 = vmatprep.subr.mxu0 0.0
    %4258 = vmatpush2.msra.mxu0 0.0
    %4259 = vmatprep.subr.mxu0 0.0
    %4260 = vmatpush2.msra.mxu0 0.0
    %4261 = vmatprep.subr.mxu0 0.0
    %4262 = vmatpush2.msra.mxu0 0.0
    %4263 = vmatprep.subr.mxu0 0.0
    %4264 = vmatpush2.msra.mxu0 0.0
    %4265 = vmatprep.subr.mxu0 0.0
    %4266 = vmatpush2.msra.mxu0 0.0
    %4267 = vmatprep.mubr.f32.mxu0 0.0
    %4268 = vmatmul.mubr.f32.gmra.mxu0 %v2188
    %v4269 = vpop.f32.mrf.mxu0
    %v4270 = vadd.f32 %v3863, %v4269
    %v4271 = vpop.f32.mrf.mxu0
    %v4272 = vadd.f32 %v3867, %v4271
    %4273 = vmatprep.mubr.f32.mxu0 0.0
    %4274 = vmatmul.mubr.f32.gmra.mxu0 %v2189
    %v4275 = vpop.f32.mrf.mxu0
    %v4276 = vadd.f32 %v3863, %v4275
    %v4277 = vpop.f32.mrf.mxu0
    %v4278 = vadd.f32 %v3867, %v4277
    %4279 = vmatprep.mubr.f32.mxu0 0.0
    %4280 = vmatmul.mubr.f32.gmra.mxu0 %v2190
    %v4281 = vpop.f32.mrf.mxu0
    %v4282 = vadd.f32 %v3863, %v4281
    %v4283 = vpop.f32.mrf.mxu0
    %v4284 = vadd.f32 %v3867, %v4283
    %4285 = vmatprep.mubr.f32.mxu0 0.0
    %4286 = vmatmul.mubr.f32.gmra.mxu0 %v2191
    %v4287 = vpop.f32.mrf.mxu0
    %v4288 = vadd.f32 %v3863, %v4287
    %v4289 = vpop.f32.mrf.mxu0
    %v4290 = vadd.f32 %v3867, %v4289
    %4291 = vdwg.mxu0
    %4292 = vmatprep.subr.mxu0 %v3819
    %4293 = vmatpush1.msra.mxu0 %v3818
    %4294 = vmatprep.subr.mxu0 %v3799
    %4295 = vmatpush1.msra.mxu0 %v3798
    %4296 = vmatprep.subr.mxu0 %v3779
    %4297 = vmatpush1.msra.mxu0 %v3778
    %4298 = vmatprep.subr.mxu0 %v3759
    %4299 = vmatpush1.msra.mxu0 %v3758
    %4300 = vmatprep.subr.mxu0 %v3739
    %4301 = vmatpush1.msra.mxu0 %v3738
    %4302 = vmatprep.subr.mxu0 %v3719
    %4303 = vmatpush1.msra.mxu0 %v3718
    %4304 = vmatprep.subr.mxu0 %v3699
    %4305 = vmatpush1.msra.mxu0 %v3698
    %4306 = vmatprep.subr.mxu0 %v3679
    %4307 = vmatpush1.msra.mxu0 %v3678
    %4308 = vmatprep.subr.mxu0 %v3659
    %4309 = vmatpush1.msra.mxu0 %v3658
    %4310 = vmatprep.subr.mxu0 %v3639
    %4311 = vmatpush1.msra.mxu0 %v3638
    %4312 = vmatprep.subr.mxu0 %v3619
    %4313 = vmatpush1.msra.mxu0 %v3618
    %4314 = vmatprep.subr.mxu0 %v3599
    %4315 = vmatpush1.msra.mxu0 %v3598
    %4316 = vmatprep.subr.mxu0 %v3579
    %4317 = vmatpush1.msra.mxu0 %v3578
    %4318 = vmatprep.subr.mxu0 %v3559
    %4319 = vmatpush1.msra.mxu0 %v3558
    %4320 = vmatprep.subr.mxu0 %v3539
    %4321 = vmatpush1.msra.mxu0 %v3538
    %4322 = vmatprep.subr.mxu0 %v3519
    %4323 = vmatpush1.msra.mxu0 %v3518
    %4324 = vmatprep.subr.mxu0 0.0
    %4325 = vmatpush2.msra.mxu0 0.0
    %4326 = vmatprep.subr.mxu0 0.0
    %4327 = vmatpush2.msra.mxu0 0.0
    %4328 = vmatprep.subr.mxu0 0.0
    %4329 = vmatpush2.msra.mxu0 0.0
    %4330 = vmatprep.subr.mxu0 0.0
    %4331 = vmatpush2.msra.mxu0 0.0
    %4332 = vmatprep.subr.mxu0 0.0
    %4333 = vmatpush2.msra.mxu0 0.0
    %4334 = vmatprep.subr.mxu0 0.0
    %4335 = vmatpush2.msra.mxu0 0.0
    %4336 = vmatprep.subr.mxu0 0.0
    %4337 = vmatpush2.msra.mxu0 0.0
    %4338 = vmatprep.subr.mxu0 0.0
    %4339 = vmatpush2.msra.mxu0 0.0
    %4340 = vmatprep.subr.mxu0 0.0
    %4341 = vmatpush2.msra.mxu0 0.0
    %4342 = vmatprep.subr.mxu0 0.0
    %4343 = vmatpush2.msra.mxu0 0.0
    %4344 = vmatprep.subr.mxu0 0.0
    %4345 = vmatpush2.msra.mxu0 0.0
    %4346 = vmatprep.subr.mxu0 0.0
    %4347 = vmatpush2.msra.mxu0 0.0
    %4348 = vmatprep.subr.mxu0 0.0
    %4349 = vmatpush2.msra.mxu0 0.0
    %4350 = vmatprep.subr.mxu0 0.0
    %4351 = vmatpush2.msra.mxu0 0.0
    %4352 = vmatprep.subr.mxu0 0.0
    %4353 = vmatpush2.msra.mxu0 0.0
    %4354 = vmatprep.subr.mxu0 0.0
    %4355 = vmatpush2.msra.mxu0 0.0
    %4356 = vmatprep.mubr.f32.mxu0 0.0
    %4357 = vmatmul.mubr.f32.gmra.mxu0 %v2188
    %v4358 = vpop.f32.mrf.mxu0
    %v4359 = vadd.f32 %v3871, %v4358
    %v4360 = vpop.f32.mrf.mxu0
    %v4361 = vadd.f32 %v3875, %v4360
    %4362 = vmatprep.mubr.f32.mxu0 0.0
    %4363 = vmatmul.mubr.f32.gmra.mxu0 %v2189
    %v4364 = vpop.f32.mrf.mxu0
    %v4365 = vadd.f32 %v3871, %v4364
    %v4366 = vpop.f32.mrf.mxu0
    %v4367 = vadd.f32 %v3875, %v4366
    %4368 = vmatprep.mubr.f32.mxu0 0.0
    %4369 = vmatmul.mubr.f32.gmra.mxu0 %v2190
    %v4370 = vpop.f32.mrf.mxu0
    %v4371 = vadd.f32 %v3871, %v4370
    %v4372 = vpop.f32.mrf.mxu0
    %v4373 = vadd.f32 %v3875, %v4372
    %4374 = vmatprep.mubr.f32.mxu0 0.0
    %4375 = vmatmul.mubr.f32.gmra.mxu0 %v2191
    %v4376 = vpop.f32.mrf.mxu0
    %v4377 = vadd.f32 %v3871, %v4376
    %v4378 = vpop.f32.mrf.mxu0
    %v4379 = vadd.f32 %v3875, %v4378
    %4380 = vdwg.mxu0
    %4381 = vmatprep.subr.mxu0 %v3821
    %4382 = vmatpush1.msra.mxu0 %v3820
    %4383 = vmatprep.subr.mxu0 %v3801
    %4384 = vmatpush1.msra.mxu0 %v3800
    %4385 = vmatprep.subr.mxu0 %v3781
    %4386 = vmatpush1.msra.mxu0 %v3780
    %4387 = vmatprep.subr.mxu0 %v3761
    %4388 = vmatpush1.msra.mxu0 %v3760
    %4389 = vmatprep.subr.mxu0 %v3741
    %4390 = vmatpush1.msra.mxu0 %v3740
    %4391 = vmatprep.subr.mxu0 %v3721
    %4392 = vmatpush1.msra.mxu0 %v3720
    %4393 = vmatprep.subr.mxu0 %v3701
    %4394 = vmatpush1.msra.mxu0 %v3700
    %4395 = vmatprep.subr.mxu0 %v3681
    %4396 = vmatpush1.msra.mxu0 %v3680
    %4397 = vmatprep.subr.mxu0 %v3661
    %4398 = vmatpush1.msra.mxu0 %v3660
    %4399 = vmatprep.subr.mxu0 %v3641
    %4400 = vmatpush1.msra.mxu0 %v3640
    %4401 = vmatprep.subr.mxu0 %v3621
    %4402 = vmatpush1.msra.mxu0 %v3620
    %4403 = vmatprep.subr.mxu0 %v3601
    %4404 = vmatpush1.msra.mxu0 %v3600
    %4405 = vmatprep.subr.mxu0 %v3581
    %4406 = vmatpush1.msra.mxu0 %v3580
    %4407 = vmatprep.subr.mxu0 %v3561
    %4408 = vmatpush1.msra.mxu0 %v3560
    %4409 = vmatprep.subr.mxu0 %v3541
    %4410 = vmatpush1.msra.mxu0 %v3540
    %4411 = vmatprep.subr.mxu0 %v3521
    %4412 = vmatpush1.msra.mxu0 %v3520
    %4413 = vmatprep.subr.mxu0 0.0
    %4414 = vmatpush2.msra.mxu0 0.0
    %4415 = vmatprep.subr.mxu0 0.0
    %4416 = vmatpush2.msra.mxu0 0.0
    %4417 = vmatprep.subr.mxu0 0.0
    %4418 = vmatpush2.msra.mxu0 0.0
    %4419 = vmatprep.subr.mxu0 0.0
    %4420 = vmatpush2.msra.mxu0 0.0
    %4421 = vmatprep.subr.mxu0 0.0
    %4422 = vmatpush2.msra.mxu0 0.0
    %4423 = vmatprep.subr.mxu0 0.0
    %4424 = vmatpush2.msra.mxu0 0.0
    %4425 = vmatprep.subr.mxu0 0.0
    %4426 = vmatpush2.msra.mxu0 0.0
    %4427 = vmatprep.subr.mxu0 0.0
    %4428 = vmatpush2.msra.mxu0 0.0
    %4429 = vmatprep.subr.mxu0 0.0
    %4430 = vmatpush2.msra.mxu0 0.0
    %4431 = vmatprep.subr.mxu0 0.0
    %4432 = vmatpush2.msra.mxu0 0.0
    %4433 = vmatprep.subr.mxu0 0.0
    %4434 = vmatpush2.msra.mxu0 0.0
    %4435 = vmatprep.subr.mxu0 0.0
    %4436 = vmatpush2.msra.mxu0 0.0
    %4437 = vmatprep.subr.mxu0 0.0
    %4438 = vmatpush2.msra.mxu0 0.0
    %4439 = vmatprep.subr.mxu0 0.0
    %4440 = vmatpush2.msra.mxu0 0.0
    %4441 = vmatprep.subr.mxu0 0.0
    %4442 = vmatpush2.msra.mxu0 0.0
    %4443 = vmatprep.subr.mxu0 0.0
    %4444 = vmatpush2.msra.mxu0 0.0
    %4445 = vmatprep.mubr.f32.mxu0 0.0
    %4446 = vmatmul.mubr.f32.gmra.mxu0 %v2188
    %v4447 = vpop.f32.mrf.mxu0
    %v4448 = vadd.f32 %v3879, %v4447
    %v4449 = vpop.f32.mrf.mxu0
    %v4450 = vadd.f32 %v3883, %v4449
    %4451 = vmatprep.mubr.f32.mxu0 0.0
    %4452 = vmatmul.mubr.f32.gmra.mxu0 %v2189
    %v4453 = vpop.f32.mrf.mxu0
    %v4454 = vadd.f32 %v3879, %v4453
    %v4455 = vpop.f32.mrf.mxu0
    %v4456 = vadd.f32 %v3883, %v4455
    %4457 = vmatprep.mubr.f32.mxu0 0.0
    %4458 = vmatmul.mubr.f32.gmra.mxu0 %v2190
    %v4459 = vpop.f32.mrf.mxu0
    %v4460 = vadd.f32 %v3879, %v4459
    %v4461 = vpop.f32.mrf.mxu0
    %v4462 = vadd.f32 %v3883, %v4461
    %4463 = vmatprep.mubr.f32.mxu0 0.0
    %4464 = vmatmul.mubr.f32.gmra.mxu0 %v2191
    %v4465 = vpop.f32.mrf.mxu0
    %v4466 = vadd.f32 %v3879, %v4465
    %v4467 = vpop.f32.mrf.mxu0
    %v4468 = vadd.f32 %v3883, %v4467
    %4469 = vdwg.mxu0
    %4470 = vmatprep.subr.mxu0 %v3823
    %4471 = vmatpush1.msra.mxu0 %v3822
    %4472 = vmatprep.subr.mxu0 %v3803
    %4473 = vmatpush1.msra.mxu0 %v3802
    %4474 = vmatprep.subr.mxu0 %v3783
    %4475 = vmatpush1.msra.mxu0 %v3782
    %4476 = vmatprep.subr.mxu0 %v3763
    %4477 = vmatpush1.msra.mxu0 %v3762
    %4478 = vmatprep.subr.mxu0 %v3743
    %4479 = vmatpush1.msra.mxu0 %v3742
    %4480 = vmatprep.subr.mxu0 %v3723
    %4481 = vmatpush1.msra.mxu0 %v3722
    %4482 = vmatprep.subr.mxu0 %v3703
    %4483 = vmatpush1.msra.mxu0 %v3702
    %4484 = vmatprep.subr.mxu0 %v3683
    %4485 = vmatpush1.msra.mxu0 %v3682
    %4486 = vmatprep.subr.mxu0 %v3663
    %4487 = vmatpush1.msra.mxu0 %v3662
    %4488 = vmatprep.subr.mxu0 %v3643
    %4489 = vmatpush1.msra.mxu0 %v3642
    %4490 = vmatprep.subr.mxu0 %v3623
    %4491 = vmatpush1.msra.mxu0 %v3622
    %4492 = vmatprep.subr.mxu0 %v3603
    %4493 = vmatpush1.msra.mxu0 %v3602
    %4494 = vmatprep.subr.mxu0 %v3583
    %4495 = vmatpush1.msra.mxu0 %v3582
    %4496 = vmatprep.subr.mxu0 %v3563
    %4497 = vmatpush1.msra.mxu0 %v3562
    %4498 = vmatprep.subr.mxu0 %v3543
    %4499 = vmatpush1.msra.mxu0 %v3542
    %4500 = vmatprep.subr.mxu0 %v3523
    %4501 = vmatpush1.msra.mxu0 %v3522
    %4502 = vmatprep.subr.mxu0 0.0
    %4503 = vmatpush2.msra.mxu0 0.0
    %4504 = vmatprep.subr.mxu0 0.0
    %4505 = vmatpush2.msra.mxu0 0.0
    %4506 = vmatprep.subr.mxu0 0.0
    %4507 = vmatpush2.msra.mxu0 0.0
    %4508 = vmatprep.subr.mxu0 0.0
    %4509 = vmatpush2.msra.mxu0 0.0
    %4510 = vmatprep.subr.mxu0 0.0
    %4511 = vmatpush2.msra.mxu0 0.0
    %4512 = vmatprep.subr.mxu0 0.0
    %4513 = vmatpush2.msra.mxu0 0.0
    %4514 = vmatprep.subr.mxu0 0.0
    %4515 = vmatpush2.msra.mxu0 0.0
    %4516 = vmatprep.subr.mxu0 0.0
    %4517 = vmatpush2.msra.mxu0 0.0
    %4518 = vmatprep.subr.mxu0 0.0
    %4519 = vmatpush2.msra.mxu0 0.0
    %4520 = vmatprep.subr.mxu0 0.0
    %4521 = vmatpush2.msra.mxu0 0.0
    %4522 = vmatprep.subr.mxu0 0.0
    %4523 = vmatpush2.msra.mxu0 0.0
    %4524 = vmatprep.subr.mxu0 0.0
    %4525 = vmatpush2.msra.mxu0 0.0
    %4526 = vmatprep.subr.mxu0 0.0
    %4527 = vmatpush2.msra.mxu0 0.0
    %4528 = vmatprep.subr.mxu0 0.0
    %4529 = vmatpush2.msra.mxu0 0.0
    %4530 = vmatprep.subr.mxu0 0.0
    %4531 = vmatpush2.msra.mxu0 0.0
    %4532 = vmatprep.subr.mxu0 0.0
    %4533 = vmatpush2.msra.mxu0 0.0
    %4534 = vmatprep.mubr.f32.mxu0 0.0
    %4535 = vmatmul.mubr.f32.gmra.mxu0 %v2188
    %v4536 = vpop.f32.mrf.mxu0
    %v4537 = vadd.f32 %v3887, %v4536
    %v4538 = vpop.f32.mrf.mxu0
    %v4539 = vadd.f32 %v3891, %v4538
    %4540 = vmatprep.mubr.f32.mxu0 0.0
    %4541 = vmatmul.mubr.f32.gmra.mxu0 %v2189
    %v4542 = vpop.f32.mrf.mxu0
    %v4543 = vadd.f32 %v3887, %v4542
    %v4544 = vpop.f32.mrf.mxu0
    %v4545 = vadd.f32 %v3891, %v4544
    %4546 = vmatprep.mubr.f32.mxu0 0.0
    %4547 = vmatmul.mubr.f32.gmra.mxu0 %v2190
    %v4548 = vpop.f32.mrf.mxu0
    %v4549 = vadd.f32 %v3887, %v4548
    %v4550 = vpop.f32.mrf.mxu0
    %v4551 = vadd.f32 %v3891, %v4550
    %4552 = vmatprep.mubr.f32.mxu0 0.0
    %4553 = vmatmul.mubr.f32.gmra.mxu0 %v2191
    %v4554 = vpop.f32.mrf.mxu0
    %v4555 = vadd.f32 %v3887, %v4554
    %v4556 = vpop.f32.mrf.mxu0
    %v4557 = vadd.f32 %v3891, %v4556
    %4558 = vdwg.mxu0
    %4559 = vmatprep.subr.mxu0 %v3825
    %4560 = vmatpush1.msra.mxu0 %v3824
    %4561 = vmatprep.subr.mxu0 %v3805
    %4562 = vmatpush1.msra.mxu0 %v3804
    %4563 = vmatprep.subr.mxu0 %v3785
    %4564 = vmatpush1.msra.mxu0 %v3784
    %4565 = vmatprep.subr.mxu0 %v3765
    %4566 = vmatpush1.msra.mxu0 %v3764
    %4567 = vmatprep.subr.mxu0 %v3745
    %4568 = vmatpush1.msra.mxu0 %v3744
    %4569 = vmatprep.subr.mxu0 %v3725
    %4570 = vmatpush1.msra.mxu0 %v3724
    %4571 = vmatprep.subr.mxu0 %v3705
    %4572 = vmatpush1.msra.mxu0 %v3704
    %4573 = vmatprep.subr.mxu0 %v3685
    %4574 = vmatpush1.msra.mxu0 %v3684
    %4575 = vmatprep.subr.mxu0 %v3665
    %4576 = vmatpush1.msra.mxu0 %v3664
    %4577 = vmatprep.subr.mxu0 %v3645
    %4578 = vmatpush1.msra.mxu0 %v3644
    %4579 = vmatprep.subr.mxu0 %v3625
    %4580 = vmatpush1.msra.mxu0 %v3624
    %4581 = vmatprep.subr.mxu0 %v3605
    %4582 = vmatpush1.msra.mxu0 %v3604
    %4583 = vmatprep.subr.mxu0 %v3585
    %4584 = vmatpush1.msra.mxu0 %v3584
    %4585 = vmatprep.subr.mxu0 %v3565
    %4586 = vmatpush1.msra.mxu0 %v3564
    %4587 = vmatprep.subr.mxu0 %v3545
    %4588 = vmatpush1.msra.mxu0 %v3544
    %4589 = vmatprep.subr.mxu0 %v3525
    %4590 = vmatpush1.msra.mxu0 %v3524
    %4591 = vmatprep.subr.mxu0 0.0
    %4592 = vmatpush2.msra.mxu0 0.0
    %4593 = vmatprep.subr.mxu0 0.0
    %4594 = vmatpush2.msra.mxu0 0.0
    %4595 = vmatprep.subr.mxu0 0.0
    %4596 = vmatpush2.msra.mxu0 0.0
    %4597 = vmatprep.subr.mxu0 0.0
    %4598 = vmatpush2.msra.mxu0 0.0
    %4599 = vmatprep.subr.mxu0 0.0
    %4600 = vmatpush2.msra.mxu0 0.0
    %4601 = vmatprep.subr.mxu0 0.0
    %4602 = vmatpush2.msra.mxu0 0.0
    %4603 = vmatprep.subr.mxu0 0.0
    %4604 = vmatpush2.msra.mxu0 0.0
    %4605 = vmatprep.subr.mxu0 0.0
    %4606 = vmatpush2.msra.mxu0 0.0
    %4607 = vmatprep.subr.mxu0 0.0
    %4608 = vmatpush2.msra.mxu0 0.0
    %4609 = vmatprep.subr.mxu0 0.0
    %4610 = vmatpush2.msra.mxu0 0.0
    %4611 = vmatprep.subr.mxu0 0.0
    %4612 = vmatpush2.msra.mxu0 0.0
    %4613 = vmatprep.subr.mxu0 0.0
    %4614 = vmatpush2.msra.mxu0 0.0
    %4615 = vmatprep.subr.mxu0 0.0
    %4616 = vmatpush2.msra.mxu0 0.0
    %4617 = vmatprep.subr.mxu0 0.0
    %4618 = vmatpush2.msra.mxu0 0.0
    %4619 = vmatprep.subr.mxu0 0.0
    %4620 = vmatpush2.msra.mxu0 0.0
    %4621 = vmatprep.subr.mxu0 0.0
    %4622 = vmatpush2.msra.mxu0 0.0
    %4623 = vmatprep.mubr.f32.mxu0 0.0
    %4624 = vmatmul.mubr.f32.gmra.mxu0 %v2188
    %v4625 = vpop.f32.mrf.mxu0
    %v4626 = vadd.f32 %v3895, %v4625
    %v4627 = vpop.f32.mrf.mxu0
    %v4628 = vadd.f32 %v3899, %v4627
    %4629 = vmatprep.mubr.f32.mxu0 0.0
    %4630 = vmatmul.mubr.f32.gmra.mxu0 %v2189
    %v4631 = vpop.f32.mrf.mxu0
    %v4632 = vadd.f32 %v3895, %v4631
    %v4633 = vpop.f32.mrf.mxu0
    %v4634 = vadd.f32 %v3899, %v4633
    %4635 = vmatprep.mubr.f32.mxu0 0.0
    %4636 = vmatmul.mubr.f32.gmra.mxu0 %v2190
    %v4637 = vpop.f32.mrf.mxu0
    %v4638 = vadd.f32 %v3895, %v4637
    %v4639 = vpop.f32.mrf.mxu0
    %v4640 = vadd.f32 %v3899, %v4639
    %4641 = vmatprep.mubr.f32.mxu0 0.0
    %4642 = vmatmul.mubr.f32.gmra.mxu0 %v2191
    %v4643 = vpop.f32.mrf.mxu0
    %v4644 = vadd.f32 %v3895, %v4643
    %v4645 = vpop.f32.mrf.mxu0
    %v4646 = vadd.f32 %v3899, %v4645
    %4647 = vdwg.mxu0
    %4648 = vmatprep.subr.mxu0 %v3827
    %4649 = vmatpush1.msra.mxu0 %v3826
    %4650 = vmatprep.subr.mxu0 %v3807
    %4651 = vmatpush1.msra.mxu0 %v3806
    %4652 = vmatprep.subr.mxu0 %v3787
    %4653 = vmatpush1.msra.mxu0 %v3786
    %4654 = vmatprep.subr.mxu0 %v3767
    %4655 = vmatpush1.msra.mxu0 %v3766
    %4656 = vmatprep.subr.mxu0 %v3747
    %4657 = vmatpush1.msra.mxu0 %v3746
    %4658 = vmatprep.subr.mxu0 %v3727
    %4659 = vmatpush1.msra.mxu0 %v3726
    %4660 = vmatprep.subr.mxu0 %v3707
    %4661 = vmatpush1.msra.mxu0 %v3706
    %4662 = vmatprep.subr.mxu0 %v3687
    %4663 = vmatpush1.msra.mxu0 %v3686
    %4664 = vmatprep.subr.mxu0 %v3667
    %4665 = vmatpush1.msra.mxu0 %v3666
    %4666 = vmatprep.subr.mxu0 %v3647
    %4667 = vmatpush1.msra.mxu0 %v3646
    %4668 = vmatprep.subr.mxu0 %v3627
    %4669 = vmatpush1.msra.mxu0 %v3626
    %4670 = vmatprep.subr.mxu0 %v3607
    %4671 = vmatpush1.msra.mxu0 %v3606
    %4672 = vmatprep.subr.mxu0 %v3587
    %4673 = vmatpush1.msra.mxu0 %v3586
    %4674 = vmatprep.subr.mxu0 %v3567
    %4675 = vmatpush1.msra.mxu0 %v3566
    %4676 = vmatprep.subr.mxu0 %v3547
    %4677 = vmatpush1.msra.mxu0 %v3546
    %4678 = vmatprep.subr.mxu0 %v3527
    %4679 = vmatpush1.msra.mxu0 %v3526
    %4680 = vmatprep.subr.mxu0 0.0
    %4681 = vmatpush2.msra.mxu0 0.0
    %4682 = vmatprep.subr.mxu0 0.0
    %4683 = vmatpush2.msra.mxu0 0.0
    %4684 = vmatprep.subr.mxu0 0.0
    %4685 = vmatpush2.msra.mxu0 0.0
    %4686 = vmatprep.subr.mxu0 0.0
    %4687 = vmatpush2.msra.mxu0 0.0
    %4688 = vmatprep.subr.mxu0 0.0
    %4689 = vmatpush2.msra.mxu0 0.0
    %4690 = vmatprep.subr.mxu0 0.0
    %4691 = vmatpush2.msra.mxu0 0.0
    %4692 = vmatprep.subr.mxu0 0.0
    %4693 = vmatpush2.msra.mxu0 0.0
    %4694 = vmatprep.subr.mxu0 0.0
    %4695 = vmatpush2.msra.mxu0 0.0
    %4696 = vmatprep.subr.mxu0 0.0
    %4697 = vmatpush2.msra.mxu0 0.0
    %4698 = vmatprep.subr.mxu0 0.0
    %4699 = vmatpush2.msra.mxu0 0.0
    %4700 = vmatprep.subr.mxu0 0.0
    %4701 = vmatpush2.msra.mxu0 0.0
    %4702 = vmatprep.subr.mxu0 0.0
    %4703 = vmatpush2.msra.mxu0 0.0
    %4704 = vmatprep.subr.mxu0 0.0
    %4705 = vmatpush2.msra.mxu0 0.0
    %4706 = vmatprep.subr.mxu0 0.0
    %4707 = vmatpush2.msra.mxu0 0.0
    %4708 = vmatprep.subr.mxu0 0.0
    %4709 = vmatpush2.msra.mxu0 0.0
    %4710 = vmatprep.subr.mxu0 0.0
    %4711 = vmatpush2.msra.mxu0 0.0
    %4712 = vmatprep.mubr.f32.mxu0 0.0
    %4713 = vmatmul.mubr.f32.gmra.mxu0 %v2188
    %v4714 = vpop.f32.mrf.mxu0
    %v4715 = vadd.f32 %v3903, %v4714
    %v4716 = vpop.f32.mrf.mxu0
    %v4717 = vadd.f32 %v3907, %v4716
    %4718 = vmatprep.mubr.f32.mxu0 0.0
    %4719 = vmatmul.mubr.f32.gmra.mxu0 %v2189
    %v4720 = vpop.f32.mrf.mxu0
    %v4721 = vadd.f32 %v3903, %v4720
    %v4722 = vpop.f32.mrf.mxu0
    %v4723 = vadd.f32 %v3907, %v4722
    %4724 = vmatprep.mubr.f32.mxu0 0.0
    %4725 = vmatmul.mubr.f32.gmra.mxu0 %v2190
    %v4726 = vpop.f32.mrf.mxu0
    %v4727 = vadd.f32 %v3903, %v4726
    %v4728 = vpop.f32.mrf.mxu0
    %v4729 = vadd.f32 %v3907, %v4728
    %4730 = vmatprep.mubr.f32.mxu0 0.0
    %4731 = vmatmul.mubr.f32.gmra.mxu0 %v2191
    %v4732 = vpop.f32.mrf.mxu0
    %v4733 = vadd.f32 %v3903, %v4732
    %v4734 = vpop.f32.mrf.mxu0
    %v4735 = vadd.f32 %v3907, %v4734
    %4736 = vdwg.mxu0
    %4737 = vmatprep.subr.mxu0 %v3829
    %4738 = vmatpush1.msra.mxu0 %v3828
    %4739 = vmatprep.subr.mxu0 %v3809
    %4740 = vmatpush1.msra.mxu0 %v3808
    %4741 = vmatprep.subr.mxu0 %v3789
    %4742 = vmatpush1.msra.mxu0 %v3788
    %4743 = vmatprep.subr.mxu0 %v3769
    %4744 = vmatpush1.msra.mxu0 %v3768
    %4745 = vmatprep.subr.mxu0 %v3749
    %4746 = vmatpush1.msra.mxu0 %v3748
    %4747 = vmatprep.subr.mxu0 %v3729
    %4748 = vmatpush1.msra.mxu0 %v3728
    %4749 = vmatprep.subr.mxu0 %v3709
    %4750 = vmatpush1.msra.mxu0 %v3708
    %4751 = vmatprep.subr.mxu0 %v3689
    %4752 = vmatpush1.msra.mxu0 %v3688
    %4753 = vmatprep.subr.mxu0 %v3669
    %4754 = vmatpush1.msra.mxu0 %v3668
    %4755 = vmatprep.subr.mxu0 %v3649
    %4756 = vmatpush1.msra.mxu0 %v3648
    %4757 = vmatprep.subr.mxu0 %v3629
    %4758 = vmatpush1.msra.mxu0 %v3628
    %4759 = vmatprep.subr.mxu0 %v3609
    %4760 = vmatpush1.msra.mxu0 %v3608
    %4761 = vmatprep.subr.mxu0 %v3589
    %4762 = vmatpush1.msra.mxu0 %v3588
    %4763 = vmatprep.subr.mxu0 %v3569
    %4764 = vmatpush1.msra.mxu0 %v3568
    %4765 = vmatprep.subr.mxu0 %v3549
    %4766 = vmatpush1.msra.mxu0 %v3548
    %4767 = vmatprep.subr.mxu0 %v3529
    %4768 = vmatpush1.msra.mxu0 %v3528
    %4769 = vmatprep.subr.mxu0 0.0
    %4770 = vmatpush2.msra.mxu0 0.0
    %4771 = vmatprep.subr.mxu0 0.0
    %4772 = vmatpush2.msra.mxu0 0.0
    %4773 = vmatprep.subr.mxu0 0.0
    %4774 = vmatpush2.msra.mxu0 0.0
    %4775 = vmatprep.subr.mxu0 0.0
    %4776 = vmatpush2.msra.mxu0 0.0
    %4777 = vmatprep.subr.mxu0 0.0
    %4778 = vmatpush2.msra.mxu0 0.0
    %4779 = vmatprep.subr.mxu0 0.0
    %4780 = vmatpush2.msra.mxu0 0.0
    %4781 = vmatprep.subr.mxu0 0.0
    %4782 = vmatpush2.msra.mxu0 0.0
    %4783 = vmatprep.subr.mxu0 0.0
    %4784 = vmatpush2.msra.mxu0 0.0
    %4785 = vmatprep.subr.mxu0 0.0
    %4786 = vmatpush2.msra.mxu0 0.0
    %4787 = vmatprep.subr.mxu0 0.0
    %4788 = vmatpush2.msra.mxu0 0.0
    %4789 = vmatprep.subr.mxu0 0.0
    %4790 = vmatpush2.msra.mxu0 0.0
    %4791 = vmatprep.subr.mxu0 0.0
    %4792 = vmatpush2.msra.mxu0 0.0
    %4793 = vmatprep.subr.mxu0 0.0
    %4794 = vmatpush2.msra.mxu0 0.0
    %4795 = vmatprep.subr.mxu0 0.0
    %4796 = vmatpush2.msra.mxu0 0.0
    %4797 = vmatprep.subr.mxu0 0.0
    %4798 = vmatpush2.msra.mxu0 0.0
    %4799 = vmatprep.subr.mxu0 0.0
    %4800 = vmatpush2.msra.mxu0 0.0
    %4801 = vmatprep.mubr.f32.mxu0 0.0
    %4802 = vmatmul.mubr.f32.gmra.mxu0 %v2188
    %v4803 = vpop.f32.mrf.mxu0
    %v4804 = vadd.f32 %v3911, %v4803
    %v4805 = vpop.f32.mrf.mxu0
    %v4806 = vadd.f32 %v3915, %v4805
    %4807 = vmatprep.mubr.f32.mxu0 0.0
    %4808 = vmatmul.mubr.f32.gmra.mxu0 %v2189
    %v4809 = vpop.f32.mrf.mxu0
    %v4810 = vadd.f32 %v3911, %v4809
    %v4811 = vpop.f32.mrf.mxu0
    %v4812 = vadd.f32 %v3915, %v4811
    %4813 = vmatprep.mubr.f32.mxu0 0.0
    %4814 = vmatmul.mubr.f32.gmra.mxu0 %v2190
    %v4815 = vpop.f32.mrf.mxu0
    %v4816 = vadd.f32 %v3911, %v4815
    %v4817 = vpop.f32.mrf.mxu0
    %v4818 = vadd.f32 %v3915, %v4817
    %4819 = vmatprep.mubr.f32.mxu0 0.0
    %4820 = vmatmul.mubr.f32.gmra.mxu0 %v2191
    %v4821 = vpop.f32.mrf.mxu0
    %v4822 = vadd.f32 %v3911, %v4821
    %v4823 = vpop.f32.mrf.mxu0
    %v4824 = vadd.f32 %v3915, %v4823
    %4825 = vdwg.mxu0
    %v4826 = vmul.f32 %v4003, 0.70710677
    %v4827 = vmul.f32 %v4005, 0.70710677
    %v4828 = vmul.f32 %v4092, 0.70710677
    %v4829 = vmul.f32 %v4094, 0.70710677
    %v4830 = vmul.f32 %v4181, 0.70710677
    %v4831 = vmul.f32 %v4183, 0.70710677
    %v4832 = vmul.f32 %v4270, 0.70710677
    %v4833 = vmul.f32 %v4272, 0.70710677
    %v4834 = vmul.f32 %v4359, 0.70710677
    %v4835 = vmul.f32 %v4361, 0.70710677
    %v4836 = vmul.f32 %v4448, 0.70710677
    %v4837 = vmul.f32 %v4450, 0.70710677
    %v4838 = vmul.f32 %v4537, 0.70710677
    %v4839 = vmul.f32 %v4539, 0.70710677
    %v4840 = vmul.f32 %v4626, 0.70710677
    %v4841 = vmul.f32 %v4628, 0.70710677
    %v4842 = vmul.f32 %v4715, 0.70710677
    %v4843 = vmul.f32 %v4717, 0.70710677
    %v4844 = vmul.f32 %v4804, 0.70710677
    %v4845 = vmul.f32 %v4806, 0.70710677
    %v4846 = vmul.f32 %v4009, 0.70710677
    %v4847 = vmul.f32 %v4011, 0.70710677
    %v4848 = vmul.f32 %v4098, 0.70710677
    %v4849 = vmul.f32 %v4100, 0.70710677
    %v4850 = vmul.f32 %v4187, 0.70710677
    %v4851 = vmul.f32 %v4189, 0.70710677
    %v4852 = vmul.f32 %v4276, 0.70710677
    %v4853 = vmul.f32 %v4278, 0.70710677
    %v4854 = vmul.f32 %v4365, 0.70710677
    %v4855 = vmul.f32 %v4367, 0.70710677
    %v4856 = vmul.f32 %v4454, 0.70710677
    %v4857 = vmul.f32 %v4456, 0.70710677
    %v4858 = vmul.f32 %v4543, 0.70710677
    %v4859 = vmul.f32 %v4545, 0.70710677
    %v4860 = vmul.f32 %v4632, 0.70710677
    %v4861 = vmul.f32 %v4634, 0.70710677
    %v4862 = vmul.f32 %v4721, 0.70710677
    %v4863 = vmul.f32 %v4723, 0.70710677
    %v4864 = vmul.f32 %v4810, 0.70710677
    %v4865 = vmul.f32 %v4812, 0.70710677
    %v4866 = vmul.f32 %v4015, 0.70710677
    %v4867 = vmul.f32 %v4017, 0.70710677
    %v4868 = vmul.f32 %v4104, 0.70710677
    %v4869 = vmul.f32 %v4106, 0.70710677
    %v4870 = vmul.f32 %v4193, 0.70710677
    %v4871 = vmul.f32 %v4195, 0.70710677
    %v4872 = vmul.f32 %v4282, 0.70710677
    %v4873 = vmul.f32 %v4284, 0.70710677
    %v4874 = vmul.f32 %v4371, 0.70710677
    %v4875 = vmul.f32 %v4373, 0.70710677
    %v4876 = vmul.f32 %v4460, 0.70710677
    %v4877 = vmul.f32 %v4462, 0.70710677
    %v4878 = vmul.f32 %v4549, 0.70710677
    %v4879 = vmul.f32 %v4551, 0.70710677
    %v4880 = vmul.f32 %v4638, 0.70710677
    %v4881 = vmul.f32 %v4640, 0.70710677
    %v4882 = vmul.f32 %v4727, 0.70710677
    %v4883 = vmul.f32 %v4729, 0.70710677
    %v4884 = vmul.f32 %v4816, 0.70710677
    %v4885 = vmul.f32 %v4818, 0.70710677
    %v4886 = vmul.f32 %v4021, 0.70710677
    %v4887 = vmul.f32 %v4023, 0.70710677
    %v4888 = vmul.f32 %v4110, 0.70710677
    %v4889 = vmul.f32 %v4112, 0.70710677
    %v4890 = vmul.f32 %v4199, 0.70710677
    %v4891 = vmul.f32 %v4201, 0.70710677
    %v4892 = vmul.f32 %v4288, 0.70710677
    %v4893 = vmul.f32 %v4290, 0.70710677
    %v4894 = vmul.f32 %v4377, 0.70710677
    %v4895 = vmul.f32 %v4379, 0.70710677
    %v4896 = vmul.f32 %v4466, 0.70710677
    %v4897 = vmul.f32 %v4468, 0.70710677
    %v4898 = vmul.f32 %v4555, 0.70710677
    %v4899 = vmul.f32 %v4557, 0.70710677
    %v4900 = vmul.f32 %v4644, 0.70710677
    %v4901 = vmul.f32 %v4646, 0.70710677
    %v4902 = vmul.f32 %v4733, 0.70710677
    %v4903 = vmul.f32 %v4735, 0.70710677
    %v4904 = vmul.f32 %v4822, 0.70710677
    %v4905 = vmul.f32 %v4824, 0.70710677
    %vm4906 = vcmp.lt.f32.partialorder %v4826, 0.0
    %vm4907 = vcmp.lt.f32.partialorder %v4827, 0.0
    %vm4908 = vcmp.lt.f32.partialorder %v4828, 0.0
    %vm4909 = vcmp.lt.f32.partialorder %v4829, 0.0
    %vm4910 = vcmp.lt.f32.partialorder %v4830, 0.0
    %vm4911 = vcmp.lt.f32.partialorder %v4831, 0.0
    %vm4912 = vcmp.lt.f32.partialorder %v4832, 0.0
    %vm4913 = vcmp.lt.f32.partialorder %v4833, 0.0
    %vm4914 = vcmp.lt.f32.partialorder %v4834, 0.0
    %vm4915 = vcmp.lt.f32.partialorder %v4835, 0.0
    %vm4916 = vcmp.lt.f32.partialorder %v4836, 0.0
    %vm4917 = vcmp.lt.f32.partialorder %v4837, 0.0
    %vm4918 = vcmp.lt.f32.partialorder %v4838, 0.0
    %vm4919 = vcmp.lt.f32.partialorder %v4839, 0.0
    %vm4920 = vcmp.lt.f32.partialorder %v4840, 0.0
    %vm4921 = vcmp.lt.f32.partialorder %v4841, 0.0
    %vm4922 = vcmp.lt.f32.partialorder %v4842, 0.0
    %vm4923 = vcmp.lt.f32.partialorder %v4843, 0.0
    %vm4924 = vcmp.lt.f32.partialorder %v4844, 0.0
    %vm4925 = vcmp.lt.f32.partialorder %v4845, 0.0
    %vm4926 = vcmp.lt.f32.partialorder %v4846, 0.0
    %vm4927 = vcmp.lt.f32.partialorder %v4847, 0.0
    %vm4928 = vcmp.lt.f32.partialorder %v4848, 0.0
    %vm4929 = vcmp.lt.f32.partialorder %v4849, 0.0
    %vm4930 = vcmp.lt.f32.partialorder %v4850, 0.0
    %vm4931 = vcmp.lt.f32.partialorder %v4851, 0.0
    %vm4932 = vcmp.lt.f32.partialorder %v4852, 0.0
    %vm4933 = vcmp.lt.f32.partialorder %v4853, 0.0
    %vm4934 = vcmp.lt.f32.partialorder %v4854, 0.0
    %vm4935 = vcmp.lt.f32.partialorder %v4855, 0.0
    %vm4936 = vcmp.lt.f32.partialorder %v4856, 0.0
    %vm4937 = vcmp.lt.f32.partialorder %v4857, 0.0
    %vm4938 = vcmp.lt.f32.partialorder %v4858, 0.0
    %vm4939 = vcmp.lt.f32.partialorder %v4859, 0.0
    %vm4940 = vcmp.lt.f32.partialorder %v4860, 0.0
    %vm4941 = vcmp.lt.f32.partialorder %v4861, 0.0
    %vm4942 = vcmp.lt.f32.partialorder %v4862, 0.0
    %vm4943 = vcmp.lt.f32.partialorder %v4863, 0.0
    %vm4944 = vcmp.lt.f32.partialorder %v4864, 0.0
    %vm4945 = vcmp.lt.f32.partialorder %v4865, 0.0
    %vm4946 = vcmp.lt.f32.partialorder %v4866, 0.0
    %vm4947 = vcmp.lt.f32.partialorder %v4867, 0.0
    %vm4948 = vcmp.lt.f32.partialorder %v4868, 0.0
    %vm4949 = vcmp.lt.f32.partialorder %v4869, 0.0
    %vm4950 = vcmp.lt.f32.partialorder %v4870, 0.0
    %vm4951 = vcmp.lt.f32.partialorder %v4871, 0.0
    %vm4952 = vcmp.lt.f32.partialorder %v4872, 0.0
    %vm4953 = vcmp.lt.f32.partialorder %v4873, 0.0
    %vm4954 = vcmp.lt.f32.partialorder %v4874, 0.0
    %vm4955 = vcmp.lt.f32.partialorder %v4875, 0.0
    %vm4956 = vcmp.lt.f32.partialorder %v4876, 0.0
    %vm4957 = vcmp.lt.f32.partialorder %v4877, 0.0
    %vm4958 = vcmp.lt.f32.partialorder %v4878, 0.0
    %vm4959 = vcmp.lt.f32.partialorder %v4879, 0.0
    %vm4960 = vcmp.lt.f32.partialorder %v4880, 0.0
    %vm4961 = vcmp.lt.f32.partialorder %v4881, 0.0
    %vm4962 = vcmp.lt.f32.partialorder %v4882, 0.0
    %vm4963 = vcmp.lt.f32.partialorder %v4883, 0.0
    %vm4964 = vcmp.lt.f32.partialorder %v4884, 0.0
    %vm4965 = vcmp.lt.f32.partialorder %v4885, 0.0
    %vm4966 = vcmp.lt.f32.partialorder %v4886, 0.0
    %vm4967 = vcmp.lt.f32.partialorder %v4887, 0.0
    %vm4968 = vcmp.lt.f32.partialorder %v4888, 0.0
    %vm4969 = vcmp.lt.f32.partialorder %v4889, 0.0
    %vm4970 = vcmp.lt.f32.partialorder %v4890, 0.0
    %vm4971 = vcmp.lt.f32.partialorder %v4891, 0.0
    %vm4972 = vcmp.lt.f32.partialorder %v4892, 0.0
    %vm4973 = vcmp.lt.f32.partialorder %v4893, 0.0
    %vm4974 = vcmp.lt.f32.partialorder %v4894, 0.0
    %vm4975 = vcmp.lt.f32.partialorder %v4895, 0.0
    %vm4976 = vcmp.lt.f32.partialorder %v4896, 0.0
    %vm4977 = vcmp.lt.f32.partialorder %v4897, 0.0
    %vm4978 = vcmp.lt.f32.partialorder %v4898, 0.0
    %vm4979 = vcmp.lt.f32.partialorder %v4899, 0.0
    %vm4980 = vcmp.lt.f32.partialorder %v4900, 0.0
    %vm4981 = vcmp.lt.f32.partialorder %v4901, 0.0
    %vm4982 = vcmp.lt.f32.partialorder %v4902, 0.0
    %vm4983 = vcmp.lt.f32.partialorder %v4903, 0.0
    %vm4984 = vcmp.lt.f32.partialorder %v4904, 0.0
    %vm4985 = vcmp.lt.f32.partialorder %v4905, 0.0
    %v4986 = vsel %vm4906, -1.0, 1.0
    %v4987 = vsel %vm4907, -1.0, 1.0
    %v4988 = vsel %vm4908, -1.0, 1.0
    %v4989 = vsel %vm4909, -1.0, 1.0
    %v4990 = vsel %vm4910, -1.0, 1.0
    %v4991 = vsel %vm4911, -1.0, 1.0
    %v4992 = vsel %vm4912, -1.0, 1.0
    %v4993 = vsel %vm4913, -1.0, 1.0
    %v4994 = vsel %vm4914, -1.0, 1.0
    %v4995 = vsel %vm4915, -1.0, 1.0
    %v4996 = vsel %vm4916, -1.0, 1.0
    %v4997 = vsel %vm4917, -1.0, 1.0
    %v4998 = vsel %vm4918, -1.0, 1.0
    %v4999 = vsel %vm4919, -1.0, 1.0
    %v5000 = vsel %vm4920, -1.0, 1.0
    %v5001 = vsel %vm4921, -1.0, 1.0
    %v5002 = vsel %vm4922, -1.0, 1.0
    %v5003 = vsel %vm4923, -1.0, 1.0
    %v5004 = vsel %vm4924, -1.0, 1.0
    %v5005 = vsel %vm4925, -1.0, 1.0
    %v5006 = vsel %vm4926, -1.0, 1.0
    %v5007 = vsel %vm4927, -1.0, 1.0
    %v5008 = vsel %vm4928, -1.0, 1.0
    %v5009 = vsel %vm4929, -1.0, 1.0
    %v5010 = vsel %vm4930, -1.0, 1.0
    %v5011 = vsel %vm4931, -1.0, 1.0
    %v5012 = vsel %vm4932, -1.0, 1.0
    %v5013 = vsel %vm4933, -1.0, 1.0
    %v5014 = vsel %vm4934, -1.0, 1.0
    %v5015 = vsel %vm4935, -1.0, 1.0
    %v5016 = vsel %vm4936, -1.0, 1.0
    %v5017 = vsel %vm4937, -1.0, 1.0
    %v5018 = vsel %vm4938, -1.0, 1.0
    %v5019 = vsel %vm4939, -1.0, 1.0
    %v5020 = vsel %vm4940, -1.0, 1.0
    %v5021 = vsel %vm4941, -1.0, 1.0
    %v5022 = vsel %vm4942, -1.0, 1.0
    %v5023 = vsel %vm4943, -1.0, 1.0
    %v5024 = vsel %vm4944, -1.0, 1.0
    %v5025 = vsel %vm4945, -1.0, 1.0
    %v5026 = vsel %vm4946, -1.0, 1.0
    %v5027 = vsel %vm4947, -1.0, 1.0
    %v5028 = vsel %vm4948, -1.0, 1.0
    %v5029 = vsel %vm4949, -1.0, 1.0
    %v5030 = vsel %vm4950, -1.0, 1.0
    %v5031 = vsel %vm4951, -1.0, 1.0
    %v5032 = vsel %vm4952, -1.0, 1.0
    %v5033 = vsel %vm4953, -1.0, 1.0
    %v5034 = vsel %vm4954, -1.0, 1.0
    %v5035 = vsel %vm4955, -1.0, 1.0
    %v5036 = vsel %vm4956, -1.0, 1.0
    %v5037 = vsel %vm4957, -1.0, 1.0
    %v5038 = vsel %vm4958, -1.0, 1.0
    %v5039 = vsel %vm4959, -1.0, 1.0
    %v5040 = vsel %vm4960, -1.0, 1.0
    %v5041 = vsel %vm4961, -1.0, 1.0
    %v5042 = vsel %vm4962, -1.0, 1.0
    %v5043 = vsel %vm4963, -1.0, 1.0
    %v5044 = vsel %vm4964, -1.0, 1.0
    %v5045 = vsel %vm4965, -1.0, 1.0
    %v5046 = vsel %vm4966, -1.0, 1.0
    %v5047 = vsel %vm4967, -1.0, 1.0
    %v5048 = vsel %vm4968, -1.0, 1.0
    %v5049 = vsel %vm4969, -1.0, 1.0
    %v5050 = vsel %vm4970, -1.0, 1.0
    %v5051 = vsel %vm4971, -1.0, 1.0
    %v5052 = vsel %vm4972, -1.0, 1.0
    %v5053 = vsel %vm4973, -1.0, 1.0
    %v5054 = vsel %vm4974, -1.0, 1.0
    %v5055 = vsel %vm4975, -1.0, 1.0
    %v5056 = vsel %vm4976, -1.0, 1.0
    %v5057 = vsel %vm4977, -1.0, 1.0
    %v5058 = vsel %vm4978, -1.0, 1.0
    %v5059 = vsel %vm4979, -1.0, 1.0
    %v5060 = vsel %vm4980, -1.0, 1.0
    %v5061 = vsel %vm4981, -1.0, 1.0
    %v5062 = vsel %vm4982, -1.0, 1.0
    %v5063 = vsel %vm4983, -1.0, 1.0
    %v5064 = vsel %vm4984, -1.0, 1.0
    %v5065 = vsel %vm4985, -1.0, 1.0
    %v5066 = vand.u32 2147483647, %v4826
    %v5067 = vand.u32 2147483647, %v4827
    %v5068 = vand.u32 2147483647, %v4828
    %v5069 = vand.u32 2147483647, %v4829
    %v5070 = vand.u32 2147483647, %v4830
    %v5071 = vand.u32 2147483647, %v4831
    %v5072 = vand.u32 2147483647, %v4832
    %v5073 = vand.u32 2147483647, %v4833
    %v5074 = vand.u32 2147483647, %v4834
    %v5075 = vand.u32 2147483647, %v4835
    %v5076 = vand.u32 2147483647, %v4836
    %v5077 = vand.u32 2147483647, %v4837
    %v5078 = vand.u32 2147483647, %v4838
    %v5079 = vand.u32 2147483647, %v4839
    %v5080 = vand.u32 2147483647, %v4840
    %v5081 = vand.u32 2147483647, %v4841
    %v5082 = vand.u32 2147483647, %v4842
    %v5083 = vand.u32 2147483647, %v4843
    %v5084 = vand.u32 2147483647, %v4844
    %v5085 = vand.u32 2147483647, %v4845
    %v5086 = vand.u32 2147483647, %v4846
    %v5087 = vand.u32 2147483647, %v4847
    %v5088 = vand.u32 2147483647, %v4848
    %v5089 = vand.u32 2147483647, %v4849
    %v5090 = vand.u32 2147483647, %v4850
    %v5091 = vand.u32 2147483647, %v4851
    %v5092 = vand.u32 2147483647, %v4852
    %v5093 = vand.u32 2147483647, %v4853
    %v5094 = vand.u32 2147483647, %v4854
    %v5095 = vand.u32 2147483647, %v4855
    %v5096 = vand.u32 2147483647, %v4856
    %v5097 = vand.u32 2147483647, %v4857
    %v5098 = vand.u32 2147483647, %v4858
    %v5099 = vand.u32 2147483647, %v4859
    %v5100 = vand.u32 2147483647, %v4860
    %v5101 = vand.u32 2147483647, %v4861
    %v5102 = vand.u32 2147483647, %v4862
    %v5103 = vand.u32 2147483647, %v4863
    %v5104 = vand.u32 2147483647, %v4864
    %v5105 = vand.u32 2147483647, %v4865
    %v5106 = vand.u32 2147483647, %v4866
    %v5107 = vand.u32 2147483647, %v4867
    %v5108 = vand.u32 2147483647, %v4868
    %v5109 = vand.u32 2147483647, %v4869
    %v5110 = vand.u32 2147483647, %v4870
    %v5111 = vand.u32 2147483647, %v4871
    %v5112 = vand.u32 2147483647, %v4872
    %v5113 = vand.u32 2147483647, %v4873
    %v5114 = vand.u32 2147483647, %v4874
    %v5115 = vand.u32 2147483647, %v4875
    %v5116 = vand.u32 2147483647, %v4876
    %v5117 = vand.u32 2147483647, %v4877
    %v5118 = vand.u32 2147483647, %v4878
    %v5119 = vand.u32 2147483647, %v4879
    %v5120 = vand.u32 2147483647, %v4880
    %v5121 = vand.u32 2147483647, %v4881
    %v5122 = vand.u32 2147483647, %v4882
    %v5123 = vand.u32 2147483647, %v4883
    %v5124 = vand.u32 2147483647, %v4884
    %v5125 = vand.u32 2147483647, %v4885
    %v5126 = vand.u32 2147483647, %v4886
    %v5127 = vand.u32 2147483647, %v4887
    %v5128 = vand.u32 2147483647, %v4888
    %v5129 = vand.u32 2147483647, %v4889
    %v5130 = vand.u32 2147483647, %v4890
    %v5131 = vand.u32 2147483647, %v4891
    %v5132 = vand.u32 2147483647, %v4892
    %v5133 = vand.u32 2147483647, %v4893
    %v5134 = vand.u32 2147483647, %v4894
    %v5135 = vand.u32 2147483647, %v4895
    %v5136 = vand.u32 2147483647, %v4896
    %v5137 = vand.u32 2147483647, %v4897
    %v5138 = vand.u32 2147483647, %v4898
    %v5139 = vand.u32 2147483647, %v4899
    %v5140 = vand.u32 2147483647, %v4900
    %v5141 = vand.u32 2147483647, %v4901
    %v5142 = vand.u32 2147483647, %v4902
    %v5143 = vand.u32 2147483647, %v4903
    %v5144 = vand.u32 2147483647, %v4904
    %v5145 = vand.u32 2147483647, %v4905
    %v5146 = vmul.f32 %v5066, 0.3275911
    %v5147 = vmul.f32 %v5067, 0.3275911
    %v5148 = vmul.f32 %v5068, 0.3275911
    %v5149 = vmul.f32 %v5069, 0.3275911
    %v5150 = vmul.f32 %v5070, 0.3275911
    %v5151 = vmul.f32 %v5071, 0.3275911
    %v5152 = vmul.f32 %v5072, 0.3275911
    %v5153 = vmul.f32 %v5073, 0.3275911
    %v5154 = vmul.f32 %v5074, 0.3275911
    %v5155 = vmul.f32 %v5075, 0.3275911
    %v5156 = vmul.f32 %v5076, 0.3275911
    %v5157 = vmul.f32 %v5077, 0.3275911
    %v5158 = vmul.f32 %v5078, 0.3275911
    %v5159 = vmul.f32 %v5079, 0.3275911
    %v5160 = vmul.f32 %v5080, 0.3275911
    %v5161 = vmul.f32 %v5081, 0.3275911
    %v5162 = vmul.f32 %v5082, 0.3275911
    %v5163 = vmul.f32 %v5083, 0.3275911
    %v5164 = vmul.f32 %v5084, 0.3275911
    %v5165 = vmul.f32 %v5085, 0.3275911
    %v5166 = vmul.f32 %v5086, 0.3275911
    %v5167 = vmul.f32 %v5087, 0.3275911
    %v5168 = vmul.f32 %v5088, 0.3275911
    %v5169 = vmul.f32 %v5089, 0.3275911
    %v5170 = vmul.f32 %v5090, 0.3275911
    %v5171 = vmul.f32 %v5091, 0.3275911
    %v5172 = vmul.f32 %v5092, 0.3275911
    %v5173 = vmul.f32 %v5093, 0.3275911
    %v5174 = vmul.f32 %v5094, 0.3275911
    %v5175 = vmul.f32 %v5095, 0.3275911
    %v5176 = vmul.f32 %v5096, 0.3275911
    %v5177 = vmul.f32 %v5097, 0.3275911
    %v5178 = vmul.f32 %v5098, 0.3275911
    %v5179 = vmul.f32 %v5099, 0.3275911
    %v5180 = vmul.f32 %v5100, 0.3275911
    %v5181 = vmul.f32 %v5101, 0.3275911
    %v5182 = vmul.f32 %v5102, 0.3275911
    %v5183 = vmul.f32 %v5103, 0.3275911
    %v5184 = vmul.f32 %v5104, 0.3275911
    %v5185 = vmul.f32 %v5105, 0.3275911
    %v5186 = vmul.f32 %v5106, 0.3275911
    %v5187 = vmul.f32 %v5107, 0.3275911
    %v5188 = vmul.f32 %v5108, 0.3275911
    %v5189 = vmul.f32 %v5109, 0.3275911
    %v5190 = vmul.f32 %v5110, 0.3275911
    %v5191 = vmul.f32 %v5111, 0.3275911
    %v5192 = vmul.f32 %v5112, 0.3275911
    %v5193 = vmul.f32 %v5113, 0.3275911
    %v5194 = vmul.f32 %v5114, 0.3275911
    %v5195 = vmul.f32 %v5115, 0.3275911
    %v5196 = vmul.f32 %v5116, 0.3275911
    %v5197 = vmul.f32 %v5117, 0.3275911
    %v5198 = vmul.f32 %v5118, 0.3275911
    %v5199 = vmul.f32 %v5119, 0.3275911
    %v5200 = vmul.f32 %v5120, 0.3275911
    %v5201 = vmul.f32 %v5121, 0.3275911
    %v5202 = vmul.f32 %v5122, 0.3275911
    %v5203 = vmul.f32 %v5123, 0.3275911
    %v5204 = vmul.f32 %v5124, 0.3275911
    %v5205 = vmul.f32 %v5125, 0.3275911
    %v5206 = vmul.f32 %v5126, 0.3275911
    %v5207 = vmul.f32 %v5127, 0.3275911
    %v5208 = vmul.f32 %v5128, 0.3275911
    %v5209 = vmul.f32 %v5129, 0.3275911
    %v5210 = vmul.f32 %v5130, 0.3275911
    %v5211 = vmul.f32 %v5131, 0.3275911
    %v5212 = vmul.f32 %v5132, 0.3275911
    %v5213 = vmul.f32 %v5133, 0.3275911
    %v5214 = vmul.f32 %v5134, 0.3275911
    %v5215 = vmul.f32 %v5135, 0.3275911
    %v5216 = vmul.f32 %v5136, 0.3275911
    %v5217 = vmul.f32 %v5137, 0.3275911
    %v5218 = vmul.f32 %v5138, 0.3275911
    %v5219 = vmul.f32 %v5139, 0.3275911
    %v5220 = vmul.f32 %v5140, 0.3275911
    %v5221 = vmul.f32 %v5141, 0.3275911
    %v5222 = vmul.f32 %v5142, 0.3275911
    %v5223 = vmul.f32 %v5143, 0.3275911
    %v5224 = vmul.f32 %v5144, 0.3275911
    %v5225 = vmul.f32 %v5145, 0.3275911
    %v5226 = vadd.f32 %v5146, 1.0
    %v5227 = vadd.f32 %v5147, 1.0
    %v5228 = vadd.f32 %v5148, 1.0
    %v5229 = vadd.f32 %v5149, 1.0
    %v5230 = vadd.f32 %v5150, 1.0
    %v5231 = vadd.f32 %v5151, 1.0
    %v5232 = vadd.f32 %v5152, 1.0
    %v5233 = vadd.f32 %v5153, 1.0
    %v5234 = vadd.f32 %v5154, 1.0
    %v5235 = vadd.f32 %v5155, 1.0
    %v5236 = vadd.f32 %v5156, 1.0
    %v5237 = vadd.f32 %v5157, 1.0
    %v5238 = vadd.f32 %v5158, 1.0
    %v5239 = vadd.f32 %v5159, 1.0
    %v5240 = vadd.f32 %v5160, 1.0
    %v5241 = vadd.f32 %v5161, 1.0
    %v5242 = vadd.f32 %v5162, 1.0
    %v5243 = vadd.f32 %v5163, 1.0
    %v5244 = vadd.f32 %v5164, 1.0
    %v5245 = vadd.f32 %v5165, 1.0
    %v5246 = vadd.f32 %v5166, 1.0
    %v5247 = vadd.f32 %v5167, 1.0
    %v5248 = vadd.f32 %v5168, 1.0
    %v5249 = vadd.f32 %v5169, 1.0
    %v5250 = vadd.f32 %v5170, 1.0
    %v5251 = vadd.f32 %v5171, 1.0
    %v5252 = vadd.f32 %v5172, 1.0
    %v5253 = vadd.f32 %v5173, 1.0
    %v5254 = vadd.f32 %v5174, 1.0
    %v5255 = vadd.f32 %v5175, 1.0
    %v5256 = vadd.f32 %v5176, 1.0
    %v5257 = vadd.f32 %v5177, 1.0
    %v5258 = vadd.f32 %v5178, 1.0
    %v5259 = vadd.f32 %v5179, 1.0
    %v5260 = vadd.f32 %v5180, 1.0
    %v5261 = vadd.f32 %v5181, 1.0
    %v5262 = vadd.f32 %v5182, 1.0
    %v5263 = vadd.f32 %v5183, 1.0
    %v5264 = vadd.f32 %v5184, 1.0
    %v5265 = vadd.f32 %v5185, 1.0
    %v5266 = vadd.f32 %v5186, 1.0
    %v5267 = vadd.f32 %v5187, 1.0
    %v5268 = vadd.f32 %v5188, 1.0
    %v5269 = vadd.f32 %v5189, 1.0
    %v5270 = vadd.f32 %v5190, 1.0
    %v5271 = vadd.f32 %v5191, 1.0
    %v5272 = vadd.f32 %v5192, 1.0
    %v5273 = vadd.f32 %v5193, 1.0
    %v5274 = vadd.f32 %v5194, 1.0
    %v5275 = vadd.f32 %v5195, 1.0
    %v5276 = vadd.f32 %v5196, 1.0
    %v5277 = vadd.f32 %v5197, 1.0
    %v5278 = vadd.f32 %v5198, 1.0
    %v5279 = vadd.f32 %v5199, 1.0
    %v5280 = vadd.f32 %v5200, 1.0
    %v5281 = vadd.f32 %v5201, 1.0
    %v5282 = vadd.f32 %v5202, 1.0
    %v5283 = vadd.f32 %v5203, 1.0
    %v5284 = vadd.f32 %v5204, 1.0
    %v5285 = vadd.f32 %v5205, 1.0
    %v5286 = vadd.f32 %v5206, 1.0
    %v5287 = vadd.f32 %v5207, 1.0
    %v5288 = vadd.f32 %v5208, 1.0
    %v5289 = vadd.f32 %v5209, 1.0
    %v5290 = vadd.f32 %v5210, 1.0
    %v5291 = vadd.f32 %v5211, 1.0
    %v5292 = vadd.f32 %v5212, 1.0
    %v5293 = vadd.f32 %v5213, 1.0
    %v5294 = vadd.f32 %v5214, 1.0
    %v5295 = vadd.f32 %v5215, 1.0
    %v5296 = vadd.f32 %v5216, 1.0
    %v5297 = vadd.f32 %v5217, 1.0
    %v5298 = vadd.f32 %v5218, 1.0
    %v5299 = vadd.f32 %v5219, 1.0
    %v5300 = vadd.f32 %v5220, 1.0
    %v5301 = vadd.f32 %v5221, 1.0
    %v5302 = vadd.f32 %v5222, 1.0
    %v5303 = vadd.f32 %v5223, 1.0
    %v5304 = vadd.f32 %v5224, 1.0
    %v5305 = vadd.f32 %v5225, 1.0
    %v5306 = vrcp.pop %v5226
    %v5307 = vmul.f32 1.0, %v5306
    %v5308 = vrcp.pop %v5227
    %v5309 = vmul.f32 1.0, %v5308
    %v5310 = vrcp.pop %v5228
    %v5311 = vmul.f32 1.0, %v5310
    %v5312 = vrcp.pop %v5229
    %v5313 = vmul.f32 1.0, %v5312
    %v5314 = vrcp.pop %v5230
    %v5315 = vmul.f32 1.0, %v5314
    %v5316 = vrcp.pop %v5231
    %v5317 = vmul.f32 1.0, %v5316
    %v5318 = vrcp.pop %v5232
    %v5319 = vmul.f32 1.0, %v5318
    %v5320 = vrcp.pop %v5233
    %v5321 = vmul.f32 1.0, %v5320
    %v5322 = vrcp.pop %v5234
    %v5323 = vmul.f32 1.0, %v5322
    %v5324 = vrcp.pop %v5235
    %v5325 = vmul.f32 1.0, %v5324
    %v5326 = vrcp.pop %v5236
    %v5327 = vmul.f32 1.0, %v5326
    %v5328 = vrcp.pop %v5237
    %v5329 = vmul.f32 1.0, %v5328
    %v5330 = vrcp.pop %v5238
    %v5331 = vmul.f32 1.0, %v5330
    %v5332 = vrcp.pop %v5239
    %v5333 = vmul.f32 1.0, %v5332
    %v5334 = vrcp.pop %v5240
    %v5335 = vmul.f32 1.0, %v5334
    %v5336 = vrcp.pop %v5241
    %v5337 = vmul.f32 1.0, %v5336
    %v5338 = vrcp.pop %v5242
    %v5339 = vmul.f32 1.0, %v5338
    %v5340 = vrcp.pop %v5243
    %v5341 = vmul.f32 1.0, %v5340
    %v5342 = vrcp.pop %v5244
    %v5343 = vmul.f32 1.0, %v5342
    %v5344 = vrcp.pop %v5245
    %v5345 = vmul.f32 1.0, %v5344
    %v5346 = vrcp.pop %v5246
    %v5347 = vmul.f32 1.0, %v5346
    %v5348 = vrcp.pop %v5247
    %v5349 = vmul.f32 1.0, %v5348
    %v5350 = vrcp.pop %v5248
    %v5351 = vmul.f32 1.0, %v5350
    %v5352 = vrcp.pop %v5249
    %v5353 = vmul.f32 1.0, %v5352
    %v5354 = vrcp.pop %v5250
    %v5355 = vmul.f32 1.0, %v5354
    %v5356 = vrcp.pop %v5251
    %v5357 = vmul.f32 1.0, %v5356
    %v5358 = vrcp.pop %v5252
    %v5359 = vmul.f32 1.0, %v5358
    %v5360 = vrcp.pop %v5253
    %v5361 = vmul.f32 1.0, %v5360
    %v5362 = vrcp.pop %v5254
    %v5363 = vmul.f32 1.0, %v5362
    %v5364 = vrcp.pop %v5255
    %v5365 = vmul.f32 1.0, %v5364
    %v5366 = vrcp.pop %v5256
    %v5367 = vmul.f32 1.0, %v5366
    %v5368 = vrcp.pop %v5257
    %v5369 = vmul.f32 1.0, %v5368
    %v5370 = vrcp.pop %v5258
    %v5371 = vmul.f32 1.0, %v5370
    %v5372 = vrcp.pop %v5259
    %v5373 = vmul.f32 1.0, %v5372
    %v5374 = vrcp.pop %v5260
    %v5375 = vmul.f32 1.0, %v5374
    %v5376 = vrcp.pop %v5261
    %v5377 = vmul.f32 1.0, %v5376
    %v5378 = vrcp.pop %v5262
    %v5379 = vmul.f32 1.0, %v5378
    %v5380 = vrcp.pop %v5263
    %v5381 = vmul.f32 1.0, %v5380
    %v5382 = vrcp.pop %v5264
    %v5383 = vmul.f32 1.0, %v5382
    %v5384 = vrcp.pop %v5265
    %v5385 = vmul.f32 1.0, %v5384
    %v5386 = vrcp.pop %v5266
    %v5387 = vmul.f32 1.0, %v5386
    %v5388 = vrcp.pop %v5267
    %v5389 = vmul.f32 1.0, %v5388
    %v5390 = vrcp.pop %v5268
    %v5391 = vmul.f32 1.0, %v5390
    %v5392 = vrcp.pop %v5269
    %v5393 = vmul.f32 1.0, %v5392
    %v5394 = vrcp.pop %v5270
    %v5395 = vmul.f32 1.0, %v5394
    %v5396 = vrcp.pop %v5271
    %v5397 = vmul.f32 1.0, %v5396
    %v5398 = vrcp.pop %v5272
    %v5399 = vmul.f32 1.0, %v5398
    %v5400 = vrcp.pop %v5273
    %v5401 = vmul.f32 1.0, %v5400
    %v5402 = vrcp.pop %v5274
    %v5403 = vmul.f32 1.0, %v5402
    %v5404 = vrcp.pop %v5275
    %v5405 = vmul.f32 1.0, %v5404
    %v5406 = vrcp.pop %v5276
    %v5407 = vmul.f32 1.0, %v5406
    %v5408 = vrcp.pop %v5277
    %v5409 = vmul.f32 1.0, %v5408
    %v5410 = vrcp.pop %v5278
    %v5411 = vmul.f32 1.0, %v5410
    %v5412 = vrcp.pop %v5279
    %v5413 = vmul.f32 1.0, %v5412
    %v5414 = vrcp.pop %v5280
    %v5415 = vmul.f32 1.0, %v5414
    %v5416 = vrcp.pop %v5281
    %v5417 = vmul.f32 1.0, %v5416
    %v5418 = vrcp.pop %v5282
    %v5419 = vmul.f32 1.0, %v5418
    %v5420 = vrcp.pop %v5283
    %v5421 = vmul.f32 1.0, %v5420
    %v5422 = vrcp.pop %v5284
    %v5423 = vmul.f32 1.0, %v5422
    %v5424 = vrcp.pop %v5285
    %v5425 = vmul.f32 1.0, %v5424
    %v5426 = vrcp.pop %v5286
    %v5427 = vmul.f32 1.0, %v5426
    %v5428 = vrcp.pop %v5287
    %v5429 = vmul.f32 1.0, %v5428
    %v5430 = vrcp.pop %v5288
    %v5431 = vmul.f32 1.0, %v5430
    %v5432 = vrcp.pop %v5289
    %v5433 = vmul.f32 1.0, %v5432
    %v5434 = vrcp.pop %v5290
    %v5435 = vmul.f32 1.0, %v5434
    %v5436 = vrcp.pop %v5291
    %v5437 = vmul.f32 1.0, %v5436
    %v5438 = vrcp.pop %v5292
    %v5439 = vmul.f32 1.0, %v5438
    %v5440 = vrcp.pop %v5293
    %v5441 = vmul.f32 1.0, %v5440
    %v5442 = vrcp.pop %v5294
    %v5443 = vmul.f32 1.0, %v5442
    %v5444 = vrcp.pop %v5295
    %v5445 = vmul.f32 1.0, %v5444
    %v5446 = vrcp.pop %v5296
    %v5447 = vmul.f32 1.0, %v5446
    %v5448 = vrcp.pop %v5297
    %v5449 = vmul.f32 1.0, %v5448
    %v5450 = vrcp.pop %v5298
    %v5451 = vmul.f32 1.0, %v5450
    %v5452 = vrcp.pop %v5299
    %v5453 = vmul.f32 1.0, %v5452
    %v5454 = vrcp.pop %v5300
    %v5455 = vmul.f32 1.0, %v5454
    %v5456 = vrcp.pop %v5301
    %v5457 = vmul.f32 1.0, %v5456
    %v5458 = vrcp.pop %v5302
    %v5459 = vmul.f32 1.0, %v5458
    %v5460 = vrcp.pop %v5303
    %v5461 = vmul.f32 1.0, %v5460
    %v5462 = vrcp.pop %v5304
    %v5463 = vmul.f32 1.0, %v5462
    %v5464 = vrcp.pop %v5305
    %v5465 = vmul.f32 1.0, %v5464
    %v5466 = vmul.f32 %v5307, 1.0614054
    %v5467 = vmul.f32 %v5309, 1.0614054
    %v5468 = vmul.f32 %v5311, 1.0614054
    %v5469 = vmul.f32 %v5313, 1.0614054
    %v5470 = vmul.f32 %v5315, 1.0614054
    %v5471 = vmul.f32 %v5317, 1.0614054
    %v5472 = vmul.f32 %v5319, 1.0614054
    %v5473 = vmul.f32 %v5321, 1.0614054
    %v5474 = vmul.f32 %v5323, 1.0614054
    %v5475 = vmul.f32 %v5325, 1.0614054
    %v5476 = vmul.f32 %v5327, 1.0614054
    %v5477 = vmul.f32 %v5329, 1.0614054
    %v5478 = vmul.f32 %v5331, 1.0614054
    %v5479 = vmul.f32 %v5333, 1.0614054
    %v5480 = vmul.f32 %v5335, 1.0614054
    %v5481 = vmul.f32 %v5337, 1.0614054
    %v5482 = vmul.f32 %v5339, 1.0614054
    %v5483 = vmul.f32 %v5341, 1.0614054
    %v5484 = vmul.f32 %v5343, 1.0614054
    %v5485 = vmul.f32 %v5345, 1.0614054
    %v5486 = vmul.f32 %v5347, 1.0614054
    %v5487 = vmul.f32 %v5349, 1.0614054
    %v5488 = vmul.f32 %v5351, 1.0614054
    %v5489 = vmul.f32 %v5353, 1.0614054
    %v5490 = vmul.f32 %v5355, 1.0614054
    %v5491 = vmul.f32 %v5357, 1.0614054
    %v5492 = vmul.f32 %v5359, 1.0614054
    %v5493 = vmul.f32 %v5361, 1.0614054
    %v5494 = vmul.f32 %v5363, 1.0614054
    %v5495 = vmul.f32 %v5365, 1.0614054
    %v5496 = vmul.f32 %v5367, 1.0614054
    %v5497 = vmul.f32 %v5369, 1.0614054
    %v5498 = vmul.f32 %v5371, 1.0614054
    %v5499 = vmul.f32 %v5373, 1.0614054
    %v5500 = vmul.f32 %v5375, 1.0614054
    %v5501 = vmul.f32 %v5377, 1.0614054
    %v5502 = vmul.f32 %v5379, 1.0614054
    %v5503 = vmul.f32 %v5381, 1.0614054
    %v5504 = vmul.f32 %v5383, 1.0614054
    %v5505 = vmul.f32 %v5385, 1.0614054
    %v5506 = vmul.f32 %v5387, 1.0614054
    %v5507 = vmul.f32 %v5389, 1.0614054
    %v5508 = vmul.f32 %v5391, 1.0614054
    %v5509 = vmul.f32 %v5393, 1.0614054
    %v5510 = vmul.f32 %v5395, 1.0614054
    %v5511 = vmul.f32 %v5397, 1.0614054
    %v5512 = vmul.f32 %v5399, 1.0614054
    %v5513 = vmul.f32 %v5401, 1.0614054
    %v5514 = vmul.f32 %v5403, 1.0614054
    %v5515 = vmul.f32 %v5405, 1.0614054
    %v5516 = vmul.f32 %v5407, 1.0614054
    %v5517 = vmul.f32 %v5409, 1.0614054
    %v5518 = vmul.f32 %v5411, 1.0614054
    %v5519 = vmul.f32 %v5413, 1.0614054
    %v5520 = vmul.f32 %v5415, 1.0614054
    %v5521 = vmul.f32 %v5417, 1.0614054
    %v5522 = vmul.f32 %v5419, 1.0614054
    %v5523 = vmul.f32 %v5421, 1.0614054
    %v5524 = vmul.f32 %v5423, 1.0614054
    %v5525 = vmul.f32 %v5425, 1.0614054
    %v5526 = vmul.f32 %v5427, 1.0614054
    %v5527 = vmul.f32 %v5429, 1.0614054
    %v5528 = vmul.f32 %v5431, 1.0614054
    %v5529 = vmul.f32 %v5433, 1.0614054
    %v5530 = vmul.f32 %v5435, 1.0614054
    %v5531 = vmul.f32 %v5437, 1.0614054
    %v5532 = vmul.f32 %v5439, 1.0614054
    %v5533 = vmul.f32 %v5441, 1.0614054
    %v5534 = vmul.f32 %v5443, 1.0614054
    %v5535 = vmul.f32 %v5445, 1.0614054
    %v5536 = vmul.f32 %v5447, 1.0614054
    %v5537 = vmul.f32 %v5449, 1.0614054
    %v5538 = vmul.f32 %v5451, 1.0614054
    %v5539 = vmul.f32 %v5453, 1.0614054
    %v5540 = vmul.f32 %v5455, 1.0614054
    %v5541 = vmul.f32 %v5457, 1.0614054
    %v5542 = vmul.f32 %v5459, 1.0614054
    %v5543 = vmul.f32 %v5461, 1.0614054
    %v5544 = vmul.f32 %v5463, 1.0614054
    %v5545 = vmul.f32 %v5465, 1.0614054
    %v5546 = vadd.f32 %v5466, -1.4531521
    %v5547 = vadd.f32 %v5467, -1.4531521
    %v5548 = vadd.f32 %v5468, -1.4531521
    %v5549 = vadd.f32 %v5469, -1.4531521
    %v5550 = vadd.f32 %v5470, -1.4531521
    %v5551 = vadd.f32 %v5471, -1.4531521
    %v5552 = vadd.f32 %v5472, -1.4531521
    %v5553 = vadd.f32 %v5473, -1.4531521
    %v5554 = vadd.f32 %v5474, -1.4531521
    %v5555 = vadd.f32 %v5475, -1.4531521
    %v5556 = vadd.f32 %v5476, -1.4531521
    %v5557 = vadd.f32 %v5477, -1.4531521
    %v5558 = vadd.f32 %v5478, -1.4531521
    %v5559 = vadd.f32 %v5479, -1.4531521
    %v5560 = vadd.f32 %v5480, -1.4531521
    %v5561 = vadd.f32 %v5481, -1.4531521
    %v5562 = vadd.f32 %v5482, -1.4531521
    %v5563 = vadd.f32 %v5483, -1.4531521
    %v5564 = vadd.f32 %v5484, -1.4531521
    %v5565 = vadd.f32 %v5485, -1.4531521
    %v5566 = vadd.f32 %v5486, -1.4531521
    %v5567 = vadd.f32 %v5487, -1.4531521
    %v5568 = vadd.f32 %v5488, -1.4531521
    %v5569 = vadd.f32 %v5489, -1.4531521
    %v5570 = vadd.f32 %v5490, -1.4531521
    %v5571 = vadd.f32 %v5491, -1.4531521
    %v5572 = vadd.f32 %v5492, -1.4531521
    %v5573 = vadd.f32 %v5493, -1.4531521
    %v5574 = vadd.f32 %v5494, -1.4531521
    %v5575 = vadd.f32 %v5495, -1.4531521
    %v5576 = vadd.f32 %v5496, -1.4531521
    %v5577 = vadd.f32 %v5497, -1.4531521
    %v5578 = vadd.f32 %v5498, -1.4531521
    %v5579 = vadd.f32 %v5499, -1.4531521
    %v5580 = vadd.f32 %v5500, -1.4531521
    %v5581 = vadd.f32 %v5501, -1.4531521
    %v5582 = vadd.f32 %v5502, -1.4531521
    %v5583 = vadd.f32 %v5503, -1.4531521
    %v5584 = vadd.f32 %v5504, -1.4531521
    %v5585 = vadd.f32 %v5505, -1.4531521
    %v5586 = vadd.f32 %v5506, -1.4531521
    %v5587 = vadd.f32 %v5507, -1.4531521
    %v5588 = vadd.f32 %v5508, -1.4531521
    %v5589 = vadd.f32 %v5509, -1.4531521
    %v5590 = vadd.f32 %v5510, -1.4531521
    %v5591 = vadd.f32 %v5511, -1.4531521
    %v5592 = vadd.f32 %v5512, -1.4531521
    %v5593 = vadd.f32 %v5513, -1.4531521
    %v5594 = vadd.f32 %v5514, -1.4531521
    %v5595 = vadd.f32 %v5515, -1.4531521
    %v5596 = vadd.f32 %v5516, -1.4531521
    %v5597 = vadd.f32 %v5517, -1.4531521
    %v5598 = vadd.f32 %v5518, -1.4531521
    %v5599 = vadd.f32 %v5519, -1.4531521
    %v5600 = vadd.f32 %v5520, -1.4531521
    %v5601 = vadd.f32 %v5521, -1.4531521
    %v5602 = vadd.f32 %v5522, -1.4531521
    %v5603 = vadd.f32 %v5523, -1.4531521
    %v5604 = vadd.f32 %v5524, -1.4531521
    %v5605 = vadd.f32 %v5525, -1.4531521
    %v5606 = vadd.f32 %v5526, -1.4531521
    %v5607 = vadd.f32 %v5527, -1.4531521
    %v5608 = vadd.f32 %v5528, -1.4531521
    %v5609 = vadd.f32 %v5529, -1.4531521
    %v5610 = vadd.f32 %v5530, -1.4531521
    %v5611 = vadd.f32 %v5531, -1.4531521
    %v5612 = vadd.f32 %v5532, -1.4531521
    %v5613 = vadd.f32 %v5533, -1.4531521
    %v5614 = vadd.f32 %v5534, -1.4531521
    %v5615 = vadd.f32 %v5535, -1.4531521
    %v5616 = vadd.f32 %v5536, -1.4531521
    %v5617 = vadd.f32 %v5537, -1.4531521
    %v5618 = vadd.f32 %v5538, -1.4531521
    %v5619 = vadd.f32 %v5539, -1.4531521
    %v5620 = vadd.f32 %v5540, -1.4531521
    %v5621 = vadd.f32 %v5541, -1.4531521
    %v5622 = vadd.f32 %v5542, -1.4531521
    %v5623 = vadd.f32 %v5543, -1.4531521
    %v5624 = vadd.f32 %v5544, -1.4531521
    %v5625 = vadd.f32 %v5545, -1.4531521
    %v5626 = vmul.f32 %v5546, %v5307
    %v5627 = vmul.f32 %v5547, %v5309
    %v5628 = vmul.f32 %v5548, %v5311
    %v5629 = vmul.f32 %v5549, %v5313
    %v5630 = vmul.f32 %v5550, %v5315
    %v5631 = vmul.f32 %v5551, %v5317
    %v5632 = vmul.f32 %v5552, %v5319
    %v5633 = vmul.f32 %v5553, %v5321
    %v5634 = vmul.f32 %v5554, %v5323
    %v5635 = vmul.f32 %v5555, %v5325
    %v5636 = vmul.f32 %v5556, %v5327
    %v5637 = vmul.f32 %v5557, %v5329
    %v5638 = vmul.f32 %v5558, %v5331
    %v5639 = vmul.f32 %v5559, %v5333
    %v5640 = vmul.f32 %v5560, %v5335
    %v5641 = vmul.f32 %v5561, %v5337
    %v5642 = vmul.f32 %v5562, %v5339
    %v5643 = vmul.f32 %v5563, %v5341
    %v5644 = vmul.f32 %v5564, %v5343
    %v5645 = vmul.f32 %v5565, %v5345
    %v5646 = vmul.f32 %v5566, %v5347
    %v5647 = vmul.f32 %v5567, %v5349
    %v5648 = vmul.f32 %v5568, %v5351
    %v5649 = vmul.f32 %v5569, %v5353
    %v5650 = vmul.f32 %v5570, %v5355
    %v5651 = vmul.f32 %v5571, %v5357
    %v5652 = vmul.f32 %v5572, %v5359
    %v5653 = vmul.f32 %v5573, %v5361
    %v5654 = vmul.f32 %v5574, %v5363
    %v5655 = vmul.f32 %v5575, %v5365
    %v5656 = vmul.f32 %v5576, %v5367
    %v5657 = vmul.f32 %v5577, %v5369
    %v5658 = vmul.f32 %v5578, %v5371
    %v5659 = vmul.f32 %v5579, %v5373
    %v5660 = vmul.f32 %v5580, %v5375
    %v5661 = vmul.f32 %v5581, %v5377
    %v5662 = vmul.f32 %v5582, %v5379
    %v5663 = vmul.f32 %v5583, %v5381
    %v5664 = vmul.f32 %v5584, %v5383
    %v5665 = vmul.f32 %v5585, %v5385
    %v5666 = vmul.f32 %v5586, %v5387
    %v5667 = vmul.f32 %v5587, %v5389
    %v5668 = vmul.f32 %v5588, %v5391
    %v5669 = vmul.f32 %v5589, %v5393
    %v5670 = vmul.f32 %v5590, %v5395
    %v5671 = vmul.f32 %v5591, %v5397
    %v5672 = vmul.f32 %v5592, %v5399
    %v5673 = vmul.f32 %v5593, %v5401
    %v5674 = vmul.f32 %v5594, %v5403
    %v5675 = vmul.f32 %v5595, %v5405
    %v5676 = vmul.f32 %v5596, %v5407
    %v5677 = vmul.f32 %v5597, %v5409
    %v5678 = vmul.f32 %v5598, %v5411
    %v5679 = vmul.f32 %v5599, %v5413
    %v5680 = vmul.f32 %v5600, %v5415
    %v5681 = vmul.f32 %v5601, %v5417
    %v5682 = vmul.f32 %v5602, %v5419
    %v5683 = vmul.f32 %v5603, %v5421
    %v5684 = vmul.f32 %v5604, %v5423
    %v5685 = vmul.f32 %v5605, %v5425
    %v5686 = vmul.f32 %v5606, %v5427
    %v5687 = vmul.f32 %v5607, %v5429
    %v5688 = vmul.f32 %v5608, %v5431
    %v5689 = vmul.f32 %v5609, %v5433
    %v5690 = vmul.f32 %v5610, %v5435
    %v5691 = vmul.f32 %v5611, %v5437
    %v5692 = vmul.f32 %v5612, %v5439
    %v5693 = vmul.f32 %v5613, %v5441
    %v5694 = vmul.f32 %v5614, %v5443
    %v5695 = vmul.f32 %v5615, %v5445
    %v5696 = vmul.f32 %v5616, %v5447
    %v5697 = vmul.f32 %v5617, %v5449
    %v5698 = vmul.f32 %v5618, %v5451
    %v5699 = vmul.f32 %v5619, %v5453
    %v5700 = vmul.f32 %v5620, %v5455
    %v5701 = vmul.f32 %v5621, %v5457
    %v5702 = vmul.f32 %v5622, %v5459
    %v5703 = vmul.f32 %v5623, %v5461
    %v5704 = vmul.f32 %v5624, %v5463
    %v5705 = vmul.f32 %v5625, %v5465
    %v5706 = vadd.f32 %v5626, 1.4214138
    %v5707 = vadd.f32 %v5627, 1.4214138
    %v5708 = vadd.f32 %v5628, 1.4214138
    %v5709 = vadd.f32 %v5629, 1.4214138
    %v5710 = vadd.f32 %v5630, 1.4214138
    %v5711 = vadd.f32 %v5631, 1.4214138
    %v5712 = vadd.f32 %v5632, 1.4214138
    %v5713 = vadd.f32 %v5633, 1.4214138
    %v5714 = vadd.f32 %v5634, 1.4214138
    %v5715 = vadd.f32 %v5635, 1.4214138
    %v5716 = vadd.f32 %v5636, 1.4214138
    %v5717 = vadd.f32 %v5637, 1.4214138
    %v5718 = vadd.f32 %v5638, 1.4214138
    %v5719 = vadd.f32 %v5639, 1.4214138
    %v5720 = vadd.f32 %v5640, 1.4214138
    %v5721 = vadd.f32 %v5641, 1.4214138
    %v5722 = vadd.f32 %v5642, 1.4214138
    %v5723 = vadd.f32 %v5643, 1.4214138
    %v5724 = vadd.f32 %v5644, 1.4214138
    %v5725 = vadd.f32 %v5645, 1.4214138
    %v5726 = vadd.f32 %v5646, 1.4214138
    %v5727 = vadd.f32 %v5647, 1.4214138
    %v5728 = vadd.f32 %v5648, 1.4214138
    %v5729 = vadd.f32 %v5649, 1.4214138
    %v5730 = vadd.f32 %v5650, 1.4214138
    %v5731 = vadd.f32 %v5651, 1.4214138
    %v5732 = vadd.f32 %v5652, 1.4214138
    %v5733 = vadd.f32 %v5653, 1.4214138
    %v5734 = vadd.f32 %v5654, 1.4214138
    %v5735 = vadd.f32 %v5655, 1.4214138
    %v5736 = vadd.f32 %v5656, 1.4214138
    %v5737 = vadd.f32 %v5657, 1.4214138
    %v5738 = vadd.f32 %v5658, 1.4214138
    %v5739 = vadd.f32 %v5659, 1.4214138
    %v5740 = vadd.f32 %v5660, 1.4214138
    %v5741 = vadd.f32 %v5661, 1.4214138
    %v5742 = vadd.f32 %v5662, 1.4214138
    %v5743 = vadd.f32 %v5663, 1.4214138
    %v5744 = vadd.f32 %v5664, 1.4214138
    %v5745 = vadd.f32 %v5665, 1.4214138
    %v5746 = vadd.f32 %v5666, 1.4214138
    %v5747 = vadd.f32 %v5667, 1.4214138
    %v5748 = vadd.f32 %v5668, 1.4214138
    %v5749 = vadd.f32 %v5669, 1.4214138
    %v5750 = vadd.f32 %v5670, 1.4214138
    %v5751 = vadd.f32 %v5671, 1.4214138
    %v5752 = vadd.f32 %v5672, 1.4214138
    %v5753 = vadd.f32 %v5673, 1.4214138
    %v5754 = vadd.f32 %v5674, 1.4214138
    %v5755 = vadd.f32 %v5675, 1.4214138
    %v5756 = vadd.f32 %v5676, 1.4214138
    %v5757 = vadd.f32 %v5677, 1.4214138
    %v5758 = vadd.f32 %v5678, 1.4214138
    %v5759 = vadd.f32 %v5679, 1.4214138
    %v5760 = vadd.f32 %v5680, 1.4214138
    %v5761 = vadd.f32 %v5681, 1.4214138
    %v5762 = vadd.f32 %v5682, 1.4214138
    %v5763 = vadd.f32 %v5683, 1.4214138
    %v5764 = vadd.f32 %v5684, 1.4214138
    %v5765 = vadd.f32 %v5685, 1.4214138
    %v5766 = vadd.f32 %v5686, 1.4214138
    %v5767 = vadd.f32 %v5687, 1.4214138
    %v5768 = vadd.f32 %v5688, 1.4214138
    %v5769 = vadd.f32 %v5689, 1.4214138
    %v5770 = vadd.f32 %v5690, 1.4214138
    %v5771 = vadd.f32 %v5691, 1.4214138
    %v5772 = vadd.f32 %v5692, 1.4214138
    %v5773 = vadd.f32 %v5693, 1.4214138
    %v5774 = vadd.f32 %v5694, 1.4214138
    %v5775 = vadd.f32 %v5695, 1.4214138
    %v5776 = vadd.f32 %v5696, 1.4214138
    %v5777 = vadd.f32 %v5697, 1.4214138
    %v5778 = vadd.f32 %v5698, 1.4214138
    %v5779 = vadd.f32 %v5699, 1.4214138
    %v5780 = vadd.f32 %v5700, 1.4214138
    %v5781 = vadd.f32 %v5701, 1.4214138
    %v5782 = vadd.f32 %v5702, 1.4214138
    %v5783 = vadd.f32 %v5703, 1.4214138
    %v5784 = vadd.f32 %v5704, 1.4214138
    %v5785 = vadd.f32 %v5705, 1.4214138
    %v5786 = vmul.f32 %v5706, %v5307
    %v5787 = vmul.f32 %v5707, %v5309
    %v5788 = vmul.f32 %v5708, %v5311
    %v5789 = vmul.f32 %v5709, %v5313
    %v5790 = vmul.f32 %v5710, %v5315
    %v5791 = vmul.f32 %v5711, %v5317
    %v5792 = vmul.f32 %v5712, %v5319
    %v5793 = vmul.f32 %v5713, %v5321
    %v5794 = vmul.f32 %v5714, %v5323
    %v5795 = vmul.f32 %v5715, %v5325
    %v5796 = vmul.f32 %v5716, %v5327
    %v5797 = vmul.f32 %v5717, %v5329
    %v5798 = vmul.f32 %v5718, %v5331
    %v5799 = vmul.f32 %v5719, %v5333
    %v5800 = vmul.f32 %v5720, %v5335
    %v5801 = vmul.f32 %v5721, %v5337
    %v5802 = vmul.f32 %v5722, %v5339
    %v5803 = vmul.f32 %v5723, %v5341
    %v5804 = vmul.f32 %v5724, %v5343
    %v5805 = vmul.f32 %v5725, %v5345
    %v5806 = vmul.f32 %v5726, %v5347
    %v5807 = vmul.f32 %v5727, %v5349
    %v5808 = vmul.f32 %v5728, %v5351
    %v5809 = vmul.f32 %v5729, %v5353
    %v5810 = vmul.f32 %v5730, %v5355
    %v5811 = vmul.f32 %v5731, %v5357
    %v5812 = vmul.f32 %v5732, %v5359
    %v5813 = vmul.f32 %v5733, %v5361
    %v5814 = vmul.f32 %v5734, %v5363
    %v5815 = vmul.f32 %v5735, %v5365
    %v5816 = vmul.f32 %v5736, %v5367
    %v5817 = vmul.f32 %v5737, %v5369
    %v5818 = vmul.f32 %v5738, %v5371
    %v5819 = vmul.f32 %v5739, %v5373
    %v5820 = vmul.f32 %v5740, %v5375
    %v5821 = vmul.f32 %v5741, %v5377
    %v5822 = vmul.f32 %v5742, %v5379
    %v5823 = vmul.f32 %v5743, %v5381
    %v5824 = vmul.f32 %v5744, %v5383
    %v5825 = vmul.f32 %v5745, %v5385
    %v5826 = vmul.f32 %v5746, %v5387
    %v5827 = vmul.f32 %v5747, %v5389
    %v5828 = vmul.f32 %v5748, %v5391
    %v5829 = vmul.f32 %v5749, %v5393
    %v5830 = vmul.f32 %v5750, %v5395
    %v5831 = vmul.f32 %v5751, %v5397
    %v5832 = vmul.f32 %v5752, %v5399
    %v5833 = vmul.f32 %v5753, %v5401
    %v5834 = vmul.f32 %v5754, %v5403
    %v5835 = vmul.f32 %v5755, %v5405
    %v5836 = vmul.f32 %v5756, %v5407
    %v5837 = vmul.f32 %v5757, %v5409
    %v5838 = vmul.f32 %v5758, %v5411
    %v5839 = vmul.f32 %v5759, %v5413
    %v5840 = vmul.f32 %v5760, %v5415
    %v5841 = vmul.f32 %v5761, %v5417
    %v5842 = vmul.f32 %v5762, %v5419
    %v5843 = vmul.f32 %v5763, %v5421
    %v5844 = vmul.f32 %v5764, %v5423
    %v5845 = vmul.f32 %v5765, %v5425
    %v5846 = vmul.f32 %v5766, %v5427
    %v5847 = vmul.f32 %v5767, %v5429
    %v5848 = vmul.f32 %v5768, %v5431
    %v5849 = vmul.f32 %v5769, %v5433
    %v5850 = vmul.f32 %v5770, %v5435
    %v5851 = vmul.f32 %v5771, %v5437
    %v5852 = vmul.f32 %v5772, %v5439
    %v5853 = vmul.f32 %v5773, %v5441
    %v5854 = vmul.f32 %v5774, %v5443
    %v5855 = vmul.f32 %v5775, %v5445
    %v5856 = vmul.f32 %v5776, %v5447
    %v5857 = vmul.f32 %v5777, %v5449
    %v5858 = vmul.f32 %v5778, %v5451
    %v5859 = vmul.f32 %v5779, %v5453
    %v5860 = vmul.f32 %v5780, %v5455
    %v5861 = vmul.f32 %v5781, %v5457
    %v5862 = vmul.f32 %v5782, %v5459
    %v5863 = vmul.f32 %v5783, %v5461
    %v5864 = vmul.f32 %v5784, %v5463
    %v5865 = vmul.f32 %v5785, %v5465
    %v5866 = vadd.f32 %v5786, -0.28449672
    %v5867 = vadd.f32 %v5787, -0.28449672
    %v5868 = vadd.f32 %v5788, -0.28449672
    %v5869 = vadd.f32 %v5789, -0.28449672
    %v5870 = vadd.f32 %v5790, -0.28449672
    %v5871 = vadd.f32 %v5791, -0.28449672
    %v5872 = vadd.f32 %v5792, -0.28449672
    %v5873 = vadd.f32 %v5793, -0.28449672
    %v5874 = vadd.f32 %v5794, -0.28449672
    %v5875 = vadd.f32 %v5795, -0.28449672
    %v5876 = vadd.f32 %v5796, -0.28449672
    %v5877 = vadd.f32 %v5797, -0.28449672
    %v5878 = vadd.f32 %v5798, -0.28449672
    %v5879 = vadd.f32 %v5799, -0.28449672
    %v5880 = vadd.f32 %v5800, -0.28449672
    %v5881 = vadd.f32 %v5801, -0.28449672
    %v5882 = vadd.f32 %v5802, -0.28449672
    %v5883 = vadd.f32 %v5803, -0.28449672
    %v5884 = vadd.f32 %v5804, -0.28449672
    %v5885 = vadd.f32 %v5805, -0.28449672
    %v5886 = vadd.f32 %v5806, -0.28449672
    %v5887 = vadd.f32 %v5807, -0.28449672
    %v5888 = vadd.f32 %v5808, -0.28449672
    %v5889 = vadd.f32 %v5809, -0.28449672
    %v5890 = vadd.f32 %v5810, -0.28449672
    %v5891 = vadd.f32 %v5811, -0.28449672
    %v5892 = vadd.f32 %v5812, -0.28449672
    %v5893 = vadd.f32 %v5813, -0.28449672
    %v5894 = vadd.f32 %v5814, -0.28449672
    %v5895 = vadd.f32 %v5815, -0.28449672
    %v5896 = vadd.f32 %v5816, -0.28449672
    %v5897 = vadd.f32 %v5817, -0.28449672
    %v5898 = vadd.f32 %v5818, -0.28449672
    %v5899 = vadd.f32 %v5819, -0.28449672
    %v5900 = vadd.f32 %v5820, -0.28449672
    %v5901 = vadd.f32 %v5821, -0.28449672
    %v5902 = vadd.f32 %v5822, -0.28449672
    %v5903 = vadd.f32 %v5823, -0.28449672
    %v5904 = vadd.f32 %v5824, -0.28449672
    %v5905 = vadd.f32 %v5825, -0.28449672
    %v5906 = vadd.f32 %v5826, -0.28449672
    %v5907 = vadd.f32 %v5827, -0.28449672
    %v5908 = vadd.f32 %v5828, -0.28449672
    %v5909 = vadd.f32 %v5829, -0.28449672
    %v5910 = vadd.f32 %v5830, -0.28449672
    %v5911 = vadd.f32 %v5831, -0.28449672
    %v5912 = vadd.f32 %v5832, -0.28449672
    %v5913 = vadd.f32 %v5833, -0.28449672
    %v5914 = vadd.f32 %v5834, -0.28449672
    %v5915 = vadd.f32 %v5835, -0.28449672
    %v5916 = vadd.f32 %v5836, -0.28449672
    %v5917 = vadd.f32 %v5837, -0.28449672
    %v5918 = vadd.f32 %v5838, -0.28449672
    %v5919 = vadd.f32 %v5839, -0.28449672
    %v5920 = vadd.f32 %v5840, -0.28449672
    %v5921 = vadd.f32 %v5841, -0.28449672
    %v5922 = vadd.f32 %v5842, -0.28449672
    %v5923 = vadd.f32 %v5843, -0.28449672
    %v5924 = vadd.f32 %v5844, -0.28449672
    %v5925 = vadd.f32 %v5845, -0.28449672
    %v5926 = vadd.f32 %v5846, -0.28449672
    %v5927 = vadd.f32 %v5847, -0.28449672
    %v5928 = vadd.f32 %v5848, -0.28449672
    %v5929 = vadd.f32 %v5849, -0.28449672
    %v5930 = vadd.f32 %v5850, -0.28449672
    %v5931 = vadd.f32 %v5851, -0.28449672
    %v5932 = vadd.f32 %v5852, -0.28449672
    %v5933 = vadd.f32 %v5853, -0.28449672
    %v5934 = vadd.f32 %v5854, -0.28449672
    %v5935 = vadd.f32 %v5855, -0.28449672
    %v5936 = vadd.f32 %v5856, -0.28449672
    %v5937 = vadd.f32 %v5857, -0.28449672
    %v5938 = vadd.f32 %v5858, -0.28449672
    %v5939 = vadd.f32 %v5859, -0.28449672
    %v5940 = vadd.f32 %v5860, -0.28449672
    %v5941 = vadd.f32 %v5861, -0.28449672
    %v5942 = vadd.f32 %v5862, -0.28449672
    %v5943 = vadd.f32 %v5863, -0.28449672
    %v5944 = vadd.f32 %v5864, -0.28449672
    %v5945 = vadd.f32 %v5865, -0.28449672
    %v5946 = vmul.f32 %v5866, %v5307
    %v5947 = vmul.f32 %v5867, %v5309
    %v5948 = vmul.f32 %v5868, %v5311
    %v5949 = vmul.f32 %v5869, %v5313
    %v5950 = vmul.f32 %v5870, %v5315
    %v5951 = vmul.f32 %v5871, %v5317
    %v5952 = vmul.f32 %v5872, %v5319
    %v5953 = vmul.f32 %v5873, %v5321
    %v5954 = vmul.f32 %v5874, %v5323
    %v5955 = vmul.f32 %v5875, %v5325
    %v5956 = vmul.f32 %v5876, %v5327
    %v5957 = vmul.f32 %v5877, %v5329
    %v5958 = vmul.f32 %v5878, %v5331
    %v5959 = vmul.f32 %v5879, %v5333
    %v5960 = vmul.f32 %v5880, %v5335
    %v5961 = vmul.f32 %v5881, %v5337
    %v5962 = vmul.f32 %v5882, %v5339
    %v5963 = vmul.f32 %v5883, %v5341
    %v5964 = vmul.f32 %v5884, %v5343
    %v5965 = vmul.f32 %v5885, %v5345
    %v5966 = vmul.f32 %v5886, %v5347
    %v5967 = vmul.f32 %v5887, %v5349
    %v5968 = vmul.f32 %v5888, %v5351
    %v5969 = vmul.f32 %v5889, %v5353
    %v5970 = vmul.f32 %v5890, %v5355
    %v5971 = vmul.f32 %v5891, %v5357
    %v5972 = vmul.f32 %v5892, %v5359
    %v5973 = vmul.f32 %v5893, %v5361
    %v5974 = vmul.f32 %v5894, %v5363
    %v5975 = vmul.f32 %v5895, %v5365
    %v5976 = vmul.f32 %v5896, %v5367
    %v5977 = vmul.f32 %v5897, %v5369
    %v5978 = vmul.f32 %v5898, %v5371
    %v5979 = vmul.f32 %v5899, %v5373
    %v5980 = vmul.f32 %v5900, %v5375
    %v5981 = vmul.f32 %v5901, %v5377
    %v5982 = vmul.f32 %v5902, %v5379
    %v5983 = vmul.f32 %v5903, %v5381
    %v5984 = vmul.f32 %v5904, %v5383
    %v5985 = vmul.f32 %v5905, %v5385
    %v5986 = vmul.f32 %v5906, %v5387
    %v5987 = vmul.f32 %v5907, %v5389
    %v5988 = vmul.f32 %v5908, %v5391
    %v5989 = vmul.f32 %v5909, %v5393
    %v5990 = vmul.f32 %v5910, %v5395
    %v5991 = vmul.f32 %v5911, %v5397
    %v5992 = vmul.f32 %v5912, %v5399
    %v5993 = vmul.f32 %v5913, %v5401
    %v5994 = vmul.f32 %v5914, %v5403
    %v5995 = vmul.f32 %v5915, %v5405
    %v5996 = vmul.f32 %v5916, %v5407
    %v5997 = vmul.f32 %v5917, %v5409
    %v5998 = vmul.f32 %v5918, %v5411
    %v5999 = vmul.f32 %v5919, %v5413
    %v6000 = vmul.f32 %v5920, %v5415
    %v6001 = vmul.f32 %v5921, %v5417
    %v6002 = vmul.f32 %v5922, %v5419
    %v6003 = vmul.f32 %v5923, %v5421
    %v6004 = vmul.f32 %v5924, %v5423
    %v6005 = vmul.f32 %v5925, %v5425
    %v6006 = vmul.f32 %v5926, %v5427
    %v6007 = vmul.f32 %v5927, %v5429
    %v6008 = vmul.f32 %v5928, %v5431
    %v6009 = vmul.f32 %v5929, %v5433
    %v6010 = vmul.f32 %v5930, %v5435
    %v6011 = vmul.f32 %v5931, %v5437
    %v6012 = vmul.f32 %v5932, %v5439
    %v6013 = vmul.f32 %v5933, %v5441
    %v6014 = vmul.f32 %v5934, %v5443
    %v6015 = vmul.f32 %v5935, %v5445
    %v6016 = vmul.f32 %v5936, %v5447
    %v6017 = vmul.f32 %v5937, %v5449
    %v6018 = vmul.f32 %v5938, %v5451
    %v6019 = vmul.f32 %v5939, %v5453
    %v6020 = vmul.f32 %v5940, %v5455
    %v6021 = vmul.f32 %v5941, %v5457
    %v6022 = vmul.f32 %v5942, %v5459
    %v6023 = vmul.f32 %v5943, %v5461
    %v6024 = vmul.f32 %v5944, %v5463
    %v6025 = vmul.f32 %v5945, %v5465
    %v6026 = vadd.f32 %v5946, 0.2548296
    %v6027 = vadd.f32 %v5947, 0.2548296
    %v6028 = vadd.f32 %v5948, 0.2548296
    %v6029 = vadd.f32 %v5949, 0.2548296
    %v6030 = vadd.f32 %v5950, 0.2548296
    %v6031 = vadd.f32 %v5951, 0.2548296
    %v6032 = vadd.f32 %v5952, 0.2548296
    %v6033 = vadd.f32 %v5953, 0.2548296
    %v6034 = vadd.f32 %v5954, 0.2548296
    %v6035 = vadd.f32 %v5955, 0.2548296
    %v6036 = vadd.f32 %v5956, 0.2548296
    %v6037 = vadd.f32 %v5957, 0.2548296
    %v6038 = vadd.f32 %v5958, 0.2548296
    %v6039 = vadd.f32 %v5959, 0.2548296
    %v6040 = vadd.f32 %v5960, 0.2548296
    %v6041 = vadd.f32 %v5961, 0.2548296
    %v6042 = vadd.f32 %v5962, 0.2548296
    %v6043 = vadd.f32 %v5963, 0.2548296
    %v6044 = vadd.f32 %v5964, 0.2548296
    %v6045 = vadd.f32 %v5965, 0.2548296
    %v6046 = vadd.f32 %v5966, 0.2548296
    %v6047 = vadd.f32 %v5967, 0.2548296
    %v6048 = vadd.f32 %v5968, 0.2548296
    %v6049 = vadd.f32 %v5969, 0.2548296
    %v6050 = vadd.f32 %v5970, 0.2548296
    %v6051 = vadd.f32 %v5971, 0.2548296
    %v6052 = vadd.f32 %v5972, 0.2548296
    %v6053 = vadd.f32 %v5973, 0.2548296
    %v6054 = vadd.f32 %v5974, 0.2548296
    %v6055 = vadd.f32 %v5975, 0.2548296
    %v6056 = vadd.f32 %v5976, 0.2548296
    %v6057 = vadd.f32 %v5977, 0.2548296
    %v6058 = vadd.f32 %v5978, 0.2548296
    %v6059 = vadd.f32 %v5979, 0.2548296
    %v6060 = vadd.f32 %v5980, 0.2548296
    %v6061 = vadd.f32 %v5981, 0.2548296
    %v6062 = vadd.f32 %v5982, 0.2548296
    %v6063 = vadd.f32 %v5983, 0.2548296
    %v6064 = vadd.f32 %v5984, 0.2548296
    %v6065 = vadd.f32 %v5985, 0.2548296
    %v6066 = vadd.f32 %v5986, 0.2548296
    %v6067 = vadd.f32 %v5987, 0.2548296
    %v6068 = vadd.f32 %v5988, 0.2548296
    %v6069 = vadd.f32 %v5989, 0.2548296
    %v6070 = vadd.f32 %v5990, 0.2548296
    %v6071 = vadd.f32 %v5991, 0.2548296
    %v6072 = vadd.f32 %v5992, 0.2548296
    %v6073 = vadd.f32 %v5993, 0.2548296
    %v6074 = vadd.f32 %v5994, 0.2548296
    %v6075 = vadd.f32 %v5995, 0.2548296
    %v6076 = vadd.f32 %v5996, 0.2548296
    %v6077 = vadd.f32 %v5997, 0.2548296
    %v6078 = vadd.f32 %v5998, 0.2548296
    %v6079 = vadd.f32 %v5999, 0.2548296
    %v6080 = vadd.f32 %v6000, 0.2548296
    %v6081 = vadd.f32 %v6001, 0.2548296
    %v6082 = vadd.f32 %v6002, 0.2548296
    %v6083 = vadd.f32 %v6003, 0.2548296
    %v6084 = vadd.f32 %v6004, 0.2548296
    %v6085 = vadd.f32 %v6005, 0.2548296
    %v6086 = vadd.f32 %v6006, 0.2548296
    %v6087 = vadd.f32 %v6007, 0.2548296
    %v6088 = vadd.f32 %v6008, 0.2548296
    %v6089 = vadd.f32 %v6009, 0.2548296
    %v6090 = vadd.f32 %v6010, 0.2548296
    %v6091 = vadd.f32 %v6011, 0.2548296
    %v6092 = vadd.f32 %v6012, 0.2548296
    %v6093 = vadd.f32 %v6013, 0.2548296
    %v6094 = vadd.f32 %v6014, 0.2548296
    %v6095 = vadd.f32 %v6015, 0.2548296
    %v6096 = vadd.f32 %v6016, 0.2548296
    %v6097 = vadd.f32 %v6017, 0.2548296
    %v6098 = vadd.f32 %v6018, 0.2548296
    %v6099 = vadd.f32 %v6019, 0.2548296
    %v6100 = vadd.f32 %v6020, 0.2548296
    %v6101 = vadd.f32 %v6021, 0.2548296
    %v6102 = vadd.f32 %v6022, 0.2548296
    %v6103 = vadd.f32 %v6023, 0.2548296
    %v6104 = vadd.f32 %v6024, 0.2548296
    %v6105 = vadd.f32 %v6025, 0.2548296
    %v6106 = vmul.f32 %v6026, %v5307
    %v6107 = vmul.f32 %v6027, %v5309
    %v6108 = vmul.f32 %v6028, %v5311
    %v6109 = vmul.f32 %v6029, %v5313
    %v6110 = vmul.f32 %v6030, %v5315
    %v6111 = vmul.f32 %v6031, %v5317
    %v6112 = vmul.f32 %v6032, %v5319
    %v6113 = vmul.f32 %v6033, %v5321
    %v6114 = vmul.f32 %v6034, %v5323
    %v6115 = vmul.f32 %v6035, %v5325
    %v6116 = vmul.f32 %v6036, %v5327
    %v6117 = vmul.f32 %v6037, %v5329
    %v6118 = vmul.f32 %v6038, %v5331
    %v6119 = vmul.f32 %v6039, %v5333
    %v6120 = vmul.f32 %v6040, %v5335
    %v6121 = vmul.f32 %v6041, %v5337
    %v6122 = vmul.f32 %v6042, %v5339
    %v6123 = vmul.f32 %v6043, %v5341
    %v6124 = vmul.f32 %v6044, %v5343
    %v6125 = vmul.f32 %v6045, %v5345
    %v6126 = vmul.f32 %v6046, %v5347
    %v6127 = vmul.f32 %v6047, %v5349
    %v6128 = vmul.f32 %v6048, %v5351
    %v6129 = vmul.f32 %v6049, %v5353
    %v6130 = vmul.f32 %v6050, %v5355
    %v6131 = vmul.f32 %v6051, %v5357
    %v6132 = vmul.f32 %v6052, %v5359
    %v6133 = vmul.f32 %v6053, %v5361
    %v6134 = vmul.f32 %v6054, %v5363
    %v6135 = vmul.f32 %v6055, %v5365
    %v6136 = vmul.f32 %v6056, %v5367
    %v6137 = vmul.f32 %v6057, %v5369
    %v6138 = vmul.f32 %v6058, %v5371
    %v6139 = vmul.f32 %v6059, %v5373
    %v6140 = vmul.f32 %v6060, %v5375
    %v6141 = vmul.f32 %v6061, %v5377
    %v6142 = vmul.f32 %v6062, %v5379
    %v6143 = vmul.f32 %v6063, %v5381
    %v6144 = vmul.f32 %v6064, %v5383
    %v6145 = vmul.f32 %v6065, %v5385
    %v6146 = vmul.f32 %v6066, %v5387
    %v6147 = vmul.f32 %v6067, %v5389
    %v6148 = vmul.f32 %v6068, %v5391
    %v6149 = vmul.f32 %v6069, %v5393
    %v6150 = vmul.f32 %v6070, %v5395
    %v6151 = vmul.f32 %v6071, %v5397
    %v6152 = vmul.f32 %v6072, %v5399
    %v6153 = vmul.f32 %v6073, %v5401
    %v6154 = vmul.f32 %v6074, %v5403
    %v6155 = vmul.f32 %v6075, %v5405
    %v6156 = vmul.f32 %v6076, %v5407
    %v6157 = vmul.f32 %v6077, %v5409
    %v6158 = vmul.f32 %v6078, %v5411
    %v6159 = vmul.f32 %v6079, %v5413
    %v6160 = vmul.f32 %v6080, %v5415
    %v6161 = vmul.f32 %v6081, %v5417
    %v6162 = vmul.f32 %v6082, %v5419
    %v6163 = vmul.f32 %v6083, %v5421
    %v6164 = vmul.f32 %v6084, %v5423
    %v6165 = vmul.f32 %v6085, %v5425
    %v6166 = vmul.f32 %v6086, %v5427
    %v6167 = vmul.f32 %v6087, %v5429
    %v6168 = vmul.f32 %v6088, %v5431
    %v6169 = vmul.f32 %v6089, %v5433
    %v6170 = vmul.f32 %v6090, %v5435
    %v6171 = vmul.f32 %v6091, %v5437
    %v6172 = vmul.f32 %v6092, %v5439
    %v6173 = vmul.f32 %v6093, %v5441
    %v6174 = vmul.f32 %v6094, %v5443
    %v6175 = vmul.f32 %v6095, %v5445
    %v6176 = vmul.f32 %v6096, %v5447
    %v6177 = vmul.f32 %v6097, %v5449
    %v6178 = vmul.f32 %v6098, %v5451
    %v6179 = vmul.f32 %v6099, %v5453
    %v6180 = vmul.f32 %v6100, %v5455
    %v6181 = vmul.f32 %v6101, %v5457
    %v6182 = vmul.f32 %v6102, %v5459
    %v6183 = vmul.f32 %v6103, %v5461
    %v6184 = vmul.f32 %v6104, %v5463
    %v6185 = vmul.f32 %v6105, %v5465
    %v6186 = vsub.f32 0.0, %v5066
    %v6187 = vsub.f32 0.0, %v5067
    %v6188 = vsub.f32 0.0, %v5068
    %v6189 = vsub.f32 0.0, %v5069
    %v6190 = vsub.f32 0.0, %v5070
    %v6191 = vsub.f32 0.0, %v5071
    %v6192 = vsub.f32 0.0, %v5072
    %v6193 = vsub.f32 0.0, %v5073
    %v6194 = vsub.f32 0.0, %v5074
    %v6195 = vsub.f32 0.0, %v5075
    %v6196 = vsub.f32 0.0, %v5076
    %v6197 = vsub.f32 0.0, %v5077
    %v6198 = vsub.f32 0.0, %v5078
    %v6199 = vsub.f32 0.0, %v5079
    %v6200 = vsub.f32 0.0, %v5080
    %v6201 = vsub.f32 0.0, %v5081
    %v6202 = vsub.f32 0.0, %v5082
    %v6203 = vsub.f32 0.0, %v5083
    %v6204 = vsub.f32 0.0, %v5084
    %v6205 = vsub.f32 0.0, %v5085
    %v6206 = vsub.f32 0.0, %v5086
    %v6207 = vsub.f32 0.0, %v5087
    %v6208 = vsub.f32 0.0, %v5088
    %v6209 = vsub.f32 0.0, %v5089
    %v6210 = vsub.f32 0.0, %v5090
    %v6211 = vsub.f32 0.0, %v5091
    %v6212 = vsub.f32 0.0, %v5092
    %v6213 = vsub.f32 0.0, %v5093
    %v6214 = vsub.f32 0.0, %v5094
    %v6215 = vsub.f32 0.0, %v5095
    %v6216 = vsub.f32 0.0, %v5096
    %v6217 = vsub.f32 0.0, %v5097
    %v6218 = vsub.f32 0.0, %v5098
    %v6219 = vsub.f32 0.0, %v5099
    %v6220 = vsub.f32 0.0, %v5100
    %v6221 = vsub.f32 0.0, %v5101
    %v6222 = vsub.f32 0.0, %v5102
    %v6223 = vsub.f32 0.0, %v5103
    %v6224 = vsub.f32 0.0, %v5104
    %v6225 = vsub.f32 0.0, %v5105
    %v6226 = vsub.f32 0.0, %v5106
    %v6227 = vsub.f32 0.0, %v5107
    %v6228 = vsub.f32 0.0, %v5108
    %v6229 = vsub.f32 0.0, %v5109
    %v6230 = vsub.f32 0.0, %v5110
    %v6231 = vsub.f32 0.0, %v5111
    %v6232 = vsub.f32 0.0, %v5112
    %v6233 = vsub.f32 0.0, %v5113
    %v6234 = vsub.f32 0.0, %v5114
    %v6235 = vsub.f32 0.0, %v5115
    %v6236 = vsub.f32 0.0, %v5116
    %v6237 = vsub.f32 0.0, %v5117
    %v6238 = vsub.f32 0.0, %v5118
    %v6239 = vsub.f32 0.0, %v5119
    %v6240 = vsub.f32 0.0, %v5120
    %v6241 = vsub.f32 0.0, %v5121
    %v6242 = vsub.f32 0.0, %v5122
    %v6243 = vsub.f32 0.0, %v5123
    %v6244 = vsub.f32 0.0, %v5124
    %v6245 = vsub.f32 0.0, %v5125
    %v6246 = vsub.f32 0.0, %v5126
    %v6247 = vsub.f32 0.0, %v5127
    %v6248 = vsub.f32 0.0, %v5128
    %v6249 = vsub.f32 0.0, %v5129
    %v6250 = vsub.f32 0.0, %v5130
    %v6251 = vsub.f32 0.0, %v5131
    %v6252 = vsub.f32 0.0, %v5132
    %v6253 = vsub.f32 0.0, %v5133
    %v6254 = vsub.f32 0.0, %v5134
    %v6255 = vsub.f32 0.0, %v5135
    %v6256 = vsub.f32 0.0, %v5136
    %v6257 = vsub.f32 0.0, %v5137
    %v6258 = vsub.f32 0.0, %v5138
    %v6259 = vsub.f32 0.0, %v5139
    %v6260 = vsub.f32 0.0, %v5140
    %v6261 = vsub.f32 0.0, %v5141
    %v6262 = vsub.f32 0.0, %v5142
    %v6263 = vsub.f32 0.0, %v5143
    %v6264 = vsub.f32 0.0, %v5144
    %v6265 = vsub.f32 0.0, %v5145
    %v6266 = vmul.f32 %v6186, %v5066
    %v6267 = vmul.f32 %v6187, %v5067
    %v6268 = vmul.f32 %v6188, %v5068
    %v6269 = vmul.f32 %v6189, %v5069
    %v6270 = vmul.f32 %v6190, %v5070
    %v6271 = vmul.f32 %v6191, %v5071
    %v6272 = vmul.f32 %v6192, %v5072
    %v6273 = vmul.f32 %v6193, %v5073
    %v6274 = vmul.f32 %v6194, %v5074
    %v6275 = vmul.f32 %v6195, %v5075
    %v6276 = vmul.f32 %v6196, %v5076
    %v6277 = vmul.f32 %v6197, %v5077
    %v6278 = vmul.f32 %v6198, %v5078
    %v6279 = vmul.f32 %v6199, %v5079
    %v6280 = vmul.f32 %v6200, %v5080
    %v6281 = vmul.f32 %v6201, %v5081
    %v6282 = vmul.f32 %v6202, %v5082
    %v6283 = vmul.f32 %v6203, %v5083
    %v6284 = vmul.f32 %v6204, %v5084
    %v6285 = vmul.f32 %v6205, %v5085
    %v6286 = vmul.f32 %v6206, %v5086
    %v6287 = vmul.f32 %v6207, %v5087
    %v6288 = vmul.f32 %v6208, %v5088
    %v6289 = vmul.f32 %v6209, %v5089
    %v6290 = vmul.f32 %v6210, %v5090
    %v6291 = vmul.f32 %v6211, %v5091
    %v6292 = vmul.f32 %v6212, %v5092
    %v6293 = vmul.f32 %v6213, %v5093
    %v6294 = vmul.f32 %v6214, %v5094
    %v6295 = vmul.f32 %v6215, %v5095
    %v6296 = vmul.f32 %v6216, %v5096
    %v6297 = vmul.f32 %v6217, %v5097
    %v6298 = vmul.f32 %v6218, %v5098
    %v6299 = vmul.f32 %v6219, %v5099
    %v6300 = vmul.f32 %v6220, %v5100
    %v6301 = vmul.f32 %v6221, %v5101
    %v6302 = vmul.f32 %v6222, %v5102
    %v6303 = vmul.f32 %v6223, %v5103
    %v6304 = vmul.f32 %v6224, %v5104
    %v6305 = vmul.f32 %v6225, %v5105
    %v6306 = vmul.f32 %v6226, %v5106
    %v6307 = vmul.f32 %v6227, %v5107
    %v6308 = vmul.f32 %v6228, %v5108
    %v6309 = vmul.f32 %v6229, %v5109
    %v6310 = vmul.f32 %v6230, %v5110
    %v6311 = vmul.f32 %v6231, %v5111
    %v6312 = vmul.f32 %v6232, %v5112
    %v6313 = vmul.f32 %v6233, %v5113
    %v6314 = vmul.f32 %v6234, %v5114
    %v6315 = vmul.f32 %v6235, %v5115
    %v6316 = vmul.f32 %v6236, %v5116
    %v6317 = vmul.f32 %v6237, %v5117
    %v6318 = vmul.f32 %v6238, %v5118
    %v6319 = vmul.f32 %v6239, %v5119
    %v6320 = vmul.f32 %v6240, %v5120
    %v6321 = vmul.f32 %v6241, %v5121
    %v6322 = vmul.f32 %v6242, %v5122
    %v6323 = vmul.f32 %v6243, %v5123
    %v6324 = vmul.f32 %v6244, %v5124
    %v6325 = vmul.f32 %v6245, %v5125
    %v6326 = vmul.f32 %v6246, %v5126
    %v6327 = vmul.f32 %v6247, %v5127
    %v6328 = vmul.f32 %v6248, %v5128
    %v6329 = vmul.f32 %v6249, %v5129
    %v6330 = vmul.f32 %v6250, %v5130
    %v6331 = vmul.f32 %v6251, %v5131
    %v6332 = vmul.f32 %v6252, %v5132
    %v6333 = vmul.f32 %v6253, %v5133
    %v6334 = vmul.f32 %v6254, %v5134
    %v6335 = vmul.f32 %v6255, %v5135
    %v6336 = vmul.f32 %v6256, %v5136
    %v6337 = vmul.f32 %v6257, %v5137
    %v6338 = vmul.f32 %v6258, %v5138
    %v6339 = vmul.f32 %v6259, %v5139
    %v6340 = vmul.f32 %v6260, %v5140
    %v6341 = vmul.f32 %v6261, %v5141
    %v6342 = vmul.f32 %v6262, %v5142
    %v6343 = vmul.f32 %v6263, %v5143
    %v6344 = vmul.f32 %v6264, %v5144
    %v6345 = vmul.f32 %v6265, %v5145
    %v6346 = vmul.f32 %v6266, 1.442695
    %v6347 = vpow.pop %v6346
    %v6348 = vmul.f32 %v6267, 1.442695
    %v6349 = vpow.pop %v6348
    %v6350 = vmul.f32 %v6268, 1.442695
    %v6351 = vpow.pop %v6350
    %v6352 = vmul.f32 %v6269, 1.442695
    %v6353 = vpow.pop %v6352
    %v6354 = vmul.f32 %v6270, 1.442695
    %v6355 = vpow.pop %v6354
    %v6356 = vmul.f32 %v6271, 1.442695
    %v6357 = vpow.pop %v6356
    %v6358 = vmul.f32 %v6272, 1.442695
    %v6359 = vpow.pop %v6358
    %v6360 = vmul.f32 %v6273, 1.442695
    %v6361 = vpow.pop %v6360
    %v6362 = vmul.f32 %v6274, 1.442695
    %v6363 = vpow.pop %v6362
    %v6364 = vmul.f32 %v6275, 1.442695
    %v6365 = vpow.pop %v6364
    %v6366 = vmul.f32 %v6276, 1.442695
    %v6367 = vpow.pop %v6366
    %v6368 = vmul.f32 %v6277, 1.442695
    %v6369 = vpow.pop %v6368
    %v6370 = vmul.f32 %v6278, 1.442695
    %v6371 = vpow.pop %v6370
    %v6372 = vmul.f32 %v6279, 1.442695
    %v6373 = vpow.pop %v6372
    %v6374 = vmul.f32 %v6280, 1.442695
    %v6375 = vpow.pop %v6374
    %v6376 = vmul.f32 %v6281, 1.442695
    %v6377 = vpow.pop %v6376
    %v6378 = vmul.f32 %v6282, 1.442695
    %v6379 = vpow.pop %v6378
    %v6380 = vmul.f32 %v6283, 1.442695
    %v6381 = vpow.pop %v6380
    %v6382 = vmul.f32 %v6284, 1.442695
    %v6383 = vpow.pop %v6382
    %v6384 = vmul.f32 %v6285, 1.442695
    %v6385 = vpow.pop %v6384
    %v6386 = vmul.f32 %v6286, 1.442695
    %v6387 = vpow.pop %v6386
    %v6388 = vmul.f32 %v6287, 1.442695
    %v6389 = vpow.pop %v6388
    %v6390 = vmul.f32 %v6288, 1.442695
    %v6391 = vpow.pop %v6390
    %v6392 = vmul.f32 %v6289, 1.442695
    %v6393 = vpow.pop %v6392
    %v6394 = vmul.f32 %v6290, 1.442695
    %v6395 = vpow.pop %v6394
    %v6396 = vmul.f32 %v6291, 1.442695
    %v6397 = vpow.pop %v6396
    %v6398 = vmul.f32 %v6292, 1.442695
    %v6399 = vpow.pop %v6398
    %v6400 = vmul.f32 %v6293, 1.442695
    %v6401 = vpow.pop %v6400
    %v6402 = vmul.f32 %v6294, 1.442695
    %v6403 = vpow.pop %v6402
    %v6404 = vmul.f32 %v6295, 1.442695
    %v6405 = vpow.pop %v6404
    %v6406 = vmul.f32 %v6296, 1.442695
    %v6407 = vpow.pop %v6406
    %v6408 = vmul.f32 %v6297, 1.442695
    %v6409 = vpow.pop %v6408
    %v6410 = vmul.f32 %v6298, 1.442695
    %v6411 = vpow.pop %v6410
    %v6412 = vmul.f32 %v6299, 1.442695
    %v6413 = vpow.pop %v6412
    %v6414 = vmul.f32 %v6300, 1.442695
    %v6415 = vpow.pop %v6414
    %v6416 = vmul.f32 %v6301, 1.442695
    %v6417 = vpow.pop %v6416
    %v6418 = vmul.f32 %v6302, 1.442695
    %v6419 = vpow.pop %v6418
    %v6420 = vmul.f32 %v6303, 1.442695
    %v6421 = vpow.pop %v6420
    %v6422 = vmul.f32 %v6304, 1.442695
    %v6423 = vpow.pop %v6422
    %v6424 = vmul.f32 %v6305, 1.442695
    %v6425 = vpow.pop %v6424
    %v6426 = vmul.f32 %v6306, 1.442695
    %v6427 = vpow.pop %v6426
    %v6428 = vmul.f32 %v6307, 1.442695
    %v6429 = vpow.pop %v6428
    %v6430 = vmul.f32 %v6308, 1.442695
    %v6431 = vpow.pop %v6430
    %v6432 = vmul.f32 %v6309, 1.442695
    %v6433 = vpow.pop %v6432
    %v6434 = vmul.f32 %v6310, 1.442695
    %v6435 = vpow.pop %v6434
    %v6436 = vmul.f32 %v6311, 1.442695
    %v6437 = vpow.pop %v6436
    %v6438 = vmul.f32 %v6312, 1.442695
    %v6439 = vpow.pop %v6438
    %v6440 = vmul.f32 %v6313, 1.442695
    %v6441 = vpow.pop %v6440
    %v6442 = vmul.f32 %v6314, 1.442695
    %v6443 = vpow.pop %v6442
    %v6444 = vmul.f32 %v6315, 1.442695
    %v6445 = vpow.pop %v6444
    %v6446 = vmul.f32 %v6316, 1.442695
    %v6447 = vpow.pop %v6446
    %v6448 = vmul.f32 %v6317, 1.442695
    %v6449 = vpow.pop %v6448
    %v6450 = vmul.f32 %v6318, 1.442695
    %v6451 = vpow.pop %v6450
    %v6452 = vmul.f32 %v6319, 1.442695
    %v6453 = vpow.pop %v6452
    %v6454 = vmul.f32 %v6320, 1.442695
    %v6455 = vpow.pop %v6454
    %v6456 = vmul.f32 %v6321, 1.442695
    %v6457 = vpow.pop %v6456
    %v6458 = vmul.f32 %v6322, 1.442695
    %v6459 = vpow.pop %v6458
    %v6460 = vmul.f32 %v6323, 1.442695
    %v6461 = vpow.pop %v6460
    %v6462 = vmul.f32 %v6324, 1.442695
    %v6463 = vpow.pop %v6462
    %v6464 = vmul.f32 %v6325, 1.442695
    %v6465 = vpow.pop %v6464
    %v6466 = vmul.f32 %v6326, 1.442695
    %v6467 = vpow.pop %v6466
    %v6468 = vmul.f32 %v6327, 1.442695
    %v6469 = vpow.pop %v6468
    %v6470 = vmul.f32 %v6328, 1.442695
    %v6471 = vpow.pop %v6470
    %v6472 = vmul.f32 %v6329, 1.442695
    %v6473 = vpow.pop %v6472
    %v6474 = vmul.f32 %v6330, 1.442695
    %v6475 = vpow.pop %v6474
    %v6476 = vmul.f32 %v6331, 1.442695
    %v6477 = vpow.pop %v6476
    %v6478 = vmul.f32 %v6332, 1.442695
    %v6479 = vpow.pop %v6478
    %v6480 = vmul.f32 %v6333, 1.442695
    %v6481 = vpow.pop %v6480
    %v6482 = vmul.f32 %v6334, 1.442695
    %v6483 = vpow.pop %v6482
    %v6484 = vmul.f32 %v6335, 1.442695
    %v6485 = vpow.pop %v6484
    %v6486 = vmul.f32 %v6336, 1.442695
    %v6487 = vpow.pop %v6486
    %v6488 = vmul.f32 %v6337, 1.442695
    %v6489 = vpow.pop %v6488
    %v6490 = vmul.f32 %v6338, 1.442695
    %v6491 = vpow.pop %v6490
    %v6492 = vmul.f32 %v6339, 1.442695
    %v6493 = vpow.pop %v6492
    %v6494 = vmul.f32 %v6340, 1.442695
    %v6495 = vpow.pop %v6494
    %v6496 = vmul.f32 %v6341, 1.442695
    %v6497 = vpow.pop %v6496
    %v6498 = vmul.f32 %v6342, 1.442695
    %v6499 = vpow.pop %v6498
    %v6500 = vmul.f32 %v6343, 1.442695
    %v6501 = vpow.pop %v6500
    %v6502 = vmul.f32 %v6344, 1.442695
    %v6503 = vpow.pop %v6502
    %v6504 = vmul.f32 %v6345, 1.442695
    %v6505 = vpow.pop %v6504
    %v6506 = vmul.f32 %v6106, %v6347
    %v6507 = vmul.f32 %v6107, %v6349
    %v6508 = vmul.f32 %v6108, %v6351
    %v6509 = vmul.f32 %v6109, %v6353
    %v6510 = vmul.f32 %v6110, %v6355
    %v6511 = vmul.f32 %v6111, %v6357
    %v6512 = vmul.f32 %v6112, %v6359
    %v6513 = vmul.f32 %v6113, %v6361
    %v6514 = vmul.f32 %v6114, %v6363
    %v6515 = vmul.f32 %v6115, %v6365
    %v6516 = vmul.f32 %v6116, %v6367
    %v6517 = vmul.f32 %v6117, %v6369
    %v6518 = vmul.f32 %v6118, %v6371
    %v6519 = vmul.f32 %v6119, %v6373
    %v6520 = vmul.f32 %v6120, %v6375
    %v6521 = vmul.f32 %v6121, %v6377
    %v6522 = vmul.f32 %v6122, %v6379
    %v6523 = vmul.f32 %v6123, %v6381
    %v6524 = vmul.f32 %v6124, %v6383
    %v6525 = vmul.f32 %v6125, %v6385
    %v6526 = vmul.f32 %v6126, %v6387
    %v6527 = vmul.f32 %v6127, %v6389
    %v6528 = vmul.f32 %v6128, %v6391
    %v6529 = vmul.f32 %v6129, %v6393
    %v6530 = vmul.f32 %v6130, %v6395
    %v6531 = vmul.f32 %v6131, %v6397
    %v6532 = vmul.f32 %v6132, %v6399
    %v6533 = vmul.f32 %v6133, %v6401
    %v6534 = vmul.f32 %v6134, %v6403
    %v6535 = vmul.f32 %v6135, %v6405
    %v6536 = vmul.f32 %v6136, %v6407
    %v6537 = vmul.f32 %v6137, %v6409
    %v6538 = vmul.f32 %v6138, %v6411
    %v6539 = vmul.f32 %v6139, %v6413
    %v6540 = vmul.f32 %v6140, %v6415
    %v6541 = vmul.f32 %v6141, %v6417
    %v6542 = vmul.f32 %v6142, %v6419
    %v6543 = vmul.f32 %v6143, %v6421
    %v6544 = vmul.f32 %v6144, %v6423
    %v6545 = vmul.f32 %v6145, %v6425
    %v6546 = vmul.f32 %v6146, %v6427
    %v6547 = vmul.f32 %v6147, %v6429
    %v6548 = vmul.f32 %v6148, %v6431
    %v6549 = vmul.f32 %v6149, %v6433
    %v6550 = vmul.f32 %v6150, %v6435
    %v6551 = vmul.f32 %v6151, %v6437
    %v6552 = vmul.f32 %v6152, %v6439
    %v6553 = vmul.f32 %v6153, %v6441
    %v6554 = vmul.f32 %v6154, %v6443
    %v6555 = vmul.f32 %v6155, %v6445
    %v6556 = vmul.f32 %v6156, %v6447
    %v6557 = vmul.f32 %v6157, %v6449
    %v6558 = vmul.f32 %v6158, %v6451
    %v6559 = vmul.f32 %v6159, %v6453
    %v6560 = vmul.f32 %v6160, %v6455
    %v6561 = vmul.f32 %v6161, %v6457
    %v6562 = vmul.f32 %v6162, %v6459
    %v6563 = vmul.f32 %v6163, %v6461
    %v6564 = vmul.f32 %v6164, %v6463
    %v6565 = vmul.f32 %v6165, %v6465
    %v6566 = vmul.f32 %v6166, %v6467
    %v6567 = vmul.f32 %v6167, %v6469
    %v6568 = vmul.f32 %v6168, %v6471
    %v6569 = vmul.f32 %v6169, %v6473
    %v6570 = vmul.f32 %v6170, %v6475
    %v6571 = vmul.f32 %v6171, %v6477
    %v6572 = vmul.f32 %v6172, %v6479
    %v6573 = vmul.f32 %v6173, %v6481
    %v6574 = vmul.f32 %v6174, %v6483
    %v6575 = vmul.f32 %v6175, %v6485
    %v6576 = vmul.f32 %v6176, %v6487
    %v6577 = vmul.f32 %v6177, %v6489
    %v6578 = vmul.f32 %v6178, %v6491
    %v6579 = vmul.f32 %v6179, %v6493
    %v6580 = vmul.f32 %v6180, %v6495
    %v6581 = vmul.f32 %v6181, %v6497
    %v6582 = vmul.f32 %v6182, %v6499
    %v6583 = vmul.f32 %v6183, %v6501
    %v6584 = vmul.f32 %v6184, %v6503
    %v6585 = vmul.f32 %v6185, %v6505
    %v6586 = vsub.f32 1.0, %v6506
    %v6587 = vsub.f32 1.0, %v6507
    %v6588 = vsub.f32 1.0, %v6508
    %v6589 = vsub.f32 1.0, %v6509
    %v6590 = vsub.f32 1.0, %v6510
    %v6591 = vsub.f32 1.0, %v6511
    %v6592 = vsub.f32 1.0, %v6512
    %v6593 = vsub.f32 1.0, %v6513
    %v6594 = vsub.f32 1.0, %v6514
    %v6595 = vsub.f32 1.0, %v6515
    %v6596 = vsub.f32 1.0, %v6516
    %v6597 = vsub.f32 1.0, %v6517
    %v6598 = vsub.f32 1.0, %v6518
    %v6599 = vsub.f32 1.0, %v6519
    %v6600 = vsub.f32 1.0, %v6520
    %v6601 = vsub.f32 1.0, %v6521
    %v6602 = vsub.f32 1.0, %v6522
    %v6603 = vsub.f32 1.0, %v6523
    %v6604 = vsub.f32 1.0, %v6524
    %v6605 = vsub.f32 1.0, %v6525
    %v6606 = vsub.f32 1.0, %v6526
    %v6607 = vsub.f32 1.0, %v6527
    %v6608 = vsub.f32 1.0, %v6528
    %v6609 = vsub.f32 1.0, %v6529
    %v6610 = vsub.f32 1.0, %v6530
    %v6611 = vsub.f32 1.0, %v6531
    %v6612 = vsub.f32 1.0, %v6532
    %v6613 = vsub.f32 1.0, %v6533
    %v6614 = vsub.f32 1.0, %v6534
    %v6615 = vsub.f32 1.0, %v6535
    %v6616 = vsub.f32 1.0, %v6536
    %v6617 = vsub.f32 1.0, %v6537
    %v6618 = vsub.f32 1.0, %v6538
    %v6619 = vsub.f32 1.0, %v6539
    %v6620 = vsub.f32 1.0, %v6540
    %v6621 = vsub.f32 1.0, %v6541
    %v6622 = vsub.f32 1.0, %v6542
    %v6623 = vsub.f32 1.0, %v6543
    %v6624 = vsub.f32 1.0, %v6544
    %v6625 = vsub.f32 1.0, %v6545
    %v6626 = vsub.f32 1.0, %v6546
    %v6627 = vsub.f32 1.0, %v6547
    %v6628 = vsub.f32 1.0, %v6548
    %v6629 = vsub.f32 1.0, %v6549
    %v6630 = vsub.f32 1.0, %v6550
    %v6631 = vsub.f32 1.0, %v6551
    %v6632 = vsub.f32 1.0, %v6552
    %v6633 = vsub.f32 1.0, %v6553
    %v6634 = vsub.f32 1.0, %v6554
    %v6635 = vsub.f32 1.0, %v6555
    %v6636 = vsub.f32 1.0, %v6556
    %v6637 = vsub.f32 1.0, %v6557
    %v6638 = vsub.f32 1.0, %v6558
    %v6639 = vsub.f32 1.0, %v6559
    %v6640 = vsub.f32 1.0, %v6560
    %v6641 = vsub.f32 1.0, %v6561
    %v6642 = vsub.f32 1.0, %v6562
    %v6643 = vsub.f32 1.0, %v6563
    %v6644 = vsub.f32 1.0, %v6564
    %v6645 = vsub.f32 1.0, %v6565
    %v6646 = vsub.f32 1.0, %v6566
    %v6647 = vsub.f32 1.0, %v6567
    %v6648 = vsub.f32 1.0, %v6568
    %v6649 = vsub.f32 1.0, %v6569
    %v6650 = vsub.f32 1.0, %v6570
    %v6651 = vsub.f32 1.0, %v6571
    %v6652 = vsub.f32 1.0, %v6572
    %v6653 = vsub.f32 1.0, %v6573
    %v6654 = vsub.f32 1.0, %v6574
    %v6655 = vsub.f32 1.0, %v6575
    %v6656 = vsub.f32 1.0, %v6576
    %v6657 = vsub.f32 1.0, %v6577
    %v6658 = vsub.f32 1.0, %v6578
    %v6659 = vsub.f32 1.0, %v6579
    %v6660 = vsub.f32 1.0, %v6580
    %v6661 = vsub.f32 1.0, %v6581
    %v6662 = vsub.f32 1.0, %v6582
    %v6663 = vsub.f32 1.0, %v6583
    %v6664 = vsub.f32 1.0, %v6584
    %v6665 = vsub.f32 1.0, %v6585
    %v6666 = vmul.f32 %v4986, %v6586
    %v6667 = vmul.f32 %v4987, %v6587
    %v6668 = vmul.f32 %v4988, %v6588
    %v6669 = vmul.f32 %v4989, %v6589
    %v6670 = vmul.f32 %v4990, %v6590
    %v6671 = vmul.f32 %v4991, %v6591
    %v6672 = vmul.f32 %v4992, %v6592
    %v6673 = vmul.f32 %v4993, %v6593
    %v6674 = vmul.f32 %v4994, %v6594
    %v6675 = vmul.f32 %v4995, %v6595
    %v6676 = vmul.f32 %v4996, %v6596
    %v6677 = vmul.f32 %v4997, %v6597
    %v6678 = vmul.f32 %v4998, %v6598
    %v6679 = vmul.f32 %v4999, %v6599
    %v6680 = vmul.f32 %v5000, %v6600
    %v6681 = vmul.f32 %v5001, %v6601
    %v6682 = vmul.f32 %v5002, %v6602
    %v6683 = vmul.f32 %v5003, %v6603
    %v6684 = vmul.f32 %v5004, %v6604
    %v6685 = vmul.f32 %v5005, %v6605
    %v6686 = vmul.f32 %v5006, %v6606
    %v6687 = vmul.f32 %v5007, %v6607
    %v6688 = vmul.f32 %v5008, %v6608
    %v6689 = vmul.f32 %v5009, %v6609
    %v6690 = vmul.f32 %v5010, %v6610
    %v6691 = vmul.f32 %v5011, %v6611
    %v6692 = vmul.f32 %v5012, %v6612
    %v6693 = vmul.f32 %v5013, %v6613
    %v6694 = vmul.f32 %v5014, %v6614
    %v6695 = vmul.f32 %v5015, %v6615
    %v6696 = vmul.f32 %v5016, %v6616
    %v6697 = vmul.f32 %v5017, %v6617
    %v6698 = vmul.f32 %v5018, %v6618
    %v6699 = vmul.f32 %v5019, %v6619
    %v6700 = vmul.f32 %v5020, %v6620
    %v6701 = vmul.f32 %v5021, %v6621
    %v6702 = vmul.f32 %v5022, %v6622
    %v6703 = vmul.f32 %v5023, %v6623
    %v6704 = vmul.f32 %v5024, %v6624
    %v6705 = vmul.f32 %v5025, %v6625
    %v6706 = vmul.f32 %v5026, %v6626
    %v6707 = vmul.f32 %v5027, %v6627
    %v6708 = vmul.f32 %v5028, %v6628
    %v6709 = vmul.f32 %v5029, %v6629
    %v6710 = vmul.f32 %v5030, %v6630
    %v6711 = vmul.f32 %v5031, %v6631
    %v6712 = vmul.f32 %v5032, %v6632
    %v6713 = vmul.f32 %v5033, %v6633
    %v6714 = vmul.f32 %v5034, %v6634
    %v6715 = vmul.f32 %v5035, %v6635
    %v6716 = vmul.f32 %v5036, %v6636
    %v6717 = vmul.f32 %v5037, %v6637
    %v6718 = vmul.f32 %v5038, %v6638
    %v6719 = vmul.f32 %v5039, %v6639
    %v6720 = vmul.f32 %v5040, %v6640
    %v6721 = vmul.f32 %v5041, %v6641
    %v6722 = vmul.f32 %v5042, %v6642
    %v6723 = vmul.f32 %v5043, %v6643
    %v6724 = vmul.f32 %v5044, %v6644
    %v6725 = vmul.f32 %v5045, %v6645
    %v6726 = vmul.f32 %v5046, %v6646
    %v6727 = vmul.f32 %v5047, %v6647
    %v6728 = vmul.f32 %v5048, %v6648
    %v6729 = vmul.f32 %v5049, %v6649
    %v6730 = vmul.f32 %v5050, %v6650
    %v6731 = vmul.f32 %v5051, %v6651
    %v6732 = vmul.f32 %v5052, %v6652
    %v6733 = vmul.f32 %v5053, %v6653
    %v6734 = vmul.f32 %v5054, %v6654
    %v6735 = vmul.f32 %v5055, %v6655
    %v6736 = vmul.f32 %v5056, %v6656
    %v6737 = vmul.f32 %v5057, %v6657
    %v6738 = vmul.f32 %v5058, %v6658
    %v6739 = vmul.f32 %v5059, %v6659
    %v6740 = vmul.f32 %v5060, %v6660
    %v6741 = vmul.f32 %v5061, %v6661
    %v6742 = vmul.f32 %v5062, %v6662
    %v6743 = vmul.f32 %v5063, %v6663
    %v6744 = vmul.f32 %v5064, %v6664
    %v6745 = vmul.f32 %v5065, %v6665
    %v6746 = vmul.f32 %v4003, 0.5
    %v6747 = vmul.f32 %v4005, 0.5
    %v6748 = vmul.f32 %v4092, 0.5
    %v6749 = vmul.f32 %v4094, 0.5
    %v6750 = vmul.f32 %v4181, 0.5
    %v6751 = vmul.f32 %v4183, 0.5
    %v6752 = vmul.f32 %v4270, 0.5
    %v6753 = vmul.f32 %v4272, 0.5
    %v6754 = vmul.f32 %v4359, 0.5
    %v6755 = vmul.f32 %v4361, 0.5
    %v6756 = vmul.f32 %v4448, 0.5
    %v6757 = vmul.f32 %v4450, 0.5
    %v6758 = vmul.f32 %v4537, 0.5
    %v6759 = vmul.f32 %v4539, 0.5
    %v6760 = vmul.f32 %v4626, 0.5
    %v6761 = vmul.f32 %v4628, 0.5
    %v6762 = vmul.f32 %v4715, 0.5
    %v6763 = vmul.f32 %v4717, 0.5
    %v6764 = vmul.f32 %v4804, 0.5
    %v6765 = vmul.f32 %v4806, 0.5
    %v6766 = vmul.f32 %v4009, 0.5
    %v6767 = vmul.f32 %v4011, 0.5
    %v6768 = vmul.f32 %v4098, 0.5
    %v6769 = vmul.f32 %v4100, 0.5
    %v6770 = vmul.f32 %v4187, 0.5
    %v6771 = vmul.f32 %v4189, 0.5
    %v6772 = vmul.f32 %v4276, 0.5
    %v6773 = vmul.f32 %v4278, 0.5
    %v6774 = vmul.f32 %v4365, 0.5
    %v6775 = vmul.f32 %v4367, 0.5
    %v6776 = vmul.f32 %v4454, 0.5
    %v6777 = vmul.f32 %v4456, 0.5
    %v6778 = vmul.f32 %v4543, 0.5
    %v6779 = vmul.f32 %v4545, 0.5
    %v6780 = vmul.f32 %v4632, 0.5
    %v6781 = vmul.f32 %v4634, 0.5
    %v6782 = vmul.f32 %v4721, 0.5
    %v6783 = vmul.f32 %v4723, 0.5
    %v6784 = vmul.f32 %v4810, 0.5
    %v6785 = vmul.f32 %v4812, 0.5
    %v6786 = vmul.f32 %v4015, 0.5
    %v6787 = vmul.f32 %v4017, 0.5
    %v6788 = vmul.f32 %v4104, 0.5
    %v6789 = vmul.f32 %v4106, 0.5
    %v6790 = vmul.f32 %v4193, 0.5
    %v6791 = vmul.f32 %v4195, 0.5
    %v6792 = vmul.f32 %v4282, 0.5
    %v6793 = vmul.f32 %v4284, 0.5
    %v6794 = vmul.f32 %v4371, 0.5
    %v6795 = vmul.f32 %v4373, 0.5
    %v6796 = vmul.f32 %v4460, 0.5
    %v6797 = vmul.f32 %v4462, 0.5
    %v6798 = vmul.f32 %v4549, 0.5
    %v6799 = vmul.f32 %v4551, 0.5
    %v6800 = vmul.f32 %v4638, 0.5
    %v6801 = vmul.f32 %v4640, 0.5
    %v6802 = vmul.f32 %v4727, 0.5
    %v6803 = vmul.f32 %v4729, 0.5
    %v6804 = vmul.f32 %v4816, 0.5
    %v6805 = vmul.f32 %v4818, 0.5
    %v6806 = vmul.f32 %v4021, 0.5
    %v6807 = vmul.f32 %v4023, 0.5
    %v6808 = vmul.f32 %v4110, 0.5
    %v6809 = vmul.f32 %v4112, 0.5
    %v6810 = vmul.f32 %v4199, 0.5
    %v6811 = vmul.f32 %v4201, 0.5
    %v6812 = vmul.f32 %v4288, 0.5
    %v6813 = vmul.f32 %v4290, 0.5
    %v6814 = vmul.f32 %v4377, 0.5
    %v6815 = vmul.f32 %v4379, 0.5
    %v6816 = vmul.f32 %v4466, 0.5
    %v6817 = vmul.f32 %v4468, 0.5
    %v6818 = vmul.f32 %v4555, 0.5
    %v6819 = vmul.f32 %v4557, 0.5
    %v6820 = vmul.f32 %v4644, 0.5
    %v6821 = vmul.f32 %v4646, 0.5
    %v6822 = vmul.f32 %v4733, 0.5
    %v6823 = vmul.f32 %v4735, 0.5
    %v6824 = vmul.f32 %v4822, 0.5
    %v6825 = vmul.f32 %v4824, 0.5
    %v6826 = vadd.f32 %v6666, 1.0
    %v6827 = vadd.f32 %v6667, 1.0
    %v6828 = vadd.f32 %v6668, 1.0
    %v6829 = vadd.f32 %v6669, 1.0
    %v6830 = vadd.f32 %v6670, 1.0
    %v6831 = vadd.f32 %v6671, 1.0
    %v6832 = vadd.f32 %v6672, 1.0
    %v6833 = vadd.f32 %v6673, 1.0
    %v6834 = vadd.f32 %v6674, 1.0
    %v6835 = vadd.f32 %v6675, 1.0
    %v6836 = vadd.f32 %v6676, 1.0
    %v6837 = vadd.f32 %v6677, 1.0
    %v6838 = vadd.f32 %v6678, 1.0
    %v6839 = vadd.f32 %v6679, 1.0
    %v6840 = vadd.f32 %v6680, 1.0
    %v6841 = vadd.f32 %v6681, 1.0
    %v6842 = vadd.f32 %v6682, 1.0
    %v6843 = vadd.f32 %v6683, 1.0
    %v6844 = vadd.f32 %v6684, 1.0
    %v6845 = vadd.f32 %v6685, 1.0
    %v6846 = vadd.f32 %v6686, 1.0
    %v6847 = vadd.f32 %v6687, 1.0
    %v6848 = vadd.f32 %v6688, 1.0
    %v6849 = vadd.f32 %v6689, 1.0
    %v6850 = vadd.f32 %v6690, 1.0
    %v6851 = vadd.f32 %v6691, 1.0
    %v6852 = vadd.f32 %v6692, 1.0
    %v6853 = vadd.f32 %v6693, 1.0
    %v6854 = vadd.f32 %v6694, 1.0
    %v6855 = vadd.f32 %v6695, 1.0
    %v6856 = vadd.f32 %v6696, 1.0
    %v6857 = vadd.f32 %v6697, 1.0
    %v6858 = vadd.f32 %v6698, 1.0
    %v6859 = vadd.f32 %v6699, 1.0
    %v6860 = vadd.f32 %v6700, 1.0
    %v6861 = vadd.f32 %v6701, 1.0
    %v6862 = vadd.f32 %v6702, 1.0
    %v6863 = vadd.f32 %v6703, 1.0
    %v6864 = vadd.f32 %v6704, 1.0
    %v6865 = vadd.f32 %v6705, 1.0
    %v6866 = vadd.f32 %v6706, 1.0
    %v6867 = vadd.f32 %v6707, 1.0
    %v6868 = vadd.f32 %v6708, 1.0
    %v6869 = vadd.f32 %v6709, 1.0
    %v6870 = vadd.f32 %v6710, 1.0
    %v6871 = vadd.f32 %v6711, 1.0
    %v6872 = vadd.f32 %v6712, 1.0
    %v6873 = vadd.f32 %v6713, 1.0
    %v6874 = vadd.f32 %v6714, 1.0
    %v6875 = vadd.f32 %v6715, 1.0
    %v6876 = vadd.f32 %v6716, 1.0
    %v6877 = vadd.f32 %v6717, 1.0
    %v6878 = vadd.f32 %v6718, 1.0
    %v6879 = vadd.f32 %v6719, 1.0
    %v6880 = vadd.f32 %v6720, 1.0
    %v6881 = vadd.f32 %v6721, 1.0
    %v6882 = vadd.f32 %v6722, 1.0
    %v6883 = vadd.f32 %v6723, 1.0
    %v6884 = vadd.f32 %v6724, 1.0
    %v6885 = vadd.f32 %v6725, 1.0
    %v6886 = vadd.f32 %v6726, 1.0
    %v6887 = vadd.f32 %v6727, 1.0
    %v6888 = vadd.f32 %v6728, 1.0
    %v6889 = vadd.f32 %v6729, 1.0
    %v6890 = vadd.f32 %v6730, 1.0
    %v6891 = vadd.f32 %v6731, 1.0
    %v6892 = vadd.f32 %v6732, 1.0
    %v6893 = vadd.f32 %v6733, 1.0
    %v6894 = vadd.f32 %v6734, 1.0
    %v6895 = vadd.f32 %v6735, 1.0
    %v6896 = vadd.f32 %v6736, 1.0
    %v6897 = vadd.f32 %v6737, 1.0
    %v6898 = vadd.f32 %v6738, 1.0
    %v6899 = vadd.f32 %v6739, 1.0
    %v6900 = vadd.f32 %v6740, 1.0
    %v6901 = vadd.f32 %v6741, 1.0
    %v6902 = vadd.f32 %v6742, 1.0
    %v6903 = vadd.f32 %v6743, 1.0
    %v6904 = vadd.f32 %v6744, 1.0
    %v6905 = vadd.f32 %v6745, 1.0
    %v6906 = vmul.f32 %v6746, %v6826
    %v6907 = vmul.f32 %v6747, %v6827
    %v6908 = vmul.f32 %v6748, %v6828
    %v6909 = vmul.f32 %v6749, %v6829
    %v6910 = vmul.f32 %v6750, %v6830
    %v6911 = vmul.f32 %v6751, %v6831
    %v6912 = vmul.f32 %v6752, %v6832
    %v6913 = vmul.f32 %v6753, %v6833
    %v6914 = vmul.f32 %v6754, %v6834
    %v6915 = vmul.f32 %v6755, %v6835
    %v6916 = vmul.f32 %v6756, %v6836
    %v6917 = vmul.f32 %v6757, %v6837
    %v6918 = vmul.f32 %v6758, %v6838
    %v6919 = vmul.f32 %v6759, %v6839
    %v6920 = vmul.f32 %v6760, %v6840
    %v6921 = vmul.f32 %v6761, %v6841
    %v6922 = vmul.f32 %v6762, %v6842
    %v6923 = vmul.f32 %v6763, %v6843
    %v6924 = vmul.f32 %v6764, %v6844
    %v6925 = vmul.f32 %v6765, %v6845
    %v6926 = vmul.f32 %v6766, %v6846
    %v6927 = vmul.f32 %v6767, %v6847
    %v6928 = vmul.f32 %v6768, %v6848
    %v6929 = vmul.f32 %v6769, %v6849
    %v6930 = vmul.f32 %v6770, %v6850
    %v6931 = vmul.f32 %v6771, %v6851
    %v6932 = vmul.f32 %v6772, %v6852
    %v6933 = vmul.f32 %v6773, %v6853
    %v6934 = vmul.f32 %v6774, %v6854
    %v6935 = vmul.f32 %v6775, %v6855
    %v6936 = vmul.f32 %v6776, %v6856
    %v6937 = vmul.f32 %v6777, %v6857
    %v6938 = vmul.f32 %v6778, %v6858
    %v6939 = vmul.f32 %v6779, %v6859
    %v6940 = vmul.f32 %v6780, %v6860
    %v6941 = vmul.f32 %v6781, %v6861
    %v6942 = vmul.f32 %v6782, %v6862
    %v6943 = vmul.f32 %v6783, %v6863
    %v6944 = vmul.f32 %v6784, %v6864
    %v6945 = vmul.f32 %v6785, %v6865
    %v6946 = vmul.f32 %v6786, %v6866
    %v6947 = vmul.f32 %v6787, %v6867
    %v6948 = vmul.f32 %v6788, %v6868
    %v6949 = vmul.f32 %v6789, %v6869
    %v6950 = vmul.f32 %v6790, %v6870
    %v6951 = vmul.f32 %v6791, %v6871
    %v6952 = vmul.f32 %v6792, %v6872
    %v6953 = vmul.f32 %v6793, %v6873
    %v6954 = vmul.f32 %v6794, %v6874
    %v6955 = vmul.f32 %v6795, %v6875
    %v6956 = vmul.f32 %v6796, %v6876
    %v6957 = vmul.f32 %v6797, %v6877
    %v6958 = vmul.f32 %v6798, %v6878
    %v6959 = vmul.f32 %v6799, %v6879
    %v6960 = vmul.f32 %v6800, %v6880
    %v6961 = vmul.f32 %v6801, %v6881
    %v6962 = vmul.f32 %v6802, %v6882
    %v6963 = vmul.f32 %v6803, %v6883
    %v6964 = vmul.f32 %v6804, %v6884
    %v6965 = vmul.f32 %v6805, %v6885
    %v6966 = vmul.f32 %v6806, %v6886
    %v6967 = vmul.f32 %v6807, %v6887
    %v6968 = vmul.f32 %v6808, %v6888
    %v6969 = vmul.f32 %v6809, %v6889
    %v6970 = vmul.f32 %v6810, %v6890
    %v6971 = vmul.f32 %v6811, %v6891
    %v6972 = vmul.f32 %v6812, %v6892
    %v6973 = vmul.f32 %v6813, %v6893
    %v6974 = vmul.f32 %v6814, %v6894
    %v6975 = vmul.f32 %v6815, %v6895
    %v6976 = vmul.f32 %v6816, %v6896
    %v6977 = vmul.f32 %v6817, %v6897
    %v6978 = vmul.f32 %v6818, %v6898
    %v6979 = vmul.f32 %v6819, %v6899
    %v6980 = vmul.f32 %v6820, %v6900
    %v6981 = vmul.f32 %v6821, %v6901
    %v6982 = vmul.f32 %v6822, %v6902
    %v6983 = vmul.f32 %v6823, %v6903
    %v6984 = vmul.f32 %v6824, %v6904
    %v6985 = vmul.f32 %v6825, %v6905
    %v6986 = vmul.f32 %v6906, %v2687
    %v6987 = vmul.f32 %v6907, %v2689
    %v6988 = vmul.f32 %v6908, %v2776
    %v6989 = vmul.f32 %v6909, %v2778
    %v6990 = vmul.f32 %v6910, %v2865
    %v6991 = vmul.f32 %v6911, %v2867
    %v6992 = vmul.f32 %v6912, %v2954
    %v6993 = vmul.f32 %v6913, %v2956
    %v6994 = vmul.f32 %v6914, %v3043
    %v6995 = vmul.f32 %v6915, %v3045
    %v6996 = vmul.f32 %v6916, %v3132
    %v6997 = vmul.f32 %v6917, %v3134
    %v6998 = vmul.f32 %v6918, %v3221
    %v6999 = vmul.f32 %v6919, %v3223
    %v7000 = vmul.f32 %v6920, %v3310
    %v7001 = vmul.f32 %v6921, %v3312
    %v7002 = vmul.f32 %v6922, %v3399
    %v7003 = vmul.f32 %v6923, %v3401
    %v7004 = vmul.f32 %v6924, %v3488
    %v7005 = vmul.f32 %v6925, %v3490
    %v7006 = vmul.f32 %v6926, %v2693
    %v7007 = vmul.f32 %v6927, %v2695
    %v7008 = vmul.f32 %v6928, %v2782
    %v7009 = vmul.f32 %v6929, %v2784
    %v7010 = vmul.f32 %v6930, %v2871
    %v7011 = vmul.f32 %v6931, %v2873
    %v7012 = vmul.f32 %v6932, %v2960
    %v7013 = vmul.f32 %v6933, %v2962
    %v7014 = vmul.f32 %v6934, %v3049
    %v7015 = vmul.f32 %v6935, %v3051
    %v7016 = vmul.f32 %v6936, %v3138
    %v7017 = vmul.f32 %v6937, %v3140
    %v7018 = vmul.f32 %v6938, %v3227
    %v7019 = vmul.f32 %v6939, %v3229
    %v7020 = vmul.f32 %v6940, %v3316
    %v7021 = vmul.f32 %v6941, %v3318
    %v7022 = vmul.f32 %v6942, %v3405
    %v7023 = vmul.f32 %v6943, %v3407
    %v7024 = vmul.f32 %v6944, %v3494
    %v7025 = vmul.f32 %v6945, %v3496
    %v7026 = vmul.f32 %v6946, %v2699
    %v7027 = vmul.f32 %v6947, %v2701
    %v7028 = vmul.f32 %v6948, %v2788
    %v7029 = vmul.f32 %v6949, %v2790
    %v7030 = vmul.f32 %v6950, %v2877
    %v7031 = vmul.f32 %v6951, %v2879
    %v7032 = vmul.f32 %v6952, %v2966
    %v7033 = vmul.f32 %v6953, %v2968
    %v7034 = vmul.f32 %v6954, %v3055
    %v7035 = vmul.f32 %v6955, %v3057
    %v7036 = vmul.f32 %v6956, %v3144
    %v7037 = vmul.f32 %v6957, %v3146
    %v7038 = vmul.f32 %v6958, %v3233
    %v7039 = vmul.f32 %v6959, %v3235
    %v7040 = vmul.f32 %v6960, %v3322
    %v7041 = vmul.f32 %v6961, %v3324
    %v7042 = vmul.f32 %v6962, %v3411
    %v7043 = vmul.f32 %v6963, %v3413
    %v7044 = vmul.f32 %v6964, %v3500
    %v7045 = vmul.f32 %v6965, %v3502
    %v7046 = vmul.f32 %v6966, %v2705
    %v7047 = vmul.f32 %v6967, %v2707
    %v7048 = vmul.f32 %v6968, %v2794
    %v7049 = vmul.f32 %v6969, %v2796
    %v7050 = vmul.f32 %v6970, %v2883
    %v7051 = vmul.f32 %v6971, %v2885
    %v7052 = vmul.f32 %v6972, %v2972
    %v7053 = vmul.f32 %v6973, %v2974
    %v7054 = vmul.f32 %v6974, %v3061
    %v7055 = vmul.f32 %v6975, %v3063
    %v7056 = vmul.f32 %v6976, %v3150
    %v7057 = vmul.f32 %v6977, %v3152
    %v7058 = vmul.f32 %v6978, %v3239
    %v7059 = vmul.f32 %v6979, %v3241
    %v7060 = vmul.f32 %v6980, %v3328
    %v7061 = vmul.f32 %v6981, %v3330
    %v7062 = vmul.f32 %v6982, %v3417
    %v7063 = vmul.f32 %v6983, %v3419
    %v7064 = vmul.f32 %v6984, %v3506
    %v7065 = vmul.f32 %v6985, %v3508
    %v7066 = vld [vmem:[#allocation28] sm:$0xff]
    %v7067 = vld [vmem:[#allocation28 + $0x8] sm:$0xff]
    %v7068 = vld [vmem:[#allocation28 + $0x10] sm:$0xff]
    %v7069 = vld [vmem:[#allocation28 + $0x18] sm:$0xff]
    %v7070 = vld [vmem:[#allocation28 + $0x20] sm:$0xff]
    %v7071 = vld [vmem:[#allocation28 + $0x28] sm:$0xff]
    %v7072 = vld [vmem:[#allocation28 + $0x30] sm:$0xff]
    %v7073 = vld [vmem:[#allocation28 + $0x38] sm:$0xff]
    %v7074 = vld [vmem:[#allocation28 + $0x40] sm:$0xff]
    %v7075 = vld [vmem:[#allocation28 + $0x48] sm:$0xff]
    %v7076 = vld [vmem:[#allocation28 + $0x50] sm:$0xff]
    %v7077 = vld [vmem:[#allocation28 + $0x58] sm:$0xff]
    %v7078 = vld [vmem:[#allocation28 + $0x60] sm:$0xff]
    %v7079 = vld [vmem:[#allocation28 + $0x68] sm:$0xff]
    %v7080 = vld [vmem:[#allocation28 + $0x70] sm:$0xff]
    %v7081 = vld [vmem:[#allocation28 + $0x78] sm:$0xff]
    %v7082 = vld [vmem:[#allocation28 + $0x80] sm:$0xff]
    %v7083 = vld [vmem:[#allocation28 + $0x88] sm:$0xff]
    %v7084 = vld [vmem:[#allocation28 + $0x90] sm:$0xff]
    %v7085 = vld [vmem:[#allocation28 + $0x98] sm:$0xff]
    %v7086 = vld [vmem:[#allocation28 + $0xa0] sm:$0xff]
    %v7087 = vld [vmem:[#allocation28 + $0xa8] sm:$0xff]
    %v7088 = vld [vmem:[#allocation28 + $0xb0] sm:$0xff]
    %v7089 = vld [vmem:[#allocation28 + $0xb8] sm:$0xff]
    %v7090 = vld [vmem:[#allocation28 + $0xc0] sm:$0xff]
    %v7091 = vld [vmem:[#allocation28 + $0xc8] sm:$0xff]
    %v7092 = vld [vmem:[#allocation28 + $0xd0] sm:$0xff]
    %v7093 = vld [vmem:[#allocation28 + $0xd8] sm:$0xff]
    %v7094 = vld [vmem:[#allocation28 + $0xe0] sm:$0xff]
    %v7095 = vld [vmem:[#allocation28 + $0xe8] sm:$0xff]
    %v7096 = vld [vmem:[#allocation28 + $0xf0] sm:$0xff]
    %v7097 = vld [vmem:[#allocation28 + $0xf8] sm:$0xff]
    %v7098 = vld [vmem:[#allocation28 + $0x100] sm:$0xff]
    %v7099 = vld [vmem:[#allocation28 + $0x108] sm:$0xff]
    %v7100 = vld [vmem:[#allocation28 + $0x110] sm:$0xff]
    %v7101 = vld [vmem:[#allocation28 + $0x118] sm:$0xff]
    %v7102 = vld [vmem:[#allocation28 + $0x120] sm:$0xff]
    %v7103 = vld [vmem:[#allocation28 + $0x128] sm:$0xff]
    %v7104 = vld [vmem:[#allocation28 + $0x130] sm:$0xff]
    %v7105 = vld [vmem:[#allocation28 + $0x138] sm:$0xff]
    %v7106 = vld [vmem:[#allocation28 + $0x140] sm:$0xff]
    %v7107 = vld [vmem:[#allocation28 + $0x148] sm:$0xff]
    %v7108 = vld [vmem:[#allocation28 + $0x150] sm:$0xff]
    %v7109 = vld [vmem:[#allocation28 + $0x158] sm:$0xff]
    %v7110 = vld [vmem:[#allocation28 + $0x160] sm:$0xff]
    %v7111 = vld [vmem:[#allocation28 + $0x168] sm:$0xff]
    %v7112 = vld [vmem:[#allocation28 + $0x170] sm:$0xff]
    %v7113 = vld [vmem:[#allocation28 + $0x178] sm:$0xff]
    %v7114 = vld [vmem:[#allocation28 + $0x180] sm:$0xff]
    %v7115 = vld [vmem:[#allocation28 + $0x188] sm:$0xff]
    %v7116 = vld [vmem:[#allocation28 + $0x190] sm:$0xff]
    %v7117 = vld [vmem:[#allocation28 + $0x198] sm:$0xff]
    %v7118 = vld [vmem:[#allocation28 + $0x1a0] sm:$0xff]
    %v7119 = vld [vmem:[#allocation28 + $0x1a8] sm:$0xff]
    %v7120 = vld [vmem:[#allocation28 + $0x1b0] sm:$0xff]
    %v7121 = vld [vmem:[#allocation28 + $0x1b8] sm:$0xff]
    %v7122 = vld [vmem:[#allocation28 + $0x1c0] sm:$0xff]
    %v7123 = vld [vmem:[#allocation28 + $0x1c8] sm:$0xff]
    %v7124 = vld [vmem:[#allocation28 + $0x1d0] sm:$0xff]
    %v7125 = vld [vmem:[#allocation28 + $0x1d8] sm:$0xff]
    %v7126 = vld [vmem:[#allocation28 + $0x1e0] sm:$0xff]
    %v7127 = vld [vmem:[#allocation28 + $0x1e8] sm:$0xff]
    %v7128 = vld [vmem:[#allocation28 + $0x1f0] sm:$0xff]
    %v7129 = vld [vmem:[#allocation28 + $0x1f8] sm:$0xff]
    %v7130 = vld [vmem:[#allocation28 + $0x200] sm:$0xff]
    %v7131 = vld [vmem:[#allocation28 + $0x208] sm:$0xff]
    %v7132 = vld [vmem:[#allocation28 + $0x210] sm:$0xff]
    %v7133 = vld [vmem:[#allocation28 + $0x218] sm:$0xff]
    %v7134 = vld [vmem:[#allocation28 + $0x220] sm:$0xff]
    %v7135 = vld [vmem:[#allocation28 + $0x228] sm:$0xff]
    %v7136 = vld [vmem:[#allocation28 + $0x230] sm:$0xff]
    %v7137 = vld [vmem:[#allocation28 + $0x238] sm:$0xff]
    %v7138 = vld [vmem:[#allocation28 + $0x240] sm:$0xff]
    %v7139 = vld [vmem:[#allocation28 + $0x248] sm:$0xff]
    %v7140 = vld [vmem:[#allocation28 + $0x250] sm:$0xff]
    %v7141 = vld [vmem:[#allocation28 + $0x258] sm:$0xff]
    %v7142 = vld [vmem:[#allocation28 + $0x260] sm:$0xff]
    %v7143 = vld [vmem:[#allocation28 + $0x268] sm:$0xff]
    %v7144 = vld [vmem:[#allocation28 + $0x270] sm:$0xff]
    %v7145 = vld [vmem:[#allocation28 + $0x278] sm:$0xff]
    %v7146 = vld [vmem:[#allocation28 + $0x280] sm:$0xff]
    %v7147 = vld [vmem:[#allocation28 + $0x288] sm:$0xff]
    %v7148 = vld [vmem:[#allocation28 + $0x290] sm:$0xff]
    %v7149 = vld [vmem:[#allocation28 + $0x298] sm:$0xff]
    %v7150 = vld [vmem:[#allocation28 + $0x2a0] sm:$0xff]
    %v7151 = vld [vmem:[#allocation28 + $0x2a8] sm:$0xff]
    %v7152 = vld [vmem:[#allocation28 + $0x2b0] sm:$0xff]
    %v7153 = vld [vmem:[#allocation28 + $0x2b8] sm:$0xff]
    %v7154 = vld [vmem:[#allocation28 + $0x2c0] sm:$0xff]
    %v7155 = vld [vmem:[#allocation28 + $0x2c8] sm:$0xff]
    %v7156 = vld [vmem:[#allocation28 + $0x2d0] sm:$0xff]
    %v7157 = vld [vmem:[#allocation28 + $0x2d8] sm:$0xff]
    %v7158 = vld [vmem:[#allocation28 + $0x2e0] sm:$0xff]
    %v7159 = vld [vmem:[#allocation28 + $0x2e8] sm:$0xff]
    %v7160 = vld [vmem:[#allocation28 + $0x2f0] sm:$0xff]
    %v7161 = vld [vmem:[#allocation28 + $0x2f8] sm:$0xff]
    %v7162 = vld [vmem:[#allocation28 + $0x300] sm:$0xff]
    %v7163 = vld [vmem:[#allocation28 + $0x308] sm:$0xff]
    %v7164 = vld [vmem:[#allocation28 + $0x310] sm:$0xff]
    %v7165 = vld [vmem:[#allocation28 + $0x318] sm:$0xff]
    %v7166 = vld [vmem:[#allocation28 + $0x320] sm:$0xff]
    %v7167 = vld [vmem:[#allocation28 + $0x328] sm:$0xff]
    %v7168 = vld [vmem:[#allocation28 + $0x330] sm:$0xff]
    %v7169 = vld [vmem:[#allocation28 + $0x338] sm:$0xff]
    %v7170 = vld [vmem:[#allocation28 + $0x340] sm:$0xff]
    %v7171 = vld [vmem:[#allocation28 + $0x348] sm:$0xff]
    %v7172 = vld [vmem:[#allocation28 + $0x350] sm:$0xff]
    %v7173 = vld [vmem:[#allocation28 + $0x358] sm:$0xff]
    %v7174 = vld [vmem:[#allocation28 + $0x360] sm:$0xff]
    %v7175 = vld [vmem:[#allocation28 + $0x368] sm:$0xff]
    %v7176 = vld [vmem:[#allocation28 + $0x370] sm:$0xff]
    %v7177 = vld [vmem:[#allocation28 + $0x378] sm:$0xff]
    %v7178 = vld [vmem:[#allocation28 + $0x380] sm:$0xff]
    %v7179 = vld [vmem:[#allocation28 + $0x388] sm:$0xff]
    %v7180 = vld [vmem:[#allocation28 + $0x390] sm:$0xff]
    %v7181 = vld [vmem:[#allocation28 + $0x398] sm:$0xff]
    %v7182 = vld [vmem:[#allocation28 + $0x3a0] sm:$0xff]
    %v7183 = vld [vmem:[#allocation28 + $0x3a8] sm:$0xff]
    %v7184 = vld [vmem:[#allocation28 + $0x3b0] sm:$0xff]
    %v7185 = vld [vmem:[#allocation28 + $0x3b8] sm:$0xff]
    %v7186 = vld [vmem:[#allocation28 + $0x3c0] sm:$0xff]
    %v7187 = vld [vmem:[#allocation28 + $0x3c8] sm:$0xff]
    %v7188 = vld [vmem:[#allocation28 + $0x3d0] sm:$0xff]
    %v7189 = vld [vmem:[#allocation28 + $0x3d8] sm:$0xff]
    %v7190 = vld [vmem:[#allocation28 + $0x3e0] sm:$0xff]
    %v7191 = vld [vmem:[#allocation28 + $0x3e8] sm:$0xff]
    %v7192 = vld [vmem:[#allocation28 + $0x3f0] sm:$0xff]
    %v7193 = vld [vmem:[#allocation28 + $0x3f8] sm:$0xff]
    %v7194 = vld [vmem:[#allocation28 + $0x400] sm:$0xff]
    %v7195 = vld [vmem:[#allocation28 + $0x408] sm:$0xff]
    %v7196 = vld [vmem:[#allocation28 + $0x410] sm:$0xff]
    %v7197 = vld [vmem:[#allocation28 + $0x418] sm:$0xff]
    %v7198 = vld [vmem:[#allocation28 + $0x420] sm:$0xff]
    %v7199 = vld [vmem:[#allocation28 + $0x428] sm:$0xff]
    %v7200 = vld [vmem:[#allocation28 + $0x430] sm:$0xff]
    %v7201 = vld [vmem:[#allocation28 + $0x438] sm:$0xff]
    %v7202 = vld [vmem:[#allocation28 + $0x440] sm:$0xff]
    %v7203 = vld [vmem:[#allocation28 + $0x448] sm:$0xff]
    %v7204 = vld [vmem:[#allocation28 + $0x450] sm:$0xff]
    %v7205 = vld [vmem:[#allocation28 + $0x458] sm:$0xff]
    %v7206 = vld [vmem:[#allocation28 + $0x460] sm:$0xff]
    %v7207 = vld [vmem:[#allocation28 + $0x468] sm:$0xff]
    %v7208 = vld [vmem:[#allocation28 + $0x470] sm:$0xff]
    %v7209 = vld [vmem:[#allocation28 + $0x478] sm:$0xff]
    %v7210 = vld [vmem:[#allocation28 + $0x480] sm:$0xff]
    %v7211 = vld [vmem:[#allocation28 + $0x488] sm:$0xff]
    %v7212 = vld [vmem:[#allocation28 + $0x490] sm:$0xff]
    %v7213 = vld [vmem:[#allocation28 + $0x498] sm:$0xff]
    %v7214 = vld [vmem:[#allocation28 + $0x4a0] sm:$0xff]
    %v7215 = vld [vmem:[#allocation28 + $0x4a8] sm:$0xff]
    %v7216 = vld [vmem:[#allocation28 + $0x4b0] sm:$0xff]
    %v7217 = vld [vmem:[#allocation28 + $0x4b8] sm:$0xff]
    %v7218 = vld [vmem:[#allocation28 + $0x4c0] sm:$0xff]
    %v7219 = vld [vmem:[#allocation28 + $0x4c8] sm:$0xff]
    %v7220 = vld [vmem:[#allocation28 + $0x4d0] sm:$0xff]
    %v7221 = vld [vmem:[#allocation28 + $0x4d8] sm:$0xff]
    %v7222 = vld [vmem:[#allocation28 + $0x4e0] sm:$0xff]
    %v7223 = vld [vmem:[#allocation28 + $0x4e8] sm:$0xff]
    %v7224 = vld [vmem:[#allocation28 + $0x4f0] sm:$0xff]
    %v7225 = vld [vmem:[#allocation28 + $0x4f8] sm:$0xff]
    %v7226 = vld [vmem:[#allocation28 + $0x500] sm:$0xff]
    %v7227 = vld [vmem:[#allocation28 + $0x508] sm:$0xff]
    %v7228 = vld [vmem:[#allocation28 + $0x510] sm:$0xff]
    %v7229 = vld [vmem:[#allocation28 + $0x518] sm:$0xff]
    %v7230 = vld [vmem:[#allocation28 + $0x520] sm:$0xff]
    %v7231 = vld [vmem:[#allocation28 + $0x528] sm:$0xff]
    %v7232 = vld [vmem:[#allocation28 + $0x530] sm:$0xff]
    %v7233 = vld [vmem:[#allocation28 + $0x538] sm:$0xff]
    %v7234 = vld [vmem:[#allocation28 + $0x540] sm:$0xff]
    %v7235 = vld [vmem:[#allocation28 + $0x548] sm:$0xff]
    %v7236 = vld [vmem:[#allocation28 + $0x550] sm:$0xff]
    %v7237 = vld [vmem:[#allocation28 + $0x558] sm:$0xff]
    %v7238 = vld [vmem:[#allocation28 + $0x560] sm:$0xff]
    %v7239 = vld [vmem:[#allocation28 + $0x568] sm:$0xff]
    %v7240 = vld [vmem:[#allocation28 + $0x570] sm:$0xff]
    %v7241 = vld [vmem:[#allocation28 + $0x578] sm:$0xff]
    %v7242 = vld [vmem:[#allocation28 + $0x580] sm:$0xff]
    %v7243 = vld [vmem:[#allocation28 + $0x588] sm:$0xff]
    %v7244 = vld [vmem:[#allocation28 + $0x590] sm:$0xff]
    %v7245 = vld [vmem:[#allocation28 + $0x598] sm:$0xff]
    %v7246 = vld [vmem:[#allocation28 + $0x5a0] sm:$0xff]
    %v7247 = vld [vmem:[#allocation28 + $0x5a8] sm:$0xff]
    %v7248 = vld [vmem:[#allocation28 + $0x5b0] sm:$0xff]
    %v7249 = vld [vmem:[#allocation28 + $0x5b8] sm:$0xff]
    %v7250 = vld [vmem:[#allocation28 + $0x5c0] sm:$0xff]
    %v7251 = vld [vmem:[#allocation28 + $0x5c8] sm:$0xff]
    %v7252 = vld [vmem:[#allocation28 + $0x5d0] sm:$0xff]
    %v7253 = vld [vmem:[#allocation28 + $0x5d8] sm:$0xff]
    %v7254 = vld [vmem:[#allocation28 + $0x5e0] sm:$0xff]
    %v7255 = vld [vmem:[#allocation28 + $0x5e8] sm:$0xff]
    %v7256 = vld [vmem:[#allocation28 + $0x5f0] sm:$0xff]
    %v7257 = vld [vmem:[#allocation28 + $0x5f8] sm:$0xff]
    %v7258 = vld [vmem:[#allocation28 + $0x600] sm:$0xff]
    %v7259 = vld [vmem:[#allocation28 + $0x608] sm:$0xff]
    %v7260 = vld [vmem:[#allocation28 + $0x610] sm:$0xff]
    %v7261 = vld [vmem:[#allocation28 + $0x618] sm:$0xff]
    %v7262 = vld [vmem:[#allocation28 + $0x620] sm:$0xff]
    %v7263 = vld [vmem:[#allocation28 + $0x628] sm:$0xff]
    %v7264 = vld [vmem:[#allocation28 + $0x630] sm:$0xff]
    %v7265 = vld [vmem:[#allocation28 + $0x638] sm:$0xff]
    %v7266 = vld [vmem:[#allocation28 + $0x640] sm:$0xff]
    %v7267 = vld [vmem:[#allocation28 + $0x648] sm:$0xff]
    %v7268 = vld [vmem:[#allocation28 + $0x650] sm:$0xff]
    %v7269 = vld [vmem:[#allocation28 + $0x658] sm:$0xff]
    %v7270 = vld [vmem:[#allocation28 + $0x660] sm:$0xff]
    %v7271 = vld [vmem:[#allocation28 + $0x668] sm:$0xff]
    %v7272 = vld [vmem:[#allocation28 + $0x670] sm:$0xff]
    %v7273 = vld [vmem:[#allocation28 + $0x678] sm:$0xff]
    %v7274 = vld [vmem:[#allocation28 + $0x680] sm:$0xff]
    %v7275 = vld [vmem:[#allocation28 + $0x688] sm:$0xff]
    %v7276 = vld [vmem:[#allocation28 + $0x690] sm:$0xff]
    %v7277 = vld [vmem:[#allocation28 + $0x698] sm:$0xff]
    %v7278 = vld [vmem:[#allocation28 + $0x6a0] sm:$0xff]
    %v7279 = vld [vmem:[#allocation28 + $0x6a8] sm:$0xff]
    %v7280 = vld [vmem:[#allocation28 + $0x6b0] sm:$0xff]
    %v7281 = vld [vmem:[#allocation28 + $0x6b8] sm:$0xff]
    %v7282 = vld [vmem:[#allocation28 + $0x6c0] sm:$0xff]
    %v7283 = vld [vmem:[#allocation28 + $0x6c8] sm:$0xff]
    %v7284 = vld [vmem:[#allocation28 + $0x6d0] sm:$0xff]
    %v7285 = vld [vmem:[#allocation28 + $0x6d8] sm:$0xff]
    %v7286 = vld [vmem:[#allocation28 + $0x6e0] sm:$0xff]
    %v7287 = vld [vmem:[#allocation28 + $0x6e8] sm:$0xff]
    %v7288 = vld [vmem:[#allocation28 + $0x6f0] sm:$0xff]
    %v7289 = vld [vmem:[#allocation28 + $0x6f8] sm:$0xff]
    %v7290 = vld [vmem:[#allocation28 + $0x700] sm:$0xff]
    %v7291 = vld [vmem:[#allocation28 + $0x708] sm:$0xff]
    %v7292 = vld [vmem:[#allocation28 + $0x710] sm:$0xff]
    %v7293 = vld [vmem:[#allocation28 + $0x718] sm:$0xff]
    %v7294 = vld [vmem:[#allocation28 + $0x720] sm:$0xff]
    %v7295 = vld [vmem:[#allocation28 + $0x728] sm:$0xff]
    %v7296 = vld [vmem:[#allocation28 + $0x730] sm:$0xff]
    %v7297 = vld [vmem:[#allocation28 + $0x738] sm:$0xff]
    %v7298 = vld [vmem:[#allocation28 + $0x740] sm:$0xff]
    %v7299 = vld [vmem:[#allocation28 + $0x748] sm:$0xff]
    %v7300 = vld [vmem:[#allocation28 + $0x750] sm:$0xff]
    %v7301 = vld [vmem:[#allocation28 + $0x758] sm:$0xff]
    %v7302 = vld [vmem:[#allocation28 + $0x760] sm:$0xff]
    %v7303 = vld [vmem:[#allocation28 + $0x768] sm:$0xff]
    %v7304 = vld [vmem:[#allocation28 + $0x770] sm:$0xff]
    %v7305 = vld [vmem:[#allocation28 + $0x778] sm:$0xff]
    %v7306 = vld [vmem:[#allocation28 + $0x780] sm:$0xff]
    %v7307 = vld [vmem:[#allocation28 + $0x788] sm:$0xff]
    %v7308 = vld [vmem:[#allocation28 + $0x790] sm:$0xff]
    %v7309 = vld [vmem:[#allocation28 + $0x798] sm:$0xff]
    %v7310 = vld [vmem:[#allocation28 + $0x7a0] sm:$0xff]
    %v7311 = vld [vmem:[#allocation28 + $0x7a8] sm:$0xff]
    %v7312 = vld [vmem:[#allocation28 + $0x7b0] sm:$0xff]
    %v7313 = vld [vmem:[#allocation28 + $0x7b8] sm:$0xff]
    %v7314 = vld [vmem:[#allocation28 + $0x7c0] sm:$0xff]
    %v7315 = vld [vmem:[#allocation28 + $0x7c8] sm:$0xff]
    %v7316 = vld [vmem:[#allocation28 + $0x7d0] sm:$0xff]
    %v7317 = vld [vmem:[#allocation28 + $0x7d8] sm:$0xff]
    %v7318 = vld [vmem:[#allocation28 + $0x7e0] sm:$0xff]
    %v7319 = vld [vmem:[#allocation28 + $0x7e8] sm:$0xff]
    %v7320 = vld [vmem:[#allocation28 + $0x7f0] sm:$0xff]
    %v7321 = vld [vmem:[#allocation28 + $0x7f8] sm:$0xff]
    %v7322 = vld [vmem:[#allocation28 + $0x800] sm:$0xff]
    %v7323 = vld [vmem:[#allocation28 + $0x808] sm:$0xff]
    %v7324 = vld [vmem:[#allocation28 + $0x810] sm:$0xff]
    %v7325 = vld [vmem:[#allocation28 + $0x818] sm:$0xff]
    %v7326 = vld [vmem:[#allocation28 + $0x820] sm:$0xff]
    %v7327 = vld [vmem:[#allocation28 + $0x828] sm:$0xff]
    %v7328 = vld [vmem:[#allocation28 + $0x830] sm:$0xff]
    %v7329 = vld [vmem:[#allocation28 + $0x838] sm:$0xff]
    %v7330 = vld [vmem:[#allocation28 + $0x840] sm:$0xff]
    %v7331 = vld [vmem:[#allocation28 + $0x848] sm:$0xff]
    %v7332 = vld [vmem:[#allocation28 + $0x850] sm:$0xff]
    %v7333 = vld [vmem:[#allocation28 + $0x858] sm:$0xff]
    %v7334 = vld [vmem:[#allocation28 + $0x860] sm:$0xff]
    %v7335 = vld [vmem:[#allocation28 + $0x868] sm:$0xff]
    %v7336 = vld [vmem:[#allocation28 + $0x870] sm:$0xff]
    %v7337 = vld [vmem:[#allocation28 + $0x878] sm:$0xff]
    %v7338 = vld [vmem:[#allocation28 + $0x880] sm:$0xff]
    %v7339 = vld [vmem:[#allocation28 + $0x888] sm:$0xff]
    %v7340 = vld [vmem:[#allocation28 + $0x890] sm:$0xff]
    %v7341 = vld [vmem:[#allocation28 + $0x898] sm:$0xff]
    %v7342 = vld [vmem:[#allocation28 + $0x8a0] sm:$0xff]
    %v7343 = vld [vmem:[#allocation28 + $0x8a8] sm:$0xff]
    %v7344 = vld [vmem:[#allocation28 + $0x8b0] sm:$0xff]
    %v7345 = vld [vmem:[#allocation28 + $0x8b8] sm:$0xff]
    %v7346 = vld [vmem:[#allocation28 + $0x8c0] sm:$0xff]
    %v7347 = vld [vmem:[#allocation28 + $0x8c8] sm:$0xff]
    %v7348 = vld [vmem:[#allocation28 + $0x8d0] sm:$0xff]
    %v7349 = vld [vmem:[#allocation28 + $0x8d8] sm:$0xff]
    %v7350 = vld [vmem:[#allocation28 + $0x8e0] sm:$0xff]
    %v7351 = vld [vmem:[#allocation28 + $0x8e8] sm:$0xff]
    %v7352 = vld [vmem:[#allocation28 + $0x8f0] sm:$0xff]
    %v7353 = vld [vmem:[#allocation28 + $0x8f8] sm:$0xff]
    %v7354 = vld [vmem:[#allocation28 + $0x900] sm:$0xff]
    %v7355 = vld [vmem:[#allocation28 + $0x908] sm:$0xff]
    %v7356 = vld [vmem:[#allocation28 + $0x910] sm:$0xff]
    %v7357 = vld [vmem:[#allocation28 + $0x918] sm:$0xff]
    %v7358 = vld [vmem:[#allocation28 + $0x920] sm:$0xff]
    %v7359 = vld [vmem:[#allocation28 + $0x928] sm:$0xff]
    %v7360 = vld [vmem:[#allocation28 + $0x930] sm:$0xff]
    %v7361 = vld [vmem:[#allocation28 + $0x938] sm:$0xff]
    %v7362 = vld [vmem:[#allocation28 + $0x940] sm:$0xff]
    %v7363 = vld [vmem:[#allocation28 + $0x948] sm:$0xff]
    %v7364 = vld [vmem:[#allocation28 + $0x950] sm:$0xff]
    %v7365 = vld [vmem:[#allocation28 + $0x958] sm:$0xff]
    %v7366 = vld [vmem:[#allocation28 + $0x960] sm:$0xff]
    %v7367 = vld [vmem:[#allocation28 + $0x968] sm:$0xff]
    %v7368 = vld [vmem:[#allocation28 + $0x970] sm:$0xff]
    %v7369 = vld [vmem:[#allocation28 + $0x978] sm:$0xff]
    %v7370 = vld [vmem:[#allocation28 + $0x980] sm:$0xff]
    %v7371 = vld [vmem:[#allocation28 + $0x988] sm:$0xff]
    %v7372 = vld [vmem:[#allocation28 + $0x990] sm:$0xff]
    %v7373 = vld [vmem:[#allocation28 + $0x998] sm:$0xff]
    %v7374 = vld [vmem:[#allocation28 + $0x9a0] sm:$0xff]
    %v7375 = vld [vmem:[#allocation28 + $0x9a8] sm:$0xff]
    %v7376 = vld [vmem:[#allocation28 + $0x9b0] sm:$0xff]
    %v7377 = vld [vmem:[#allocation28 + $0x9b8] sm:$0xff]
    %v7378 = vld [vmem:[#allocation28 + $0x9c0] sm:$0xff]
    %v7379 = vld [vmem:[#allocation28 + $0x9c8] sm:$0xff]
    %v7380 = vld [vmem:[#allocation28 + $0x9d0] sm:$0xff]
    %v7381 = vld [vmem:[#allocation28 + $0x9d8] sm:$0xff]
    %v7382 = vld [vmem:[#allocation28 + $0x9e0] sm:$0xff]
    %v7383 = vld [vmem:[#allocation28 + $0x9e8] sm:$0xff]
    %v7384 = vld [vmem:[#allocation28 + $0x9f0] sm:$0xff]
    %v7385 = vld [vmem:[#allocation28 + $0x9f8] sm:$0xff]
    %v7386 = vld [vmem:[#allocation29] sm:$0xff]
    %7387 = vmatprep.subr.mxu0 0.0
    %7388 = vmatpush1.msra.mxu0 0.0
    %7389 = vmatprep.subr.mxu0 0.0
    %7390 = vmatpush1.msra.mxu0 0.0
    %7391 = vmatprep.subr.mxu0 0.0
    %7392 = vmatpush1.msra.mxu0 0.0
    %7393 = vmatprep.subr.mxu0 0.0
    %7394 = vmatpush1.msra.mxu0 0.0
    %7395 = vmatprep.subr.mxu0 0.0
    %7396 = vmatpush1.msra.mxu0 0.0
    %7397 = vmatprep.subr.mxu0 0.0
    %7398 = vmatpush1.msra.mxu0 0.0
    %7399 = vmatprep.subr.mxu0 0.0
    %7400 = vmatpush1.msra.mxu0 0.0
    %7401 = vmatprep.subr.mxu0 0.0
    %7402 = vmatpush1.msra.mxu0 0.0
    %7403 = vmatprep.subr.mxu0 0.0
    %7404 = vmatpush1.msra.mxu0 0.0
    %7405 = vmatprep.subr.mxu0 0.0
    %7406 = vmatpush1.msra.mxu0 0.0
    %7407 = vmatprep.subr.mxu0 0.0
    %7408 = vmatpush1.msra.mxu0 0.0
    %7409 = vmatprep.subr.mxu0 0.0
    %7410 = vmatpush1.msra.mxu0 0.0
    %7411 = vmatprep.subr.mxu0 0.0
    %7412 = vmatpush1.msra.mxu0 0.0
    %7413 = vmatprep.subr.mxu0 0.0
    %7414 = vmatpush1.msra.mxu0 0.0
    %7415 = vmatprep.subr.mxu0 0.0
    %7416 = vmatpush1.msra.mxu0 0.0
    %7417 = vmatprep.subr.mxu0 0.0
    %7418 = vmatpush1.msra.mxu0 %v7386
    %7419 = vmatprep.subr.mxu0 0.0
    %7420 = vmatpush2.msra.mxu0 0.0
    %7421 = vmatprep.subr.mxu0 0.0
    %7422 = vmatpush2.msra.mxu0 0.0
    %7423 = vmatprep.subr.mxu0 0.0
    %7424 = vmatpush2.msra.mxu0 0.0
    %7425 = vmatprep.subr.mxu0 0.0
    %7426 = vmatpush2.msra.mxu0 0.0
    %7427 = vmatprep.subr.mxu0 0.0
    %7428 = vmatpush2.msra.mxu0 0.0
    %7429 = vmatprep.subr.mxu0 0.0
    %7430 = vmatpush2.msra.mxu0 0.0
    %7431 = vmatprep.subr.mxu0 0.0
    %7432 = vmatpush2.msra.mxu0 0.0
    %7433 = vmatprep.subr.mxu0 0.0
    %7434 = vmatpush2.msra.mxu0 0.0
    %7435 = vmatprep.subr.mxu0 0.0
    %7436 = vmatpush2.msra.mxu0 0.0
    %7437 = vmatprep.subr.mxu0 0.0
    %7438 = vmatpush2.msra.mxu0 0.0
    %7439 = vmatprep.subr.mxu0 0.0
    %7440 = vmatpush2.msra.mxu0 0.0
    %7441 = vmatprep.subr.mxu0 0.0
    %7442 = vmatpush2.msra.mxu0 0.0
    %7443 = vmatprep.subr.mxu0 0.0
    %7444 = vmatpush2.msra.mxu0 0.0
    %7445 = vmatprep.subr.mxu0 0.0
    %7446 = vmatpush2.msra.mxu0 0.0
    %7447 = vmatprep.subr.mxu0 0.0
    %7448 = vmatpush2.msra.mxu0 0.0
    %7449 = vmatprep.subr.mxu0 0.0
    %7450 = vmatpush2.msra.mxu0 0.0
    %7451 = vmatprep.mubr.f32.mxu0 0.0
    %7452 = vmatmul.mubr.f32.gmra.mxu0 %v2609
    %v7453 = vpop.f32.mrf.mxu0
    %v7454 = vadd.f32 0.0, %v7453
    %v7455 = vpop.f32.mrf.mxu0
    %7456 = vmatprep.mubr.f32.mxu0 0.0
    %7457 = vmatmul.mubr.f32.gmra.mxu0 %v2612
    %v7458 = vpop.f32.mrf.mxu0
    %v7459 = vadd.f32 0.0, %v7458
    %v7460 = vpop.f32.mrf.mxu0
    %7461 = vmatprep.mubr.f32.mxu0 0.0
    %7462 = vmatmul.mubr.f32.gmra.mxu0 %v2615
    %v7463 = vpop.f32.mrf.mxu0
    %v7464 = vadd.f32 0.0, %v7463
    %v7465 = vpop.f32.mrf.mxu0
    %7466 = vmatprep.mubr.f32.mxu0 0.0
    %7467 = vmatmul.mubr.f32.gmra.mxu0 %v2618
    %v7468 = vpop.f32.mrf.mxu0
    %v7469 = vadd.f32 0.0, %v7468
    %v7470 = vpop.f32.mrf.mxu0
    %7471 = vdwg.mxu0
    %7472 = vmatprep.subr.mxu0 0.0
    %7473 = vmatpush1.msra.mxu0 %v7081
    %7474 = vmatprep.subr.mxu0 0.0
    %7475 = vmatpush1.msra.mxu0 %v7080
    %7476 = vmatprep.subr.mxu0 0.0
    %7477 = vmatpush1.msra.mxu0 %v7079
    %7478 = vmatprep.subr.mxu0 0.0
    %7479 = vmatpush1.msra.mxu0 %v7078
    %7480 = vmatprep.subr.mxu0 0.0
    %7481 = vmatpush1.msra.mxu0 %v7077
    %7482 = vmatprep.subr.mxu0 0.0
    %7483 = vmatpush1.msra.mxu0 %v7076
    %7484 = vmatprep.subr.mxu0 0.0
    %7485 = vmatpush1.msra.mxu0 %v7075
    %7486 = vmatprep.subr.mxu0 0.0
    %7487 = vmatpush1.msra.mxu0 %v7074
    %7488 = vmatprep.subr.mxu0 0.0
    %7489 = vmatpush1.msra.mxu0 %v7073
    %7490 = vmatprep.subr.mxu0 0.0
    %7491 = vmatpush1.msra.mxu0 %v7072
    %7492 = vmatprep.subr.mxu0 0.0
    %7493 = vmatpush1.msra.mxu0 %v7071
    %7494 = vmatprep.subr.mxu0 0.0
    %7495 = vmatpush1.msra.mxu0 %v7070
    %7496 = vmatprep.subr.mxu0 0.0
    %7497 = vmatpush1.msra.mxu0 %v7069
    %7498 = vmatprep.subr.mxu0 0.0
    %7499 = vmatpush1.msra.mxu0 %v7068
    %7500 = vmatprep.subr.mxu0 0.0
    %7501 = vmatpush1.msra.mxu0 %v7067
    %7502 = vmatprep.subr.mxu0 0.0
    %7503 = vmatpush1.msra.mxu0 %v7066
    %7504 = vmatprep.subr.mxu0 0.0
    %7505 = vmatpush2.msra.mxu0 %v7097
    %7506 = vmatprep.subr.mxu0 0.0
    %7507 = vmatpush2.msra.mxu0 %v7096
    %7508 = vmatprep.subr.mxu0 0.0
    %7509 = vmatpush2.msra.mxu0 %v7095
    %7510 = vmatprep.subr.mxu0 0.0
    %7511 = vmatpush2.msra.mxu0 %v7094
    %7512 = vmatprep.subr.mxu0 0.0
    %7513 = vmatpush2.msra.mxu0 %v7093
    %7514 = vmatprep.subr.mxu0 0.0
    %7515 = vmatpush2.msra.mxu0 %v7092
    %7516 = vmatprep.subr.mxu0 0.0
    %7517 = vmatpush2.msra.mxu0 %v7091
    %7518 = vmatprep.subr.mxu0 0.0
    %7519 = vmatpush2.msra.mxu0 %v7090
    %7520 = vmatprep.subr.mxu0 0.0
    %7521 = vmatpush2.msra.mxu0 %v7089
    %7522 = vmatprep.subr.mxu0 0.0
    %7523 = vmatpush2.msra.mxu0 %v7088
    %7524 = vmatprep.subr.mxu0 0.0
    %7525 = vmatpush2.msra.mxu0 %v7087
    %7526 = vmatprep.subr.mxu0 0.0
    %7527 = vmatpush2.msra.mxu0 %v7086
    %7528 = vmatprep.subr.mxu0 0.0
    %7529 = vmatpush2.msra.mxu0 %v7085
    %7530 = vmatprep.subr.mxu0 0.0
    %7531 = vmatpush2.msra.mxu0 %v7084
    %7532 = vmatprep.subr.mxu0 0.0
    %7533 = vmatpush2.msra.mxu0 %v7083
    %7534 = vmatprep.subr.mxu0 0.0
    %7535 = vmatpush2.msra.mxu0 %v7082
    %7536 = vmatprep.mubr.f32.mxu0 %v6987
    %7537 = vmatmul.mubr.f32.gmra.mxu0 %v6986
    %v7538 = vpop.f32.mrf.mxu0
    %v7539 = vadd.f32 %v7454, %v7538
    %v7540 = vpop.f32.mrf.mxu0
    %7541 = vmatprep.mubr.f32.mxu0 %v7007
    %7542 = vmatmul.mubr.f32.gmra.mxu0 %v7006
    %v7543 = vpop.f32.mrf.mxu0
    %v7544 = vadd.f32 %v7459, %v7543
    %v7545 = vpop.f32.mrf.mxu0
    %7546 = vmatprep.mubr.f32.mxu0 %v7027
    %7547 = vmatmul.mubr.f32.gmra.mxu0 %v7026
    %v7548 = vpop.f32.mrf.mxu0
    %v7549 = vadd.f32 %v7464, %v7548
    %v7550 = vpop.f32.mrf.mxu0
    %7551 = vmatprep.mubr.f32.mxu0 %v7047
    %7552 = vmatmul.mubr.f32.gmra.mxu0 %v7046
    %v7553 = vpop.f32.mrf.mxu0
    %v7554 = vadd.f32 %v7469, %v7553
    %v7555 = vpop.f32.mrf.mxu0
    %7556 = vdwg.mxu0
    %7557 = vmatprep.subr.mxu0 0.0
    %7558 = vmatpush1.msra.mxu0 %v7113
    %7559 = vmatprep.subr.mxu0 0.0
    %7560 = vmatpush1.msra.mxu0 %v7112
    %7561 = vmatprep.subr.mxu0 0.0
    %7562 = vmatpush1.msra.mxu0 %v7111
    %7563 = vmatprep.subr.mxu0 0.0
    %7564 = vmatpush1.msra.mxu0 %v7110
    %7565 = vmatprep.subr.mxu0 0.0
    %7566 = vmatpush1.msra.mxu0 %v7109
    %7567 = vmatprep.subr.mxu0 0.0
    %7568 = vmatpush1.msra.mxu0 %v7108
    %7569 = vmatprep.subr.mxu0 0.0
    %7570 = vmatpush1.msra.mxu0 %v7107
    %7571 = vmatprep.subr.mxu0 0.0
    %7572 = vmatpush1.msra.mxu0 %v7106
    %7573 = vmatprep.subr.mxu0 0.0
    %7574 = vmatpush1.msra.mxu0 %v7105
    %7575 = vmatprep.subr.mxu0 0.0
    %7576 = vmatpush1.msra.mxu0 %v7104
    %7577 = vmatprep.subr.mxu0 0.0
    %7578 = vmatpush1.msra.mxu0 %v7103
    %7579 = vmatprep.subr.mxu0 0.0
    %7580 = vmatpush1.msra.mxu0 %v7102
    %7581 = vmatprep.subr.mxu0 0.0
    %7582 = vmatpush1.msra.mxu0 %v7101
    %7583 = vmatprep.subr.mxu0 0.0
    %7584 = vmatpush1.msra.mxu0 %v7100
    %7585 = vmatprep.subr.mxu0 0.0
    %7586 = vmatpush1.msra.mxu0 %v7099
    %7587 = vmatprep.subr.mxu0 0.0
    %7588 = vmatpush1.msra.mxu0 %v7098
    %7589 = vmatprep.subr.mxu0 0.0
    %7590 = vmatpush2.msra.mxu0 %v7129
    %7591 = vmatprep.subr.mxu0 0.0
    %7592 = vmatpush2.msra.mxu0 %v7128
    %7593 = vmatprep.subr.mxu0 0.0
    %7594 = vmatpush2.msra.mxu0 %v7127
    %7595 = vmatprep.subr.mxu0 0.0
    %7596 = vmatpush2.msra.mxu0 %v7126
    %7597 = vmatprep.subr.mxu0 0.0
    %7598 = vmatpush2.msra.mxu0 %v7125
    %7599 = vmatprep.subr.mxu0 0.0
    %7600 = vmatpush2.msra.mxu0 %v7124
    %7601 = vmatprep.subr.mxu0 0.0
    %7602 = vmatpush2.msra.mxu0 %v7123
    %7603 = vmatprep.subr.mxu0 0.0
    %7604 = vmatpush2.msra.mxu0 %v7122
    %7605 = vmatprep.subr.mxu0 0.0
    %7606 = vmatpush2.msra.mxu0 %v7121
    %7607 = vmatprep.subr.mxu0 0.0
    %7608 = vmatpush2.msra.mxu0 %v7120
    %7609 = vmatprep.subr.mxu0 0.0
    %7610 = vmatpush2.msra.mxu0 %v7119
    %7611 = vmatprep.subr.mxu0 0.0
    %7612 = vmatpush2.msra.mxu0 %v7118
    %7613 = vmatprep.subr.mxu0 0.0
    %7614 = vmatpush2.msra.mxu0 %v7117
    %7615 = vmatprep.subr.mxu0 0.0
    %7616 = vmatpush2.msra.mxu0 %v7116
    %7617 = vmatprep.subr.mxu0 0.0
    %7618 = vmatpush2.msra.mxu0 %v7115
    %7619 = vmatprep.subr.mxu0 0.0
    %7620 = vmatpush2.msra.mxu0 %v7114
    %7621 = vmatprep.mubr.f32.mxu0 %v6989
    %7622 = vmatmul.mubr.f32.gmra.mxu0 %v6988
    %v7623 = vpop.f32.mrf.mxu0
    %v7624 = vadd.f32 %v7539, %v7623
    %v7625 = vpop.f32.mrf.mxu0
    %7626 = vmatprep.mubr.f32.mxu0 %v7009
    %7627 = vmatmul.mubr.f32.gmra.mxu0 %v7008
    %v7628 = vpop.f32.mrf.mxu0
    %v7629 = vadd.f32 %v7544, %v7628
    %v7630 = vpop.f32.mrf.mxu0
    %7631 = vmatprep.mubr.f32.mxu0 %v7029
    %7632 = vmatmul.mubr.f32.gmra.mxu0 %v7028
    %v7633 = vpop.f32.mrf.mxu0
    %v7634 = vadd.f32 %v7549, %v7633
    %v7635 = vpop.f32.mrf.mxu0
    %7636 = vmatprep.mubr.f32.mxu0 %v7049
    %7637 = vmatmul.mubr.f32.gmra.mxu0 %v7048
    %v7638 = vpop.f32.mrf.mxu0
    %v7639 = vadd.f32 %v7554, %v7638
    %v7640 = vpop.f32.mrf.mxu0
    %7641 = vdwg.mxu0
    %7642 = vmatprep.subr.mxu0 0.0
    %7643 = vmatpush1.msra.mxu0 %v7145
    %7644 = vmatprep.subr.mxu0 0.0
    %7645 = vmatpush1.msra.mxu0 %v7144
    %7646 = vmatprep.subr.mxu0 0.0
    %7647 = vmatpush1.msra.mxu0 %v7143
    %7648 = vmatprep.subr.mxu0 0.0
    %7649 = vmatpush1.msra.mxu0 %v7142
    %7650 = vmatprep.subr.mxu0 0.0
    %7651 = vmatpush1.msra.mxu0 %v7141
    %7652 = vmatprep.subr.mxu0 0.0
    %7653 = vmatpush1.msra.mxu0 %v7140
    %7654 = vmatprep.subr.mxu0 0.0
    %7655 = vmatpush1.msra.mxu0 %v7139
    %7656 = vmatprep.subr.mxu0 0.0
    %7657 = vmatpush1.msra.mxu0 %v7138
    %7658 = vmatprep.subr.mxu0 0.0
    %7659 = vmatpush1.msra.mxu0 %v7137
    %7660 = vmatprep.subr.mxu0 0.0
    %7661 = vmatpush1.msra.mxu0 %v7136
    %7662 = vmatprep.subr.mxu0 0.0
    %7663 = vmatpush1.msra.mxu0 %v7135
    %7664 = vmatprep.subr.mxu0 0.0
    %7665 = vmatpush1.msra.mxu0 %v7134
    %7666 = vmatprep.subr.mxu0 0.0
    %7667 = vmatpush1.msra.mxu0 %v7133
    %7668 = vmatprep.subr.mxu0 0.0
    %7669 = vmatpush1.msra.mxu0 %v7132
    %7670 = vmatprep.subr.mxu0 0.0
    %7671 = vmatpush1.msra.mxu0 %v7131
    %7672 = vmatprep.subr.mxu0 0.0
    %7673 = vmatpush1.msra.mxu0 %v7130
    %7674 = vmatprep.subr.mxu0 0.0
    %7675 = vmatpush2.msra.mxu0 %v7161
    %7676 = vmatprep.subr.mxu0 0.0
    %7677 = vmatpush2.msra.mxu0 %v7160
    %7678 = vmatprep.subr.mxu0 0.0
    %7679 = vmatpush2.msra.mxu0 %v7159
    %7680 = vmatprep.subr.mxu0 0.0
    %7681 = vmatpush2.msra.mxu0 %v7158
    %7682 = vmatprep.subr.mxu0 0.0
    %7683 = vmatpush2.msra.mxu0 %v7157
    %7684 = vmatprep.subr.mxu0 0.0
    %7685 = vmatpush2.msra.mxu0 %v7156
    %7686 = vmatprep.subr.mxu0 0.0
    %7687 = vmatpush2.msra.mxu0 %v7155
    %7688 = vmatprep.subr.mxu0 0.0
    %7689 = vmatpush2.msra.mxu0 %v7154
    %7690 = vmatprep.subr.mxu0 0.0
    %7691 = vmatpush2.msra.mxu0 %v7153
    %7692 = vmatprep.subr.mxu0 0.0
    %7693 = vmatpush2.msra.mxu0 %v7152
    %7694 = vmatprep.subr.mxu0 0.0
    %7695 = vmatpush2.msra.mxu0 %v7151
    %7696 = vmatprep.subr.mxu0 0.0
    %7697 = vmatpush2.msra.mxu0 %v7150
    %7698 = vmatprep.subr.mxu0 0.0
    %7699 = vmatpush2.msra.mxu0 %v7149
    %7700 = vmatprep.subr.mxu0 0.0
    %7701 = vmatpush2.msra.mxu0 %v7148
    %7702 = vmatprep.subr.mxu0 0.0
    %7703 = vmatpush2.msra.mxu0 %v7147
    %7704 = vmatprep.subr.mxu0 0.0
    %7705 = vmatpush2.msra.mxu0 %v7146
    %7706 = vmatprep.mubr.f32.mxu0 %v6991
    %7707 = vmatmul.mubr.f32.gmra.mxu0 %v6990
    %v7708 = vpop.f32.mrf.mxu0
    %v7709 = vadd.f32 %v7624, %v7708
    %v7710 = vpop.f32.mrf.mxu0
    %7711 = vmatprep.mubr.f32.mxu0 %v7011
    %7712 = vmatmul.mubr.f32.gmra.mxu0 %v7010
    %v7713 = vpop.f32.mrf.mxu0
    %v7714 = vadd.f32 %v7629, %v7713
    %v7715 = vpop.f32.mrf.mxu0
    %7716 = vmatprep.mubr.f32.mxu0 %v7031
    %7717 = vmatmul.mubr.f32.gmra.mxu0 %v7030
    %v7718 = vpop.f32.mrf.mxu0
    %v7719 = vadd.f32 %v7634, %v7718
    %v7720 = vpop.f32.mrf.mxu0
    %7721 = vmatprep.mubr.f32.mxu0 %v7051
    %7722 = vmatmul.mubr.f32.gmra.mxu0 %v7050
    %v7723 = vpop.f32.mrf.mxu0
    %v7724 = vadd.f32 %v7639, %v7723
    %v7725 = vpop.f32.mrf.mxu0
    %7726 = vdwg.mxu0
    %7727 = vmatprep.subr.mxu0 0.0
    %7728 = vmatpush1.msra.mxu0 %v7177
    %7729 = vmatprep.subr.mxu0 0.0
    %7730 = vmatpush1.msra.mxu0 %v7176
    %7731 = vmatprep.subr.mxu0 0.0
    %7732 = vmatpush1.msra.mxu0 %v7175
    %7733 = vmatprep.subr.mxu0 0.0
    %7734 = vmatpush1.msra.mxu0 %v7174
    %7735 = vmatprep.subr.mxu0 0.0
    %7736 = vmatpush1.msra.mxu0 %v7173
    %7737 = vmatprep.subr.mxu0 0.0
    %7738 = vmatpush1.msra.mxu0 %v7172
    %7739 = vmatprep.subr.mxu0 0.0
    %7740 = vmatpush1.msra.mxu0 %v7171
    %7741 = vmatprep.subr.mxu0 0.0
    %7742 = vmatpush1.msra.mxu0 %v7170
    %7743 = vmatprep.subr.mxu0 0.0
    %7744 = vmatpush1.msra.mxu0 %v7169
    %7745 = vmatprep.subr.mxu0 0.0
    %7746 = vmatpush1.msra.mxu0 %v7168
    %7747 = vmatprep.subr.mxu0 0.0
    %7748 = vmatpush1.msra.mxu0 %v7167
    %7749 = vmatprep.subr.mxu0 0.0
    %7750 = vmatpush1.msra.mxu0 %v7166
    %7751 = vmatprep.subr.mxu0 0.0
    %7752 = vmatpush1.msra.mxu0 %v7165
    %7753 = vmatprep.subr.mxu0 0.0
    %7754 = vmatpush1.msra.mxu0 %v7164
    %7755 = vmatprep.subr.mxu0 0.0
    %7756 = vmatpush1.msra.mxu0 %v7163
    %7757 = vmatprep.subr.mxu0 0.0
    %7758 = vmatpush1.msra.mxu0 %v7162
    %7759 = vmatprep.subr.mxu0 0.0
    %7760 = vmatpush2.msra.mxu0 %v7193
    %7761 = vmatprep.subr.mxu0 0.0
    %7762 = vmatpush2.msra.mxu0 %v7192
    %7763 = vmatprep.subr.mxu0 0.0
    %7764 = vmatpush2.msra.mxu0 %v7191
    %7765 = vmatprep.subr.mxu0 0.0
    %7766 = vmatpush2.msra.mxu0 %v7190
    %7767 = vmatprep.subr.mxu0 0.0
    %7768 = vmatpush2.msra.mxu0 %v7189
    %7769 = vmatprep.subr.mxu0 0.0
    %7770 = vmatpush2.msra.mxu0 %v7188
    %7771 = vmatprep.subr.mxu0 0.0
    %7772 = vmatpush2.msra.mxu0 %v7187
    %7773 = vmatprep.subr.mxu0 0.0
    %7774 = vmatpush2.msra.mxu0 %v7186
    %7775 = vmatprep.subr.mxu0 0.0
    %7776 = vmatpush2.msra.mxu0 %v7185
    %7777 = vmatprep.subr.mxu0 0.0
    %7778 = vmatpush2.msra.mxu0 %v7184
    %7779 = vmatprep.subr.mxu0 0.0
    %7780 = vmatpush2.msra.mxu0 %v7183
    %7781 = vmatprep.subr.mxu0 0.0
    %7782 = vmatpush2.msra.mxu0 %v7182
    %7783 = vmatprep.subr.mxu0 0.0
    %7784 = vmatpush2.msra.mxu0 %v7181
    %7785 = vmatprep.subr.mxu0 0.0
    %7786 = vmatpush2.msra.mxu0 %v7180
    %7787 = vmatprep.subr.mxu0 0.0
    %7788 = vmatpush2.msra.mxu0 %v7179
    %7789 = vmatprep.subr.mxu0 0.0
    %7790 = vmatpush2.msra.mxu0 %v7178
    %7791 = vmatprep.mubr.f32.mxu0 %v6993
    %7792 = vmatmul.mubr.f32.gmra.mxu0 %v6992
    %v7793 = vpop.f32.mrf.mxu0
    %v7794 = vadd.f32 %v7709, %v7793
    %v7795 = vpop.f32.mrf.mxu0
    %7796 = vmatprep.mubr.f32.mxu0 %v7013
    %7797 = vmatmul.mubr.f32.gmra.mxu0 %v7012
    %v7798 = vpop.f32.mrf.mxu0
    %v7799 = vadd.f32 %v7714, %v7798
    %v7800 = vpop.f32.mrf.mxu0
    %7801 = vmatprep.mubr.f32.mxu0 %v7033
    %7802 = vmatmul.mubr.f32.gmra.mxu0 %v7032
    %v7803 = vpop.f32.mrf.mxu0
    %v7804 = vadd.f32 %v7719, %v7803
    %v7805 = vpop.f32.mrf.mxu0
    %7806 = vmatprep.mubr.f32.mxu0 %v7053
    %7807 = vmatmul.mubr.f32.gmra.mxu0 %v7052
    %v7808 = vpop.f32.mrf.mxu0
    %v7809 = vadd.f32 %v7724, %v7808
    %v7810 = vpop.f32.mrf.mxu0
    %7811 = vdwg.mxu0
    %7812 = vmatprep.subr.mxu0 0.0
    %7813 = vmatpush1.msra.mxu0 %v7209
    %7814 = vmatprep.subr.mxu0 0.0
    %7815 = vmatpush1.msra.mxu0 %v7208
    %7816 = vmatprep.subr.mxu0 0.0
    %7817 = vmatpush1.msra.mxu0 %v7207
    %7818 = vmatprep.subr.mxu0 0.0
    %7819 = vmatpush1.msra.mxu0 %v7206
    %7820 = vmatprep.subr.mxu0 0.0
    %7821 = vmatpush1.msra.mxu0 %v7205
    %7822 = vmatprep.subr.mxu0 0.0
    %7823 = vmatpush1.msra.mxu0 %v7204
    %7824 = vmatprep.subr.mxu0 0.0
    %7825 = vmatpush1.msra.mxu0 %v7203
    %7826 = vmatprep.subr.mxu0 0.0
    %7827 = vmatpush1.msra.mxu0 %v7202
    %7828 = vmatprep.subr.mxu0 0.0
    %7829 = vmatpush1.msra.mxu0 %v7201
    %7830 = vmatprep.subr.mxu0 0.0
    %7831 = vmatpush1.msra.mxu0 %v7200
    %7832 = vmatprep.subr.mxu0 0.0
    %7833 = vmatpush1.msra.mxu0 %v7199
    %7834 = vmatprep.subr.mxu0 0.0
    %7835 = vmatpush1.msra.mxu0 %v7198
    %7836 = vmatprep.subr.mxu0 0.0
    %7837 = vmatpush1.msra.mxu0 %v7197
    %7838 = vmatprep.subr.mxu0 0.0
    %7839 = vmatpush1.msra.mxu0 %v7196
    %7840 = vmatprep.subr.mxu0 0.0
    %7841 = vmatpush1.msra.mxu0 %v7195
    %7842 = vmatprep.subr.mxu0 0.0
    %7843 = vmatpush1.msra.mxu0 %v7194
    %7844 = vmatprep.subr.mxu0 0.0
    %7845 = vmatpush2.msra.mxu0 %v7225
    %7846 = vmatprep.subr.mxu0 0.0
    %7847 = vmatpush2.msra.mxu0 %v7224
    %7848 = vmatprep.subr.mxu0 0.0
    %7849 = vmatpush2.msra.mxu0 %v7223
    %7850 = vmatprep.subr.mxu0 0.0
    %7851 = vmatpush2.msra.mxu0 %v7222
    %7852 = vmatprep.subr.mxu0 0.0
    %7853 = vmatpush2.msra.mxu0 %v7221
    %7854 = vmatprep.subr.mxu0 0.0
    %7855 = vmatpush2.msra.mxu0 %v7220
    %7856 = vmatprep.subr.mxu0 0.0
    %7857 = vmatpush2.msra.mxu0 %v7219
    %7858 = vmatprep.subr.mxu0 0.0
    %7859 = vmatpush2.msra.mxu0 %v7218
    %7860 = vmatprep.subr.mxu0 0.0
    %7861 = vmatpush2.msra.mxu0 %v7217
    %7862 = vmatprep.subr.mxu0 0.0
    %7863 = vmatpush2.msra.mxu0 %v7216
    %7864 = vmatprep.subr.mxu0 0.0
    %7865 = vmatpush2.msra.mxu0 %v7215
    %7866 = vmatprep.subr.mxu0 0.0
    %7867 = vmatpush2.msra.mxu0 %v7214
    %7868 = vmatprep.subr.mxu0 0.0
    %7869 = vmatpush2.msra.mxu0 %v7213
    %7870 = vmatprep.subr.mxu0 0.0
    %7871 = vmatpush2.msra.mxu0 %v7212
    %7872 = vmatprep.subr.mxu0 0.0
    %7873 = vmatpush2.msra.mxu0 %v7211
    %7874 = vmatprep.subr.mxu0 0.0
    %7875 = vmatpush2.msra.mxu0 %v7210
    %7876 = vmatprep.mubr.f32.mxu0 %v6995
    %7877 = vmatmul.mubr.f32.gmra.mxu0 %v6994
    %v7878 = vpop.f32.mrf.mxu0
    %v7879 = vadd.f32 %v7794, %v7878
    %v7880 = vpop.f32.mrf.mxu0
    %7881 = vmatprep.mubr.f32.mxu0 %v7015
    %7882 = vmatmul.mubr.f32.gmra.mxu0 %v7014
    %v7883 = vpop.f32.mrf.mxu0
    %v7884 = vadd.f32 %v7799, %v7883
    %v7885 = vpop.f32.mrf.mxu0
    %7886 = vmatprep.mubr.f32.mxu0 %v7035
    %7887 = vmatmul.mubr.f32.gmra.mxu0 %v7034
    %v7888 = vpop.f32.mrf.mxu0
    %v7889 = vadd.f32 %v7804, %v7888
    %v7890 = vpop.f32.mrf.mxu0
    %7891 = vmatprep.mubr.f32.mxu0 %v7055
    %7892 = vmatmul.mubr.f32.gmra.mxu0 %v7054
    %v7893 = vpop.f32.mrf.mxu0
    %v7894 = vadd.f32 %v7809, %v7893
    %v7895 = vpop.f32.mrf.mxu0
    %7896 = vdwg.mxu0
    %7897 = vmatprep.subr.mxu0 0.0
    %7898 = vmatpush1.msra.mxu0 %v7241
    %7899 = vmatprep.subr.mxu0 0.0
    %7900 = vmatpush1.msra.mxu0 %v7240
    %7901 = vmatprep.subr.mxu0 0.0
    %7902 = vmatpush1.msra.mxu0 %v7239
    %7903 = vmatprep.subr.mxu0 0.0
    %7904 = vmatpush1.msra.mxu0 %v7238
    %7905 = vmatprep.subr.mxu0 0.0
    %7906 = vmatpush1.msra.mxu0 %v7237
    %7907 = vmatprep.subr.mxu0 0.0
    %7908 = vmatpush1.msra.mxu0 %v7236
    %7909 = vmatprep.subr.mxu0 0.0
    %7910 = vmatpush1.msra.mxu0 %v7235
    %7911 = vmatprep.subr.mxu0 0.0
    %7912 = vmatpush1.msra.mxu0 %v7234
    %7913 = vmatprep.subr.mxu0 0.0
    %7914 = vmatpush1.msra.mxu0 %v7233
    %7915 = vmatprep.subr.mxu0 0.0
    %7916 = vmatpush1.msra.mxu0 %v7232
    %7917 = vmatprep.subr.mxu0 0.0
    %7918 = vmatpush1.msra.mxu0 %v7231
    %7919 = vmatprep.subr.mxu0 0.0
    %7920 = vmatpush1.msra.mxu0 %v7230
    %7921 = vmatprep.subr.mxu0 0.0
    %7922 = vmatpush1.msra.mxu0 %v7229
    %7923 = vmatprep.subr.mxu0 0.0
    %7924 = vmatpush1.msra.mxu0 %v7228
    %7925 = vmatprep.subr.mxu0 0.0
    %7926 = vmatpush1.msra.mxu0 %v7227
    %7927 = vmatprep.subr.mxu0 0.0
    %7928 = vmatpush1.msra.mxu0 %v7226
    %7929 = vmatprep.subr.mxu0 0.0
    %7930 = vmatpush2.msra.mxu0 %v7257
    %7931 = vmatprep.subr.mxu0 0.0
    %7932 = vmatpush2.msra.mxu0 %v7256
    %7933 = vmatprep.subr.mxu0 0.0
    %7934 = vmatpush2.msra.mxu0 %v7255
    %7935 = vmatprep.subr.mxu0 0.0
    %7936 = vmatpush2.msra.mxu0 %v7254
    %7937 = vmatprep.subr.mxu0 0.0
    %7938 = vmatpush2.msra.mxu0 %v7253
    %7939 = vmatprep.subr.mxu0 0.0
    %7940 = vmatpush2.msra.mxu0 %v7252
    %7941 = vmatprep.subr.mxu0 0.0
    %7942 = vmatpush2.msra.mxu0 %v7251
    %7943 = vmatprep.subr.mxu0 0.0
    %7944 = vmatpush2.msra.mxu0 %v7250
    %7945 = vmatprep.subr.mxu0 0.0
    %7946 = vmatpush2.msra.mxu0 %v7249
    %7947 = vmatprep.subr.mxu0 0.0
    %7948 = vmatpush2.msra.mxu0 %v7248
    %7949 = vmatprep.subr.mxu0 0.0
    %7950 = vmatpush2.msra.mxu0 %v7247
    %7951 = vmatprep.subr.mxu0 0.0
    %7952 = vmatpush2.msra.mxu0 %v7246
    %7953 = vmatprep.subr.mxu0 0.0
    %7954 = vmatpush2.msra.mxu0 %v7245
    %7955 = vmatprep.subr.mxu0 0.0
    %7956 = vmatpush2.msra.mxu0 %v7244
    %7957 = vmatprep.subr.mxu0 0.0
    %7958 = vmatpush2.msra.mxu0 %v7243
    %7959 = vmatprep.subr.mxu0 0.0
    %7960 = vmatpush2.msra.mxu0 %v7242
    %7961 = vmatprep.mubr.f32.mxu0 %v6997
    %7962 = vmatmul.mubr.f32.gmra.mxu0 %v6996
    %v7963 = vpop.f32.mrf.mxu0
    %v7964 = vadd.f32 %v7879, %v7963
    %v7965 = vpop.f32.mrf.mxu0
    %7966 = vmatprep.mubr.f32.mxu0 %v7017
    %7967 = vmatmul.mubr.f32.gmra.mxu0 %v7016
    %v7968 = vpop.f32.mrf.mxu0
    %v7969 = vadd.f32 %v7884, %v7968
    %v7970 = vpop.f32.mrf.mxu0
    %7971 = vmatprep.mubr.f32.mxu0 %v7037
    %7972 = vmatmul.mubr.f32.gmra.mxu0 %v7036
    %v7973 = vpop.f32.mrf.mxu0
    %v7974 = vadd.f32 %v7889, %v7973
    %v7975 = vpop.f32.mrf.mxu0
    %7976 = vmatprep.mubr.f32.mxu0 %v7057
    %7977 = vmatmul.mubr.f32.gmra.mxu0 %v7056
    %v7978 = vpop.f32.mrf.mxu0
    %v7979 = vadd.f32 %v7894, %v7978
    %v7980 = vpop.f32.mrf.mxu0
    %7981 = vdwg.mxu0
    %7982 = vmatprep.subr.mxu0 0.0
    %7983 = vmatpush1.msra.mxu0 %v7273
    %7984 = vmatprep.subr.mxu0 0.0
    %7985 = vmatpush1.msra.mxu0 %v7272
    %7986 = vmatprep.subr.mxu0 0.0
    %7987 = vmatpush1.msra.mxu0 %v7271
    %7988 = vmatprep.subr.mxu0 0.0
    %7989 = vmatpush1.msra.mxu0 %v7270
    %7990 = vmatprep.subr.mxu0 0.0
    %7991 = vmatpush1.msra.mxu0 %v7269
    %7992 = vmatprep.subr.mxu0 0.0
    %7993 = vmatpush1.msra.mxu0 %v7268
    %7994 = vmatprep.subr.mxu0 0.0
    %7995 = vmatpush1.msra.mxu0 %v7267
    %7996 = vmatprep.subr.mxu0 0.0
    %7997 = vmatpush1.msra.mxu0 %v7266
    %7998 = vmatprep.subr.mxu0 0.0
    %7999 = vmatpush1.msra.mxu0 %v7265
    %8000 = vmatprep.subr.mxu0 0.0
    %8001 = vmatpush1.msra.mxu0 %v7264
    %8002 = vmatprep.subr.mxu0 0.0
    %8003 = vmatpush1.msra.mxu0 %v7263
    %8004 = vmatprep.subr.mxu0 0.0
    %8005 = vmatpush1.msra.mxu0 %v7262
    %8006 = vmatprep.subr.mxu0 0.0
    %8007 = vmatpush1.msra.mxu0 %v7261
    %8008 = vmatprep.subr.mxu0 0.0
    %8009 = vmatpush1.msra.mxu0 %v7260
    %8010 = vmatprep.subr.mxu0 0.0
    %8011 = vmatpush1.msra.mxu0 %v7259
    %8012 = vmatprep.subr.mxu0 0.0
    %8013 = vmatpush1.msra.mxu0 %v7258
    %8014 = vmatprep.subr.mxu0 0.0
    %8015 = vmatpush2.msra.mxu0 %v7289
    %8016 = vmatprep.subr.mxu0 0.0
    %8017 = vmatpush2.msra.mxu0 %v7288
    %8018 = vmatprep.subr.mxu0 0.0
    %8019 = vmatpush2.msra.mxu0 %v7287
    %8020 = vmatprep.subr.mxu0 0.0
    %8021 = vmatpush2.msra.mxu0 %v7286
    %8022 = vmatprep.subr.mxu0 0.0
    %8023 = vmatpush2.msra.mxu0 %v7285
    %8024 = vmatprep.subr.mxu0 0.0
    %8025 = vmatpush2.msra.mxu0 %v7284
    %8026 = vmatprep.subr.mxu0 0.0
    %8027 = vmatpush2.msra.mxu0 %v7283
    %8028 = vmatprep.subr.mxu0 0.0
    %8029 = vmatpush2.msra.mxu0 %v7282
    %8030 = vmatprep.subr.mxu0 0.0
    %8031 = vmatpush2.msra.mxu0 %v7281
    %8032 = vmatprep.subr.mxu0 0.0
    %8033 = vmatpush2.msra.mxu0 %v7280
    %8034 = vmatprep.subr.mxu0 0.0
    %8035 = vmatpush2.msra.mxu0 %v7279
    %8036 = vmatprep.subr.mxu0 0.0
    %8037 = vmatpush2.msra.mxu0 %v7278
    %8038 = vmatprep.subr.mxu0 0.0
    %8039 = vmatpush2.msra.mxu0 %v7277
    %8040 = vmatprep.subr.mxu0 0.0
    %8041 = vmatpush2.msra.mxu0 %v7276
    %8042 = vmatprep.subr.mxu0 0.0
    %8043 = vmatpush2.msra.mxu0 %v7275
    %8044 = vmatprep.subr.mxu0 0.0
    %8045 = vmatpush2.msra.mxu0 %v7274
    %8046 = vmatprep.mubr.f32.mxu0 %v6999
    %8047 = vmatmul.mubr.f32.gmra.mxu0 %v6998
    %v8048 = vpop.f32.mrf.mxu0
    %v8049 = vadd.f32 %v7964, %v8048
    %v8050 = vpop.f32.mrf.mxu0
    %8051 = vmatprep.mubr.f32.mxu0 %v7019
    %8052 = vmatmul.mubr.f32.gmra.mxu0 %v7018
    %v8053 = vpop.f32.mrf.mxu0
    %v8054 = vadd.f32 %v7969, %v8053
    %v8055 = vpop.f32.mrf.mxu0
    %8056 = vmatprep.mubr.f32.mxu0 %v7039
    %8057 = vmatmul.mubr.f32.gmra.mxu0 %v7038
    %v8058 = vpop.f32.mrf.mxu0
    %v8059 = vadd.f32 %v7974, %v8058
    %v8060 = vpop.f32.mrf.mxu0
    %8061 = vmatprep.mubr.f32.mxu0 %v7059
    %8062 = vmatmul.mubr.f32.gmra.mxu0 %v7058
    %v8063 = vpop.f32.mrf.mxu0
    %v8064 = vadd.f32 %v7979, %v8063
    %v8065 = vpop.f32.mrf.mxu0
    %8066 = vdwg.mxu0
    %8067 = vmatprep.subr.mxu0 0.0
    %8068 = vmatpush1.msra.mxu0 %v7305
    %8069 = vmatprep.subr.mxu0 0.0
    %8070 = vmatpush1.msra.mxu0 %v7304
    %8071 = vmatprep.subr.mxu0 0.0
    %8072 = vmatpush1.msra.mxu0 %v7303
    %8073 = vmatprep.subr.mxu0 0.0
    %8074 = vmatpush1.msra.mxu0 %v7302
    %8075 = vmatprep.subr.mxu0 0.0
    %8076 = vmatpush1.msra.mxu0 %v7301
    %8077 = vmatprep.subr.mxu0 0.0
    %8078 = vmatpush1.msra.mxu0 %v7300
    %8079 = vmatprep.subr.mxu0 0.0
    %8080 = vmatpush1.msra.mxu0 %v7299
    %8081 = vmatprep.subr.mxu0 0.0
    %8082 = vmatpush1.msra.mxu0 %v7298
    %8083 = vmatprep.subr.mxu0 0.0
    %8084 = vmatpush1.msra.mxu0 %v7297
    %8085 = vmatprep.subr.mxu0 0.0
    %8086 = vmatpush1.msra.mxu0 %v7296
    %8087 = vmatprep.subr.mxu0 0.0
    %8088 = vmatpush1.msra.mxu0 %v7295
    %8089 = vmatprep.subr.mxu0 0.0
    %8090 = vmatpush1.msra.mxu0 %v7294
    %8091 = vmatprep.subr.mxu0 0.0
    %8092 = vmatpush1.msra.mxu0 %v7293
    %8093 = vmatprep.subr.mxu0 0.0
    %8094 = vmatpush1.msra.mxu0 %v7292
    %8095 = vmatprep.subr.mxu0 0.0
    %8096 = vmatpush1.msra.mxu0 %v7291
    %8097 = vmatprep.subr.mxu0 0.0
    %8098 = vmatpush1.msra.mxu0 %v7290
    %8099 = vmatprep.subr.mxu0 0.0
    %8100 = vmatpush2.msra.mxu0 %v7321
    %8101 = vmatprep.subr.mxu0 0.0
    %8102 = vmatpush2.msra.mxu0 %v7320
    %8103 = vmatprep.subr.mxu0 0.0
    %8104 = vmatpush2.msra.mxu0 %v7319
    %8105 = vmatprep.subr.mxu0 0.0
    %8106 = vmatpush2.msra.mxu0 %v7318
    %8107 = vmatprep.subr.mxu0 0.0
    %8108 = vmatpush2.msra.mxu0 %v7317
    %8109 = vmatprep.subr.mxu0 0.0
    %8110 = vmatpush2.msra.mxu0 %v7316
    %8111 = vmatprep.subr.mxu0 0.0
    %8112 = vmatpush2.msra.mxu0 %v7315
    %8113 = vmatprep.subr.mxu0 0.0
    %8114 = vmatpush2.msra.mxu0 %v7314
    %8115 = vmatprep.subr.mxu0 0.0
    %8116 = vmatpush2.msra.mxu0 %v7313
    %8117 = vmatprep.subr.mxu0 0.0
    %8118 = vmatpush2.msra.mxu0 %v7312
    %8119 = vmatprep.subr.mxu0 0.0
    %8120 = vmatpush2.msra.mxu0 %v7311
    %8121 = vmatprep.subr.mxu0 0.0
    %8122 = vmatpush2.msra.mxu0 %v7310
    %8123 = vmatprep.subr.mxu0 0.0
    %8124 = vmatpush2.msra.mxu0 %v7309
    %8125 = vmatprep.subr.mxu0 0.0
    %8126 = vmatpush2.msra.mxu0 %v7308
    %8127 = vmatprep.subr.mxu0 0.0
    %8128 = vmatpush2.msra.mxu0 %v7307
    %8129 = vmatprep.subr.mxu0 0.0
    %8130 = vmatpush2.msra.mxu0 %v7306
    %8131 = vmatprep.mubr.f32.mxu0 %v7001
    %8132 = vmatmul.mubr.f32.gmra.mxu0 %v7000
    %v8133 = vpop.f32.mrf.mxu0
    %v8134 = vadd.f32 %v8049, %v8133
    %v8135 = vpop.f32.mrf.mxu0
    %8136 = vmatprep.mubr.f32.mxu0 %v7021
    %8137 = vmatmul.mubr.f32.gmra.mxu0 %v7020
    %v8138 = vpop.f32.mrf.mxu0
    %v8139 = vadd.f32 %v8054, %v8138
    %v8140 = vpop.f32.mrf.mxu0
    %8141 = vmatprep.mubr.f32.mxu0 %v7041
    %8142 = vmatmul.mubr.f32.gmra.mxu0 %v7040
    %v8143 = vpop.f32.mrf.mxu0
    %v8144 = vadd.f32 %v8059, %v8143
    %v8145 = vpop.f32.mrf.mxu0
    %8146 = vmatprep.mubr.f32.mxu0 %v7061
    %8147 = vmatmul.mubr.f32.gmra.mxu0 %v7060
    %v8148 = vpop.f32.mrf.mxu0
    %v8149 = vadd.f32 %v8064, %v8148
    %v8150 = vpop.f32.mrf.mxu0
    %8151 = vdwg.mxu0
    %8152 = vmatprep.subr.mxu0 0.0
    %8153 = vmatpush1.msra.mxu0 %v7337
    %8154 = vmatprep.subr.mxu0 0.0
    %8155 = vmatpush1.msra.mxu0 %v7336
    %8156 = vmatprep.subr.mxu0 0.0
    %8157 = vmatpush1.msra.mxu0 %v7335
    %8158 = vmatprep.subr.mxu0 0.0
    %8159 = vmatpush1.msra.mxu0 %v7334
    %8160 = vmatprep.subr.mxu0 0.0
    %8161 = vmatpush1.msra.mxu0 %v7333
    %8162 = vmatprep.subr.mxu0 0.0
    %8163 = vmatpush1.msra.mxu0 %v7332
    %8164 = vmatprep.subr.mxu0 0.0
    %8165 = vmatpush1.msra.mxu0 %v7331
    %8166 = vmatprep.subr.mxu0 0.0
    %8167 = vmatpush1.msra.mxu0 %v7330
    %8168 = vmatprep.subr.mxu0 0.0
    %8169 = vmatpush1.msra.mxu0 %v7329
    %8170 = vmatprep.subr.mxu0 0.0
    %8171 = vmatpush1.msra.mxu0 %v7328
    %8172 = vmatprep.subr.mxu0 0.0
    %8173 = vmatpush1.msra.mxu0 %v7327
    %8174 = vmatprep.subr.mxu0 0.0
    %8175 = vmatpush1.msra.mxu0 %v7326
    %8176 = vmatprep.subr.mxu0 0.0
    %8177 = vmatpush1.msra.mxu0 %v7325
    %8178 = vmatprep.subr.mxu0 0.0
    %8179 = vmatpush1.msra.mxu0 %v7324
    %8180 = vmatprep.subr.mxu0 0.0
    %8181 = vmatpush1.msra.mxu0 %v7323
    %8182 = vmatprep.subr.mxu0 0.0
    %8183 = vmatpush1.msra.mxu0 %v7322
    %8184 = vmatprep.subr.mxu0 0.0
    %8185 = vmatpush2.msra.mxu0 %v7353
    %8186 = vmatprep.subr.mxu0 0.0
    %8187 = vmatpush2.msra.mxu0 %v7352
    %8188 = vmatprep.subr.mxu0 0.0
    %8189 = vmatpush2.msra.mxu0 %v7351
    %8190 = vmatprep.subr.mxu0 0.0
    %8191 = vmatpush2.msra.mxu0 %v7350
    %8192 = vmatprep.subr.mxu0 0.0
    %8193 = vmatpush2.msra.mxu0 %v7349
    %8194 = vmatprep.subr.mxu0 0.0
    %8195 = vmatpush2.msra.mxu0 %v7348
    %8196 = vmatprep.subr.mxu0 0.0
    %8197 = vmatpush2.msra.mxu0 %v7347
    %8198 = vmatprep.subr.mxu0 0.0
    %8199 = vmatpush2.msra.mxu0 %v7346
    %8200 = vmatprep.subr.mxu0 0.0
    %8201 = vmatpush2.msra.mxu0 %v7345
    %8202 = vmatprep.subr.mxu0 0.0
    %8203 = vmatpush2.msra.mxu0 %v7344
    %8204 = vmatprep.subr.mxu0 0.0
    %8205 = vmatpush2.msra.mxu0 %v7343
    %8206 = vmatprep.subr.mxu0 0.0
    %8207 = vmatpush2.msra.mxu0 %v7342
    %8208 = vmatprep.subr.mxu0 0.0
    %8209 = vmatpush2.msra.mxu0 %v7341
    %8210 = vmatprep.subr.mxu0 0.0
    %8211 = vmatpush2.msra.mxu0 %v7340
    %8212 = vmatprep.subr.mxu0 0.0
    %8213 = vmatpush2.msra.mxu0 %v7339
    %8214 = vmatprep.subr.mxu0 0.0
    %8215 = vmatpush2.msra.mxu0 %v7338
    %8216 = vmatprep.mubr.f32.mxu0 %v7003
    %8217 = vmatmul.mubr.f32.gmra.mxu0 %v7002
    %v8218 = vpop.f32.mrf.mxu0
    %v8219 = vadd.f32 %v8134, %v8218
    %v8220 = vpop.f32.mrf.mxu0
    %8221 = vmatprep.mubr.f32.mxu0 %v7023
    %8222 = vmatmul.mubr.f32.gmra.mxu0 %v7022
    %v8223 = vpop.f32.mrf.mxu0
    %v8224 = vadd.f32 %v8139, %v8223
    %v8225 = vpop.f32.mrf.mxu0
    %8226 = vmatprep.mubr.f32.mxu0 %v7043
    %8227 = vmatmul.mubr.f32.gmra.mxu0 %v7042
    %v8228 = vpop.f32.mrf.mxu0
    %v8229 = vadd.f32 %v8144, %v8228
    %v8230 = vpop.f32.mrf.mxu0
    %8231 = vmatprep.mubr.f32.mxu0 %v7063
    %8232 = vmatmul.mubr.f32.gmra.mxu0 %v7062
    %v8233 = vpop.f32.mrf.mxu0
    %v8234 = vadd.f32 %v8149, %v8233
    %v8235 = vpop.f32.mrf.mxu0
    %8236 = vdwg.mxu0
    %8237 = vmatprep.subr.mxu0 0.0
    %8238 = vmatpush1.msra.mxu0 %v7369
    %8239 = vmatprep.subr.mxu0 0.0
    %8240 = vmatpush1.msra.mxu0 %v7368
    %8241 = vmatprep.subr.mxu0 0.0
    %8242 = vmatpush1.msra.mxu0 %v7367
    %8243 = vmatprep.subr.mxu0 0.0
    %8244 = vmatpush1.msra.mxu0 %v7366
    %8245 = vmatprep.subr.mxu0 0.0
    %8246 = vmatpush1.msra.mxu0 %v7365
    %8247 = vmatprep.subr.mxu0 0.0
    %8248 = vmatpush1.msra.mxu0 %v7364
    %8249 = vmatprep.subr.mxu0 0.0
    %8250 = vmatpush1.msra.mxu0 %v7363
    %8251 = vmatprep.subr.mxu0 0.0
    %8252 = vmatpush1.msra.mxu0 %v7362
    %8253 = vmatprep.subr.mxu0 0.0
    %8254 = vmatpush1.msra.mxu0 %v7361
    %8255 = vmatprep.subr.mxu0 0.0
    %8256 = vmatpush1.msra.mxu0 %v7360
    %8257 = vmatprep.subr.mxu0 0.0
    %8258 = vmatpush1.msra.mxu0 %v7359
    %8259 = vmatprep.subr.mxu0 0.0
    %8260 = vmatpush1.msra.mxu0 %v7358
    %8261 = vmatprep.subr.mxu0 0.0
    %8262 = vmatpush1.msra.mxu0 %v7357
    %8263 = vmatprep.subr.mxu0 0.0
    %8264 = vmatpush1.msra.mxu0 %v7356
    %8265 = vmatprep.subr.mxu0 0.0
    %8266 = vmatpush1.msra.mxu0 %v7355
    %8267 = vmatprep.subr.mxu0 0.0
    %8268 = vmatpush1.msra.mxu0 %v7354
    %8269 = vmatprep.subr.mxu0 0.0
    %8270 = vmatpush2.msra.mxu0 %v7385
    %8271 = vmatprep.subr.mxu0 0.0
    %8272 = vmatpush2.msra.mxu0 %v7384
    %8273 = vmatprep.subr.mxu0 0.0
    %8274 = vmatpush2.msra.mxu0 %v7383
    %8275 = vmatprep.subr.mxu0 0.0
    %8276 = vmatpush2.msra.mxu0 %v7382
    %8277 = vmatprep.subr.mxu0 0.0
    %8278 = vmatpush2.msra.mxu0 %v7381
    %8279 = vmatprep.subr.mxu0 0.0
    %8280 = vmatpush2.msra.mxu0 %v7380
    %8281 = vmatprep.subr.mxu0 0.0
    %8282 = vmatpush2.msra.mxu0 %v7379
    %8283 = vmatprep.subr.mxu0 0.0
    %8284 = vmatpush2.msra.mxu0 %v7378
    %8285 = vmatprep.subr.mxu0 0.0
    %8286 = vmatpush2.msra.mxu0 %v7377
    %8287 = vmatprep.subr.mxu0 0.0
    %8288 = vmatpush2.msra.mxu0 %v7376
    %8289 = vmatprep.subr.mxu0 0.0
    %8290 = vmatpush2.msra.mxu0 %v7375
    %8291 = vmatprep.subr.mxu0 0.0
    %8292 = vmatpush2.msra.mxu0 %v7374
    %8293 = vmatprep.subr.mxu0 0.0
    %8294 = vmatpush2.msra.mxu0 %v7373
    %8295 = vmatprep.subr.mxu0 0.0
    %8296 = vmatpush2.msra.mxu0 %v7372
    %8297 = vmatprep.subr.mxu0 0.0
    %8298 = vmatpush2.msra.mxu0 %v7371
    %8299 = vmatprep.subr.mxu0 0.0
    %8300 = vmatpush2.msra.mxu0 %v7370
    %8301 = vmatprep.mubr.f32.mxu0 %v7005
    %8302 = vmatmul.mubr.f32.gmra.mxu0 %v7004
    %v8303 = vpop.f32.mrf.mxu0
    %v8304 = vadd.f32 %v8219, %v8303
    %v8305 = vpop.f32.mrf.mxu0
    %8306 = vmatprep.mubr.f32.mxu0 %v7025
    %8307 = vmatmul.mubr.f32.gmra.mxu0 %v7024
    %v8308 = vpop.f32.mrf.mxu0
    %v8309 = vadd.f32 %v8224, %v8308
    %v8310 = vpop.f32.mrf.mxu0
    %8311 = vmatprep.mubr.f32.mxu0 %v7045
    %8312 = vmatmul.mubr.f32.gmra.mxu0 %v7044
    %v8313 = vpop.f32.mrf.mxu0
    %v8314 = vadd.f32 %v8229, %v8313
    %v8315 = vpop.f32.mrf.mxu0
    %8316 = vmatprep.mubr.f32.mxu0 %v7065
    %8317 = vmatmul.mubr.f32.gmra.mxu0 %v7064
    %v8318 = vpop.f32.mrf.mxu0
    %v8319 = vadd.f32 %v8234, %v8318
    %v8320 = vpop.f32.mrf.mxu0
    %8321 = vdwg.mxu0
    %v8322 = vadd.f32 %v2122, %v8304
    %v8323 = vadd.f32 %v2123, %v8309
    %v8324 = vadd.f32 %v2124, %v8314
    %v8325 = vadd.f32 %v2125, %v8319
    %8326 = vst [vmem:[#allocation31] sm:$0xff] %v8322
    %8327 = vst [vmem:[#allocation31 + $0x8] sm:$0xff] %v8323
    %8328 = vst [vmem:[#allocation31 + $0x10] sm:$0xff] %v8324
    %8329 = vst [vmem:[#allocation31 + $0x18] sm:$0xff] %v8325
    // Predicated region
    $region166: #{deepseek_layer_forward.1} parent=1 // pred_check
      _
    $region167: #{deepseek_layer_forward.1} parent=1 // pred_check_branch
      %8331 = sbr.rel (0) target = $region169
    $region168: #{deepseek_layer_forward.1} parent=1 // pred_region
      %s8333 = ssub.s32 512, 512
      %8334 = vsyncadd [#allocation4], %s8333
      %s8335 = sshll.u32 [#allocation31], 4
      %s8336 = int_to_ptr.vmem [resolvable:$true] %s8335
      %8341 = dma.vmem_to_hbm [thread:$0]  %s8336, 512, %s23, [#allocation4], 128, 128, 8
    $region169: #{deepseek_layer_forward.1} parent=1 // pred_fallthru
      _
    // Predicated region
    $region170: #{deepseek_layer_forward.1} parent=1 // pred_check
      _
    $region171: #{deepseek_layer_forward.1} parent=1 // pred_check_branch
      %8343 = sbr.rel (0) target = $region173
    $region172: #{deepseek_layer_forward.1} parent=1 // pred_region
      %8344 = dma.done [#allocation4], 512
    $region173: #{deepseek_layer_forward.1} parent=1 // pred_fallthru
      _
    %8345 = vsyncpa [#allocation3], 1
    %8346 = vsyncpa [#allocation6], 1
    %8347 = vsyncpa [#allocation9], 1
    %8348 = vsyncpa [#allocation12], 1
    %8349 = vsyncpa [#allocation15], 1
    %8350 = vsyncpa [#allocation18], 1
    %8351 = vsyncpa [#allocation21], 1
    %8352 = vsyncpa [#allocation24], 1
    %8353 = vsyncpa [#allocation27], 1
    %8354 = vsyncpa [#allocation30], 1
    %8355 = vsyncpa [#allocation4], 1

</llo_original>
